<compile_context>
chip_gen: v7x
topology: tpu7x:2x2x1
jax: 0.10.0
libtpu: 0.0.40
codegen_flags: <defaults>
</compile_context>

<pallas_src>
import functools

import jax
import jax.numpy as jnp
from jax.experimental import pallas as pl
from jax.experimental.pallas import tpu as pltpu

_EPS = 1e-5
_LANE = 128


def _round_up(x, m):
    return (x + m - 1) // m * m


# ----------------------------------------------------------------------------
# In-kernel helpers
# ----------------------------------------------------------------------------
def _bn_scale_shift(st, gamma, beta, cnt):
    """Fused BN scale/shift from per-image partial (sum, sum_sq) stats.

    st: (N, 2, Cp) f32, gamma/beta: (1, Cp) f32. Returns (1, Cp) scale, shift.
    """
    tot = jnp.sum(st, axis=0)                      # (2, Cp)
    mean = tot[0:1, :] / cnt
    var = jnp.maximum(tot[1:2, :] / cnt - mean * mean, 0.0)   # biased (training) var
    scale = gamma * jax.lax.rsqrt(var + _EPS)
    shift = beta - mean * scale
    return scale, shift


def _conv_taps(xpad_ref, w_ref, mask, *, offsets, hext):
    """3x3 conv on a row-flattened padded image via 9 accumulated per-tap matmuls.

    xpad_ref: (Lp, C)   f32 padded, row-flattened input (VMEM scratch)
    w_ref   : (9, C, Cp) bf16 per-tap weights, t = kh*3 + kw
    mask    : (Hext, 1) f32, 1.0 at valid output rows, 0.0 at junk (pad) columns
    Returns conv output (Hext, Cp) f32 plus masked partial sum / sum-of-squares.
    """
    acc = None
    for t, d in enumerate(offsets):
        lhs = xpad_ref[d:d + hext, :].astype(jnp.bfloat16)
        part = jnp.dot(lhs, w_ref[t], preferred_element_type=jnp.float32)
        acc = part if acc is None else acc + part
    am = acc * mask
    s = jnp.sum(am, axis=0, keepdims=True)
    sq = jnp.sum(acc * am, axis=0, keepdims=True)
    return acc, s, sq


# ----------------------------------------------------------------------------
# Kernel bodies
# ----------------------------------------------------------------------------
def _conv1_kernel(x_ref, w_ref, mask_ref, y_ref, st_ref, xpad_ref,
                  *, offsets, hext, top, lp, H, W, Wp, C):
    # x_ref: (1, H*W, C) f32 ; y_ref: (1, Hext, Cp) bf16 ; st_ref: (1, 2, Cp) f32
    # xpad_ref: (Lp, C) f32 scratch holding the zero-padded, pitch-aligned image.
    # Zero only the halo strips (8-aligned); valid rows are fully rewritten below.
    xpad_ref[0:top, :] = jnp.zeros((top, C), jnp.float32)
    xpad_ref[top + hext:, :] = jnp.zeros((lp - top - hext, C), jnp.float32)
    for h in range(H):
        base = top + h * Wp
        xpad_ref[base + W:base + Wp, :] = jnp.zeros((Wp - W, C), jnp.float32)
        xpad_ref[base:base + W, :] = x_ref[0, h * W:(h + 1) * W, :]
    acc, s, sq = _conv_taps(xpad_ref, w_ref, mask_ref[...], offsets=offsets, hext=hext)
    y_ref[0] = acc.astype(y_ref.dtype)
    st_ref[0, 0:1, :] = s
    st_ref[0, 1:2, :] = sq


def _conv2_kernel(y1_ref, st1_ref, g1_ref, b1_ref, w_ref, mask_ref,
                  y2_ref, st_ref, hpad_ref, *, offsets, hext, top, lp, C, cnt):
    # y1_ref: (1, Hext, Cp) bf16 conv1 output; st1_ref: (N, 2, Cp) f32 (resident).
    mask = mask_ref[...]
    sc, sh = _bn_scale_shift(st1_ref[...], g1_ref[...], b1_ref[...], cnt)
    h1 = y1_ref[0].astype(jnp.float32) * sc + sh
    h1 = jnp.maximum(h1, 0.0) * mask               # relu + zero junk (pad) columns
    # Only the 1-px border rows need zeroing; interior (incl. pad columns, which
    # receive mask-zeroed values) is fully rewritten each grid step.
    hpad_ref[0:top, :] = jnp.zeros((top, C), jnp.float32)
    hpad_ref[top + hext:, :] = jnp.zeros((lp - top - hext, C), jnp.float32)
    hpad_ref[top:top + hext, :] = h1[:, :C]
    acc, s, sq = _conv_taps(hpad_ref, w_ref, mask, offsets=offsets, hext=hext)
    y2_ref[0] = acc.astype(y2_ref.dtype)
    st_ref[0, 0:1, :] = s
    st_ref[0, 1:2, :] = sq


def _residual_kernel(y2_ref, x_ref, st2_ref, g2_ref, b2_ref, out_ref,
                     *, H, W, Wp, C, cnt):
    # BN2 (fused scale/shift) + identity add + relu; output written compactly
    # as (H*W, C) -- no junk columns, no channel padding.
    sc, sh = _bn_scale_shift(st2_ref[...], g2_ref[...], b2_ref[...], cnt)
    h2 = y2_ref[0].astype(jnp.float32) * sc + sh    # (Hext, Cp)
    for h in range(H):
        ident = x_ref[0, h * W:(h + 1) * W, :]      # (W, C)
        val = h2[h * Wp:h * Wp + W, :C] + ident
        out_ref[0, h * W:(h + 1) * W, :] = jnp.maximum(val, 0.0)


# ----------------------------------------------------------------------------
# Forward
# ----------------------------------------------------------------------------
@jax.jit
def _forward_impl(x_nchw, domain_label, params):
    N, C, H, W = x_nchw.shape
    Cp = params["conv1_w"].shape[2]          # lane-padded OUT channel count
    HW = H * W
    Wp = _round_up(W + 2, 8)                 # 8-aligned row pitch (extra cols masked)
    Hext = H * Wp                            # width-extended output rows per image
    TOP = _round_up(Wp + 1, 8)               # 8-aligned flat offset of pixel (0, 0)
    Lp = _round_up(TOP + Hext + Wp + 1, 8)   # padded flattened length (all taps in-bounds)
    base = TOP - Wp - 1
    offsets = tuple(base + kh * Wp + kw for kh in range(3) for kw in range(3))
    cnt = float(N * H * W)

    d = domain_label[0]                      # on-device domain selection (no host sync)
    g1 = params["bn1_gamma"][d].reshape(1, Cp)
    b1 = params["bn1_beta"][d].reshape(1, Cp)
    g2 = params["bn2_gamma"][d].reshape(1, Cp)
    b2 = params["bn2_beta"][d].reshape(1, Cp)

    # Minimal layout glue: NCHW -> (N, H*W, C) at the TRUE channel count.
    # Spatial padding / un-extending happens inside the kernels.
    x_flat = jnp.transpose(x_nchw, (0, 2, 3, 1)).reshape(N, HW, C).astype(jnp.float32)

    mask = (jnp.arange(Hext, dtype=jnp.int32) % Wp < W).astype(jnp.float32)
    mask = mask.reshape(Hext, 1)

    cparams = pltpu.CompilerParams(
        dimension_semantics=("parallel",),           # shard images over TCs (v7x)
        vmem_limit_bytes=40 * 1024 * 1024)

    x_spec = pl.BlockSpec((1, HW, C), lambda n: (n, 0, 0))
    w_spec = pl.BlockSpec((9, C, Cp), lambda n: (0, 0, 0))        # resident
    mask_spec = pl.BlockSpec((Hext, 1), lambda n: (0, 0))         # resident
    vec_spec = pl.BlockSpec((1, Cp), lambda n: (0, 0))            # resident
    st_all_spec = pl.BlockSpec((N, 2, Cp), lambda n: (0, 0, 0))   # resident
    ext_spec = pl.BlockSpec((1, Hext, Cp), lambda n: (n, 0, 0))
    st_spec = pl.BlockSpec((1, 2, Cp), lambda n: (n, 0, 0))

    # ---- pass 1: pad-in-VMEM + conv1 + per-image BN1 partial sums ------------
    y1, st1 = pl.pallas_call(
        functools.partial(_conv1_kernel, offsets=offsets, hext=Hext, top=TOP,
                          lp=Lp, H=H, W=W, Wp=Wp, C=C),
        grid=(N,),
        in_specs=[x_spec, w_spec, mask_spec],
        out_specs=(ext_spec, st_spec),
        out_shape=(jax.ShapeDtypeStruct((N, Hext, Cp), jnp.bfloat16),
                   jax.ShapeDtypeStruct((N, 2, Cp), jnp.float32)),
        scratch_shapes=[pltpu.VMEM((Lp, C), jnp.float32)],
        compiler_params=cparams,
    )(x_flat, params["conv1_w"], mask)

    # ---- pass 2: BN1(in-kernel coeffs) + relu + conv2 + BN2 partial sums -----
    y2, st2 = pl.pallas_call(
        functools.partial(_conv2_kernel, offsets=offsets, hext=Hext, top=TOP,
                          lp=Lp, C=C, cnt=cnt),
        grid=(N,),
        in_specs=[ext_spec, st_all_spec, vec_spec, vec_spec, w_spec, mask_spec],
        out_specs=(ext_spec, st_spec),
        out_shape=(jax.ShapeDtypeStruct((N, Hext, Cp), jnp.bfloat16),
                   jax.ShapeDtypeStruct((N, 2, Cp), jnp.float32)),
        scratch_shapes=[pltpu.VMEM((Lp, C), jnp.float32)],
        compiler_params=cparams,
    )(y1, st1, g1, b1, params["conv2_w"], mask)

    # ---- pass 3: BN2(in-kernel coeffs) + residual add + relu -----------------
    out_flat = pl.pallas_call(
        functools.partial(_residual_kernel, H=H, W=W, Wp=Wp, C=C, cnt=cnt),
        grid=(N,),
        in_specs=[ext_spec, x_spec, st_all_spec, vec_spec, vec_spec],
        out_specs=x_spec,
        out_shape=jax.ShapeDtypeStruct((N, HW, C), jnp.float32),
        compiler_params=cparams,
    )(y2, x_flat, st2, g2, b2)

    # Remaining glue: NHWC -> NCHW (keep NHWC end-to-end in a real model).
    return jnp.transpose(out_flat.reshape(N, H, W, C), (0, 3, 1, 2))


def basic_block_forward(x_nchw, domain_label, prepared_params):
    """Mirrors BasicBlock.forward(x, domain_label) -> (out, domain_label)."""
    out = _forward_impl(x_nchw, domain_label, prepared_params)
    return out, domain_label


# ----------------------------------------------------------------------------
# Parameter handling
# ----------------------------------------------------------------------------
def init_params(key, inplanes, planes, num_domains=2):
    """PyTorch-layout parameters (conv: (Cout, Cin, 3, 3), BN: (num_domains, C))."""
    k1, k2, k3, k4, k5, k6 = jax.random.split(key, 6)
    return {
        "conv1_w": 0.1 * jax.random.normal(k1, (planes, inplanes, 3, 3), jnp.float32),
        "conv2_w": 0.1 * jax.random.normal(k2, (planes, planes, 3, 3), jnp.float32),
        "bn1_gamma": 1.0 + 0.05 * jax.random.normal(k3, (num_domains, planes), jnp.float32),
        "bn1_beta": 0.05 * jax.random.normal(k4, (num_domains, planes), jnp.float32),
        "bn2_gamma": 1.0 + 0.05 * jax.random.normal(k5, (num_domains, planes), jnp.float32),
        "bn2_beta": 0.05 * jax.random.normal(k6, (num_domains, planes), jnp.float32),
    }


def prepare_params(raw):
    """One-time conversion to kernel layout: per-tap weights, Cout lane-padded, bf16."""
    c_out, c_in = raw["conv1_w"].shape[0], raw["conv1_w"].shape[1]
    assert c_out == c_in, "BasicBlock with stride=1 / downsample=None needs inplanes==planes"
    cp = _round_up(c_out, _LANE)

    def prep_w(w):  # (Cout, Cin, 3, 3) -> (9, Cin, Cp) bf16, tap index t = kh*3 + kw
        w = jnp.transpose(w, (2, 3, 1, 0)).reshape(9, c_in, c_out)
        w = jnp.pad(w, ((0, 0), (0, 0), (0, cp - c_out)))
        return w.astype(jnp.bfloat16)

    def prep_bn(v):  # (D, C) -> (D, Cp); zero-padded channels stay inert
        return jnp.pad(v, ((0, 0), (0, cp - v.shape[1]))).astype(jnp.float32)

    return {
        "conv1_w": prep_w(raw["conv1_w"]),
        "conv2_w": prep_w(raw["conv2_w"]),
        "bn1_gamma": prep_bn(raw["bn1_gamma"]),
        "bn1_beta": prep_bn(raw["bn1_beta"]),
        "bn2_gamma": prep_bn(raw["bn2_gamma"]),
        "bn2_beta": prep_bn(raw["bn2_beta"]),
    }


# ----------------------------------------------------------------------------
# Pure-JAX reference (test only)
# ----------------------------------------------------------------------------
def _reference_forward(x, domain_label, raw):
    d = int(domain_label[0])

    def conv(x, w):
        return jax.lax.conv_general_dilated(
            x, w, window_strides=(1, 1), padding=((1, 1), (1, 1)),
            dimension_numbers=("NCHW", "OIHW", "NCHW"))

    def bn(y, gamma, beta):
        mean = y.mean(axis=(0, 2, 3), keepdims=True)
        var = ((y - mean) ** 2).mean(axis=(0, 2, 3), keepdims=True)
        return ((y - mean) * jax.lax.rsqrt(var + _EPS)
                * gamma[None, :, None, None] + beta[None, :, None, None])

    out = conv(x, raw["conv1_w"])
    out = jnp.maximum(bn(out, raw["bn1_gamma"][d], raw["bn1_beta"][d]), 0.0)
    out = conv(out, raw["conv2_w"])
    out = bn(out, raw["bn2_gamma"][d], raw["bn2_beta"][d])
    return jnp.maximum(out + x, 0.0)


if __name__ == "__main__":
    key = jax.random.PRNGKey(0)
    kx, kp = jax.random.split(key)

    # Small shapes: batch=2, inplanes=planes=8, spatial=16, stride=1, downsample=None.
    N, C, H, W = 2, 8, 16, 16
    x = jax.random.normal(kx, (N, C, H, W), jnp.float32)
    domain_label = jnp.zeros((N,), jnp.int32)   # all samples from domain 0

    raw_params = init_params(kp, inplanes=C, planes=C, num_domains=2)
    params = prepare_params(raw_params)

    out, dl = basic_block_forward(x, domain_label, params)
    out = jax.block_until_ready(out)

    assert out.shape == (N, C, H, W)
    assert bool(jnp.all(out >= 0.0))            # final ReLU

    ref = _reference_forward(x, domain_label, raw_params)
    err = float(jnp.max(jnp.abs(out - ref)))
    assert err < 5e-2, f"max abs error vs reference: {err}"

    print("KERNEL_OK")
</pallas_src>

<mosaic_0001>
module attributes {stable_mosaic.version = 11 : i64} {
  func.func @_conv1_kernel(%arg0: i32, %arg1: memref<1x256x8xf32, #tpu.memory_space<vmem>>, %arg2: memref<9x8x128xbf16, #tpu.memory_space<vmem>>, %arg3: memref<384x1xf32, #tpu.memory_space<vmem>>, %arg4: memref<1x384x128xbf16, #tpu.memory_space<vmem>>, %arg5: memref<1x2x128xf32, #tpu.memory_space<vmem>>, %arg6: memref<448x8xf32, #tpu.memory_space<vmem>>) attributes {dimension_semantics = [#tpu.dimension_semantics<parallel>], iteration_bounds = array<i64: 2>, scalar_prefetch = 0 : i64, scratch_operands = 1 : i64, tpu.core_type = #tpu.core_type<tc>, window_params = [{transform_indices = @transform_0, window_bounds = array<i64: 1, 256, 8>}, {pipeline_mode = #tpu.pipeline_mode<synchronous>, transform_indices = @transform_1, window_bounds = array<i64: 9, 8, 128>}, {pipeline_mode = #tpu.pipeline_mode<synchronous>, transform_indices = @transform_2, window_bounds = array<i64: 384, 1>}, {transform_indices = @transform_3, window_bounds = array<i64: 1, 384, 128>}, {transform_indices = @transform_4, window_bounds = array<i64: 1, 2, 128>}]} {
    %cst = arith.constant 0.000000e+00 : f32
    %0 = vector.broadcast %cst : f32 to vector<32x8xf32>
    %c0 = arith.constant 0 : index
    %c0_0 = arith.constant 0 : index
    %1 = vector.load %arg6[%c0, %c0_0] : memref<448x8xf32, #tpu.memory_space<vmem>>, vector<32x8xf32>
    tpu.vector_store %arg6[%c0, %c0_0], %0 {strides = array<i32>} : memref<448x8xf32, #tpu.memory_space<vmem>>, vector<32x8xf32>,
    %cst_1 = arith.constant 0.000000e+00 : f32
    %2 = vector.broadcast %cst_1 : f32 to vector<32x8xf32>
    %c416 = arith.constant 416 : index
    %c0_2 = arith.constant 0 : index
    %3 = vector.load %arg6[%c416, %c0_2] : memref<448x8xf32, #tpu.memory_space<vmem>>, vector<32x8xf32>
    tpu.vector_store %arg6[%c416, %c0_2], %2 {strides = array<i32>} : memref<448x8xf32, #tpu.memory_space<vmem>>, vector<32x8xf32>,
    %cst_3 = arith.constant 0.000000e+00 : f32
    %4 = vector.broadcast %cst_3 : f32 to vector<8x8xf32>
    %c48 = arith.constant 48 : index
    %c0_4 = arith.constant 0 : index
    %5 = vector.load %arg6[%c48, %c0_4] : memref<448x8xf32, #tpu.memory_space<vmem>>, vector<8x8xf32>
    tpu.vector_store %arg6[%c48, %c0_4], %4 {strides = array<i32>} : memref<448x8xf32, #tpu.memory_space<vmem>>, vector<8x8xf32>,
    %c0_5 = arith.constant 0 : index
    %c0_6 = arith.constant 0 : index
    %c0_7 = arith.constant 0 : index
    %6 = vector.load %arg1[%c0_5, %c0_6, %c0_7] : memref<1x256x8xf32, #tpu.memory_space<vmem>>, vector<1x16x8xf32>
    %7 = vector.shape_cast %6 : vector<1x16x8xf32> to vector<16x8xf32>
    %c32 = arith.constant 32 : index
    %c0_8 = arith.constant 0 : index
    %8 = vector.load %arg6[%c32, %c0_8] : memref<448x8xf32, #tpu.memory_space<vmem>>, vector<16x8xf32>
    tpu.vector_store %arg6[%c32, %c0_8], %7 {strides = array<i32>} : memref<448x8xf32, #tpu.memory_space<vmem>>, vector<16x8xf32>,
    %cst_9 = arith.constant 0.000000e+00 : f32
    %9 = vector.broadcast %cst_9 : f32 to vector<8x8xf32>
    %c72 = arith.constant 72 : index
    %c0_10 = arith.constant 0 : index
    %10 = vector.load %arg6[%c72, %c0_10] : memref<448x8xf32, #tpu.memory_space<vmem>>, vector<8x8xf32>
    tpu.vector_store %arg6[%c72, %c0_10], %9 {strides = array<i32>} : memref<448x8xf32, #tpu.memory_space<vmem>>, vector<8x8xf32>,
    %c0_11 = arith.constant 0 : index
    %c16 = arith.constant 16 : index
    %c0_12 = arith.constant 0 : index
    %11 = vector.load %arg1[%c0_11, %c16, %c0_12] : memref<1x256x8xf32, #tpu.memory_space<vmem>>, vector<1x16x8xf32>
    %12 = vector.shape_cast %11 : vector<1x16x8xf32> to vector<16x8xf32>
    %c56 = arith.constant 56 : index
    %c0_13 = arith.constant 0 : index
    %13 = vector.load %arg6[%c56, %c0_13] : memref<448x8xf32, #tpu.memory_space<vmem>>, vector<16x8xf32>
    tpu.vector_store %arg6[%c56, %c0_13], %12 {strides = array<i32>} : memref<448x8xf32, #tpu.memory_space<vmem>>, vector<16x8xf32>,
    %cst_14 = arith.constant 0.000000e+00 : f32
    %14 = vector.broadcast %cst_14 : f32 to vector<8x8xf32>
    %c96 = arith.constant 96 : index
    %c0_15 = arith.constant 0 : index
    %15 = vector.load %arg6[%c96, %c0_15] : memref<448x8xf32, #tpu.memory_space<vmem>>, vector<8x8xf32>
    tpu.vector_store %arg6[%c96, %c0_15], %14 {strides = array<i32>} : memref<448x8xf32, #tpu.memory_space<vmem>>, vector<8x8xf32>,
    %c0_16 = arith.constant 0 : index
    %c32_17 = arith.constant 32 : index
    %c0_18 = arith.constant 0 : index
    %16 = vector.load %arg1[%c0_16, %c32_17, %c0_18] : memref<1x256x8xf32, #tpu.memory_space<vmem>>, vector<1x16x8xf32>
    %17 = vector.shape_cast %16 : vector<1x16x8xf32> to vector<16x8xf32>
    %c80 = arith.constant 80 : index
    %c0_19 = arith.constant 0 : index
    %18 = vector.load %arg6[%c80, %c0_19] : memref<448x8xf32, #tpu.memory_space<vmem>>, vector<16x8xf32>
    tpu.vector_store %arg6[%c80, %c0_19], %17 {strides = array<i32>} : memref<448x8xf32, #tpu.memory_space<vmem>>, vector<16x8xf32>,
    %cst_20 = arith.constant 0.000000e+00 : f32
    %19 = vector.broadcast %cst_20 : f32 to vector<8x8xf32>
    %c120 = arith.constant 120 : index
    %c0_21 = arith.constant 0 : index
    %20 = vector.load %arg6[%c120, %c0_21] : memref<448x8xf32, #tpu.memory_space<vmem>>, vector<8x8xf32>
    tpu.vector_store %arg6[%c120, %c0_21], %19 {strides = array<i32>} : memref<448x8xf32, #tpu.memory_space<vmem>>, vector<8x8xf32>,
    %c0_22 = arith.constant 0 : index
    %c48_23 = arith.constant 48 : index
    %c0_24 = arith.constant 0 : index
    %21 = vector.load %arg1[%c0_22, %c48_23, %c0_24] : memref<1x256x8xf32, #tpu.memory_space<vmem>>, vector<1x16x8xf32>
    %22 = vector.shape_cast %21 : vector<1x16x8xf32> to vector<16x8xf32>
    %c104 = arith.constant 104 : index
    %c0_25 = arith.constant 0 : index
    %23 = vector.load %arg6[%c104, %c0_25] : memref<448x8xf32, #tpu.memory_space<vmem>>, vector<16x8xf32>
    tpu.vector_store %arg6[%c104, %c0_25], %22 {strides = array<i32>} : memref<448x8xf32, #tpu.memory_space<vmem>>, vector<16x8xf32>,
    %cst_26 = arith.constant 0.000000e+00 : f32
    %24 = vector.broadcast %cst_26 : f32 to vector<8x8xf32>
    %c144 = arith.constant 144 : index
    %c0_27 = arith.constant 0 : index
    %25 = vector.load %arg6[%c144, %c0_27] : memref<448x8xf32, #tpu.memory_space<vmem>>, vector<8x8xf32>
    tpu.vector_store %arg6[%c144, %c0_27], %24 {strides = array<i32>} : memref<448x8xf32, #tpu.memory_space<vmem>>, vector<8x8xf32>,
    %c0_28 = arith.constant 0 : index
    %c64 = arith.constant 64 : index
    %c0_29 = arith.constant 0 : index
    %26 = vector.load %arg1[%c0_28, %c64, %c0_29] : memref<1x256x8xf32, #tpu.memory_space<vmem>>, vector<1x16x8xf32>
    %27 = vector.shape_cast %26 : vector<1x16x8xf32> to vector<16x8xf32>
    %c128 = arith.constant 128 : index
    %c0_30 = arith.constant 0 : index
    %28 = vector.load %arg6[%c128, %c0_30] : memref<448x8xf32, #tpu.memory_space<vmem>>, vector<16x8xf32>
    tpu.vector_store %arg6[%c128, %c0_30], %27 {strides = array<i32>} : memref<448x8xf32, #tpu.memory_space<vmem>>, vector<16x8xf32>,
    %cst_31 = arith.constant 0.000000e+00 : f32
    %29 = vector.broadcast %cst_31 : f32 to vector<8x8xf32>
    %c168 = arith.constant 168 : index
    %c0_32 = arith.constant 0 : index
    %30 = vector.load %arg6[%c168, %c0_32] : memref<448x8xf32, #tpu.memory_space<vmem>>, vector<8x8xf32>
    tpu.vector_store %arg6[%c168, %c0_32], %29 {strides = array<i32>} : memref<448x8xf32, #tpu.memory_space<vmem>>, vector<8x8xf32>,
    %c0_33 = arith.constant 0 : index
    %c80_34 = arith.constant 80 : index
    %c0_35 = arith.constant 0 : index
    %31 = vector.load %arg1[%c0_33, %c80_34, %c0_35] : memref<1x256x8xf32, #tpu.memory_space<vmem>>, vector<1x16x8xf32>
    %32 = vector.shape_cast %31 : vector<1x16x8xf32> to vector<16x8xf32>
    %c152 = arith.constant 152 : index
    %c0_36 = arith.constant 0 : index
    %33 = vector.load %arg6[%c152, %c0_36] : memref<448x8xf32, #tpu.memory_space<vmem>>, vector<16x8xf32>
    tpu.vector_store %arg6[%c152, %c0_36], %32 {strides = array<i32>} : memref<448x8xf32, #tpu.memory_space<vmem>>, vector<16x8xf32>,
    %cst_37 = arith.constant 0.000000e+00 : f32
    %34 = vector.broadcast %cst_37 : f32 to vector<8x8xf32>
    %c192 = arith.constant 192 : index
    %c0_38 = arith.constant 0 : index
    %35 = vector.load %arg6[%c192, %c0_38] : memref<448x8xf32, #tpu.memory_space<vmem>>, vector<8x8xf32>
    tpu.vector_store %arg6[%c192, %c0_38], %34 {strides = array<i32>} : memref<448x8xf32, #tpu.memory_space<vmem>>, vector<8x8xf32>,
    %c0_39 = arith.constant 0 : index
    %c96_40 = arith.constant 96 : index
    %c0_41 = arith.constant 0 : index
    %36 = vector.load %arg1[%c0_39, %c96_40, %c0_41] : memref<1x256x8xf32, #tpu.memory_space<vmem>>, vector<1x16x8xf32>
    %37 = vector.shape_cast %36 : vector<1x16x8xf32> to vector<16x8xf32>
    %c176 = arith.constant 176 : index
    %c0_42 = arith.constant 0 : index
    %38 = vector.load %arg6[%c176, %c0_42] : memref<448x8xf32, #tpu.memory_space<vmem>>, vector<16x8xf32>
    tpu.vector_store %arg6[%c176, %c0_42], %37 {strides = array<i32>} : memref<448x8xf32, #tpu.memory_space<vmem>>, vector<16x8xf32>,
    %cst_43 = arith.constant 0.000000e+00 : f32
    %39 = vector.broadcast %cst_43 : f32 to vector<8x8xf32>
    %c216 = arith.constant 216 : index
    %c0_44 = arith.constant 0 : index
    %40 = vector.load %arg6[%c216, %c0_44] : memref<448x8xf32, #tpu.memory_space<vmem>>, vector<8x8xf32>
    tpu.vector_store %arg6[%c216, %c0_44], %39 {strides = array<i32>} : memref<448x8xf32, #tpu.memory_space<vmem>>, vector<8x8xf32>,
    %c0_45 = arith.constant 0 : index
    %c112 = arith.constant 112 : index
    %c0_46 = arith.constant 0 : index
    %41 = vector.load %arg1[%c0_45, %c112, %c0_46] : memref<1x256x8xf32, #tpu.memory_space<vmem>>, vector<1x16x8xf32>
    %42 = vector.shape_cast %41 : vector<1x16x8xf32> to vector<16x8xf32>
    %c200 = arith.constant 200 : index
    %c0_47 = arith.constant 0 : index
    %43 = vector.load %arg6[%c200, %c0_47] : memref<448x8xf32, #tpu.memory_space<vmem>>, vector<16x8xf32>
    tpu.vector_store %arg6[%c200, %c0_47], %42 {strides = array<i32>} : memref<448x8xf32, #tpu.memory_space<vmem>>, vector<16x8xf32>,
    %cst_48 = arith.constant 0.000000e+00 : f32
    %44 = vector.broadcast %cst_48 : f32 to vector<8x8xf32>
    %c240 = arith.constant 240 : index
    %c0_49 = arith.constant 0 : index
    %45 = vector.load %arg6[%c240, %c0_49] : memref<448x8xf32, #tpu.memory_space<vmem>>, vector<8x8xf32>
    tpu.vector_store %arg6[%c240, %c0_49], %44 {strides = array<i32>} : memref<448x8xf32, #tpu.memory_space<vmem>>, vector<8x8xf32>,
    %c0_50 = arith.constant 0 : index
    %c128_51 = arith.constant 128 : index
    %c0_52 = arith.constant 0 : index
    %46 = vector.load %arg1[%c0_50, %c128_51, %c0_52] : memref<1x256x8xf32, #tpu.memory_space<vmem>>, vector<1x16x8xf32>
    %47 = vector.shape_cast %46 : vector<1x16x8xf32> to vector<16x8xf32>
    %c224 = arith.constant 224 : index
    %c0_53 = arith.constant 0 : index
    %48 = vector.load %arg6[%c224, %c0_53] : memref<448x8xf32, #tpu.memory_space<vmem>>, vector<16x8xf32>
    tpu.vector_store %arg6[%c224, %c0_53], %47 {strides = array<i32>} : memref<448x8xf32, #tpu.memory_space<vmem>>, vector<16x8xf32>,
    %cst_54 = arith.constant 0.000000e+00 : f32
    %49 = vector.broadcast %cst_54 : f32 to vector<8x8xf32>
    %c264 = arith.constant 264 : index
    %c0_55 = arith.constant 0 : index
    %50 = vector.load %arg6[%c264, %c0_55] : memref<448x8xf32, #tpu.memory_space<vmem>>, vector<8x8xf32>
    tpu.vector_store %arg6[%c264, %c0_55], %49 {strides = array<i32>} : memref<448x8xf32, #tpu.memory_space<vmem>>, vector<8x8xf32>,
    %c0_56 = arith.constant 0 : index
    %c144_57 = arith.constant 144 : index
    %c0_58 = arith.constant 0 : index
    %51 = vector.load %arg1[%c0_56, %c144_57, %c0_58] : memref<1x256x8xf32, #tpu.memory_space<vmem>>, vector<1x16x8xf32>
    %52 = vector.shape_cast %51 : vector<1x16x8xf32> to vector<16x8xf32>
    %c248 = arith.constant 248 : index
    %c0_59 = arith.constant 0 : index
    %53 = vector.load %arg6[%c248, %c0_59] : memref<448x8xf32, #tpu.memory_space<vmem>>, vector<16x8xf32>
    tpu.vector_store %arg6[%c248, %c0_59], %52 {strides = array<i32>} : memref<448x8xf32, #tpu.memory_space<vmem>>, vector<16x8xf32>,
    %cst_60 = arith.constant 0.000000e+00 : f32
    %54 = vector.broadcast %cst_60 : f32 to vector<8x8xf32>
    %c288 = arith.constant 288 : index
    %c0_61 = arith.constant 0 : index
    %55 = vector.load %arg6[%c288, %c0_61] : memref<448x8xf32, #tpu.memory_space<vmem>>, vector<8x8xf32>
    tpu.vector_store %arg6[%c288, %c0_61], %54 {strides = array<i32>} : memref<448x8xf32, #tpu.memory_space<vmem>>, vector<8x8xf32>,
    %c0_62 = arith.constant 0 : index
    %c160 = arith.constant 160 : index
    %c0_63 = arith.constant 0 : index
    %56 = vector.load %arg1[%c0_62, %c160, %c0_63] : memref<1x256x8xf32, #tpu.memory_space<vmem>>, vector<1x16x8xf32>
    %57 = vector.shape_cast %56 : vector<1x16x8xf32> to vector<16x8xf32>
    %c272 = arith.constant 272 : index
    %c0_64 = arith.constant 0 : index
    %58 = vector.load %arg6[%c272, %c0_64] : memref<448x8xf32, #tpu.memory_space<vmem>>, vector<16x8xf32>
    tpu.vector_store %arg6[%c272, %c0_64], %57 {strides = array<i32>} : memref<448x8xf32, #tpu.memory_space<vmem>>, vector<16x8xf32>,
    %cst_65 = arith.constant 0.000000e+00 : f32
    %59 = vector.broadcast %cst_65 : f32 to vector<8x8xf32>
    %c312 = arith.constant 312 : index
    %c0_66 = arith.constant 0 : index
    %60 = vector.load %arg6[%c312, %c0_66] : memref<448x8xf32, #tpu.memory_space<vmem>>, vector<8x8xf32>
    tpu.vector_store %arg6[%c312, %c0_66], %59 {strides = array<i32>} : memref<448x8xf32, #tpu.memory_space<vmem>>, vector<8x8xf32>,
    %c0_67 = arith.constant 0 : index
    %c176_68 = arith.constant 176 : index
    %c0_69 = arith.constant 0 : index
    %61 = vector.load %arg1[%c0_67, %c176_68, %c0_69] : memref<1x256x8xf32, #tpu.memory_space<vmem>>, vector<1x16x8xf32>
    %62 = vector.shape_cast %61 : vector<1x16x8xf32> to vector<16x8xf32>
    %c296 = arith.constant 296 : index
    %c0_70 = arith.constant 0 : index
    %63 = vector.load %arg6[%c296, %c0_70] : memref<448x8xf32, #tpu.memory_space<vmem>>, vector<16x8xf32>
    tpu.vector_store %arg6[%c296, %c0_70], %62 {strides = array<i32>} : memref<448x8xf32, #tpu.memory_space<vmem>>, vector<16x8xf32>,
    %cst_71 = arith.constant 0.000000e+00 : f32
    %64 = vector.broadcast %cst_71 : f32 to vector<8x8xf32>
    %c336 = arith.constant 336 : index
    %c0_72 = arith.constant 0 : index
    %65 = vector.load %arg6[%c336, %c0_72] : memref<448x8xf32, #tpu.memory_space<vmem>>, vector<8x8xf32>
    tpu.vector_store %arg6[%c336, %c0_72], %64 {strides = array<i32>} : memref<448x8xf32, #tpu.memory_space<vmem>>, vector<8x8xf32>,
    %c0_73 = arith.constant 0 : index
    %c192_74 = arith.constant 192 : index
    %c0_75 = arith.constant 0 : index
    %66 = vector.load %arg1[%c0_73, %c192_74, %c0_75] : memref<1x256x8xf32, #tpu.memory_space<vmem>>, vector<1x16x8xf32>
    %67 = vector.shape_cast %66 : vector<1x16x8xf32> to vector<16x8xf32>
    %c320 = arith.constant 320 : index
    %c0_76 = arith.constant 0 : index
    %68 = vector.load %arg6[%c320, %c0_76] : memref<448x8xf32, #tpu.memory_space<vmem>>, vector<16x8xf32>
    tpu.vector_store %arg6[%c320, %c0_76], %67 {strides = array<i32>} : memref<448x8xf32, #tpu.memory_space<vmem>>, vector<16x8xf32>,
    %cst_77 = arith.constant 0.000000e+00 : f32
    %69 = vector.broadcast %cst_77 : f32 to vector<8x8xf32>
    %c360 = arith.constant 360 : index
    %c0_78 = arith.constant 0 : index
    %70 = vector.load %arg6[%c360, %c0_78] : memref<448x8xf32, #tpu.memory_space<vmem>>, vector<8x8xf32>
    tpu.vector_store %arg6[%c360, %c0_78], %69 {strides = array<i32>} : memref<448x8xf32, #tpu.memory_space<vmem>>, vector<8x8xf32>,
    %c0_79 = arith.constant 0 : index
    %c208 = arith.constant 208 : index
    %c0_80 = arith.constant 0 : index
    %71 = vector.load %arg1[%c0_79, %c208, %c0_80] : memref<1x256x8xf32, #tpu.memory_space<vmem>>, vector<1x16x8xf32>
    %72 = vector.shape_cast %71 : vector<1x16x8xf32> to vector<16x8xf32>
    %c344 = arith.constant 344 : index
    %c0_81 = arith.constant 0 : index
    %73 = vector.load %arg6[%c344, %c0_81] : memref<448x8xf32, #tpu.memory_space<vmem>>, vector<16x8xf32>
    tpu.vector_store %arg6[%c344, %c0_81], %72 {strides = array<i32>} : memref<448x8xf32, #tpu.memory_space<vmem>>, vector<16x8xf32>,
    %cst_82 = arith.constant 0.000000e+00 : f32
    %74 = vector.broadcast %cst_82 : f32 to vector<8x8xf32>
    %c384 = arith.constant 384 : index
    %c0_83 = arith.constant 0 : index
    %75 = vector.load %arg6[%c384, %c0_83] : memref<448x8xf32, #tpu.memory_space<vmem>>, vector<8x8xf32>
    tpu.vector_store %arg6[%c384, %c0_83], %74 {strides = array<i32>} : memref<448x8xf32, #tpu.memory_space<vmem>>, vector<8x8xf32>,
    %c0_84 = arith.constant 0 : index
    %c224_85 = arith.constant 224 : index
    %c0_86 = arith.constant 0 : index
    %76 = vector.load %arg1[%c0_84, %c224_85, %c0_86] : memref<1x256x8xf32, #tpu.memory_space<vmem>>, vector<1x16x8xf32>
    %77 = vector.shape_cast %76 : vector<1x16x8xf32> to vector<16x8xf32>
    %c368 = arith.constant 368 : index
    %c0_87 = arith.constant 0 : index
    %78 = vector.load %arg6[%c368, %c0_87] : memref<448x8xf32, #tpu.memory_space<vmem>>, vector<16x8xf32>
    tpu.vector_store %arg6[%c368, %c0_87], %77 {strides = array<i32>} : memref<448x8xf32, #tpu.memory_space<vmem>>, vector<16x8xf32>,
    %cst_88 = arith.constant 0.000000e+00 : f32
    %79 = vector.broadcast %cst_88 : f32 to vector<8x8xf32>
    %c408 = arith.constant 408 : index
    %c0_89 = arith.constant 0 : index
    %80 = vector.load %arg6[%c408, %c0_89] : memref<448x8xf32, #tpu.memory_space<vmem>>, vector<8x8xf32>
    tpu.vector_store %arg6[%c408, %c0_89], %79 {strides = array<i32>} : memref<448x8xf32, #tpu.memory_space<vmem>>, vector<8x8xf32>,
    %c0_90 = arith.constant 0 : index
    %c240_91 = arith.constant 240 : index
    %c0_92 = arith.constant 0 : index
    %81 = vector.load %arg1[%c0_90, %c240_91, %c0_92] : memref<1x256x8xf32, #tpu.memory_space<vmem>>, vector<1x16x8xf32>
    %82 = vector.shape_cast %81 : vector<1x16x8xf32> to vector<16x8xf32>
    %c392 = arith.constant 392 : index
    %c0_93 = arith.constant 0 : index
    %83 = vector.load %arg6[%c392, %c0_93] : memref<448x8xf32, #tpu.memory_space<vmem>>, vector<16x8xf32>
    tpu.vector_store %arg6[%c392, %c0_93], %82 {strides = array<i32>} : memref<448x8xf32, #tpu.memory_space<vmem>>, vector<16x8xf32>,
    %c0_94 = arith.constant 0 : index
    %c0_95 = arith.constant 0 : index
    %84 = vector.load %arg3[%c0_94, %c0_95] : memref<384x1xf32, #tpu.memory_space<vmem>>, vector<384x1xf32>
    %c7 = arith.constant 7 : index
    %c0_96 = arith.constant 0 : index
    %85 = vector.load %arg6[%c7, %c0_96] : memref<448x8xf32, #tpu.memory_space<vmem>>, vector<384x8xf32>
    %86 = arith.truncf %85 : vector<384x8xf32> to vector<384x8xbf16>
    %c0_97 = arith.constant 0 : index
    %c0_98 = arith.constant 0 : index
    %c0_99 = arith.constant 0 : index
    %87 = vector.load %arg2[%c0_97, %c0_98, %c0_99] : memref<9x8x128xbf16, #tpu.memory_space<vmem>>, vector<1x8x128xbf16>
    %88 = vector.shape_cast %87 : vector<1x8x128xbf16> to vector<8x128xbf16>
    %cst_100 = arith.constant dense<0.000000e+00> : vector<384x128xf32>
    %89 = tpu.matmul %86, %88, %cst_100 {dimension_numbers = #tpu.dot_dimension_numbers<[1], [0], [0], [1], [0, 0, 1, 1], [], []>} : vector<384x8xbf16>, vector<8x128xbf16>, vector<384x128xf32> -> vector<384x128xf32>
    %c8 = arith.constant 8 : index
    %c0_101 = arith.constant 0 : index
    %90 = vector.load %arg6[%c8, %c0_101] : memref<448x8xf32, #tpu.memory_space<vmem>>, vector<384x8xf32>
    %91 = arith.truncf %90 : vector<384x8xf32> to vector<384x8xbf16>
    %c1 = arith.constant 1 : index
    %c0_102 = arith.constant 0 : index
    %c0_103 = arith.constant 0 : index
    %92 = vector.load %arg2[%c1, %c0_102, %c0_103] : memref<9x8x128xbf16, #tpu.memory_space<vmem>>, vector<1x8x128xbf16>
    %93 = vector.shape_cast %92 : vector<1x8x128xbf16> to vector<8x128xbf16>
    %cst_104 = arith.constant dense<0.000000e+00> : vector<384x128xf32>
    %94 = tpu.matmul %91, %93, %cst_104 {dimension_numbers = #tpu.dot_dimension_numbers<[1], [0], [0], [1], [0, 0, 1, 1], [], []>} : vector<384x8xbf16>, vector<8x128xbf16>, vector<384x128xf32> -> vector<384x128xf32>
    %95 = arith.addf %89, %94 : vector<384x128xf32>
    %c9 = arith.constant 9 : index
    %c0_105 = arith.constant 0 : index
    %96 = vector.load %arg6[%c9, %c0_105] : memref<448x8xf32, #tpu.memory_space<vmem>>, vector<384x8xf32>
    %97 = arith.truncf %96 : vector<384x8xf32> to vector<384x8xbf16>
    %c2 = arith.constant 2 : index
    %c0_106 = arith.constant 0 : index
    %c0_107 = arith.constant 0 : index
    %98 = vector.load %arg2[%c2, %c0_106, %c0_107] : memref<9x8x128xbf16, #tpu.memory_space<vmem>>, vector<1x8x128xbf16>
    %99 = vector.shape_cast %98 : vector<1x8x128xbf16> to vector<8x128xbf16>
    %cst_108 = arith.constant dense<0.000000e+00> : vector<384x128xf32>
    %100 = tpu.matmul %97, %99, %cst_108 {dimension_numbers = #tpu.dot_dimension_numbers<[1], [0], [0], [1], [0, 0, 1, 1], [], []>} : vector<384x8xbf16>, vector<8x128xbf16>, vector<384x128xf32> -> vector<384x128xf32>
    %101 = arith.addf %95, %100 : vector<384x128xf32>
    %c31 = arith.constant 31 : index
    %c0_109 = arith.constant 0 : index
    %102 = vector.load %arg6[%c31, %c0_109] : memref<448x8xf32, #tpu.memory_space<vmem>>, vector<384x8xf32>
    %103 = arith.truncf %102 : vector<384x8xf32> to vector<384x8xbf16>
    %c3 = arith.constant 3 : index
    %c0_110 = arith.constant 0 : index
    %c0_111 = arith.constant 0 : index
    %104 = vector.load %arg2[%c3, %c0_110, %c0_111] : memref<9x8x128xbf16, #tpu.memory_space<vmem>>, vector<1x8x128xbf16>
    %105 = vector.shape_cast %104 : vector<1x8x128xbf16> to vector<8x128xbf16>
    %cst_112 = arith.constant dense<0.000000e+00> : vector<384x128xf32>
    %106 = tpu.matmul %103, %105, %cst_112 {dimension_numbers = #tpu.dot_dimension_numbers<[1], [0], [0], [1], [0, 0, 1, 1], [], []>} : vector<384x8xbf16>, vector<8x128xbf16>, vector<384x128xf32> -> vector<384x128xf32>
    %107 = arith.addf %101, %106 : vector<384x128xf32>
    %c32_113 = arith.constant 32 : index
    %c0_114 = arith.constant 0 : index
    %108 = vector.load %arg6[%c32_113, %c0_114] : memref<448x8xf32, #tpu.memory_space<vmem>>, vector<384x8xf32>
    %109 = arith.truncf %108 : vector<384x8xf32> to vector<384x8xbf16>
    %c4 = arith.constant 4 : index
    %c0_115 = arith.constant 0 : index
    %c0_116 = arith.constant 0 : index
    %110 = vector.load %arg2[%c4, %c0_115, %c0_116] : memref<9x8x128xbf16, #tpu.memory_space<vmem>>, vector<1x8x128xbf16>
    %111 = vector.shape_cast %110 : vector<1x8x128xbf16> to vector<8x128xbf16>
    %cst_117 = arith.constant dense<0.000000e+00> : vector<384x128xf32>
    %112 = tpu.matmul %109, %111, %cst_117 {dimension_numbers = #tpu.dot_dimension_numbers<[1], [0], [0], [1], [0, 0, 1, 1], [], []>} : vector<384x8xbf16>, vector<8x128xbf16>, vector<384x128xf32> -> vector<384x128xf32>
    %113 = arith.addf %107, %112 : vector<384x128xf32>
    %c33 = arith.constant 33 : index
    %c0_118 = arith.constant 0 : index
    %114 = vector.load %arg6[%c33, %c0_118] : memref<448x8xf32, #tpu.memory_space<vmem>>, vector<384x8xf32>
    %115 = arith.truncf %114 : vector<384x8xf32> to vector<384x8xbf16>
    %c5 = arith.constant 5 : index
    %c0_119 = arith.constant 0 : index
    %c0_120 = arith.constant 0 : index
    %116 = vector.load %arg2[%c5, %c0_119, %c0_120] : memref<9x8x128xbf16, #tpu.memory_space<vmem>>, vector<1x8x128xbf16>
    %117 = vector.shape_cast %116 : vector<1x8x128xbf16> to vector<8x128xbf16>
    %cst_121 = arith.constant dense<0.000000e+00> : vector<384x128xf32>
    %118 = tpu.matmul %115, %117, %cst_121 {dimension_numbers = #tpu.dot_dimension_numbers<[1], [0], [0], [1], [0, 0, 1, 1], [], []>} : vector<384x8xbf16>, vector<8x128xbf16>, vector<384x128xf32> -> vector<384x128xf32>
    %119 = arith.addf %113, %118 : vector<384x128xf32>
    %c55 = arith.constant 55 : index
    %c0_122 = arith.constant 0 : index
    %120 = vector.load %arg6[%c55, %c0_122] : memref<448x8xf32, #tpu.memory_space<vmem>>, vector<384x8xf32>
    %121 = arith.truncf %120 : vector<384x8xf32> to vector<384x8xbf16>
    %c6 = arith.constant 6 : index
    %c0_123 = arith.constant 0 : index
    %c0_124 = arith.constant 0 : index
    %122 = vector.load %arg2[%c6, %c0_123, %c0_124] : memref<9x8x128xbf16, #tpu.memory_space<vmem>>, vector<1x8x128xbf16>
    %123 = vector.shape_cast %122 : vector<1x8x128xbf16> to vector<8x128xbf16>
    %cst_125 = arith.constant dense<0.000000e+00> : vector<384x128xf32>
    %124 = tpu.matmul %121, %123, %cst_125 {dimension_numbers = #tpu.dot_dimension_numbers<[1], [0], [0], [1], [0, 0, 1, 1], [], []>} : vector<384x8xbf16>, vector<8x128xbf16>, vector<384x128xf32> -> vector<384x128xf32>
    %125 = arith.addf %119, %124 : vector<384x128xf32>
    %c56_126 = arith.constant 56 : index
    %c0_127 = arith.constant 0 : index
    %126 = vector.load %arg6[%c56_126, %c0_127] : memref<448x8xf32, #tpu.memory_space<vmem>>, vector<384x8xf32>
    %127 = arith.truncf %126 : vector<384x8xf32> to vector<384x8xbf16>
    %c7_128 = arith.constant 7 : index
    %c0_129 = arith.constant 0 : index
    %c0_130 = arith.constant 0 : index
    %128 = vector.load %arg2[%c7_128, %c0_129, %c0_130] : memref<9x8x128xbf16, #tpu.memory_space<vmem>>, vector<1x8x128xbf16>
    %129 = vector.shape_cast %128 : vector<1x8x128xbf16> to vector<8x128xbf16>
    %cst_131 = arith.constant dense<0.000000e+00> : vector<384x128xf32>
    %130 = tpu.matmul %127, %129, %cst_131 {dimension_numbers = #tpu.dot_dimension_numbers<[1], [0], [0], [1], [0, 0, 1, 1], [], []>} : vector<384x8xbf16>, vector<8x128xbf16>, vector<384x128xf32> -> vector<384x128xf32>
    %131 = arith.addf %125, %130 : vector<384x128xf32>
    %c57 = arith.constant 57 : index
    %c0_132 = arith.constant 0 : index
    %132 = vector.load %arg6[%c57, %c0_132] : memref<448x8xf32, #tpu.memory_space<vmem>>, vector<384x8xf32>
    %133 = arith.truncf %132 : vector<384x8xf32> to vector<384x8xbf16>
    %c8_133 = arith.constant 8 : index
    %c0_134 = arith.constant 0 : index
    %c0_135 = arith.constant 0 : index
    %134 = vector.load %arg2[%c8_133, %c0_134, %c0_135] : memref<9x8x128xbf16, #tpu.memory_space<vmem>>, vector<1x8x128xbf16>
    %135 = vector.shape_cast %134 : vector<1x8x128xbf16> to vector<8x128xbf16>
    %cst_136 = arith.constant dense<0.000000e+00> : vector<384x128xf32>
    %136 = tpu.matmul %133, %135, %cst_136 {dimension_numbers = #tpu.dot_dimension_numbers<[1], [0], [0], [1], [0, 0, 1, 1], [], []>} : vector<384x8xbf16>, vector<8x128xbf16>, vector<384x128xf32> -> vector<384x128xf32>
    %137 = arith.addf %131, %136 : vector<384x128xf32>
    %138 = vector.broadcast %84 : vector<384x1xf32> to vector<384x128xf32>
    %139 = arith.mulf %137, %138 : vector<384x128xf32>
    %cst_137 = arith.constant dense<0.000000e+00> : vector<128xf32>
    %140 = vector.multi_reduction <add>, %139, %cst_137 [0] : vector<384x128xf32> to vector<128xf32>
    %141 = vector.shape_cast %140 : vector<128xf32> to vector<1x128xf32>
    %142 = arith.mulf %137, %139 : vector<384x128xf32>
    %cst_138 = arith.constant dense<0.000000e+00> : vector<128xf32>
    %143 = vector.multi_reduction <add>, %142, %cst_138 [0] : vector<384x128xf32> to vector<128xf32>
    %144 = vector.shape_cast %143 : vector<128xf32> to vector<1x128xf32>
    %145 = arith.truncf %137 : vector<384x128xf32> to vector<384x128xbf16>
    %c0_139 = arith.constant 0 : index
    %c0_140 = arith.constant 0 : index
    %c0_141 = arith.constant 0 : index
    %146 = vector.load %arg4[%c0_139, %c0_140, %c0_141] : memref<1x384x128xbf16, #tpu.memory_space<vmem>>, vector<1x384x128xbf16>
    %147 = vector.shape_cast %146 : vector<1x384x128xbf16> to vector<384x128xbf16>
    %148 = vector.shape_cast %145 : vector<384x128xbf16> to vector<1x384x128xbf16>
    tpu.vector_store %arg4[%c0_139, %c0_140, %c0_141], %148 {strides = array<i32>} : memref<1x384x128xbf16, #tpu.memory_space<vmem>>, vector<1x384x128xbf16>,
    %c0_142 = arith.constant 0 : index
    %c0_143 = arith.constant 0 : index
    %c0_144 = arith.constant 0 : index
    %149 = vector.load %arg5[%c0_142, %c0_143, %c0_144] : memref<1x2x128xf32, #tpu.memory_space<vmem>>, vector<1x1x128xf32>
    %150 = vector.shape_cast %149 : vector<1x1x128xf32> to vector<1x128xf32>
    %151 = vector.shape_cast %141 : vector<1x128xf32> to vector<1x1x128xf32>
    tpu.vector_store %arg5[%c0_142, %c0_143, %c0_144], %151 {strides = array<i32>} : memref<1x2x128xf32, #tpu.memory_space<vmem>>, vector<1x1x128xf32>,
    %c0_145 = arith.constant 0 : index
    %c1_146 = arith.constant 1 : index
    %c0_147 = arith.constant 0 : index
    %152 = vector.load %arg5[%c0_145, %c1_146, %c0_147] : memref<1x2x128xf32, #tpu.memory_space<vmem>>, vector<1x1x128xf32>
    %153 = vector.shape_cast %152 : vector<1x1x128xf32> to vector<1x128xf32>
    %154 = vector.shape_cast %144 : vector<1x128xf32> to vector<1x1x128xf32>
    tpu.vector_store %arg5[%c0_145, %c1_146, %c0_147], %154 {strides = array<i32>} : memref<1x2x128xf32, #tpu.memory_space<vmem>>, vector<1x1x128xf32>,
    return
  }
  func.func @transform_0(%arg0: i32) -> (i32, i32, i32) {
    %c0_i32 = arith.constant 0 : i32
    %c0_i32_0 = arith.constant 0 : i32
    %c0_i32_1 = arith.constant 0 : i32
    return %arg0, %c0_i32, %c0_i32_0 : i32, i32, i32
  }
  func.func @transform_1(%arg0: i32) -> (i32, i32, i32) {
    %c0_i32 = arith.constant 0 : i32
    %c0_i32_0 = arith.constant 0 : i32
    %c0_i32_1 = arith.constant 0 : i32
    %c0_i32_2 = arith.constant 0 : i32
    return %c0_i32, %c0_i32_0, %c0_i32_1 : i32, i32, i32
  }
  func.func @transform_2(%arg0: i32) -> (i32, i32) {
    %c0_i32 = arith.constant 0 : i32
    %c0_i32_0 = arith.constant 0 : i32
    %c0_i32_1 = arith.constant 0 : i32
    return %c0_i32, %c0_i32_0 : i32, i32
  }
  func.func @transform_3(%arg0: i32) -> (i32, i32, i32) {
    %c0_i32 = arith.constant 0 : i32
    %c0_i32_0 = arith.constant 0 : i32
    %c0_i32_1 = arith.constant 0 : i32
    return %arg0, %c0_i32, %c0_i32_0 : i32, i32, i32
  }
  func.func @transform_4(%arg0: i32) -> (i32, i32, i32) {
    %c0_i32 = arith.constant 0 : i32
    %c0_i32_0 = arith.constant 0 : i32
    %c0_i32_1 = arith.constant 0 : i32
    return %arg0, %c0_i32, %c0_i32_0 : i32, i32, i32
  }
}

module attributes {stable_mosaic.version = 11 : i64} {
  func.func @_conv2_kernel(%arg0: i32, %arg1: memref<1x384x128xbf16, #tpu.memory_space<vmem>>, %arg2: memref<2x2x128xf32, #tpu.memory_space<vmem>>, %arg3: memref<1x128xf32, #tpu.memory_space<vmem>>, %arg4: memref<1x128xf32, #tpu.memory_space<vmem>>, %arg5: memref<9x8x128xbf16, #tpu.memory_space<vmem>>, %arg6: memref<384x1xf32, #tpu.memory_space<vmem>>, %arg7: memref<1x384x128xbf16, #tpu.memory_space<vmem>>, %arg8: memref<1x2x128xf32, #tpu.memory_space<vmem>>, %arg9: memref<448x8xf32, #tpu.memory_space<vmem>>) attributes {dimension_semantics = [#tpu.dimension_semantics<parallel>], iteration_bounds = array<i64: 2>, scalar_prefetch = 0 : i64, scratch_operands = 1 : i64, tpu.core_type = #tpu.core_type<tc>, window_params = [{transform_indices = @transform_0, window_bounds = array<i64: 1, 384, 128>}, {pipeline_mode = #tpu.pipeline_mode<synchronous>, transform_indices = @transform_1, window_bounds = array<i64: 2, 2, 128>}, {pipeline_mode = #tpu.pipeline_mode<synchronous>, transform_indices = @transform_2, window_bounds = array<i64: 1, 128>}, {pipeline_mode = #tpu.pipeline_mode<synchronous>, transform_indices = @transform_3, window_bounds = array<i64: 1, 128>}, {pipeline_mode = #tpu.pipeline_mode<synchronous>, transform_indices = @transform_4, window_bounds = array<i64: 9, 8, 128>}, {pipeline_mode = #tpu.pipeline_mode<synchronous>, transform_indices = @transform_5, window_bounds = array<i64: 384, 1>}, {transform_indices = @transform_6, window_bounds = array<i64: 1, 384, 128>}, {transform_indices = @transform_7, window_bounds = array<i64: 1, 2, 128>}]} {
    %c0 = arith.constant 0 : index
    %c0_0 = arith.constant 0 : index
    %0 = vector.load %arg6[%c0, %c0_0] : memref<384x1xf32, #tpu.memory_space<vmem>>, vector<384x1xf32>
    %c0_1 = arith.constant 0 : index
    %c0_2 = arith.constant 0 : index
    %c0_3 = arith.constant 0 : index
    %1 = vector.load %arg2[%c0_1, %c0_2, %c0_3] : memref<2x2x128xf32, #tpu.memory_space<vmem>>, vector<2x2x128xf32>
    %c0_4 = arith.constant 0 : index
    %c0_5 = arith.constant 0 : index
    %2 = vector.load %arg3[%c0_4, %c0_5] : memref<1x128xf32, #tpu.memory_space<vmem>>, vector<1x128xf32>
    %c0_6 = arith.constant 0 : index
    %c0_7 = arith.constant 0 : index
    %3 = vector.load %arg4[%c0_6, %c0_7] : memref<1x128xf32, #tpu.memory_space<vmem>>, vector<1x128xf32>
    %cst = arith.constant dense<0.000000e+00> : vector<2x128xf32>
    %4 = vector.multi_reduction <add>, %1, %cst [0] : vector<2x2x128xf32> to vector<2x128xf32>
    %5 = vector.extract_strided_slice %4 {offsets = [0, 0], sizes = [1, 128], strides = [1, 1]} : vector<2x128xf32> to vector<1x128xf32>
    %cst_8 = arith.constant 5.120000e+02 : f32
    %6 = vector.broadcast %cst_8 : f32 to vector<1x128xf32>
    %7 = arith.divf %5, %6 : vector<1x128xf32>
    %8 = vector.extract_strided_slice %4 {offsets = [1, 0], sizes = [1, 128], strides = [1, 1]} : vector<2x128xf32> to vector<1x128xf32>
    %cst_9 = arith.constant 5.120000e+02 : f32
    %9 = vector.broadcast %cst_9 : f32 to vector<1x128xf32>
    %10 = arith.divf %8, %9 : vector<1x128xf32>
    %11 = arith.mulf %7, %7 : vector<1x128xf32>
    %12 = arith.subf %10, %11 : vector<1x128xf32>
    %cst_10 = arith.constant 0.000000e+00 : f32
    %13 = vector.broadcast %cst_10 : f32 to vector<1x128xf32>
    %14 = arith.maximumf %12, %13 : vector<1x128xf32>
    %cst_11 = arith.constant 9.99999974E-6 : f32
    %15 = vector.broadcast %cst_11 : f32 to vector<1x128xf32>
    %16 = arith.addf %14, %15 : vector<1x128xf32>
    %17 = math.rsqrt %16 : vector<1x128xf32>
    %18 = arith.mulf %2, %17 : vector<1x128xf32>
    %19 = arith.mulf %7, %18 : vector<1x128xf32>
    %20 = arith.subf %3, %19 : vector<1x128xf32>
    %c0_12 = arith.constant 0 : index
    %c0_13 = arith.constant 0 : index
    %c0_14 = arith.constant 0 : index
    %21 = vector.load %arg1[%c0_12, %c0_13, %c0_14] : memref<1x384x128xbf16, #tpu.memory_space<vmem>>, vector<1x384x128xbf16>
    %22 = vector.shape_cast %21 : vector<1x384x128xbf16> to vector<384x128xbf16>
    %23 = arith.extf %22 : vector<384x128xbf16> to vector<384x128xf32>
    %24 = vector.broadcast %18 : vector<1x128xf32> to vector<384x128xf32>
    %25 = arith.mulf %23, %24 : vector<384x128xf32>
    %26 = vector.broadcast %20 : vector<1x128xf32> to vector<384x128xf32>
    %27 = arith.addf %25, %26 : vector<384x128xf32>
    %cst_15 = arith.constant 0.000000e+00 : f32
    %28 = vector.broadcast %cst_15 : f32 to vector<384x128xf32>
    %29 = arith.maximumf %27, %28 : vector<384x128xf32>
    %30 = vector.broadcast %0 : vector<384x1xf32> to vector<384x128xf32>
    %31 = arith.mulf %29, %30 : vector<384x128xf32>
    %cst_16 = arith.constant 0.000000e+00 : f32
    %32 = vector.broadcast %cst_16 : f32 to vector<32x8xf32>
    %c0_17 = arith.constant 0 : index
    %c0_18 = arith.constant 0 : index
    %33 = vector.load %arg9[%c0_17, %c0_18] : memref<448x8xf32, #tpu.memory_space<vmem>>, vector<32x8xf32>
    tpu.vector_store %arg9[%c0_17, %c0_18], %32 {strides = array<i32>} : memref<448x8xf32, #tpu.memory_space<vmem>>, vector<32x8xf32>,
    %cst_19 = arith.constant 0.000000e+00 : f32
    %34 = vector.broadcast %cst_19 : f32 to vector<32x8xf32>
    %c416 = arith.constant 416 : index
    %c0_20 = arith.constant 0 : index
    %35 = vector.load %arg9[%c416, %c0_20] : memref<448x8xf32, #tpu.memory_space<vmem>>, vector<32x8xf32>
    tpu.vector_store %arg9[%c416, %c0_20], %34 {strides = array<i32>} : memref<448x8xf32, #tpu.memory_space<vmem>>, vector<32x8xf32>,
    %36 = vector.extract_strided_slice %31 {offsets = [0, 0], sizes = [384, 8], strides = [1, 1]} : vector<384x128xf32> to vector<384x8xf32>
    %c32 = arith.constant 32 : index
    %c0_21 = arith.constant 0 : index
    %37 = vector.load %arg9[%c32, %c0_21] : memref<448x8xf32, #tpu.memory_space<vmem>>, vector<384x8xf32>
    tpu.vector_store %arg9[%c32, %c0_21], %36 {strides = array<i32>} : memref<448x8xf32, #tpu.memory_space<vmem>>, vector<384x8xf32>,
    %c7 = arith.constant 7 : index
    %c0_22 = arith.constant 0 : index
    %38 = vector.load %arg9[%c7, %c0_22] : memref<448x8xf32, #tpu.memory_space<vmem>>, vector<384x8xf32>
    %39 = arith.truncf %38 : vector<384x8xf32> to vector<384x8xbf16>
    %c0_23 = arith.constant 0 : index
    %c0_24 = arith.constant 0 : index
    %c0_25 = arith.constant 0 : index
    %40 = vector.load %arg5[%c0_23, %c0_24, %c0_25] : memref<9x8x128xbf16, #tpu.memory_space<vmem>>, vector<1x8x128xbf16>
    %41 = vector.shape_cast %40 : vector<1x8x128xbf16> to vector<8x128xbf16>
    %cst_26 = arith.constant dense<0.000000e+00> : vector<384x128xf32>
    %42 = tpu.matmul %39, %41, %cst_26 {dimension_numbers = #tpu.dot_dimension_numbers<[1], [0], [0], [1], [0, 0, 1, 1], [], []>} : vector<384x8xbf16>, vector<8x128xbf16>, vector<384x128xf32> -> vector<384x128xf32>
    %c8 = arith.constant 8 : index
    %c0_27 = arith.constant 0 : index
    %43 = vector.load %arg9[%c8, %c0_27] : memref<448x8xf32, #tpu.memory_space<vmem>>, vector<384x8xf32>
    %44 = arith.truncf %43 : vector<384x8xf32> to vector<384x8xbf16>
    %c1 = arith.constant 1 : index
    %c0_28 = arith.constant 0 : index
    %c0_29 = arith.constant 0 : index
    %45 = vector.load %arg5[%c1, %c0_28, %c0_29] : memref<9x8x128xbf16, #tpu.memory_space<vmem>>, vector<1x8x128xbf16>
    %46 = vector.shape_cast %45 : vector<1x8x128xbf16> to vector<8x128xbf16>
    %cst_30 = arith.constant dense<0.000000e+00> : vector<384x128xf32>
    %47 = tpu.matmul %44, %46, %cst_30 {dimension_numbers = #tpu.dot_dimension_numbers<[1], [0], [0], [1], [0, 0, 1, 1], [], []>} : vector<384x8xbf16>, vector<8x128xbf16>, vector<384x128xf32> -> vector<384x128xf32>
    %48 = arith.addf %42, %47 : vector<384x128xf32>
    %c9 = arith.constant 9 : index
    %c0_31 = arith.constant 0 : index
    %49 = vector.load %arg9[%c9, %c0_31] : memref<448x8xf32, #tpu.memory_space<vmem>>, vector<384x8xf32>
    %50 = arith.truncf %49 : vector<384x8xf32> to vector<384x8xbf16>
    %c2 = arith.constant 2 : index
    %c0_32 = arith.constant 0 : index
    %c0_33 = arith.constant 0 : index
    %51 = vector.load %arg5[%c2, %c0_32, %c0_33] : memref<9x8x128xbf16, #tpu.memory_space<vmem>>, vector<1x8x128xbf16>
    %52 = vector.shape_cast %51 : vector<1x8x128xbf16> to vector<8x128xbf16>
    %cst_34 = arith.constant dense<0.000000e+00> : vector<384x128xf32>
    %53 = tpu.matmul %50, %52, %cst_34 {dimension_numbers = #tpu.dot_dimension_numbers<[1], [0], [0], [1], [0, 0, 1, 1], [], []>} : vector<384x8xbf16>, vector<8x128xbf16>, vector<384x128xf32> -> vector<384x128xf32>
    %54 = arith.addf %48, %53 : vector<384x128xf32>
    %c31 = arith.constant 31 : index
    %c0_35 = arith.constant 0 : index
    %55 = vector.load %arg9[%c31, %c0_35] : memref<448x8xf32, #tpu.memory_space<vmem>>, vector<384x8xf32>
    %56 = arith.truncf %55 : vector<384x8xf32> to vector<384x8xbf16>
    %c3 = arith.constant 3 : index
    %c0_36 = arith.constant 0 : index
    %c0_37 = arith.constant 0 : index
    %57 = vector.load %arg5[%c3, %c0_36, %c0_37] : memref<9x8x128xbf16, #tpu.memory_space<vmem>>, vector<1x8x128xbf16>
    %58 = vector.shape_cast %57 : vector<1x8x128xbf16> to vector<8x128xbf16>
    %cst_38 = arith.constant dense<0.000000e+00> : vector<384x128xf32>
    %59 = tpu.matmul %56, %58, %cst_38 {dimension_numbers = #tpu.dot_dimension_numbers<[1], [0], [0], [1], [0, 0, 1, 1], [], []>} : vector<384x8xbf16>, vector<8x128xbf16>, vector<384x128xf32> -> vector<384x128xf32>
    %60 = arith.addf %54, %59 : vector<384x128xf32>
    %c32_39 = arith.constant 32 : index
    %c0_40 = arith.constant 0 : index
    %61 = vector.load %arg9[%c32_39, %c0_40] : memref<448x8xf32, #tpu.memory_space<vmem>>, vector<384x8xf32>
    %62 = arith.truncf %61 : vector<384x8xf32> to vector<384x8xbf16>
    %c4 = arith.constant 4 : index
    %c0_41 = arith.constant 0 : index
    %c0_42 = arith.constant 0 : index
    %63 = vector.load %arg5[%c4, %c0_41, %c0_42] : memref<9x8x128xbf16, #tpu.memory_space<vmem>>, vector<1x8x128xbf16>
    %64 = vector.shape_cast %63 : vector<1x8x128xbf16> to vector<8x128xbf16>
    %cst_43 = arith.constant dense<0.000000e+00> : vector<384x128xf32>
    %65 = tpu.matmul %62, %64, %cst_43 {dimension_numbers = #tpu.dot_dimension_numbers<[1], [0], [0], [1], [0, 0, 1, 1], [], []>} : vector<384x8xbf16>, vector<8x128xbf16>, vector<384x128xf32> -> vector<384x128xf32>
    %66 = arith.addf %60, %65 : vector<384x128xf32>
    %c33 = arith.constant 33 : index
    %c0_44 = arith.constant 0 : index
    %67 = vector.load %arg9[%c33, %c0_44] : memref<448x8xf32, #tpu.memory_space<vmem>>, vector<384x8xf32>
    %68 = arith.truncf %67 : vector<384x8xf32> to vector<384x8xbf16>
    %c5 = arith.constant 5 : index
    %c0_45 = arith.constant 0 : index
    %c0_46 = arith.constant 0 : index
    %69 = vector.load %arg5[%c5, %c0_45, %c0_46] : memref<9x8x128xbf16, #tpu.memory_space<vmem>>, vector<1x8x128xbf16>
    %70 = vector.shape_cast %69 : vector<1x8x128xbf16> to vector<8x128xbf16>
    %cst_47 = arith.constant dense<0.000000e+00> : vector<384x128xf32>
    %71 = tpu.matmul %68, %70, %cst_47 {dimension_numbers = #tpu.dot_dimension_numbers<[1], [0], [0], [1], [0, 0, 1, 1], [], []>} : vector<384x8xbf16>, vector<8x128xbf16>, vector<384x128xf32> -> vector<384x128xf32>
    %72 = arith.addf %66, %71 : vector<384x128xf32>
    %c55 = arith.constant 55 : index
    %c0_48 = arith.constant 0 : index
    %73 = vector.load %arg9[%c55, %c0_48] : memref<448x8xf32, #tpu.memory_space<vmem>>, vector<384x8xf32>
    %74 = arith.truncf %73 : vector<384x8xf32> to vector<384x8xbf16>
    %c6 = arith.constant 6 : index
    %c0_49 = arith.constant 0 : index
    %c0_50 = arith.constant 0 : index
    %75 = vector.load %arg5[%c6, %c0_49, %c0_50] : memref<9x8x128xbf16, #tpu.memory_space<vmem>>, vector<1x8x128xbf16>
    %76 = vector.shape_cast %75 : vector<1x8x128xbf16> to vector<8x128xbf16>
    %cst_51 = arith.constant dense<0.000000e+00> : vector<384x128xf32>
    %77 = tpu.matmul %74, %76, %cst_51 {dimension_numbers = #tpu.dot_dimension_numbers<[1], [0], [0], [1], [0, 0, 1, 1], [], []>} : vector<384x8xbf16>, vector<8x128xbf16>, vector<384x128xf32> -> vector<384x128xf32>
    %78 = arith.addf %72, %77 : vector<384x128xf32>
    %c56 = arith.constant 56 : index
    %c0_52 = arith.constant 0 : index
    %79 = vector.load %arg9[%c56, %c0_52] : memref<448x8xf32, #tpu.memory_space<vmem>>, vector<384x8xf32>
    %80 = arith.truncf %79 : vector<384x8xf32> to vector<384x8xbf16>
    %c7_53 = arith.constant 7 : index
    %c0_54 = arith.constant 0 : index
    %c0_55 = arith.constant 0 : index
    %81 = vector.load %arg5[%c7_53, %c0_54, %c0_55] : memref<9x8x128xbf16, #tpu.memory_space<vmem>>, vector<1x8x128xbf16>
    %82 = vector.shape_cast %81 : vector<1x8x128xbf16> to vector<8x128xbf16>
    %cst_56 = arith.constant dense<0.000000e+00> : vector<384x128xf32>
    %83 = tpu.matmul %80, %82, %cst_56 {dimension_numbers = #tpu.dot_dimension_numbers<[1], [0], [0], [1], [0, 0, 1, 1], [], []>} : vector<384x8xbf16>, vector<8x128xbf16>, vector<384x128xf32> -> vector<384x128xf32>
    %84 = arith.addf %78, %83 : vector<384x128xf32>
    %c57 = arith.constant 57 : index
    %c0_57 = arith.constant 0 : index
    %85 = vector.load %arg9[%c57, %c0_57] : memref<448x8xf32, #tpu.memory_space<vmem>>, vector<384x8xf32>
    %86 = arith.truncf %85 : vector<384x8xf32> to vector<384x8xbf16>
    %c8_58 = arith.constant 8 : index
    %c0_59 = arith.constant 0 : index
    %c0_60 = arith.constant 0 : index
    %87 = vector.load %arg5[%c8_58, %c0_59, %c0_60] : memref<9x8x128xbf16, #tpu.memory_space<vmem>>, vector<1x8x128xbf16>
    %88 = vector.shape_cast %87 : vector<1x8x128xbf16> to vector<8x128xbf16>
    %cst_61 = arith.constant dense<0.000000e+00> : vector<384x128xf32>
    %89 = tpu.matmul %86, %88, %cst_61 {dimension_numbers = #tpu.dot_dimension_numbers<[1], [0], [0], [1], [0, 0, 1, 1], [], []>} : vector<384x8xbf16>, vector<8x128xbf16>, vector<384x128xf32> -> vector<384x128xf32>
    %90 = arith.addf %84, %89 : vector<384x128xf32>
    %91 = vector.broadcast %0 : vector<384x1xf32> to vector<384x128xf32>
    %92 = arith.mulf %90, %91 : vector<384x128xf32>
    %cst_62 = arith.constant dense<0.000000e+00> : vector<128xf32>
    %93 = vector.multi_reduction <add>, %92, %cst_62 [0] : vector<384x128xf32> to vector<128xf32>
    %94 = vector.shape_cast %93 : vector<128xf32> to vector<1x128xf32>
    %95 = arith.mulf %90, %92 : vector<384x128xf32>
    %cst_63 = arith.constant dense<0.000000e+00> : vector<128xf32>
    %96 = vector.multi_reduction <add>, %95, %cst_63 [0] : vector<384x128xf32> to vector<128xf32>
    %97 = vector.shape_cast %96 : vector<128xf32> to vector<1x128xf32>
    %98 = arith.truncf %90 : vector<384x128xf32> to vector<384x128xbf16>
    %c0_64 = arith.constant 0 : index
    %c0_65 = arith.constant 0 : index
    %c0_66 = arith.constant 0 : index
    %99 = vector.load %arg7[%c0_64, %c0_65, %c0_66] : memref<1x384x128xbf16, #tpu.memory_space<vmem>>, vector<1x384x128xbf16>
    %100 = vector.shape_cast %99 : vector<1x384x128xbf16> to vector<384x128xbf16>
    %101 = vector.shape_cast %98 : vector<384x128xbf16> to vector<1x384x128xbf16>
    tpu.vector_store %arg7[%c0_64, %c0_65, %c0_66], %101 {strides = array<i32>} : memref<1x384x128xbf16, #tpu.memory_space<vmem>>, vector<1x384x128xbf16>,
    %c0_67 = arith.constant 0 : index
    %c0_68 = arith.constant 0 : index
    %c0_69 = arith.constant 0 : index
    %102 = vector.load %arg8[%c0_67, %c0_68, %c0_69] : memref<1x2x128xf32, #tpu.memory_space<vmem>>, vector<1x1x128xf32>
    %103 = vector.shape_cast %102 : vector<1x1x128xf32> to vector<1x128xf32>
    %104 = vector.shape_cast %94 : vector<1x128xf32> to vector<1x1x128xf32>
    tpu.vector_store %arg8[%c0_67, %c0_68, %c0_69], %104 {strides = array<i32>} : memref<1x2x128xf32, #tpu.memory_space<vmem>>, vector<1x1x128xf32>,
    %c0_70 = arith.constant 0 : index
    %c1_71 = arith.constant 1 : index
    %c0_72 = arith.constant 0 : index
    %105 = vector.load %arg8[%c0_70, %c1_71, %c0_72] : memref<1x2x128xf32, #tpu.memory_space<vmem>>, vector<1x1x128xf32>
    %106 = vector.shape_cast %105 : vector<1x1x128xf32> to vector<1x128xf32>
    %107 = vector.shape_cast %97 : vector<1x128xf32> to vector<1x1x128xf32>
    tpu.vector_store %arg8[%c0_70, %c1_71, %c0_72], %107 {strides = array<i32>} : memref<1x2x128xf32, #tpu.memory_space<vmem>>, vector<1x1x128xf32>,
    return
  }
  func.func @transform_0(%arg0: i32) -> (i32, i32, i32) {
    %c0_i32 = arith.constant 0 : i32
    %c0_i32_0 = arith.constant 0 : i32
    %c0_i32_1 = arith.constant 0 : i32
    return %arg0, %c0_i32, %c0_i32_0 : i32, i32, i32
  }
  func.func @transform_1(%arg0: i32) -> (i32, i32, i32) {
    %c0_i32 = arith.constant 0 : i32
    %c0_i32_0 = arith.constant 0 : i32
    %c0_i32_1 = arith.constant 0 : i32
    %c0_i32_2 = arith.constant 0 : i32
    return %c0_i32, %c0_i32_0, %c0_i32_1 : i32, i32, i32
  }
  func.func @transform_2(%arg0: i32) -> (i32, i32) {
    %c0_i32 = arith.constant 0 : i32
    %c0_i32_0 = arith.constant 0 : i32
    %c0_i32_1 = arith.constant 0 : i32
    return %c0_i32, %c0_i32_0 : i32, i32
  }
  func.func @transform_3(%arg0: i32) -> (i32, i32) {
    %c0_i32 = arith.constant 0 : i32
    %c0_i32_0 = arith.constant 0 : i32
    %c0_i32_1 = arith.constant 0 : i32
    return %c0_i32, %c0_i32_0 : i32, i32
  }
  func.func @transform_4(%arg0: i32) -> (i32, i32, i32) {
    %c0_i32 = arith.constant 0 : i32
    %c0_i32_0 = arith.constant 0 : i32
    %c0_i32_1 = arith.constant 0 : i32
    %c0_i32_2 = arith.constant 0 : i32
    return %c0_i32, %c0_i32_0, %c0_i32_1 : i32, i32, i32
  }
  func.func @transform_5(%arg0: i32) -> (i32, i32) {
    %c0_i32 = arith.constant 0 : i32
    %c0_i32_0 = arith.constant 0 : i32
    %c0_i32_1 = arith.constant 0 : i32
    return %c0_i32, %c0_i32_0 : i32, i32
  }
  func.func @transform_6(%arg0: i32) -> (i32, i32, i32) {
    %c0_i32 = arith.constant 0 : i32
    %c0_i32_0 = arith.constant 0 : i32
    %c0_i32_1 = arith.constant 0 : i32
    return %arg0, %c0_i32, %c0_i32_0 : i32, i32, i32
  }
  func.func @transform_7(%arg0: i32) -> (i32, i32, i32) {
    %c0_i32 = arith.constant 0 : i32
    %c0_i32_0 = arith.constant 0 : i32
    %c0_i32_1 = arith.constant 0 : i32
    return %arg0, %c0_i32, %c0_i32_0 : i32, i32, i32
  }
}

module attributes {stable_mosaic.version = 11 : i64} {
  func.func @_residual_kernel(%arg0: i32, %arg1: memref<1x384x128xbf16, #tpu.memory_space<vmem>>, %arg2: memref<1x256x8xf32, #tpu.memory_space<vmem>>, %arg3: memref<2x2x128xf32, #tpu.memory_space<vmem>>, %arg4: memref<1x128xf32, #tpu.memory_space<vmem>>, %arg5: memref<1x128xf32, #tpu.memory_space<vmem>>, %arg6: memref<1x256x8xf32, #tpu.memory_space<vmem>>) attributes {dimension_semantics = [#tpu.dimension_semantics<parallel>], iteration_bounds = array<i64: 2>, scalar_prefetch = 0 : i64, scratch_operands = 0 : i64, tpu.core_type = #tpu.core_type<tc>, window_params = [{transform_indices = @transform_0, window_bounds = array<i64: 1, 384, 128>}, {transform_indices = @transform_1, window_bounds = array<i64: 1, 256, 8>}, {pipeline_mode = #tpu.pipeline_mode<synchronous>, transform_indices = @transform_2, window_bounds = array<i64: 2, 2, 128>}, {pipeline_mode = #tpu.pipeline_mode<synchronous>, transform_indices = @transform_3, window_bounds = array<i64: 1, 128>}, {pipeline_mode = #tpu.pipeline_mode<synchronous>, transform_indices = @transform_4, window_bounds = array<i64: 1, 128>}, {transform_indices = @transform_5, window_bounds = array<i64: 1, 256, 8>}]} {
    %c0 = arith.constant 0 : index
    %c0_0 = arith.constant 0 : index
    %c0_1 = arith.constant 0 : index
    %0 = vector.load %arg3[%c0, %c0_0, %c0_1] : memref<2x2x128xf32, #tpu.memory_space<vmem>>, vector<2x2x128xf32>
    %c0_2 = arith.constant 0 : index
    %c0_3 = arith.constant 0 : index
    %1 = vector.load %arg4[%c0_2, %c0_3] : memref<1x128xf32, #tpu.memory_space<vmem>>, vector<1x128xf32>
    %c0_4 = arith.constant 0 : index
    %c0_5 = arith.constant 0 : index
    %2 = vector.load %arg5[%c0_4, %c0_5] : memref<1x128xf32, #tpu.memory_space<vmem>>, vector<1x128xf32>
    %cst = arith.constant dense<0.000000e+00> : vector<2x128xf32>
    %3 = vector.multi_reduction <add>, %0, %cst [0] : vector<2x2x128xf32> to vector<2x128xf32>
    %4 = vector.extract_strided_slice %3 {offsets = [0, 0], sizes = [1, 128], strides = [1, 1]} : vector<2x128xf32> to vector<1x128xf32>
    %cst_6 = arith.constant 5.120000e+02 : f32
    %5 = vector.broadcast %cst_6 : f32 to vector<1x128xf32>
    %6 = arith.divf %4, %5 : vector<1x128xf32>
    %7 = vector.extract_strided_slice %3 {offsets = [1, 0], sizes = [1, 128], strides = [1, 1]} : vector<2x128xf32> to vector<1x128xf32>
    %cst_7 = arith.constant 5.120000e+02 : f32
    %8 = vector.broadcast %cst_7 : f32 to vector<1x128xf32>
    %9 = arith.divf %7, %8 : vector<1x128xf32>
    %10 = arith.mulf %6, %6 : vector<1x128xf32>
    %11 = arith.subf %9, %10 : vector<1x128xf32>
    %cst_8 = arith.constant 0.000000e+00 : f32
    %12 = vector.broadcast %cst_8 : f32 to vector<1x128xf32>
    %13 = arith.maximumf %11, %12 : vector<1x128xf32>
    %cst_9 = arith.constant 9.99999974E-6 : f32
    %14 = vector.broadcast %cst_9 : f32 to vector<1x128xf32>
    %15 = arith.addf %13, %14 : vector<1x128xf32>
    %16 = math.rsqrt %15 : vector<1x128xf32>
    %17 = arith.mulf %1, %16 : vector<1x128xf32>
    %18 = arith.mulf %6, %17 : vector<1x128xf32>
    %19 = arith.subf %2, %18 : vector<1x128xf32>
    %c0_10 = arith.constant 0 : index
    %c0_11 = arith.constant 0 : index
    %c0_12 = arith.constant 0 : index
    %20 = vector.load %arg1[%c0_10, %c0_11, %c0_12] : memref<1x384x128xbf16, #tpu.memory_space<vmem>>, vector<1x384x128xbf16>
    %21 = vector.shape_cast %20 : vector<1x384x128xbf16> to vector<384x128xbf16>
    %22 = arith.extf %21 : vector<384x128xbf16> to vector<384x128xf32>
    %23 = vector.broadcast %17 : vector<1x128xf32> to vector<384x128xf32>
    %24 = arith.mulf %22, %23 : vector<384x128xf32>
    %25 = vector.broadcast %19 : vector<1x128xf32> to vector<384x128xf32>
    %26 = arith.addf %24, %25 : vector<384x128xf32>
    %c0_13 = arith.constant 0 : index
    %c0_14 = arith.constant 0 : index
    %c0_15 = arith.constant 0 : index
    %27 = vector.load %arg2[%c0_13, %c0_14, %c0_15] : memref<1x256x8xf32, #tpu.memory_space<vmem>>, vector<1x16x8xf32>
    %28 = vector.shape_cast %27 : vector<1x16x8xf32> to vector<16x8xf32>
    %29 = vector.extract_strided_slice %26 {offsets = [0, 0], sizes = [16, 8], strides = [1, 1]} : vector<384x128xf32> to vector<16x8xf32>
    %30 = arith.addf %29, %28 : vector<16x8xf32>
    %cst_16 = arith.constant 0.000000e+00 : f32
    %31 = vector.broadcast %cst_16 : f32 to vector<16x8xf32>
    %32 = arith.maximumf %30, %31 : vector<16x8xf32>
    %c0_17 = arith.constant 0 : index
    %c0_18 = arith.constant 0 : index
    %c0_19 = arith.constant 0 : index
    %33 = vector.load %arg6[%c0_17, %c0_18, %c0_19] : memref<1x256x8xf32, #tpu.memory_space<vmem>>, vector<1x16x8xf32>
    %34 = vector.shape_cast %33 : vector<1x16x8xf32> to vector<16x8xf32>
    %35 = vector.shape_cast %32 : vector<16x8xf32> to vector<1x16x8xf32>
    tpu.vector_store %arg6[%c0_17, %c0_18, %c0_19], %35 {strides = array<i32>} : memref<1x256x8xf32, #tpu.memory_space<vmem>>, vector<1x16x8xf32>,
    %c0_20 = arith.constant 0 : index
    %c16 = arith.constant 16 : index
    %c0_21 = arith.constant 0 : index
    %36 = vector.load %arg2[%c0_20, %c16, %c0_21] : memref<1x256x8xf32, #tpu.memory_space<vmem>>, vector<1x16x8xf32>
    %37 = vector.shape_cast %36 : vector<1x16x8xf32> to vector<16x8xf32>
    %38 = vector.extract_strided_slice %26 {offsets = [24, 0], sizes = [16, 8], strides = [1, 1]} : vector<384x128xf32> to vector<16x8xf32>
    %39 = arith.addf %38, %37 : vector<16x8xf32>
    %cst_22 = arith.constant 0.000000e+00 : f32
    %40 = vector.broadcast %cst_22 : f32 to vector<16x8xf32>
    %41 = arith.maximumf %39, %40 : vector<16x8xf32>
    %c0_23 = arith.constant 0 : index
    %c16_24 = arith.constant 16 : index
    %c0_25 = arith.constant 0 : index
    %42 = vector.load %arg6[%c0_23, %c16_24, %c0_25] : memref<1x256x8xf32, #tpu.memory_space<vmem>>, vector<1x16x8xf32>
    %43 = vector.shape_cast %42 : vector<1x16x8xf32> to vector<16x8xf32>
    %44 = vector.shape_cast %41 : vector<16x8xf32> to vector<1x16x8xf32>
    tpu.vector_store %arg6[%c0_23, %c16_24, %c0_25], %44 {strides = array<i32>} : memref<1x256x8xf32, #tpu.memory_space<vmem>>, vector<1x16x8xf32>,
    %c0_26 = arith.constant 0 : index
    %c32 = arith.constant 32 : index
    %c0_27 = arith.constant 0 : index
    %45 = vector.load %arg2[%c0_26, %c32, %c0_27] : memref<1x256x8xf32, #tpu.memory_space<vmem>>, vector<1x16x8xf32>
    %46 = vector.shape_cast %45 : vector<1x16x8xf32> to vector<16x8xf32>
    %47 = vector.extract_strided_slice %26 {offsets = [48, 0], sizes = [16, 8], strides = [1, 1]} : vector<384x128xf32> to vector<16x8xf32>
    %48 = arith.addf %47, %46 : vector<16x8xf32>
    %cst_28 = arith.constant 0.000000e+00 : f32
    %49 = vector.broadcast %cst_28 : f32 to vector<16x8xf32>
    %50 = arith.maximumf %48, %49 : vector<16x8xf32>
    %c0_29 = arith.constant 0 : index
    %c32_30 = arith.constant 32 : index
    %c0_31 = arith.constant 0 : index
    %51 = vector.load %arg6[%c0_29, %c32_30, %c0_31] : memref<1x256x8xf32, #tpu.memory_space<vmem>>, vector<1x16x8xf32>
    %52 = vector.shape_cast %51 : vector<1x16x8xf32> to vector<16x8xf32>
    %53 = vector.shape_cast %50 : vector<16x8xf32> to vector<1x16x8xf32>
    tpu.vector_store %arg6[%c0_29, %c32_30, %c0_31], %53 {strides = array<i32>} : memref<1x256x8xf32, #tpu.memory_space<vmem>>, vector<1x16x8xf32>,
    %c0_32 = arith.constant 0 : index
    %c48 = arith.constant 48 : index
    %c0_33 = arith.constant 0 : index
    %54 = vector.load %arg2[%c0_32, %c48, %c0_33] : memref<1x256x8xf32, #tpu.memory_space<vmem>>, vector<1x16x8xf32>
    %55 = vector.shape_cast %54 : vector<1x16x8xf32> to vector<16x8xf32>
    %56 = vector.extract_strided_slice %26 {offsets = [72, 0], sizes = [16, 8], strides = [1, 1]} : vector<384x128xf32> to vector<16x8xf32>
    %57 = arith.addf %56, %55 : vector<16x8xf32>
    %cst_34 = arith.constant 0.000000e+00 : f32
    %58 = vector.broadcast %cst_34 : f32 to vector<16x8xf32>
    %59 = arith.maximumf %57, %58 : vector<16x8xf32>
    %c0_35 = arith.constant 0 : index
    %c48_36 = arith.constant 48 : index
    %c0_37 = arith.constant 0 : index
    %60 = vector.load %arg6[%c0_35, %c48_36, %c0_37] : memref<1x256x8xf32, #tpu.memory_space<vmem>>, vector<1x16x8xf32>
    %61 = vector.shape_cast %60 : vector<1x16x8xf32> to vector<16x8xf32>
    %62 = vector.shape_cast %59 : vector<16x8xf32> to vector<1x16x8xf32>
    tpu.vector_store %arg6[%c0_35, %c48_36, %c0_37], %62 {strides = array<i32>} : memref<1x256x8xf32, #tpu.memory_space<vmem>>, vector<1x16x8xf32>,
    %c0_38 = arith.constant 0 : index
    %c64 = arith.constant 64 : index
    %c0_39 = arith.constant 0 : index
    %63 = vector.load %arg2[%c0_38, %c64, %c0_39] : memref<1x256x8xf32, #tpu.memory_space<vmem>>, vector<1x16x8xf32>
    %64 = vector.shape_cast %63 : vector<1x16x8xf32> to vector<16x8xf32>
    %65 = vector.extract_strided_slice %26 {offsets = [96, 0], sizes = [16, 8], strides = [1, 1]} : vector<384x128xf32> to vector<16x8xf32>
    %66 = arith.addf %65, %64 : vector<16x8xf32>
    %cst_40 = arith.constant 0.000000e+00 : f32
    %67 = vector.broadcast %cst_40 : f32 to vector<16x8xf32>
    %68 = arith.maximumf %66, %67 : vector<16x8xf32>
    %c0_41 = arith.constant 0 : index
    %c64_42 = arith.constant 64 : index
    %c0_43 = arith.constant 0 : index
    %69 = vector.load %arg6[%c0_41, %c64_42, %c0_43] : memref<1x256x8xf32, #tpu.memory_space<vmem>>, vector<1x16x8xf32>
    %70 = vector.shape_cast %69 : vector<1x16x8xf32> to vector<16x8xf32>
    %71 = vector.shape_cast %68 : vector<16x8xf32> to vector<1x16x8xf32>
    tpu.vector_store %arg6[%c0_41, %c64_42, %c0_43], %71 {strides = array<i32>} : memref<1x256x8xf32, #tpu.memory_space<vmem>>, vector<1x16x8xf32>,
    %c0_44 = arith.constant 0 : index
    %c80 = arith.constant 80 : index
    %c0_45 = arith.constant 0 : index
    %72 = vector.load %arg2[%c0_44, %c80, %c0_45] : memref<1x256x8xf32, #tpu.memory_space<vmem>>, vector<1x16x8xf32>
    %73 = vector.shape_cast %72 : vector<1x16x8xf32> to vector<16x8xf32>
    %74 = vector.extract_strided_slice %26 {offsets = [120, 0], sizes = [16, 8], strides = [1, 1]} : vector<384x128xf32> to vector<16x8xf32>
    %75 = arith.addf %74, %73 : vector<16x8xf32>
    %cst_46 = arith.constant 0.000000e+00 : f32
    %76 = vector.broadcast %cst_46 : f32 to vector<16x8xf32>
    %77 = arith.maximumf %75, %76 : vector<16x8xf32>
    %c0_47 = arith.constant 0 : index
    %c80_48 = arith.constant 80 : index
    %c0_49 = arith.constant 0 : index
    %78 = vector.load %arg6[%c0_47, %c80_48, %c0_49] : memref<1x256x8xf32, #tpu.memory_space<vmem>>, vector<1x16x8xf32>
    %79 = vector.shape_cast %78 : vector<1x16x8xf32> to vector<16x8xf32>
    %80 = vector.shape_cast %77 : vector<16x8xf32> to vector<1x16x8xf32>
    tpu.vector_store %arg6[%c0_47, %c80_48, %c0_49], %80 {strides = array<i32>} : memref<1x256x8xf32, #tpu.memory_space<vmem>>, vector<1x16x8xf32>,
    %c0_50 = arith.constant 0 : index
    %c96 = arith.constant 96 : index
    %c0_51 = arith.constant 0 : index
    %81 = vector.load %arg2[%c0_50, %c96, %c0_51] : memref<1x256x8xf32, #tpu.memory_space<vmem>>, vector<1x16x8xf32>
    %82 = vector.shape_cast %81 : vector<1x16x8xf32> to vector<16x8xf32>
    %83 = vector.extract_strided_slice %26 {offsets = [144, 0], sizes = [16, 8], strides = [1, 1]} : vector<384x128xf32> to vector<16x8xf32>
    %84 = arith.addf %83, %82 : vector<16x8xf32>
    %cst_52 = arith.constant 0.000000e+00 : f32
    %85 = vector.broadcast %cst_52 : f32 to vector<16x8xf32>
    %86 = arith.maximumf %84, %85 : vector<16x8xf32>
    %c0_53 = arith.constant 0 : index
    %c96_54 = arith.constant 96 : index
    %c0_55 = arith.constant 0 : index
    %87 = vector.load %arg6[%c0_53, %c96_54, %c0_55] : memref<1x256x8xf32, #tpu.memory_space<vmem>>, vector<1x16x8xf32>
    %88 = vector.shape_cast %87 : vector<1x16x8xf32> to vector<16x8xf32>
    %89 = vector.shape_cast %86 : vector<16x8xf32> to vector<1x16x8xf32>
    tpu.vector_store %arg6[%c0_53, %c96_54, %c0_55], %89 {strides = array<i32>} : memref<1x256x8xf32, #tpu.memory_space<vmem>>, vector<1x16x8xf32>,
    %c0_56 = arith.constant 0 : index
    %c112 = arith.constant 112 : index
    %c0_57 = arith.constant 0 : index
    %90 = vector.load %arg2[%c0_56, %c112, %c0_57] : memref<1x256x8xf32, #tpu.memory_space<vmem>>, vector<1x16x8xf32>
    %91 = vector.shape_cast %90 : vector<1x16x8xf32> to vector<16x8xf32>
    %92 = vector.extract_strided_slice %26 {offsets = [168, 0], sizes = [16, 8], strides = [1, 1]} : vector<384x128xf32> to vector<16x8xf32>
    %93 = arith.addf %92, %91 : vector<16x8xf32>
    %cst_58 = arith.constant 0.000000e+00 : f32
    %94 = vector.broadcast %cst_58 : f32 to vector<16x8xf32>
    %95 = arith.maximumf %93, %94 : vector<16x8xf32>
    %c0_59 = arith.constant 0 : index
    %c112_60 = arith.constant 112 : index
    %c0_61 = arith.constant 0 : index
    %96 = vector.load %arg6[%c0_59, %c112_60, %c0_61] : memref<1x256x8xf32, #tpu.memory_space<vmem>>, vector<1x16x8xf32>
    %97 = vector.shape_cast %96 : vector<1x16x8xf32> to vector<16x8xf32>
    %98 = vector.shape_cast %95 : vector<16x8xf32> to vector<1x16x8xf32>
    tpu.vector_store %arg6[%c0_59, %c112_60, %c0_61], %98 {strides = array<i32>} : memref<1x256x8xf32, #tpu.memory_space<vmem>>, vector<1x16x8xf32>,
    %c0_62 = arith.constant 0 : index
    %c128 = arith.constant 128 : index
    %c0_63 = arith.constant 0 : index
    %99 = vector.load %arg2[%c0_62, %c128, %c0_63] : memref<1x256x8xf32, #tpu.memory_space<vmem>>, vector<1x16x8xf32>
    %100 = vector.shape_cast %99 : vector<1x16x8xf32> to vector<16x8xf32>
    %101 = vector.extract_strided_slice %26 {offsets = [192, 0], sizes = [16, 8], strides = [1, 1]} : vector<384x128xf32> to vector<16x8xf32>
    %102 = arith.addf %101, %100 : vector<16x8xf32>
    %cst_64 = arith.constant 0.000000e+00 : f32
    %103 = vector.broadcast %cst_64 : f32 to vector<16x8xf32>
    %104 = arith.maximumf %102, %103 : vector<16x8xf32>
    %c0_65 = arith.constant 0 : index
    %c128_66 = arith.constant 128 : index
    %c0_67 = arith.constant 0 : index
    %105 = vector.load %arg6[%c0_65, %c128_66, %c0_67] : memref<1x256x8xf32, #tpu.memory_space<vmem>>, vector<1x16x8xf32>
    %106 = vector.shape_cast %105 : vector<1x16x8xf32> to vector<16x8xf32>
    %107 = vector.shape_cast %104 : vector<16x8xf32> to vector<1x16x8xf32>
    tpu.vector_store %arg6[%c0_65, %c128_66, %c0_67], %107 {strides = array<i32>} : memref<1x256x8xf32, #tpu.memory_space<vmem>>, vector<1x16x8xf32>,
    %c0_68 = arith.constant 0 : index
    %c144 = arith.constant 144 : index
    %c0_69 = arith.constant 0 : index
    %108 = vector.load %arg2[%c0_68, %c144, %c0_69] : memref<1x256x8xf32, #tpu.memory_space<vmem>>, vector<1x16x8xf32>
    %109 = vector.shape_cast %108 : vector<1x16x8xf32> to vector<16x8xf32>
    %110 = vector.extract_strided_slice %26 {offsets = [216, 0], sizes = [16, 8], strides = [1, 1]} : vector<384x128xf32> to vector<16x8xf32>
    %111 = arith.addf %110, %109 : vector<16x8xf32>
    %cst_70 = arith.constant 0.000000e+00 : f32
    %112 = vector.broadcast %cst_70 : f32 to vector<16x8xf32>
    %113 = arith.maximumf %111, %112 : vector<16x8xf32>
    %c0_71 = arith.constant 0 : index
    %c144_72 = arith.constant 144 : index
    %c0_73 = arith.constant 0 : index
    %114 = vector.load %arg6[%c0_71, %c144_72, %c0_73] : memref<1x256x8xf32, #tpu.memory_space<vmem>>, vector<1x16x8xf32>
    %115 = vector.shape_cast %114 : vector<1x16x8xf32> to vector<16x8xf32>
    %116 = vector.shape_cast %113 : vector<16x8xf32> to vector<1x16x8xf32>
    tpu.vector_store %arg6[%c0_71, %c144_72, %c0_73], %116 {strides = array<i32>} : memref<1x256x8xf32, #tpu.memory_space<vmem>>, vector<1x16x8xf32>,
    %c0_74 = arith.constant 0 : index
    %c160 = arith.constant 160 : index
    %c0_75 = arith.constant 0 : index
    %117 = vector.load %arg2[%c0_74, %c160, %c0_75] : memref<1x256x8xf32, #tpu.memory_space<vmem>>, vector<1x16x8xf32>
    %118 = vector.shape_cast %117 : vector<1x16x8xf32> to vector<16x8xf32>
    %119 = vector.extract_strided_slice %26 {offsets = [240, 0], sizes = [16, 8], strides = [1, 1]} : vector<384x128xf32> to vector<16x8xf32>
    %120 = arith.addf %119, %118 : vector<16x8xf32>
    %cst_76 = arith.constant 0.000000e+00 : f32
    %121 = vector.broadcast %cst_76 : f32 to vector<16x8xf32>
    %122 = arith.maximumf %120, %121 : vector<16x8xf32>
    %c0_77 = arith.constant 0 : index
    %c160_78 = arith.constant 160 : index
    %c0_79 = arith.constant 0 : index
    %123 = vector.load %arg6[%c0_77, %c160_78, %c0_79] : memref<1x256x8xf32, #tpu.memory_space<vmem>>, vector<1x16x8xf32>
    %124 = vector.shape_cast %123 : vector<1x16x8xf32> to vector<16x8xf32>
    %125 = vector.shape_cast %122 : vector<16x8xf32> to vector<1x16x8xf32>
    tpu.vector_store %arg6[%c0_77, %c160_78, %c0_79], %125 {strides = array<i32>} : memref<1x256x8xf32, #tpu.memory_space<vmem>>, vector<1x16x8xf32>,
    %c0_80 = arith.constant 0 : index
    %c176 = arith.constant 176 : index
    %c0_81 = arith.constant 0 : index
    %126 = vector.load %arg2[%c0_80, %c176, %c0_81] : memref<1x256x8xf32, #tpu.memory_space<vmem>>, vector<1x16x8xf32>
    %127 = vector.shape_cast %126 : vector<1x16x8xf32> to vector<16x8xf32>
    %128 = vector.extract_strided_slice %26 {offsets = [264, 0], sizes = [16, 8], strides = [1, 1]} : vector<384x128xf32> to vector<16x8xf32>
    %129 = arith.addf %128, %127 : vector<16x8xf32>
    %cst_82 = arith.constant 0.000000e+00 : f32
    %130 = vector.broadcast %cst_82 : f32 to vector<16x8xf32>
    %131 = arith.maximumf %129, %130 : vector<16x8xf32>
    %c0_83 = arith.constant 0 : index
    %c176_84 = arith.constant 176 : index
    %c0_85 = arith.constant 0 : index
    %132 = vector.load %arg6[%c0_83, %c176_84, %c0_85] : memref<1x256x8xf32, #tpu.memory_space<vmem>>, vector<1x16x8xf32>
    %133 = vector.shape_cast %132 : vector<1x16x8xf32> to vector<16x8xf32>
    %134 = vector.shape_cast %131 : vector<16x8xf32> to vector<1x16x8xf32>
    tpu.vector_store %arg6[%c0_83, %c176_84, %c0_85], %134 {strides = array<i32>} : memref<1x256x8xf32, #tpu.memory_space<vmem>>, vector<1x16x8xf32>,
    %c0_86 = arith.constant 0 : index
    %c192 = arith.constant 192 : index
    %c0_87 = arith.constant 0 : index
    %135 = vector.load %arg2[%c0_86, %c192, %c0_87] : memref<1x256x8xf32, #tpu.memory_space<vmem>>, vector<1x16x8xf32>
    %136 = vector.shape_cast %135 : vector<1x16x8xf32> to vector<16x8xf32>
    %137 = vector.extract_strided_slice %26 {offsets = [288, 0], sizes = [16, 8], strides = [1, 1]} : vector<384x128xf32> to vector<16x8xf32>
    %138 = arith.addf %137, %136 : vector<16x8xf32>
    %cst_88 = arith.constant 0.000000e+00 : f32
    %139 = vector.broadcast %cst_88 : f32 to vector<16x8xf32>
    %140 = arith.maximumf %138, %139 : vector<16x8xf32>
    %c0_89 = arith.constant 0 : index
    %c192_90 = arith.constant 192 : index
    %c0_91 = arith.constant 0 : index
    %141 = vector.load %arg6[%c0_89, %c192_90, %c0_91] : memref<1x256x8xf32, #tpu.memory_space<vmem>>, vector<1x16x8xf32>
    %142 = vector.shape_cast %141 : vector<1x16x8xf32> to vector<16x8xf32>
    %143 = vector.shape_cast %140 : vector<16x8xf32> to vector<1x16x8xf32>
    tpu.vector_store %arg6[%c0_89, %c192_90, %c0_91], %143 {strides = array<i32>} : memref<1x256x8xf32, #tpu.memory_space<vmem>>, vector<1x16x8xf32>,
    %c0_92 = arith.constant 0 : index
    %c208 = arith.constant 208 : index
    %c0_93 = arith.constant 0 : index
    %144 = vector.load %arg2[%c0_92, %c208, %c0_93] : memref<1x256x8xf32, #tpu.memory_space<vmem>>, vector<1x16x8xf32>
    %145 = vector.shape_cast %144 : vector<1x16x8xf32> to vector<16x8xf32>
    %146 = vector.extract_strided_slice %26 {offsets = [312, 0], sizes = [16, 8], strides = [1, 1]} : vector<384x128xf32> to vector<16x8xf32>
    %147 = arith.addf %146, %145 : vector<16x8xf32>
    %cst_94 = arith.constant 0.000000e+00 : f32
    %148 = vector.broadcast %cst_94 : f32 to vector<16x8xf32>
    %149 = arith.maximumf %147, %148 : vector<16x8xf32>
    %c0_95 = arith.constant 0 : index
    %c208_96 = arith.constant 208 : index
    %c0_97 = arith.constant 0 : index
    %150 = vector.load %arg6[%c0_95, %c208_96, %c0_97] : memref<1x256x8xf32, #tpu.memory_space<vmem>>, vector<1x16x8xf32>
    %151 = vector.shape_cast %150 : vector<1x16x8xf32> to vector<16x8xf32>
    %152 = vector.shape_cast %149 : vector<16x8xf32> to vector<1x16x8xf32>
    tpu.vector_store %arg6[%c0_95, %c208_96, %c0_97], %152 {strides = array<i32>} : memref<1x256x8xf32, #tpu.memory_space<vmem>>, vector<1x16x8xf32>,
    %c0_98 = arith.constant 0 : index
    %c224 = arith.constant 224 : index
    %c0_99 = arith.constant 0 : index
    %153 = vector.load %arg2[%c0_98, %c224, %c0_99] : memref<1x256x8xf32, #tpu.memory_space<vmem>>, vector<1x16x8xf32>
    %154 = vector.shape_cast %153 : vector<1x16x8xf32> to vector<16x8xf32>
    %155 = vector.extract_strided_slice %26 {offsets = [336, 0], sizes = [16, 8], strides = [1, 1]} : vector<384x128xf32> to vector<16x8xf32>
    %156 = arith.addf %155, %154 : vector<16x8xf32>
    %cst_100 = arith.constant 0.000000e+00 : f32
    %157 = vector.broadcast %cst_100 : f32 to vector<16x8xf32>
    %158 = arith.maximumf %156, %157 : vector<16x8xf32>
    %c0_101 = arith.constant 0 : index
    %c224_102 = arith.constant 224 : index
    %c0_103 = arith.constant 0 : index
    %159 = vector.load %arg6[%c0_101, %c224_102, %c0_103] : memref<1x256x8xf32, #tpu.memory_space<vmem>>, vector<1x16x8xf32>
    %160 = vector.shape_cast %159 : vector<1x16x8xf32> to vector<16x8xf32>
    %161 = vector.shape_cast %158 : vector<16x8xf32> to vector<1x16x8xf32>
    tpu.vector_store %arg6[%c0_101, %c224_102, %c0_103], %161 {strides = array<i32>} : memref<1x256x8xf32, #tpu.memory_space<vmem>>, vector<1x16x8xf32>,
    %c0_104 = arith.constant 0 : index
    %c240 = arith.constant 240 : index
    %c0_105 = arith.constant 0 : index
    %162 = vector.load %arg2[%c0_104, %c240, %c0_105] : memref<1x256x8xf32, #tpu.memory_space<vmem>>, vector<1x16x8xf32>
    %163 = vector.shape_cast %162 : vector<1x16x8xf32> to vector<16x8xf32>
    %164 = vector.extract_strided_slice %26 {offsets = [360, 0], sizes = [16, 8], strides = [1, 1]} : vector<384x128xf32> to vector<16x8xf32>
    %165 = arith.addf %164, %163 : vector<16x8xf32>
    %cst_106 = arith.constant 0.000000e+00 : f32
    %166 = vector.broadcast %cst_106 : f32 to vector<16x8xf32>
    %167 = arith.maximumf %165, %166 : vector<16x8xf32>
    %c0_107 = arith.constant 0 : index
    %c240_108 = arith.constant 240 : index
    %c0_109 = arith.constant 0 : index
    %168 = vector.load %arg6[%c0_107, %c240_108, %c0_109] : memref<1x256x8xf32, #tpu.memory_space<vmem>>, vector<1x16x8xf32>
    %169 = vector.shape_cast %168 : vector<1x16x8xf32> to vector<16x8xf32>
    %170 = vector.shape_cast %167 : vector<16x8xf32> to vector<1x16x8xf32>
    tpu.vector_store %arg6[%c0_107, %c240_108, %c0_109], %170 {strides = array<i32>} : memref<1x256x8xf32, #tpu.memory_space<vmem>>, vector<1x16x8xf32>,
    return
  }
  func.func @transform_0(%arg0: i32) -> (i32, i32, i32) {
    %c0_i32 = arith.constant 0 : i32
    %c0_i32_0 = arith.constant 0 : i32
    %c0_i32_1 = arith.constant 0 : i32
    return %arg0, %c0_i32, %c0_i32_0 : i32, i32, i32
  }
  func.func @transform_1(%arg0: i32) -> (i32, i32, i32) {
    %c0_i32 = arith.constant 0 : i32
    %c0_i32_0 = arith.constant 0 : i32
    %c0_i32_1 = arith.constant 0 : i32
    return %arg0, %c0_i32, %c0_i32_0 : i32, i32, i32
  }
  func.func @transform_2(%arg0: i32) -> (i32, i32, i32) {
    %c0_i32 = arith.constant 0 : i32
    %c0_i32_0 = arith.constant 0 : i32
    %c0_i32_1 = arith.constant 0 : i32
    %c0_i32_2 = arith.constant 0 : i32
    return %c0_i32, %c0_i32_0, %c0_i32_1 : i32, i32, i32
  }
  func.func @transform_3(%arg0: i32) -> (i32, i32) {
    %c0_i32 = arith.constant 0 : i32
    %c0_i32_0 = arith.constant 0 : i32
    %c0_i32_1 = arith.constant 0 : i32
    return %c0_i32, %c0_i32_0 : i32, i32
  }
  func.func @transform_4(%arg0: i32) -> (i32, i32) {
    %c0_i32 = arith.constant 0 : i32
    %c0_i32_0 = arith.constant 0 : i32
    %c0_i32_1 = arith.constant 0 : i32
    return %c0_i32, %c0_i32_0 : i32, i32
  }
  func.func @transform_5(%arg0: i32) -> (i32, i32, i32) {
    %c0_i32 = arith.constant 0 : i32
    %c0_i32_0 = arith.constant 0 : i32
    %c0_i32_1 = arith.constant 0 : i32
    return %arg0, %c0_i32, %c0_i32_0 : i32, i32, i32
  }
}

</mosaic_0001>

<llo_original>
// kernel: _forward_impl.5
$region0: #{_forward_impl.5}
  #allocation0 [shape = 'u32[]', space=smem, size = 0x4, offset = 0x4, fixed_abs, tag = 'smem constant byte address 0x4 - core index']
  #allocation1 [shape = 'u32[144,128]{1,0:T(1,128)}', space=vmem, size = 0x12000, scoped, tag = 'internal scratch']
  %s0 = inlined_call_operand.vmem [shape: bf16[2,384,128], index: 0, kind: input, shape index: {}]
  %s1 = inlined_call_operand.vmem [shape: f32[2,256,8], index: 1, kind: input, shape index: {}]
  %s2 = inlined_call_operand.vmem [shape: f32[2,2,128], index: 2, kind: input, shape index: {}]
  %s3 = inlined_call_operand.vmem [shape: f32[1,128], index: 3, kind: input, shape index: {}]
  %s4 = inlined_call_operand.vmem [shape: f32[1,128], index: 4, kind: input, shape index: {}]
  %s5 = inlined_call_operand.vmem [shape: f32[2,256,8], index: 5, kind: output, shape index: {}]
  %s6 = sld [smem:[#allocation0]]
  $region53: #{_forward_impl.5} parent=0
    _
  %s8 = ssub.s32 1, %s6
  %s9 = scalar_select 0, %s8, %s6
  loop: start=0, step=1, limit=4
  $region2: #{_forward_impl.5} parent=0 // loop_pre_header
    _
  $region3: #{_forward_impl.5} parent=0 // loop_header
    %s11 = sphi 0, %s15
    %p12 = scmp.ge.s32.totalorder %s11, 4
    %s21 = sphi 0, %s23
    %s24 = sphi 0, %s21
    %s25 = sphi 0, %s24
    %s41 = sphi 0, %s25
    %s47 = sphi 0, %s49
    %s50 = sphi 0, %s47
    %s51 = sphi 0, %s50
    %s67 = sphi 0, %s51
    %s71 = sphi 0, %s71
    %s73 = sphi 0, %s71
    %s74 = sphi 0, %s73
    %s88 = sphi 0, %s74
    %s92 = sphi 0, %s92
    %s94 = sphi 0, %s92
    %s95 = sphi 0, %s94
    %s109 = sphi 0, %s95
    %s113 = sphi 0, %s113
    %s115 = sphi 0, %s113
    %s116 = sphi 0, %s115
    %s130 = sphi 0, %s116
    %s136 = sphi 0, %s138
    %s139 = sphi 0, %s136
    %s140 = sphi 0, %s139
    %s156 = sphi 0, %s140
  $region4: #{_forward_impl.5} parent=0 // loop_header_branch
    %14 = sbr.rel (%p12) target = $region8
  $region5: #{_forward_impl.5} parent=0 // loop_body
    %s16 = ssub.s32 %s11, 1
    %s17 = ssub.s32 %s11, 2
    %s18 = sadd.s32 %s11, 1
    %s19 = ssub.s32 %s11, %s18
    %p20 = scmp.eq.s32.totalorder %s19, 0
    %s22 = sadd.s32 %s21, 1
    %s23 = scalar_select %p20, %s21, %s22
    %p26 = pneg %p20
    %p27 = scmp.eq.s32.totalorder %s11, 1
    %p28 = por %p26, %p27
    %p29 = scmp.ne.s32.totalorder %s21, %s24
    %p30 = scmp.eq.s32.totalorder %s11, 0
    %p31 = por %p29, %p30
    %p32 = scmp.ne.s32.totalorder %s21, %s24
    %p33 = scmp.eq.s32.totalorder %s16, 1
    %p34 = por %p32, %p33
    %p35 = scmp.ne.s32.totalorder %s24, %s25
    %p36 = scmp.eq.s32.totalorder %s16, 0
    %p37 = por %p35, %p36
    %p38 = scmp.ne.s32.totalorder %s24, %s25
    %p39 = scmp.eq.s32.totalorder %s17, 1
    %p40 = por %p38, %p39
    %p42 = scmp.ne.s32.totalorder %s25, %s41
    %p43 = scmp.eq.s32.totalorder %s17, 0
    %p44 = por %p42, %p43
    %s45 = ssub.s32 %s11, %s18
    %p46 = scmp.eq.s32.totalorder %s45, 0
    %s48 = sadd.s32 %s47, 1
    %s49 = scalar_select %p46, %s47, %s48
    %p52 = pneg %p46
    %p53 = scmp.eq.s32.totalorder %s11, 1
    %p54 = por %p52, %p53
    %p55 = scmp.ne.s32.totalorder %s47, %s50
    %p56 = scmp.eq.s32.totalorder %s11, 0
    %p57 = por %p55, %p56
    %p58 = scmp.ne.s32.totalorder %s47, %s50
    %p59 = scmp.eq.s32.totalorder %s16, 1
    %p60 = por %p58, %p59
    %p61 = scmp.ne.s32.totalorder %s50, %s51
    %p62 = scmp.eq.s32.totalorder %s16, 0
    %p63 = por %p61, %p62
    %p64 = scmp.ne.s32.totalorder %s50, %s51
    %p65 = scmp.eq.s32.totalorder %s17, 1
    %p66 = por %p64, %p65
    %p68 = scmp.ne.s32.totalorder %s51, %s67
    %p69 = scmp.eq.s32.totalorder %s17, 0
    %p70 = por %p68, %p69
    %s72 = sadd.s32 %s71, 1
    %p75 = scmp.eq.s32.totalorder %s11, 1
    %p76 = scmp.ne.s32.totalorder %s71, %s73
    %p77 = scmp.eq.s32.totalorder %s11, 0
    %p78 = por %p76, %p77
    %p79 = scmp.ne.s32.totalorder %s71, %s73
    %p80 = scmp.eq.s32.totalorder %s16, 1
    %p81 = por %p79, %p80
    %p82 = scmp.ne.s32.totalorder %s73, %s74
    %p83 = scmp.eq.s32.totalorder %s16, 0
    %p84 = por %p82, %p83
    %p85 = scmp.ne.s32.totalorder %s73, %s74
    %p86 = scmp.eq.s32.totalorder %s17, 1
    %p87 = por %p85, %p86
    %p89 = scmp.ne.s32.totalorder %s74, %s88
    %p90 = scmp.eq.s32.totalorder %s17, 0
    %p91 = por %p89, %p90
    %s93 = sadd.s32 %s92, 1
    %p96 = scmp.eq.s32.totalorder %s11, 1
    %p97 = scmp.ne.s32.totalorder %s92, %s94
    %p98 = scmp.eq.s32.totalorder %s11, 0
    %p99 = por %p97, %p98
    %p100 = scmp.ne.s32.totalorder %s92, %s94
    %p101 = scmp.eq.s32.totalorder %s16, 1
    %p102 = por %p100, %p101
    %p103 = scmp.ne.s32.totalorder %s94, %s95
    %p104 = scmp.eq.s32.totalorder %s16, 0
    %p105 = por %p103, %p104
    %p106 = scmp.ne.s32.totalorder %s94, %s95
    %p107 = scmp.eq.s32.totalorder %s17, 1
    %p108 = por %p106, %p107
    %p110 = scmp.ne.s32.totalorder %s95, %s109
    %p111 = scmp.eq.s32.totalorder %s17, 0
    %p112 = por %p110, %p111
    %s114 = sadd.s32 %s113, 1
    %p117 = scmp.eq.s32.totalorder %s11, 1
    %p118 = scmp.ne.s32.totalorder %s113, %s115
    %p119 = scmp.eq.s32.totalorder %s11, 0
    %p120 = por %p118, %p119
    %p121 = scmp.ne.s32.totalorder %s113, %s115
    %p122 = scmp.eq.s32.totalorder %s16, 1
    %p123 = por %p121, %p122
    %p124 = scmp.ne.s32.totalorder %s115, %s116
    %p125 = scmp.eq.s32.totalorder %s16, 0
    %p126 = por %p124, %p125
    %p127 = scmp.ne.s32.totalorder %s115, %s116
    %p128 = scmp.eq.s32.totalorder %s17, 1
    %p129 = por %p127, %p128
    %p131 = scmp.ne.s32.totalorder %s116, %s130
    %p132 = scmp.eq.s32.totalorder %s17, 0
    %p133 = por %p131, %p132
    %s134 = ssub.s32 %s11, %s18
    %p135 = scmp.eq.s32.totalorder %s134, 0
    %s137 = sadd.s32 %s136, 1
    %s138 = scalar_select %p135, %s136, %s137
    %p141 = pneg %p135
    %p142 = scmp.eq.s32.totalorder %s11, 1
    %p143 = por %p141, %p142
    %p144 = scmp.ne.s32.totalorder %s136, %s139
    %p145 = scmp.eq.s32.totalorder %s11, 0
    %p146 = por %p144, %p145
    %p147 = scmp.ne.s32.totalorder %s136, %s139
    %p148 = scmp.eq.s32.totalorder %s16, 1
    %p149 = por %p147, %p148
    %p150 = scmp.ne.s32.totalorder %s139, %s140
    %p151 = scmp.eq.s32.totalorder %s16, 0
    %p152 = por %p150, %p151
    %p153 = scmp.ne.s32.totalorder %s139, %s140
    %p154 = scmp.eq.s32.totalorder %s17, 1
    %p155 = por %p153, %p154
    %p157 = scmp.ne.s32.totalorder %s140, %s156
    %p158 = scmp.eq.s32.totalorder %s17, 0
    %p159 = por %p157, %p158
    %p160 = scmp.le.s32.totalorder 1, %s11
    %p161 = scmp.lt.s32.totalorder %s11, 3
    %p162 = pnand %p160, %p161
    %p163 = pneg %p162
    // Predicated region
    $region9: #{_forward_impl.5} parent=5 // pred_check
      _
    $region10: #{_forward_impl.5} parent=5 // pred_check_branch
      %165 = sbr.rel (%p162) target = $region12
    $region11: #{_forward_impl.5} parent=5 // pred_region
      %s166 = ssub.s32 %s11, 1
      // Predicated region
      $region13: #{_forward_impl.5} parent=11 // pred_check
        %p167 = pneg %p84
      $region14: #{_forward_impl.5} parent=11 // pred_check_branch
        %169 = sbr.rel (%p167) target = $region16
      $region15: #{_forward_impl.5} parent=11 // pred_region
        _
      $region16: #{_forward_impl.5} parent=11 // pred_fallthru
        _
      // Predicated region
      $region17: #{_forward_impl.5} parent=11 // pred_check
        %p170 = pneg %p105
      $region18: #{_forward_impl.5} parent=11 // pred_check_branch
        %172 = sbr.rel (%p170) target = $region20
      $region19: #{_forward_impl.5} parent=11 // pred_region
        _
      $region20: #{_forward_impl.5} parent=11 // pred_fallthru
        _
      // Predicated region
      $region21: #{_forward_impl.5} parent=11 // pred_check
        %p173 = pneg %p126
      $region22: #{_forward_impl.5} parent=11 // pred_check_branch
        %175 = sbr.rel (%p173) target = $region24
      $region23: #{_forward_impl.5} parent=11 // pred_region
        _
      $region24: #{_forward_impl.5} parent=11 // pred_fallthru
        _
    $region12: #{_forward_impl.5} parent=5 // pred_fallthru
      _
    %p176 = scmp.lt.s32.totalorder %s11, 2
    // Predicated region
    $region25: #{_forward_impl.5} parent=5 // pred_check
      %p177 = pneg %p176
    $region26: #{_forward_impl.5} parent=5 // pred_check_branch
      %179 = sbr.rel (%p177) target = $region28
    $region27: #{_forward_impl.5} parent=5 // pred_region
      // Predicated region
      $region29: #{_forward_impl.5} parent=27 // pred_check
        %p180 = pneg %p31
      $region30: #{_forward_impl.5} parent=27 // pred_check_branch
        %182 = sbr.rel (%p180) target = $region32
      $region31: #{_forward_impl.5} parent=27 // pred_region
        %p183 = scmp.lt.s32.totalorder %s11, 1
        %s184 = scalar_select %p183, %s11, 1
        %s185 = smul.addr %s184, 48
        %s186 = smul.addr %s185, 4
        %s187 = scalar_lea.vmem %s0, %s186
      $region32: #{_forward_impl.5} parent=27 // pred_fallthru
        _
      // Predicated region
      $region33: #{_forward_impl.5} parent=27 // pred_check
        %p188 = pneg %p57
      $region34: #{_forward_impl.5} parent=27 // pred_check_branch
        %190 = sbr.rel (%p188) target = $region36
      $region35: #{_forward_impl.5} parent=27 // pred_region
        %p191 = scmp.lt.s32.totalorder %s11, 1
        %s192 = scalar_select %p191, %s11, 1
        %s193 = smul.addr %s192, 32
        %s194 = smul.addr %s193, 8
        %s195 = scalar_lea.vmem %s1, %s194
      $region36: #{_forward_impl.5} parent=27 // pred_fallthru
        _
    $region28: #{_forward_impl.5} parent=5 // pred_fallthru
      _
    %p196 = scmp.le.s32.totalorder 1, %s11
    %p197 = scmp.lt.s32.totalorder %s11, 3
    %p198 = pnand %p196, %p197
    %p199 = pneg %p198
    // Predicated region
    $region37: #{_forward_impl.5} parent=5 // pred_check
      _
    $region38: #{_forward_impl.5} parent=5 // pred_check_branch
      %201 = sbr.rel (%p198) target = $region40
    $region39: #{_forward_impl.5} parent=5 // pred_region
      %s202 = ssub.s32 %s11, 1
      %p203 = scmp.lt.s32.totalorder %s16, 1
      %s204 = scalar_select %p203, %s16, 1
      %s205 = smul.addr %s204, 48
      %s206 = smul.addr %s205, 4
      %s207 = scalar_lea.vmem %s0, %s206
      %p208 = pneg %p37
      %p209 = pneg %p34
      %p210 = scmp.lt.s32.totalorder %s16, 1
      %s211 = scalar_select %p210, %s16, 1
      %s212 = smul.addr %s211, 32
      %s213 = smul.addr %s212, 8
      %s214 = scalar_lea.vmem %s1, %s213
      %p215 = pneg %p63
      %p216 = pneg %p60
      %p217 = pneg %p84
      %p218 = pneg %p81
      %p219 = pneg %p105
      %p220 = pneg %p102
      %p221 = pneg %p126
      %p222 = pneg %p123
      %p223 = pneg %p152
      %p224 = pneg %p149
      %p225 = scmp.lt.s32.totalorder %s16, 1
      %s226 = scalar_select %p225, %s16, 1
      %s227 = smul.addr %s226, 32
      %s228 = smul.addr %s227, 8
      %s229 = scalar_lea.vmem %s5, %s228
      %p230 = scmp.lt.s32.totalorder %s16, 1
      %s231 = scalar_select %p230, %s16, 1
      %s232 = smul.addr %s231, 48
      %s233 = smul.addr %s232, 4
      %s234 = scalar_lea.vmem %s0, %s233
      %p235 = scmp.lt.s32.totalorder %s16, 1
      %s236 = scalar_select %p235, %s16, 1
      %s237 = smul.addr %s236, 32
      %s238 = smul.addr %s237, 8
      %s239 = scalar_lea.vmem %s1, %s238
      %p240 = scmp.lt.s32.totalorder %s16, 1
      %s241 = scalar_select %p240, %s16, 1
      %s242 = smul.addr %s241, 32
      %s243 = smul.addr %s242, 8
      %s244 = scalar_lea.vmem %s5, %s243
      %v245 = vld [vmem:[%s2] sm:$0x3]
      %v246 = vld [vmem:[%s2 + $0x2] sm:$0x3]
      %v247 = vld [vmem:[%s3] sm:$0x1]
      %v248 = vld [vmem:[%s4] sm:$0x1]
      %vm249 = vcmask 1041408
      %v250 = vsel %vm249, %v245, 0.0
      %v251 = vsel %vm249, %v246, 0.0
      %v252 = vadd.f32 %v250, %v251
      %v253 = vrcp.pop 512.0
      %v254 = vmul.f32 %v252, %v253
      %v255 = vmul.f32 %v254, %v254
      %v257 = vrot.slane %v255, 7
      %v259 = vsub.f32 %v254, %v257
      %v260 = vmax.f32 %v259, 0.0
      %v261 = vadd.f32 %v260, 1e-05
      %v262 = vrsqrt.pop %v261
      %v265 = vunpack.c.l.s4 1966171168
      %v266 = vunpack.c.0.s8 %v265
      %v267 = vlaneseq
      %v268 = vshrl.u32 %v267, 7
      %v269 = vsub.s32 %v266, %v268
      %v270 = vrot.slane %v262, %v269
      %v271 = vcombine.high %v270, %v270
      %v273 = vunpack.c.l.s4 1966171168
      %v274 = vunpack.c.0.s8 %v273
      %v275 = vlaneseq
      %v276 = vshrl.u32 %v275, 7
      %v277 = vsub.s32 %v274, %v276
      %v278 = vrot.slane %v271, %v277
      %v280 = vmul.f32 %v247, %v278
      %v281 = vmul.f32 %v254, %v280
      %v282 = vsub.f32 %v248, %v281
      %v283 = vld [vmem:[%s234] sm:$0xf]
      %v284 = vld [vmem:[%s234 + $0x4] sm:$0xf]
      %v285 = vld [vmem:[%s234 + $0xc] sm:$0xf]
      %v286 = vld [vmem:[%s234 + $0x10] sm:$0xf]
      %v287 = vld [vmem:[%s234 + $0x18] sm:$0xf]
      %v288 = vld [vmem:[%s234 + $0x1c] sm:$0xf]
      %v289 = vld [vmem:[%s234 + $0x24] sm:$0xf]
      %v290 = vld [vmem:[%s234 + $0x28] sm:$0xf]
      %v291 = vld [vmem:[%s234 + $0x30] sm:$0xf]
      %v292 = vld [vmem:[%s234 + $0x34] sm:$0xf]
      %v293 = vld [vmem:[%s234 + $0x3c] sm:$0xf]
      %v294 = vld [vmem:[%s234 + $0x40] sm:$0xf]
      %v295 = vld [vmem:[%s234 + $0x48] sm:$0xf]
      %v296 = vld [vmem:[%s234 + $0x4c] sm:$0xf]
      %v297 = vld [vmem:[%s234 + $0x54] sm:$0xf]
      %v298 = vld [vmem:[%s234 + $0x58] sm:$0xf]
      %v299 = vld [vmem:[%s234 + $0x60] sm:$0xf]
      %v300 = vld [vmem:[%s234 + $0x64] sm:$0xf]
      %v301 = vld [vmem:[%s234 + $0x6c] sm:$0xf]
      %v302 = vld [vmem:[%s234 + $0x70] sm:$0xf]
      %v303 = vld [vmem:[%s234 + $0x78] sm:$0xf]
      %v304 = vld [vmem:[%s234 + $0x7c] sm:$0xf]
      %v305 = vld [vmem:[%s234 + $0x84] sm:$0xf]
      %v306 = vld [vmem:[%s234 + $0x88] sm:$0xf]
      %v307 = vld [vmem:[%s234 + $0x90] sm:$0xf]
      %v308 = vld [vmem:[%s234 + $0x94] sm:$0xf]
      %v309 = vld [vmem:[%s234 + $0x9c] sm:$0xf]
      %v310 = vld [vmem:[%s234 + $0xa0] sm:$0xf]
      %v311 = vld [vmem:[%s234 + $0xa8] sm:$0xf]
      %v312 = vld [vmem:[%s234 + $0xac] sm:$0xf]
      %v313 = vld [vmem:[%s234 + $0xb4] sm:$0xf]
      %v314 = vld [vmem:[%s234 + $0xb8] sm:$0xf]
      %v315 = vunpack.c.l.bf16 %v283
      %v316 = vunpack.c.l.bf16 %v284
      %v317 = vunpack.c.l.bf16 %v285
      %v318 = vunpack.c.l.bf16 %v286
      %v319 = vunpack.c.l.bf16 %v287
      %v320 = vunpack.c.l.bf16 %v288
      %v321 = vunpack.c.l.bf16 %v289
      %v322 = vunpack.c.l.bf16 %v290
      %v323 = vunpack.c.l.bf16 %v291
      %v324 = vunpack.c.l.bf16 %v292
      %v325 = vunpack.c.l.bf16 %v293
      %v326 = vunpack.c.l.bf16 %v294
      %v327 = vunpack.c.l.bf16 %v295
      %v328 = vunpack.c.l.bf16 %v296
      %v329 = vunpack.c.l.bf16 %v297
      %v330 = vunpack.c.l.bf16 %v298
      %v331 = vunpack.c.l.bf16 %v299
      %v332 = vunpack.c.l.bf16 %v300
      %v333 = vunpack.c.l.bf16 %v301
      %v334 = vunpack.c.l.bf16 %v302
      %v335 = vunpack.c.l.bf16 %v303
      %v336 = vunpack.c.l.bf16 %v304
      %v337 = vunpack.c.l.bf16 %v305
      %v338 = vunpack.c.l.bf16 %v306
      %v339 = vunpack.c.l.bf16 %v307
      %v340 = vunpack.c.l.bf16 %v308
      %v341 = vunpack.c.l.bf16 %v309
      %v342 = vunpack.c.l.bf16 %v310
      %v343 = vunpack.c.l.bf16 %v311
      %v344 = vunpack.c.l.bf16 %v312
      %v345 = vunpack.c.l.bf16 %v313
      %v346 = vunpack.c.l.bf16 %v314
      %v348 = vlaneseq
      %v349 = vshrl.u32 %v348, 7
      %v350 = vsub.s32 0, %v349
      %v351 = vrot.slane %v280, %v350
      %v353 = vmul.f32 %v315, %v351
      %v354 = vmul.f32 %v316, %v351
      %v355 = vmul.f32 %v317, %v351
      %v356 = vmul.f32 %v318, %v351
      %v357 = vmul.f32 %v319, %v351
      %v358 = vmul.f32 %v320, %v351
      %v359 = vmul.f32 %v321, %v351
      %v360 = vmul.f32 %v322, %v351
      %v361 = vmul.f32 %v323, %v351
      %v362 = vmul.f32 %v324, %v351
      %v363 = vmul.f32 %v325, %v351
      %v364 = vmul.f32 %v326, %v351
      %v365 = vmul.f32 %v327, %v351
      %v366 = vmul.f32 %v328, %v351
      %v367 = vmul.f32 %v329, %v351
      %v368 = vmul.f32 %v330, %v351
      %v369 = vmul.f32 %v331, %v351
      %v370 = vmul.f32 %v332, %v351
      %v371 = vmul.f32 %v333, %v351
      %v372 = vmul.f32 %v334, %v351
      %v373 = vmul.f32 %v335, %v351
      %v374 = vmul.f32 %v336, %v351
      %v375 = vmul.f32 %v337, %v351
      %v376 = vmul.f32 %v338, %v351
      %v377 = vmul.f32 %v339, %v351
      %v378 = vmul.f32 %v340, %v351
      %v379 = vmul.f32 %v341, %v351
      %v380 = vmul.f32 %v342, %v351
      %v381 = vmul.f32 %v343, %v351
      %v382 = vmul.f32 %v344, %v351
      %v383 = vmul.f32 %v345, %v351
      %v384 = vmul.f32 %v346, %v351
      %v386 = vlaneseq
      %v387 = vshrl.u32 %v386, 7
      %v388 = vsub.s32 0, %v387
      %v389 = vrot.slane %v282, %v388
      %v391 = vadd.f32 %v353, %v389
      %v392 = vadd.f32 %v354, %v389
      %v393 = vadd.f32 %v355, %v389
      %v394 = vadd.f32 %v356, %v389
      %v395 = vadd.f32 %v357, %v389
      %v396 = vadd.f32 %v358, %v389
      %v397 = vadd.f32 %v359, %v389
      %v398 = vadd.f32 %v360, %v389
      %v399 = vadd.f32 %v361, %v389
      %v400 = vadd.f32 %v362, %v389
      %v401 = vadd.f32 %v363, %v389
      %v402 = vadd.f32 %v364, %v389
      %v403 = vadd.f32 %v365, %v389
      %v404 = vadd.f32 %v366, %v389
      %v405 = vadd.f32 %v367, %v389
      %v406 = vadd.f32 %v368, %v389
      %v407 = vadd.f32 %v369, %v389
      %v408 = vadd.f32 %v370, %v389
      %v409 = vadd.f32 %v371, %v389
      %v410 = vadd.f32 %v372, %v389
      %v411 = vadd.f32 %v373, %v389
      %v412 = vadd.f32 %v374, %v389
      %v413 = vadd.f32 %v375, %v389
      %v414 = vadd.f32 %v376, %v389
      %v415 = vadd.f32 %v377, %v389
      %v416 = vadd.f32 %v378, %v389
      %v417 = vadd.f32 %v379, %v389
      %v418 = vadd.f32 %v380, %v389
      %v419 = vadd.f32 %v381, %v389
      %v420 = vadd.f32 %v382, %v389
      %v421 = vadd.f32 %v383, %v389
      %v422 = vadd.f32 %v384, %v389
      %v423 = vld [vmem:[%s239] sm:$0xff]
      %v424 = vld [vmem:[%s239 + $0x8] sm:$0xff]
      %v425 = vadd.f32 %v391, %v423
      %v426 = vadd.f32 %v392, %v424
      %v427 = vmax.f32 %v425, 0.0
      %v428 = vmax.f32 %v426, 0.0
      %vm429 = vcmask 64512
      %430 = vst.msk [vmem:[%s244] sm:$0xff] %vm429, %v427
      %431 = vst.msk [vmem:[%s244 + $0x8] sm:$0xff] %vm429, %v428
      %v432 = vld [vmem:[%s239 + $0x10] sm:$0xff]
      %v433 = vld [vmem:[%s239 + $0x18] sm:$0xff]
      %v434 = vadd.f32 %v393, %v432
      %v435 = vadd.f32 %v394, %v433
      %v436 = vmax.f32 %v434, 0.0
      %v437 = vmax.f32 %v435, 0.0
      %438 = vst.msk [vmem:[%s244 + $0x10] sm:$0xff] %vm429, %v436
      %439 = vst.msk [vmem:[%s244 + $0x18] sm:$0xff] %vm429, %v437
      %v440 = vld [vmem:[%s239 + $0x20] sm:$0xff]
      %v441 = vld [vmem:[%s239 + $0x28] sm:$0xff]
      %v442 = vadd.f32 %v395, %v440
      %v443 = vadd.f32 %v396, %v441
      %v444 = vmax.f32 %v442, 0.0
      %v445 = vmax.f32 %v443, 0.0
      %446 = vst.msk [vmem:[%s244 + $0x20] sm:$0xff] %vm429, %v444
      %447 = vst.msk [vmem:[%s244 + $0x28] sm:$0xff] %vm429, %v445
      %v448 = vld [vmem:[%s239 + $0x30] sm:$0xff]
      %v449 = vld [vmem:[%s239 + $0x38] sm:$0xff]
      %v450 = vadd.f32 %v397, %v448
      %v451 = vadd.f32 %v398, %v449
      %v452 = vmax.f32 %v450, 0.0
      %v453 = vmax.f32 %v451, 0.0
      %454 = vst.msk [vmem:[%s244 + $0x30] sm:$0xff] %vm429, %v452
      %455 = vst.msk [vmem:[%s244 + $0x38] sm:$0xff] %vm429, %v453
      %v456 = vld [vmem:[%s239 + $0x40] sm:$0xff]
      %v457 = vld [vmem:[%s239 + $0x48] sm:$0xff]
      %v458 = vadd.f32 %v399, %v456
      %v459 = vadd.f32 %v400, %v457
      %v460 = vmax.f32 %v458, 0.0
      %v461 = vmax.f32 %v459, 0.0
      %462 = vst.msk [vmem:[%s244 + $0x40] sm:$0xff] %vm429, %v460
      %463 = vst.msk [vmem:[%s244 + $0x48] sm:$0xff] %vm429, %v461
      %v464 = vld [vmem:[%s239 + $0x50] sm:$0xff]
      %v465 = vld [vmem:[%s239 + $0x58] sm:$0xff]
      %v466 = vadd.f32 %v401, %v464
      %v467 = vadd.f32 %v402, %v465
      %v468 = vmax.f32 %v466, 0.0
      %v469 = vmax.f32 %v467, 0.0
      %470 = vst.msk [vmem:[%s244 + $0x50] sm:$0xff] %vm429, %v468
      %471 = vst.msk [vmem:[%s244 + $0x58] sm:$0xff] %vm429, %v469
      %v472 = vld [vmem:[%s239 + $0x60] sm:$0xff]
      %v473 = vld [vmem:[%s239 + $0x68] sm:$0xff]
      %v474 = vadd.f32 %v403, %v472
      %v475 = vadd.f32 %v404, %v473
      %v476 = vmax.f32 %v474, 0.0
      %v477 = vmax.f32 %v475, 0.0
      %478 = vst.msk [vmem:[%s244 + $0x60] sm:$0xff] %vm429, %v476
      %479 = vst.msk [vmem:[%s244 + $0x68] sm:$0xff] %vm429, %v477
      %v480 = vld [vmem:[%s239 + $0x70] sm:$0xff]
      %v481 = vld [vmem:[%s239 + $0x78] sm:$0xff]
      %v482 = vadd.f32 %v405, %v480
      %v483 = vadd.f32 %v406, %v481
      %v484 = vmax.f32 %v482, 0.0
      %v485 = vmax.f32 %v483, 0.0
      %486 = vst.msk [vmem:[%s244 + $0x70] sm:$0xff] %vm429, %v484
      %487 = vst.msk [vmem:[%s244 + $0x78] sm:$0xff] %vm429, %v485
      %v488 = vld [vmem:[%s239 + $0x80] sm:$0xff]
      %v489 = vld [vmem:[%s239 + $0x88] sm:$0xff]
      %v490 = vadd.f32 %v407, %v488
      %v491 = vadd.f32 %v408, %v489
      %v492 = vmax.f32 %v490, 0.0
      %v493 = vmax.f32 %v491, 0.0
      %494 = vst.msk [vmem:[%s244 + $0x80] sm:$0xff] %vm429, %v492
      %495 = vst.msk [vmem:[%s244 + $0x88] sm:$0xff] %vm429, %v493
      %v496 = vld [vmem:[%s239 + $0x90] sm:$0xff]
      %v497 = vld [vmem:[%s239 + $0x98] sm:$0xff]
      %v498 = vadd.f32 %v409, %v496
      %v499 = vadd.f32 %v410, %v497
      %v500 = vmax.f32 %v498, 0.0
      %v501 = vmax.f32 %v499, 0.0
      %502 = vst.msk [vmem:[%s244 + $0x90] sm:$0xff] %vm429, %v500
      %503 = vst.msk [vmem:[%s244 + $0x98] sm:$0xff] %vm429, %v501
      %v504 = vld [vmem:[%s239 + $0xa0] sm:$0xff]
      %v505 = vld [vmem:[%s239 + $0xa8] sm:$0xff]
      %v506 = vadd.f32 %v411, %v504
      %v507 = vadd.f32 %v412, %v505
      %v508 = vmax.f32 %v506, 0.0
      %v509 = vmax.f32 %v507, 0.0
      %510 = vst.msk [vmem:[%s244 + $0xa0] sm:$0xff] %vm429, %v508
      %511 = vst.msk [vmem:[%s244 + $0xa8] sm:$0xff] %vm429, %v509
      %v512 = vld [vmem:[%s239 + $0xb0] sm:$0xff]
      %v513 = vld [vmem:[%s239 + $0xb8] sm:$0xff]
      %v514 = vadd.f32 %v413, %v512
      %v515 = vadd.f32 %v414, %v513
      %v516 = vmax.f32 %v514, 0.0
      %v517 = vmax.f32 %v515, 0.0
      %518 = vst.msk [vmem:[%s244 + $0xb0] sm:$0xff] %vm429, %v516
      %519 = vst.msk [vmem:[%s244 + $0xb8] sm:$0xff] %vm429, %v517
      %v520 = vld [vmem:[%s239 + $0xc0] sm:$0xff]
      %v521 = vld [vmem:[%s239 + $0xc8] sm:$0xff]
      %v522 = vadd.f32 %v415, %v520
      %v523 = vadd.f32 %v416, %v521
      %v524 = vmax.f32 %v522, 0.0
      %v525 = vmax.f32 %v523, 0.0
      %526 = vst.msk [vmem:[%s244 + $0xc0] sm:$0xff] %vm429, %v524
      %527 = vst.msk [vmem:[%s244 + $0xc8] sm:$0xff] %vm429, %v525
      %v528 = vld [vmem:[%s239 + $0xd0] sm:$0xff]
      %v529 = vld [vmem:[%s239 + $0xd8] sm:$0xff]
      %v530 = vadd.f32 %v417, %v528
      %v531 = vadd.f32 %v418, %v529
      %v532 = vmax.f32 %v530, 0.0
      %v533 = vmax.f32 %v531, 0.0
      %534 = vst.msk [vmem:[%s244 + $0xd0] sm:$0xff] %vm429, %v532
      %535 = vst.msk [vmem:[%s244 + $0xd8] sm:$0xff] %vm429, %v533
      %v536 = vld [vmem:[%s239 + $0xe0] sm:$0xff]
      %v537 = vld [vmem:[%s239 + $0xe8] sm:$0xff]
      %v538 = vadd.f32 %v419, %v536
      %v539 = vadd.f32 %v420, %v537
      %v540 = vmax.f32 %v538, 0.0
      %v541 = vmax.f32 %v539, 0.0
      %542 = vst.msk [vmem:[%s244 + $0xe0] sm:$0xff] %vm429, %v540
      %543 = vst.msk [vmem:[%s244 + $0xe8] sm:$0xff] %vm429, %v541
      %v544 = vld [vmem:[%s239 + $0xf0] sm:$0xff]
      %v545 = vld [vmem:[%s239 + $0xf8] sm:$0xff]
      %v546 = vadd.f32 %v421, %v544
      %v547 = vadd.f32 %v422, %v545
      %v548 = vmax.f32 %v546, 0.0
      %v549 = vmax.f32 %v547, 0.0
      %550 = vst.msk [vmem:[%s244 + $0xf0] sm:$0xff] %vm429, %v548
      %551 = vst.msk [vmem:[%s244 + $0xf8] sm:$0xff] %vm429, %v549
      %p552 = scmp.lt.s32.totalorder %s16, 1
      %s553 = scalar_select %p552, %s16, 1
      %s554 = smul.addr %s553, 32
      %s555 = smul.addr %s554, 8
      %s556 = scalar_lea.vmem %s5, %s555
      // Predicated region
      $region41: #{_forward_impl.5} parent=39 // pred_check
        %p557 = pneg %p149
      $region42: #{_forward_impl.5} parent=39 // pred_check_branch
        %559 = sbr.rel (%p557) target = $region44
      $region43: #{_forward_impl.5} parent=39 // pred_region
        _
      $region44: #{_forward_impl.5} parent=39 // pred_fallthru
        _
    $region40: #{_forward_impl.5} parent=5 // pred_fallthru
      _
    %p560 = scmp.le.s32.totalorder 2, %s11
    // Predicated region
    $region45: #{_forward_impl.5} parent=5 // pred_check
      %p561 = pneg %p560
    $region46: #{_forward_impl.5} parent=5 // pred_check_branch
      %563 = sbr.rel (%p561) target = $region48
    $region47: #{_forward_impl.5} parent=5 // pred_region
      %s564 = ssub.s32 %s11, 2
      // Predicated region
      $region49: #{_forward_impl.5} parent=47 // pred_check
        %p565 = pneg %p155
      $region50: #{_forward_impl.5} parent=47 // pred_check_branch
        %567 = sbr.rel (%p565) target = $region52
      $region51: #{_forward_impl.5} parent=47 // pred_region
        %p568 = scmp.lt.s32.totalorder %s17, 1
        %s569 = scalar_select %p568, %s17, 1
        %s570 = smul.addr %s569, 32
        %s571 = smul.addr %s570, 8
        %s572 = scalar_lea.vmem %s5, %s571
      $region52: #{_forward_impl.5} parent=47 // pred_fallthru
        _
    $region48: #{_forward_impl.5} parent=5 // pred_fallthru
      _
  $region6: #{_forward_impl.5} parent=0 // loop_footer
    %s15 = sadd.s32 1, %s11
  $region7: #{_forward_impl.5} parent=0 // loop_footer_branch
    %10 = sbr.rel target = $region3
  $region8: #{_forward_impl.5} parent=0 // loop_exit
    _

// kernel: _forward_impl.4
$region0: #{_forward_impl.4}
  #allocation0 [shape = 'u32[]', space=smem, size = 0x4, offset = 0x4, fixed_abs, tag = 'smem constant byte address 0x4 - core index']
  #allocation1 [shape = 'u32[144,128]{1,0:T(1,128)}', space=vmem, size = 0x12000, scoped, tag = 'internal scratch']
  #allocation2 [shape = 'f32[448,8]{1,0:T(8,128)}', space=vmem, size = 0x38000, scoped, tag = 'scratch operand']
  %s0 = inlined_call_operand.vmem [shape: bf16[2,384,128], index: 0, kind: input, shape index: {}]
  %s1 = inlined_call_operand.vmem [shape: f32[2,2,128], index: 1, kind: input, shape index: {}]
  %s2 = inlined_call_operand.vmem [shape: f32[1,128], index: 2, kind: input, shape index: {}]
  %s3 = inlined_call_operand.vmem [shape: f32[1,128], index: 3, kind: input, shape index: {}]
  %s4 = inlined_call_operand.vmem [shape: bf16[9,8,128], index: 4, kind: input, shape index: {}]
  %s5 = inlined_call_operand.vmem [shape: f32[384,1], index: 5, kind: input, shape index: {}]
  %s6 = inlined_call_operand.vmem [shape: bf16[2,384,128], index: 6, kind: output, shape index: {0}]
  %s7 = inlined_call_operand.vmem [shape: f32[2,2,128], index: 7, kind: output, shape index: {1}]
  %8 = xla_tuple %s6, %s7
  %s9 = sld [smem:[#allocation0]]
  $region65: #{_forward_impl.4} parent=0
    _
  %s11 = ssub.s32 1, %s9
  %s12 = scalar_select 0, %s11, %s9
  loop: start=0, step=1, limit=4
  $region2: #{_forward_impl.4} parent=0 // loop_pre_header
    _
  $region3: #{_forward_impl.4} parent=0 // loop_header
    %s14 = sphi 0, %s18
    %p15 = scmp.ge.s32.totalorder %s14, 4
    %s24 = sphi 0, %s26
    %s27 = sphi 0, %s24
    %s28 = sphi 0, %s27
    %s44 = sphi 0, %s28
    %s48 = sphi 0, %s48
    %s50 = sphi 0, %s48
    %s51 = sphi 0, %s50
    %s65 = sphi 0, %s51
    %s69 = sphi 0, %s69
    %s71 = sphi 0, %s69
    %s72 = sphi 0, %s71
    %s86 = sphi 0, %s72
    %s90 = sphi 0, %s90
    %s92 = sphi 0, %s90
    %s93 = sphi 0, %s92
    %s107 = sphi 0, %s93
    %s111 = sphi 0, %s111
    %s113 = sphi 0, %s111
    %s114 = sphi 0, %s113
    %s128 = sphi 0, %s114
    %s132 = sphi 0, %s132
    %s134 = sphi 0, %s132
    %s135 = sphi 0, %s134
    %s149 = sphi 0, %s135
    %s155 = sphi 0, %s157
    %s158 = sphi 0, %s155
    %s159 = sphi 0, %s158
    %s175 = sphi 0, %s159
    %s181 = sphi 0, %s183
    %s184 = sphi 0, %s181
    %s185 = sphi 0, %s184
    %s201 = sphi 0, %s185
  $region4: #{_forward_impl.4} parent=0 // loop_header_branch
    %17 = sbr.rel (%p15) target = $region8
  $region5: #{_forward_impl.4} parent=0 // loop_body
    %s19 = ssub.s32 %s14, 1
    %s20 = ssub.s32 %s14, 2
    %s21 = sadd.s32 %s14, 1
    %s22 = ssub.s32 %s14, %s21
    %p23 = scmp.eq.s32.totalorder %s22, 0
    %s25 = sadd.s32 %s24, 1
    %s26 = scalar_select %p23, %s24, %s25
    %p29 = pneg %p23
    %p30 = scmp.eq.s32.totalorder %s14, 1
    %p31 = por %p29, %p30
    %p32 = scmp.ne.s32.totalorder %s24, %s27
    %p33 = scmp.eq.s32.totalorder %s14, 0
    %p34 = por %p32, %p33
    %p35 = scmp.ne.s32.totalorder %s24, %s27
    %p36 = scmp.eq.s32.totalorder %s19, 1
    %p37 = por %p35, %p36
    %p38 = scmp.ne.s32.totalorder %s27, %s28
    %p39 = scmp.eq.s32.totalorder %s19, 0
    %p40 = por %p38, %p39
    %p41 = scmp.ne.s32.totalorder %s27, %s28
    %p42 = scmp.eq.s32.totalorder %s20, 1
    %p43 = por %p41, %p42
    %p45 = scmp.ne.s32.totalorder %s28, %s44
    %p46 = scmp.eq.s32.totalorder %s20, 0
    %p47 = por %p45, %p46
    %s49 = sadd.s32 %s48, 1
    %p52 = scmp.eq.s32.totalorder %s14, 1
    %p53 = scmp.ne.s32.totalorder %s48, %s50
    %p54 = scmp.eq.s32.totalorder %s14, 0
    %p55 = por %p53, %p54
    %p56 = scmp.ne.s32.totalorder %s48, %s50
    %p57 = scmp.eq.s32.totalorder %s19, 1
    %p58 = por %p56, %p57
    %p59 = scmp.ne.s32.totalorder %s50, %s51
    %p60 = scmp.eq.s32.totalorder %s19, 0
    %p61 = por %p59, %p60
    %p62 = scmp.ne.s32.totalorder %s50, %s51
    %p63 = scmp.eq.s32.totalorder %s20, 1
    %p64 = por %p62, %p63
    %p66 = scmp.ne.s32.totalorder %s51, %s65
    %p67 = scmp.eq.s32.totalorder %s20, 0
    %p68 = por %p66, %p67
    %s70 = sadd.s32 %s69, 1
    %p73 = scmp.eq.s32.totalorder %s14, 1
    %p74 = scmp.ne.s32.totalorder %s69, %s71
    %p75 = scmp.eq.s32.totalorder %s14, 0
    %p76 = por %p74, %p75
    %p77 = scmp.ne.s32.totalorder %s69, %s71
    %p78 = scmp.eq.s32.totalorder %s19, 1
    %p79 = por %p77, %p78
    %p80 = scmp.ne.s32.totalorder %s71, %s72
    %p81 = scmp.eq.s32.totalorder %s19, 0
    %p82 = por %p80, %p81
    %p83 = scmp.ne.s32.totalorder %s71, %s72
    %p84 = scmp.eq.s32.totalorder %s20, 1
    %p85 = por %p83, %p84
    %p87 = scmp.ne.s32.totalorder %s72, %s86
    %p88 = scmp.eq.s32.totalorder %s20, 0
    %p89 = por %p87, %p88
    %s91 = sadd.s32 %s90, 1
    %p94 = scmp.eq.s32.totalorder %s14, 1
    %p95 = scmp.ne.s32.totalorder %s90, %s92
    %p96 = scmp.eq.s32.totalorder %s14, 0
    %p97 = por %p95, %p96
    %p98 = scmp.ne.s32.totalorder %s90, %s92
    %p99 = scmp.eq.s32.totalorder %s19, 1
    %p100 = por %p98, %p99
    %p101 = scmp.ne.s32.totalorder %s92, %s93
    %p102 = scmp.eq.s32.totalorder %s19, 0
    %p103 = por %p101, %p102
    %p104 = scmp.ne.s32.totalorder %s92, %s93
    %p105 = scmp.eq.s32.totalorder %s20, 1
    %p106 = por %p104, %p105
    %p108 = scmp.ne.s32.totalorder %s93, %s107
    %p109 = scmp.eq.s32.totalorder %s20, 0
    %p110 = por %p108, %p109
    %s112 = sadd.s32 %s111, 1
    %p115 = scmp.eq.s32.totalorder %s14, 1
    %p116 = scmp.ne.s32.totalorder %s111, %s113
    %p117 = scmp.eq.s32.totalorder %s14, 0
    %p118 = por %p116, %p117
    %p119 = scmp.ne.s32.totalorder %s111, %s113
    %p120 = scmp.eq.s32.totalorder %s19, 1
    %p121 = por %p119, %p120
    %p122 = scmp.ne.s32.totalorder %s113, %s114
    %p123 = scmp.eq.s32.totalorder %s19, 0
    %p124 = por %p122, %p123
    %p125 = scmp.ne.s32.totalorder %s113, %s114
    %p126 = scmp.eq.s32.totalorder %s20, 1
    %p127 = por %p125, %p126
    %p129 = scmp.ne.s32.totalorder %s114, %s128
    %p130 = scmp.eq.s32.totalorder %s20, 0
    %p131 = por %p129, %p130
    %s133 = sadd.s32 %s132, 1
    %p136 = scmp.eq.s32.totalorder %s14, 1
    %p137 = scmp.ne.s32.totalorder %s132, %s134
    %p138 = scmp.eq.s32.totalorder %s14, 0
    %p139 = por %p137, %p138
    %p140 = scmp.ne.s32.totalorder %s132, %s134
    %p141 = scmp.eq.s32.totalorder %s19, 1
    %p142 = por %p140, %p141
    %p143 = scmp.ne.s32.totalorder %s134, %s135
    %p144 = scmp.eq.s32.totalorder %s19, 0
    %p145 = por %p143, %p144
    %p146 = scmp.ne.s32.totalorder %s134, %s135
    %p147 = scmp.eq.s32.totalorder %s20, 1
    %p148 = por %p146, %p147
    %p150 = scmp.ne.s32.totalorder %s135, %s149
    %p151 = scmp.eq.s32.totalorder %s20, 0
    %p152 = por %p150, %p151
    %s153 = ssub.s32 %s14, %s21
    %p154 = scmp.eq.s32.totalorder %s153, 0
    %s156 = sadd.s32 %s155, 1
    %s157 = scalar_select %p154, %s155, %s156
    %p160 = pneg %p154
    %p161 = scmp.eq.s32.totalorder %s14, 1
    %p162 = por %p160, %p161
    %p163 = scmp.ne.s32.totalorder %s155, %s158
    %p164 = scmp.eq.s32.totalorder %s14, 0
    %p165 = por %p163, %p164
    %p166 = scmp.ne.s32.totalorder %s155, %s158
    %p167 = scmp.eq.s32.totalorder %s19, 1
    %p168 = por %p166, %p167
    %p169 = scmp.ne.s32.totalorder %s158, %s159
    %p170 = scmp.eq.s32.totalorder %s19, 0
    %p171 = por %p169, %p170
    %p172 = scmp.ne.s32.totalorder %s158, %s159
    %p173 = scmp.eq.s32.totalorder %s20, 1
    %p174 = por %p172, %p173
    %p176 = scmp.ne.s32.totalorder %s159, %s175
    %p177 = scmp.eq.s32.totalorder %s20, 0
    %p178 = por %p176, %p177
    %s179 = ssub.s32 %s14, %s21
    %p180 = scmp.eq.s32.totalorder %s179, 0
    %s182 = sadd.s32 %s181, 1
    %s183 = scalar_select %p180, %s181, %s182
    %p186 = pneg %p180
    %p187 = scmp.eq.s32.totalorder %s14, 1
    %p188 = por %p186, %p187
    %p189 = scmp.ne.s32.totalorder %s181, %s184
    %p190 = scmp.eq.s32.totalorder %s14, 0
    %p191 = por %p189, %p190
    %p192 = scmp.ne.s32.totalorder %s181, %s184
    %p193 = scmp.eq.s32.totalorder %s19, 1
    %p194 = por %p192, %p193
    %p195 = scmp.ne.s32.totalorder %s184, %s185
    %p196 = scmp.eq.s32.totalorder %s19, 0
    %p197 = por %p195, %p196
    %p198 = scmp.ne.s32.totalorder %s184, %s185
    %p199 = scmp.eq.s32.totalorder %s20, 1
    %p200 = por %p198, %p199
    %p202 = scmp.ne.s32.totalorder %s185, %s201
    %p203 = scmp.eq.s32.totalorder %s20, 0
    %p204 = por %p202, %p203
    %p205 = scmp.le.s32.totalorder 1, %s14
    %p206 = scmp.lt.s32.totalorder %s14, 3
    %p207 = pnand %p205, %p206
    %p208 = pneg %p207
    // Predicated region
    $region9: #{_forward_impl.4} parent=5 // pred_check
      _
    $region10: #{_forward_impl.4} parent=5 // pred_check_branch
      %210 = sbr.rel (%p207) target = $region12
    $region11: #{_forward_impl.4} parent=5 // pred_region
      %s211 = ssub.s32 %s14, 1
      // Predicated region
      $region13: #{_forward_impl.4} parent=11 // pred_check
        %p212 = pneg %p61
      $region14: #{_forward_impl.4} parent=11 // pred_check_branch
        %214 = sbr.rel (%p212) target = $region16
      $region15: #{_forward_impl.4} parent=11 // pred_region
        _
      $region16: #{_forward_impl.4} parent=11 // pred_fallthru
        _
      // Predicated region
      $region17: #{_forward_impl.4} parent=11 // pred_check
        %p215 = pneg %p82
      $region18: #{_forward_impl.4} parent=11 // pred_check_branch
        %217 = sbr.rel (%p215) target = $region20
      $region19: #{_forward_impl.4} parent=11 // pred_region
        _
      $region20: #{_forward_impl.4} parent=11 // pred_fallthru
        _
      // Predicated region
      $region21: #{_forward_impl.4} parent=11 // pred_check
        %p218 = pneg %p103
      $region22: #{_forward_impl.4} parent=11 // pred_check_branch
        %220 = sbr.rel (%p218) target = $region24
      $region23: #{_forward_impl.4} parent=11 // pred_region
        _
      $region24: #{_forward_impl.4} parent=11 // pred_fallthru
        _
      // Predicated region
      $region25: #{_forward_impl.4} parent=11 // pred_check
        %p221 = pneg %p124
      $region26: #{_forward_impl.4} parent=11 // pred_check_branch
        %223 = sbr.rel (%p221) target = $region28
      $region27: #{_forward_impl.4} parent=11 // pred_region
        _
      $region28: #{_forward_impl.4} parent=11 // pred_fallthru
        _
      // Predicated region
      $region29: #{_forward_impl.4} parent=11 // pred_check
        %p224 = pneg %p145
      $region30: #{_forward_impl.4} parent=11 // pred_check_branch
        %226 = sbr.rel (%p224) target = $region32
      $region31: #{_forward_impl.4} parent=11 // pred_region
        _
      $region32: #{_forward_impl.4} parent=11 // pred_fallthru
        _
    $region12: #{_forward_impl.4} parent=5 // pred_fallthru
      _
    %p227 = scmp.lt.s32.totalorder %s14, 2
    // Predicated region
    $region33: #{_forward_impl.4} parent=5 // pred_check
      %p228 = pneg %p227
    $region34: #{_forward_impl.4} parent=5 // pred_check_branch
      %230 = sbr.rel (%p228) target = $region36
    $region35: #{_forward_impl.4} parent=5 // pred_region
      // Predicated region
      $region37: #{_forward_impl.4} parent=35 // pred_check
        %p231 = pneg %p34
      $region38: #{_forward_impl.4} parent=35 // pred_check_branch
        %233 = sbr.rel (%p231) target = $region40
      $region39: #{_forward_impl.4} parent=35 // pred_region
        %p234 = scmp.lt.s32.totalorder %s14, 1
        %s235 = scalar_select %p234, %s14, 1
        %s236 = smul.addr %s235, 48
        %s237 = smul.addr %s236, 4
        %s238 = scalar_lea.vmem %s0, %s237
      $region40: #{_forward_impl.4} parent=35 // pred_fallthru
        _
    $region36: #{_forward_impl.4} parent=5 // pred_fallthru
      _
    %p239 = scmp.le.s32.totalorder 1, %s14
    %p240 = scmp.lt.s32.totalorder %s14, 3
    %p241 = pnand %p239, %p240
    %p242 = pneg %p241
    // Predicated region
    $region41: #{_forward_impl.4} parent=5 // pred_check
      _
    $region42: #{_forward_impl.4} parent=5 // pred_check_branch
      %244 = sbr.rel (%p241) target = $region44
    $region43: #{_forward_impl.4} parent=5 // pred_region
      %s245 = ssub.s32 %s14, 1
      %p246 = scmp.lt.s32.totalorder %s19, 1
      %s247 = scalar_select %p246, %s19, 1
      %s248 = smul.addr %s247, 48
      %s249 = smul.addr %s248, 4
      %s250 = scalar_lea.vmem %s0, %s249
      %p251 = pneg %p40
      %p252 = pneg %p37
      %p253 = pneg %p61
      %p254 = pneg %p58
      %p255 = pneg %p82
      %p256 = pneg %p79
      %p257 = pneg %p103
      %p258 = pneg %p100
      %p259 = pneg %p124
      %p260 = pneg %p121
      %p261 = pneg %p145
      %p262 = pneg %p142
      %p263 = pneg %p171
      %p264 = pneg %p168
      %p265 = scmp.lt.s32.totalorder %s19, 1
      %s266 = scalar_select %p265, %s19, 1
      %s267 = smul.addr %s266, 48
      %s268 = smul.addr %s267, 4
      %s269 = scalar_lea.vmem %s6, %s268
      %p270 = pneg %p197
      %p271 = pneg %p194
      %p272 = scmp.lt.s32.totalorder %s19, 1
      %s273 = scalar_select %p272, %s19, 1
      %s274 = smul.addr %s273, 2
      %s275 = scalar_lea.vmem %s7, %s274
      %p276 = scmp.lt.s32.totalorder %s19, 1
      %s277 = scalar_select %p276, %s19, 1
      %s278 = smul.addr %s277, 48
      %s279 = smul.addr %s278, 4
      %s280 = scalar_lea.vmem %s0, %s279
      %p281 = scmp.lt.s32.totalorder %s19, 1
      %s282 = scalar_select %p281, %s19, 1
      %s283 = smul.addr %s282, 48
      %s284 = smul.addr %s283, 4
      %s285 = scalar_lea.vmem %s6, %s284
      %p286 = scmp.lt.s32.totalorder %s19, 1
      %s287 = scalar_select %p286, %s19, 1
      %s288 = smul.addr %s287, 2
      %s289 = scalar_lea.vmem %s7, %s288
      %v291 = vld [vmem:[%s5] sm:$0xff]
      %v292 = vld [vmem:[%s5 + $0x8] sm:$0xff]
      %v293 = vld [vmem:[%s5 + $0x10] sm:$0xff]
      %v294 = vld [vmem:[%s5 + $0x18] sm:$0xff]
      %v295 = vld [vmem:[%s5 + $0x20] sm:$0xff]
      %v296 = vld [vmem:[%s5 + $0x28] sm:$0xff]
      %v297 = vld [vmem:[%s5 + $0x30] sm:$0xff]
      %v298 = vld [vmem:[%s5 + $0x38] sm:$0xff]
      %v299 = vld [vmem:[%s5 + $0x40] sm:$0xff]
      %v300 = vld [vmem:[%s5 + $0x48] sm:$0xff]
      %v301 = vld [vmem:[%s5 + $0x50] sm:$0xff]
      %v302 = vld [vmem:[%s5 + $0x58] sm:$0xff]
      %v303 = vld [vmem:[%s5 + $0x60] sm:$0xff]
      %v304 = vld [vmem:[%s5 + $0x68] sm:$0xff]
      %v305 = vld [vmem:[%s5 + $0x70] sm:$0xff]
      %v306 = vld [vmem:[%s5 + $0x78] sm:$0xff]
      %v307 = vld [vmem:[%s5 + $0x80] sm:$0xff]
      %v308 = vld [vmem:[%s5 + $0x88] sm:$0xff]
      %v309 = vld [vmem:[%s5 + $0x90] sm:$0xff]
      %v310 = vld [vmem:[%s5 + $0x98] sm:$0xff]
      %v311 = vld [vmem:[%s5 + $0xa0] sm:$0xff]
      %v312 = vld [vmem:[%s5 + $0xa8] sm:$0xff]
      %v313 = vld [vmem:[%s5 + $0xb0] sm:$0xff]
      %v314 = vld [vmem:[%s5 + $0xb8] sm:$0xff]
      %v315 = vld [vmem:[%s5 + $0xc0] sm:$0xff]
      %v316 = vld [vmem:[%s5 + $0xc8] sm:$0xff]
      %v317 = vld [vmem:[%s5 + $0xd0] sm:$0xff]
      %v318 = vld [vmem:[%s5 + $0xd8] sm:$0xff]
      %v319 = vld [vmem:[%s5 + $0xe0] sm:$0xff]
      %v320 = vld [vmem:[%s5 + $0xe8] sm:$0xff]
      %v321 = vld [vmem:[%s5 + $0xf0] sm:$0xff]
      %v322 = vld [vmem:[%s5 + $0xf8] sm:$0xff]
      %v323 = vld [vmem:[%s5 + $0x100] sm:$0xff]
      %v324 = vld [vmem:[%s5 + $0x108] sm:$0xff]
      %v325 = vld [vmem:[%s5 + $0x110] sm:$0xff]
      %v326 = vld [vmem:[%s5 + $0x118] sm:$0xff]
      %v327 = vld [vmem:[%s5 + $0x120] sm:$0xff]
      %v328 = vld [vmem:[%s5 + $0x128] sm:$0xff]
      %v329 = vld [vmem:[%s5 + $0x130] sm:$0xff]
      %v330 = vld [vmem:[%s5 + $0x138] sm:$0xff]
      %v331 = vld [vmem:[%s5 + $0x140] sm:$0xff]
      %v332 = vld [vmem:[%s5 + $0x148] sm:$0xff]
      %v333 = vld [vmem:[%s5 + $0x150] sm:$0xff]
      %v334 = vld [vmem:[%s5 + $0x158] sm:$0xff]
      %v335 = vld [vmem:[%s5 + $0x160] sm:$0xff]
      %v336 = vld [vmem:[%s5 + $0x168] sm:$0xff]
      %v337 = vld [vmem:[%s5 + $0x170] sm:$0xff]
      %v338 = vld [vmem:[%s5 + $0x178] sm:$0xff]
      %v339 = vld [vmem:[%s1] sm:$0x3]
      %v340 = vld [vmem:[%s1 + $0x2] sm:$0x3]
      %v341 = vld [vmem:[%s2] sm:$0x1]
      %v342 = vld [vmem:[%s3] sm:$0x1]
      %vm343 = vcmask 1041408
      %v344 = vsel %vm343, %v339, 0.0
      %v345 = vsel %vm343, %v340, 0.0
      %v346 = vadd.f32 %v344, %v345
      %v347 = vrcp.pop 512.0
      %v348 = vmul.f32 %v346, %v347
      %v349 = vmul.f32 %v348, %v348
      %v351 = vrot.slane %v349, 7
      %v353 = vsub.f32 %v348, %v351
      %v354 = vmax.f32 %v353, 0.0
      %v355 = vadd.f32 %v354, 1e-05
      %v356 = vrsqrt.pop %v355
      %v359 = vunpack.c.l.s4 1966171168
      %v360 = vunpack.c.0.s8 %v359
      %v361 = vlaneseq
      %v362 = vshrl.u32 %v361, 7
      %v363 = vsub.s32 %v360, %v362
      %v364 = vrot.slane %v356, %v363
      %v365 = vcombine.high %v364, %v364
      %v367 = vunpack.c.l.s4 1966171168
      %v368 = vunpack.c.0.s8 %v367
      %v369 = vlaneseq
      %v370 = vshrl.u32 %v369, 7
      %v371 = vsub.s32 %v368, %v370
      %v372 = vrot.slane %v365, %v371
      %v374 = vmul.f32 %v341, %v372
      %v375 = vmul.f32 %v348, %v374
      %v376 = vsub.f32 %v342, %v375
      %v377 = vld [vmem:[%s280] sm:$0xf]
      %v378 = vld [vmem:[%s280 + $0x4] sm:$0xf]
      %v379 = vld [vmem:[%s280 + $0x8] sm:$0xf]
      %v380 = vld [vmem:[%s280 + $0xc] sm:$0xf]
      %v381 = vld [vmem:[%s280 + $0x10] sm:$0xf]
      %v382 = vld [vmem:[%s280 + $0x14] sm:$0xf]
      %v383 = vld [vmem:[%s280 + $0x18] sm:$0xf]
      %v384 = vld [vmem:[%s280 + $0x1c] sm:$0xf]
      %v385 = vld [vmem:[%s280 + $0x20] sm:$0xf]
      %v386 = vld [vmem:[%s280 + $0x24] sm:$0xf]
      %v387 = vld [vmem:[%s280 + $0x28] sm:$0xf]
      %v388 = vld [vmem:[%s280 + $0x2c] sm:$0xf]
      %v389 = vld [vmem:[%s280 + $0x30] sm:$0xf]
      %v390 = vld [vmem:[%s280 + $0x34] sm:$0xf]
      %v391 = vld [vmem:[%s280 + $0x38] sm:$0xf]
      %v392 = vld [vmem:[%s280 + $0x3c] sm:$0xf]
      %v393 = vld [vmem:[%s280 + $0x40] sm:$0xf]
      %v394 = vld [vmem:[%s280 + $0x44] sm:$0xf]
      %v395 = vld [vmem:[%s280 + $0x48] sm:$0xf]
      %v396 = vld [vmem:[%s280 + $0x4c] sm:$0xf]
      %v397 = vld [vmem:[%s280 + $0x50] sm:$0xf]
      %v398 = vld [vmem:[%s280 + $0x54] sm:$0xf]
      %v399 = vld [vmem:[%s280 + $0x58] sm:$0xf]
      %v400 = vld [vmem:[%s280 + $0x5c] sm:$0xf]
      %v401 = vld [vmem:[%s280 + $0x60] sm:$0xf]
      %v402 = vld [vmem:[%s280 + $0x64] sm:$0xf]
      %v403 = vld [vmem:[%s280 + $0x68] sm:$0xf]
      %v404 = vld [vmem:[%s280 + $0x6c] sm:$0xf]
      %v405 = vld [vmem:[%s280 + $0x70] sm:$0xf]
      %v406 = vld [vmem:[%s280 + $0x74] sm:$0xf]
      %v407 = vld [vmem:[%s280 + $0x78] sm:$0xf]
      %v408 = vld [vmem:[%s280 + $0x7c] sm:$0xf]
      %v409 = vld [vmem:[%s280 + $0x80] sm:$0xf]
      %v410 = vld [vmem:[%s280 + $0x84] sm:$0xf]
      %v411 = vld [vmem:[%s280 + $0x88] sm:$0xf]
      %v412 = vld [vmem:[%s280 + $0x8c] sm:$0xf]
      %v413 = vld [vmem:[%s280 + $0x90] sm:$0xf]
      %v414 = vld [vmem:[%s280 + $0x94] sm:$0xf]
      %v415 = vld [vmem:[%s280 + $0x98] sm:$0xf]
      %v416 = vld [vmem:[%s280 + $0x9c] sm:$0xf]
      %v417 = vld [vmem:[%s280 + $0xa0] sm:$0xf]
      %v418 = vld [vmem:[%s280 + $0xa4] sm:$0xf]
      %v419 = vld [vmem:[%s280 + $0xa8] sm:$0xf]
      %v420 = vld [vmem:[%s280 + $0xac] sm:$0xf]
      %v421 = vld [vmem:[%s280 + $0xb0] sm:$0xf]
      %v422 = vld [vmem:[%s280 + $0xb4] sm:$0xf]
      %v423 = vld [vmem:[%s280 + $0xb8] sm:$0xf]
      %v424 = vld [vmem:[%s280 + $0xbc] sm:$0xf]
      %v425 = vunpack.c.l.bf16 %v377
      %v426 = vunpack.c.l.bf16 %v378
      %v427 = vunpack.c.l.bf16 %v379
      %v428 = vunpack.c.l.bf16 %v380
      %v429 = vunpack.c.l.bf16 %v381
      %v430 = vunpack.c.l.bf16 %v382
      %v431 = vunpack.c.l.bf16 %v383
      %v432 = vunpack.c.l.bf16 %v384
      %v433 = vunpack.c.l.bf16 %v385
      %v434 = vunpack.c.l.bf16 %v386
      %v435 = vunpack.c.l.bf16 %v387
      %v436 = vunpack.c.l.bf16 %v388
      %v437 = vunpack.c.l.bf16 %v389
      %v438 = vunpack.c.l.bf16 %v390
      %v439 = vunpack.c.l.bf16 %v391
      %v440 = vunpack.c.l.bf16 %v392
      %v441 = vunpack.c.l.bf16 %v393
      %v442 = vunpack.c.l.bf16 %v394
      %v443 = vunpack.c.l.bf16 %v395
      %v444 = vunpack.c.l.bf16 %v396
      %v445 = vunpack.c.l.bf16 %v397
      %v446 = vunpack.c.l.bf16 %v398
      %v447 = vunpack.c.l.bf16 %v399
      %v448 = vunpack.c.l.bf16 %v400
      %v449 = vunpack.c.l.bf16 %v401
      %v450 = vunpack.c.l.bf16 %v402
      %v451 = vunpack.c.l.bf16 %v403
      %v452 = vunpack.c.l.bf16 %v404
      %v453 = vunpack.c.l.bf16 %v405
      %v454 = vunpack.c.l.bf16 %v406
      %v455 = vunpack.c.l.bf16 %v407
      %v456 = vunpack.c.l.bf16 %v408
      %v457 = vunpack.c.l.bf16 %v409
      %v458 = vunpack.c.l.bf16 %v410
      %v459 = vunpack.c.l.bf16 %v411
      %v460 = vunpack.c.l.bf16 %v412
      %v461 = vunpack.c.l.bf16 %v413
      %v462 = vunpack.c.l.bf16 %v414
      %v463 = vunpack.c.l.bf16 %v415
      %v464 = vunpack.c.l.bf16 %v416
      %v465 = vunpack.c.l.bf16 %v417
      %v466 = vunpack.c.l.bf16 %v418
      %v467 = vunpack.c.l.bf16 %v419
      %v468 = vunpack.c.l.bf16 %v420
      %v469 = vunpack.c.l.bf16 %v421
      %v470 = vunpack.c.l.bf16 %v422
      %v471 = vunpack.c.l.bf16 %v423
      %v472 = vunpack.c.l.bf16 %v424
      %v474 = vlaneseq
      %v475 = vshrl.u32 %v474, 7
      %v476 = vsub.s32 0, %v475
      %v477 = vrot.slane %v374, %v476
      %v479 = vmul.f32 %v425, %v477
      %v480 = vmul.f32 %v426, %v477
      %v481 = vmul.f32 %v427, %v477
      %v482 = vmul.f32 %v428, %v477
      %v483 = vmul.f32 %v429, %v477
      %v484 = vmul.f32 %v430, %v477
      %v485 = vmul.f32 %v431, %v477
      %v486 = vmul.f32 %v432, %v477
      %v487 = vmul.f32 %v433, %v477
      %v488 = vmul.f32 %v434, %v477
      %v489 = vmul.f32 %v435, %v477
      %v490 = vmul.f32 %v436, %v477
      %v491 = vmul.f32 %v437, %v477
      %v492 = vmul.f32 %v438, %v477
      %v493 = vmul.f32 %v439, %v477
      %v494 = vmul.f32 %v440, %v477
      %v495 = vmul.f32 %v441, %v477
      %v496 = vmul.f32 %v442, %v477
      %v497 = vmul.f32 %v443, %v477
      %v498 = vmul.f32 %v444, %v477
      %v499 = vmul.f32 %v445, %v477
      %v500 = vmul.f32 %v446, %v477
      %v501 = vmul.f32 %v447, %v477
      %v502 = vmul.f32 %v448, %v477
      %v503 = vmul.f32 %v449, %v477
      %v504 = vmul.f32 %v450, %v477
      %v505 = vmul.f32 %v451, %v477
      %v506 = vmul.f32 %v452, %v477
      %v507 = vmul.f32 %v453, %v477
      %v508 = vmul.f32 %v454, %v477
      %v509 = vmul.f32 %v455, %v477
      %v510 = vmul.f32 %v456, %v477
      %v511 = vmul.f32 %v457, %v477
      %v512 = vmul.f32 %v458, %v477
      %v513 = vmul.f32 %v459, %v477
      %v514 = vmul.f32 %v460, %v477
      %v515 = vmul.f32 %v461, %v477
      %v516 = vmul.f32 %v462, %v477
      %v517 = vmul.f32 %v463, %v477
      %v518 = vmul.f32 %v464, %v477
      %v519 = vmul.f32 %v465, %v477
      %v520 = vmul.f32 %v466, %v477
      %v521 = vmul.f32 %v467, %v477
      %v522 = vmul.f32 %v468, %v477
      %v523 = vmul.f32 %v469, %v477
      %v524 = vmul.f32 %v470, %v477
      %v525 = vmul.f32 %v471, %v477
      %v526 = vmul.f32 %v472, %v477
      %v528 = vlaneseq
      %v529 = vshrl.u32 %v528, 7
      %v530 = vsub.s32 0, %v529
      %v531 = vrot.slane %v376, %v530
      %v533 = vadd.f32 %v479, %v531
      %v534 = vadd.f32 %v480, %v531
      %v535 = vadd.f32 %v481, %v531
      %v536 = vadd.f32 %v482, %v531
      %v537 = vadd.f32 %v483, %v531
      %v538 = vadd.f32 %v484, %v531
      %v539 = vadd.f32 %v485, %v531
      %v540 = vadd.f32 %v486, %v531
      %v541 = vadd.f32 %v487, %v531
      %v542 = vadd.f32 %v488, %v531
      %v543 = vadd.f32 %v489, %v531
      %v544 = vadd.f32 %v490, %v531
      %v545 = vadd.f32 %v491, %v531
      %v546 = vadd.f32 %v492, %v531
      %v547 = vadd.f32 %v493, %v531
      %v548 = vadd.f32 %v494, %v531
      %v549 = vadd.f32 %v495, %v531
      %v550 = vadd.f32 %v496, %v531
      %v551 = vadd.f32 %v497, %v531
      %v552 = vadd.f32 %v498, %v531
      %v553 = vadd.f32 %v499, %v531
      %v554 = vadd.f32 %v500, %v531
      %v555 = vadd.f32 %v501, %v531
      %v556 = vadd.f32 %v502, %v531
      %v557 = vadd.f32 %v503, %v531
      %v558 = vadd.f32 %v504, %v531
      %v559 = vadd.f32 %v505, %v531
      %v560 = vadd.f32 %v506, %v531
      %v561 = vadd.f32 %v507, %v531
      %v562 = vadd.f32 %v508, %v531
      %v563 = vadd.f32 %v509, %v531
      %v564 = vadd.f32 %v510, %v531
      %v565 = vadd.f32 %v511, %v531
      %v566 = vadd.f32 %v512, %v531
      %v567 = vadd.f32 %v513, %v531
      %v568 = vadd.f32 %v514, %v531
      %v569 = vadd.f32 %v515, %v531
      %v570 = vadd.f32 %v516, %v531
      %v571 = vadd.f32 %v517, %v531
      %v572 = vadd.f32 %v518, %v531
      %v573 = vadd.f32 %v519, %v531
      %v574 = vadd.f32 %v520, %v531
      %v575 = vadd.f32 %v521, %v531
      %v576 = vadd.f32 %v522, %v531
      %v577 = vadd.f32 %v523, %v531
      %v578 = vadd.f32 %v524, %v531
      %v579 = vadd.f32 %v525, %v531
      %v580 = vadd.f32 %v526, %v531
      %v581 = vmax.f32 %v533, 0.0
      %v582 = vmax.f32 %v534, 0.0
      %v583 = vmax.f32 %v535, 0.0
      %v584 = vmax.f32 %v536, 0.0
      %v585 = vmax.f32 %v537, 0.0
      %v586 = vmax.f32 %v538, 0.0
      %v587 = vmax.f32 %v539, 0.0
      %v588 = vmax.f32 %v540, 0.0
      %v589 = vmax.f32 %v541, 0.0
      %v590 = vmax.f32 %v542, 0.0
      %v591 = vmax.f32 %v543, 0.0
      %v592 = vmax.f32 %v544, 0.0
      %v593 = vmax.f32 %v545, 0.0
      %v594 = vmax.f32 %v546, 0.0
      %v595 = vmax.f32 %v547, 0.0
      %v596 = vmax.f32 %v548, 0.0
      %v597 = vmax.f32 %v549, 0.0
      %v598 = vmax.f32 %v550, 0.0
      %v599 = vmax.f32 %v551, 0.0
      %v600 = vmax.f32 %v552, 0.0
      %v601 = vmax.f32 %v553, 0.0
      %v602 = vmax.f32 %v554, 0.0
      %v603 = vmax.f32 %v555, 0.0
      %v604 = vmax.f32 %v556, 0.0
      %v605 = vmax.f32 %v557, 0.0
      %v606 = vmax.f32 %v558, 0.0
      %v607 = vmax.f32 %v559, 0.0
      %v608 = vmax.f32 %v560, 0.0
      %v609 = vmax.f32 %v561, 0.0
      %v610 = vmax.f32 %v562, 0.0
      %v611 = vmax.f32 %v563, 0.0
      %v612 = vmax.f32 %v564, 0.0
      %v613 = vmax.f32 %v565, 0.0
      %v614 = vmax.f32 %v566, 0.0
      %v615 = vmax.f32 %v567, 0.0
      %v616 = vmax.f32 %v568, 0.0
      %v617 = vmax.f32 %v569, 0.0
      %v618 = vmax.f32 %v570, 0.0
      %v619 = vmax.f32 %v571, 0.0
      %v620 = vmax.f32 %v572, 0.0
      %v621 = vmax.f32 %v573, 0.0
      %v622 = vmax.f32 %v574, 0.0
      %v623 = vmax.f32 %v575, 0.0
      %v624 = vmax.f32 %v576, 0.0
      %v625 = vmax.f32 %v577, 0.0
      %v626 = vmax.f32 %v578, 0.0
      %v627 = vmax.f32 %v579, 0.0
      %v628 = vmax.f32 %v580, 0.0
      %630 = vset.pattern.permute.xlu0 0
      %631 = vperm.xlu0 %630, %v291
      %v632 = vpop.permute.xlu0 %631
      %635 = vset.pattern.permute.xlu0 0
      %636 = vperm.xlu0 %635, %v292
      %v637 = vpop.permute.xlu0 %636
      %640 = vset.pattern.permute.xlu0 0
      %641 = vperm.xlu0 %640, %v293
      %v642 = vpop.permute.xlu0 %641
      %645 = vset.pattern.permute.xlu0 0
      %646 = vperm.xlu0 %645, %v294
      %v647 = vpop.permute.xlu0 %646
      %650 = vset.pattern.permute.xlu0 0
      %651 = vperm.xlu0 %650, %v295
      %v652 = vpop.permute.xlu0 %651
      %655 = vset.pattern.permute.xlu0 0
      %656 = vperm.xlu0 %655, %v296
      %v657 = vpop.permute.xlu0 %656
      %660 = vset.pattern.permute.xlu0 0
      %661 = vperm.xlu0 %660, %v297
      %v662 = vpop.permute.xlu0 %661
      %665 = vset.pattern.permute.xlu0 0
      %666 = vperm.xlu0 %665, %v298
      %v667 = vpop.permute.xlu0 %666
      %670 = vset.pattern.permute.xlu0 0
      %671 = vperm.xlu0 %670, %v299
      %v672 = vpop.permute.xlu0 %671
      %675 = vset.pattern.permute.xlu0 0
      %676 = vperm.xlu0 %675, %v300
      %v677 = vpop.permute.xlu0 %676
      %680 = vset.pattern.permute.xlu0 0
      %681 = vperm.xlu0 %680, %v301
      %v682 = vpop.permute.xlu0 %681
      %685 = vset.pattern.permute.xlu0 0
      %686 = vperm.xlu0 %685, %v302
      %v687 = vpop.permute.xlu0 %686
      %690 = vset.pattern.permute.xlu0 0
      %691 = vperm.xlu0 %690, %v303
      %v692 = vpop.permute.xlu0 %691
      %695 = vset.pattern.permute.xlu0 0
      %696 = vperm.xlu0 %695, %v304
      %v697 = vpop.permute.xlu0 %696
      %700 = vset.pattern.permute.xlu0 0
      %701 = vperm.xlu0 %700, %v305
      %v702 = vpop.permute.xlu0 %701
      %705 = vset.pattern.permute.xlu0 0
      %706 = vperm.xlu0 %705, %v306
      %v707 = vpop.permute.xlu0 %706
      %710 = vset.pattern.permute.xlu0 0
      %711 = vperm.xlu0 %710, %v307
      %v712 = vpop.permute.xlu0 %711
      %715 = vset.pattern.permute.xlu0 0
      %716 = vperm.xlu0 %715, %v308
      %v717 = vpop.permute.xlu0 %716
      %720 = vset.pattern.permute.xlu0 0
      %721 = vperm.xlu0 %720, %v309
      %v722 = vpop.permute.xlu0 %721
      %725 = vset.pattern.permute.xlu0 0
      %726 = vperm.xlu0 %725, %v310
      %v727 = vpop.permute.xlu0 %726
      %730 = vset.pattern.permute.xlu0 0
      %731 = vperm.xlu0 %730, %v311
      %v732 = vpop.permute.xlu0 %731
      %735 = vset.pattern.permute.xlu0 0
      %736 = vperm.xlu0 %735, %v312
      %v737 = vpop.permute.xlu0 %736
      %740 = vset.pattern.permute.xlu0 0
      %741 = vperm.xlu0 %740, %v313
      %v742 = vpop.permute.xlu0 %741
      %745 = vset.pattern.permute.xlu0 0
      %746 = vperm.xlu0 %745, %v314
      %v747 = vpop.permute.xlu0 %746
      %750 = vset.pattern.permute.xlu0 0
      %751 = vperm.xlu0 %750, %v315
      %v752 = vpop.permute.xlu0 %751
      %755 = vset.pattern.permute.xlu0 0
      %756 = vperm.xlu0 %755, %v316
      %v757 = vpop.permute.xlu0 %756
      %760 = vset.pattern.permute.xlu0 0
      %761 = vperm.xlu0 %760, %v317
      %v762 = vpop.permute.xlu0 %761
      %765 = vset.pattern.permute.xlu0 0
      %766 = vperm.xlu0 %765, %v318
      %v767 = vpop.permute.xlu0 %766
      %770 = vset.pattern.permute.xlu0 0
      %771 = vperm.xlu0 %770, %v319
      %v772 = vpop.permute.xlu0 %771
      %775 = vset.pattern.permute.xlu0 0
      %776 = vperm.xlu0 %775, %v320
      %v777 = vpop.permute.xlu0 %776
      %780 = vset.pattern.permute.xlu0 0
      %781 = vperm.xlu0 %780, %v321
      %v782 = vpop.permute.xlu0 %781
      %785 = vset.pattern.permute.xlu0 0
      %786 = vperm.xlu0 %785, %v322
      %v787 = vpop.permute.xlu0 %786
      %790 = vset.pattern.permute.xlu0 0
      %791 = vperm.xlu0 %790, %v323
      %v792 = vpop.permute.xlu0 %791
      %795 = vset.pattern.permute.xlu0 0
      %796 = vperm.xlu0 %795, %v324
      %v797 = vpop.permute.xlu0 %796
      %800 = vset.pattern.permute.xlu0 0
      %801 = vperm.xlu0 %800, %v325
      %v802 = vpop.permute.xlu0 %801
      %805 = vset.pattern.permute.xlu0 0
      %806 = vperm.xlu0 %805, %v326
      %v807 = vpop.permute.xlu0 %806
      %810 = vset.pattern.permute.xlu0 0
      %811 = vperm.xlu0 %810, %v327
      %v812 = vpop.permute.xlu0 %811
      %815 = vset.pattern.permute.xlu0 0
      %816 = vperm.xlu0 %815, %v328
      %v817 = vpop.permute.xlu0 %816
      %820 = vset.pattern.permute.xlu0 0
      %821 = vperm.xlu0 %820, %v329
      %v822 = vpop.permute.xlu0 %821
      %825 = vset.pattern.permute.xlu0 0
      %826 = vperm.xlu0 %825, %v330
      %v827 = vpop.permute.xlu0 %826
      %830 = vset.pattern.permute.xlu0 0
      %831 = vperm.xlu0 %830, %v331
      %v832 = vpop.permute.xlu0 %831
      %835 = vset.pattern.permute.xlu0 0
      %836 = vperm.xlu0 %835, %v332
      %v837 = vpop.permute.xlu0 %836
      %840 = vset.pattern.permute.xlu0 0
      %841 = vperm.xlu0 %840, %v333
      %v842 = vpop.permute.xlu0 %841
      %845 = vset.pattern.permute.xlu0 0
      %846 = vperm.xlu0 %845, %v334
      %v847 = vpop.permute.xlu0 %846
      %850 = vset.pattern.permute.xlu0 0
      %851 = vperm.xlu0 %850, %v335
      %v852 = vpop.permute.xlu0 %851
      %855 = vset.pattern.permute.xlu0 0
      %856 = vperm.xlu0 %855, %v336
      %v857 = vpop.permute.xlu0 %856
      %860 = vset.pattern.permute.xlu0 0
      %861 = vperm.xlu0 %860, %v337
      %v862 = vpop.permute.xlu0 %861
      %865 = vset.pattern.permute.xlu0 0
      %866 = vperm.xlu0 %865, %v338
      %v867 = vpop.permute.xlu0 %866
      %v869 = vmul.f32 %v581, %v632
      %v870 = vmul.f32 %v582, %v637
      %v871 = vmul.f32 %v583, %v642
      %v872 = vmul.f32 %v584, %v647
      %v873 = vmul.f32 %v585, %v652
      %v874 = vmul.f32 %v586, %v657
      %v875 = vmul.f32 %v587, %v662
      %v876 = vmul.f32 %v588, %v667
      %v877 = vmul.f32 %v589, %v672
      %v878 = vmul.f32 %v590, %v677
      %v879 = vmul.f32 %v591, %v682
      %v880 = vmul.f32 %v592, %v687
      %v881 = vmul.f32 %v593, %v692
      %v882 = vmul.f32 %v594, %v697
      %v883 = vmul.f32 %v595, %v702
      %v884 = vmul.f32 %v596, %v707
      %v885 = vmul.f32 %v597, %v712
      %v886 = vmul.f32 %v598, %v717
      %v887 = vmul.f32 %v599, %v722
      %v888 = vmul.f32 %v600, %v727
      %v889 = vmul.f32 %v601, %v732
      %v890 = vmul.f32 %v602, %v737
      %v891 = vmul.f32 %v603, %v742
      %v892 = vmul.f32 %v604, %v747
      %v893 = vmul.f32 %v605, %v752
      %v894 = vmul.f32 %v606, %v757
      %v895 = vmul.f32 %v607, %v762
      %v896 = vmul.f32 %v608, %v767
      %v897 = vmul.f32 %v609, %v772
      %v898 = vmul.f32 %v610, %v777
      %v899 = vmul.f32 %v611, %v782
      %v900 = vmul.f32 %v612, %v787
      %v901 = vmul.f32 %v613, %v792
      %v902 = vmul.f32 %v614, %v797
      %v903 = vmul.f32 %v615, %v802
      %v904 = vmul.f32 %v616, %v807
      %v905 = vmul.f32 %v617, %v812
      %v906 = vmul.f32 %v618, %v817
      %v907 = vmul.f32 %v619, %v822
      %v908 = vmul.f32 %v620, %v827
      %v909 = vmul.f32 %v621, %v832
      %v910 = vmul.f32 %v622, %v837
      %v911 = vmul.f32 %v623, %v842
      %v912 = vmul.f32 %v624, %v847
      %v913 = vmul.f32 %v625, %v852
      %v914 = vmul.f32 %v626, %v857
      %v915 = vmul.f32 %v627, %v862
      %v916 = vmul.f32 %v628, %v867
      %vm917 = vcmask 64512
      %918 = vst.msk [vmem:[#allocation2] sm:$0xff] %vm917, 0.0
      %919 = vst.msk [vmem:[#allocation2 + $0x8] sm:$0xff] %vm917, 0.0
      %920 = vst.msk [vmem:[#allocation2 + $0x10] sm:$0xff] %vm917, 0.0
      %921 = vst.msk [vmem:[#allocation2 + $0x18] sm:$0xff] %vm917, 0.0
      %922 = vst.msk [vmem:[#allocation2 + $0x1a0] sm:$0xff] %vm917, 0.0
      %923 = vst.msk [vmem:[#allocation2 + $0x1a8] sm:$0xff] %vm917, 0.0
      %924 = vst.msk [vmem:[#allocation2 + $0x1b0] sm:$0xff] %vm917, 0.0
      %925 = vst.msk [vmem:[#allocation2 + $0x1b8] sm:$0xff] %vm917, 0.0
      %926 = vst.msk [vmem:[#allocation2 + $0x20] sm:$0xff] %vm917, %v869
      %927 = vst.msk [vmem:[#allocation2 + $0x28] sm:$0xff] %vm917, %v870
      %928 = vst.msk [vmem:[#allocation2 + $0x30] sm:$0xff] %vm917, %v871
      %929 = vst.msk [vmem:[#allocation2 + $0x38] sm:$0xff] %vm917, %v872
      %930 = vst.msk [vmem:[#allocation2 + $0x40] sm:$0xff] %vm917, %v873
      %931 = vst.msk [vmem:[#allocation2 + $0x48] sm:$0xff] %vm917, %v874
      %932 = vst.msk [vmem:[#allocation2 + $0x50] sm:$0xff] %vm917, %v875
      %933 = vst.msk [vmem:[#allocation2 + $0x58] sm:$0xff] %vm917, %v876
      %934 = vst.msk [vmem:[#allocation2 + $0x60] sm:$0xff] %vm917, %v877
      %935 = vst.msk [vmem:[#allocation2 + $0x68] sm:$0xff] %vm917, %v878
      %936 = vst.msk [vmem:[#allocation2 + $0x70] sm:$0xff] %vm917, %v879
      %937 = vst.msk [vmem:[#allocation2 + $0x78] sm:$0xff] %vm917, %v880
      %938 = vst.msk [vmem:[#allocation2 + $0x80] sm:$0xff] %vm917, %v881
      %939 = vst.msk [vmem:[#allocation2 + $0x88] sm:$0xff] %vm917, %v882
      %940 = vst.msk [vmem:[#allocation2 + $0x90] sm:$0xff] %vm917, %v883
      %941 = vst.msk [vmem:[#allocation2 + $0x98] sm:$0xff] %vm917, %v884
      %942 = vst.msk [vmem:[#allocation2 + $0xa0] sm:$0xff] %vm917, %v885
      %943 = vst.msk [vmem:[#allocation2 + $0xa8] sm:$0xff] %vm917, %v886
      %944 = vst.msk [vmem:[#allocation2 + $0xb0] sm:$0xff] %vm917, %v887
      %945 = vst.msk [vmem:[#allocation2 + $0xb8] sm:$0xff] %vm917, %v888
      %946 = vst.msk [vmem:[#allocation2 + $0xc0] sm:$0xff] %vm917, %v889
      %947 = vst.msk [vmem:[#allocation2 + $0xc8] sm:$0xff] %vm917, %v890
      %948 = vst.msk [vmem:[#allocation2 + $0xd0] sm:$0xff] %vm917, %v891
      %949 = vst.msk [vmem:[#allocation2 + $0xd8] sm:$0xff] %vm917, %v892
      %950 = vst.msk [vmem:[#allocation2 + $0xe0] sm:$0xff] %vm917, %v893
      %951 = vst.msk [vmem:[#allocation2 + $0xe8] sm:$0xff] %vm917, %v894
      %952 = vst.msk [vmem:[#allocation2 + $0xf0] sm:$0xff] %vm917, %v895
      %953 = vst.msk [vmem:[#allocation2 + $0xf8] sm:$0xff] %vm917, %v896
      %954 = vst.msk [vmem:[#allocation2 + $0x100] sm:$0xff] %vm917, %v897
      %955 = vst.msk [vmem:[#allocation2 + $0x108] sm:$0xff] %vm917, %v898
      %956 = vst.msk [vmem:[#allocation2 + $0x110] sm:$0xff] %vm917, %v899
      %957 = vst.msk [vmem:[#allocation2 + $0x118] sm:$0xff] %vm917, %v900
      %958 = vst.msk [vmem:[#allocation2 + $0x120] sm:$0xff] %vm917, %v901
      %959 = vst.msk [vmem:[#allocation2 + $0x128] sm:$0xff] %vm917, %v902
      %960 = vst.msk [vmem:[#allocation2 + $0x130] sm:$0xff] %vm917, %v903
      %961 = vst.msk [vmem:[#allocation2 + $0x138] sm:$0xff] %vm917, %v904
      %962 = vst.msk [vmem:[#allocation2 + $0x140] sm:$0xff] %vm917, %v905
      %963 = vst.msk [vmem:[#allocation2 + $0x148] sm:$0xff] %vm917, %v906
      %964 = vst.msk [vmem:[#allocation2 + $0x150] sm:$0xff] %vm917, %v907
      %965 = vst.msk [vmem:[#allocation2 + $0x158] sm:$0xff] %vm917, %v908
      %966 = vst.msk [vmem:[#allocation2 + $0x160] sm:$0xff] %vm917, %v909
      %967 = vst.msk [vmem:[#allocation2 + $0x168] sm:$0xff] %vm917, %v910
      %968 = vst.msk [vmem:[#allocation2 + $0x170] sm:$0xff] %vm917, %v911
      %969 = vst.msk [vmem:[#allocation2 + $0x178] sm:$0xff] %vm917, %v912
      %970 = vst.msk [vmem:[#allocation2 + $0x180] sm:$0xff] %vm917, %v913
      %971 = vst.msk [vmem:[#allocation2 + $0x188] sm:$0xff] %vm917, %v914
      %972 = vst.msk [vmem:[#allocation2 + $0x190] sm:$0xff] %vm917, %v915
      %973 = vst.msk [vmem:[#allocation2 + $0x198] sm:$0xff] %vm917, %v916
      %v974 = vld [vmem:[#allocation2 + $0x7] sm:$0xff]
      %v975 = vld [vmem:[#allocation2 + $0xf] sm:$0xff]
      %v976 = vld [vmem:[#allocation2 + $0x17] sm:$0xff]
      %v977 = vld [vmem:[#allocation2 + $0x1f] sm:$0xff]
      %v978 = vld [vmem:[#allocation2 + $0x27] sm:$0xff]
      %v979 = vld [vmem:[#allocation2 + $0x2f] sm:$0xff]
      %v980 = vld [vmem:[#allocation2 + $0x37] sm:$0xff]
      %v981 = vld [vmem:[#allocation2 + $0x3f] sm:$0xff]
      %v982 = vld [vmem:[#allocation2 + $0x47] sm:$0xff]
      %v983 = vld [vmem:[#allocation2 + $0x4f] sm:$0xff]
      %v984 = vld [vmem:[#allocation2 + $0x57] sm:$0xff]
      %v985 = vld [vmem:[#allocation2 + $0x5f] sm:$0xff]
      %v986 = vld [vmem:[#allocation2 + $0x67] sm:$0xff]
      %v987 = vld [vmem:[#allocation2 + $0x6f] sm:$0xff]
      %v988 = vld [vmem:[#allocation2 + $0x77] sm:$0xff]
      %v989 = vld [vmem:[#allocation2 + $0x7f] sm:$0xff]
      %v990 = vld [vmem:[#allocation2 + $0x87] sm:$0xff]
      %v991 = vld [vmem:[#allocation2 + $0x8f] sm:$0xff]
      %v992 = vld [vmem:[#allocation2 + $0x97] sm:$0xff]
      %v993 = vld [vmem:[#allocation2 + $0x9f] sm:$0xff]
      %v994 = vld [vmem:[#allocation2 + $0xa7] sm:$0xff]
      %v995 = vld [vmem:[#allocation2 + $0xaf] sm:$0xff]
      %v996 = vld [vmem:[#allocation2 + $0xb7] sm:$0xff]
      %v997 = vld [vmem:[#allocation2 + $0xbf] sm:$0xff]
      %v998 = vld [vmem:[#allocation2 + $0xc7] sm:$0xff]
      %v999 = vld [vmem:[#allocation2 + $0xcf] sm:$0xff]
      %v1000 = vld [vmem:[#allocation2 + $0xd7] sm:$0xff]
      %v1001 = vld [vmem:[#allocation2 + $0xdf] sm:$0xff]
      %v1002 = vld [vmem:[#allocation2 + $0xe7] sm:$0xff]
      %v1003 = vld [vmem:[#allocation2 + $0xef] sm:$0xff]
      %v1004 = vld [vmem:[#allocation2 + $0xf7] sm:$0xff]
      %v1005 = vld [vmem:[#allocation2 + $0xff] sm:$0xff]
      %v1006 = vld [vmem:[#allocation2 + $0x107] sm:$0xff]
      %v1007 = vld [vmem:[#allocation2 + $0x10f] sm:$0xff]
      %v1008 = vld [vmem:[#allocation2 + $0x117] sm:$0xff]
      %v1009 = vld [vmem:[#allocation2 + $0x11f] sm:$0xff]
      %v1010 = vld [vmem:[#allocation2 + $0x127] sm:$0xff]
      %v1011 = vld [vmem:[#allocation2 + $0x12f] sm:$0xff]
      %v1012 = vld [vmem:[#allocation2 + $0x137] sm:$0xff]
      %v1013 = vld [vmem:[#allocation2 + $0x13f] sm:$0xff]
      %v1014 = vld [vmem:[#allocation2 + $0x147] sm:$0xff]
      %v1015 = vld [vmem:[#allocation2 + $0x14f] sm:$0xff]
      %v1016 = vld [vmem:[#allocation2 + $0x157] sm:$0xff]
      %v1017 = vld [vmem:[#allocation2 + $0x15f] sm:$0xff]
      %v1018 = vld [vmem:[#allocation2 + $0x167] sm:$0xff]
      %v1019 = vld [vmem:[#allocation2 + $0x16f] sm:$0xff]
      %v1020 = vld [vmem:[#allocation2 + $0x177] sm:$0xff]
      %v1021 = vld [vmem:[#allocation2 + $0x17f] sm:$0xff]
      %v1022 = vpack.c.bf16 %v975, %v974
      %v1023 = vpack.c.bf16 %v977, %v976
      %v1024 = vpack.c.bf16 %v979, %v978
      %v1025 = vpack.c.bf16 %v981, %v980
      %v1026 = vpack.c.bf16 %v983, %v982
      %v1027 = vpack.c.bf16 %v985, %v984
      %v1028 = vpack.c.bf16 %v987, %v986
      %v1029 = vpack.c.bf16 %v989, %v988
      %v1030 = vpack.c.bf16 %v991, %v990
      %v1031 = vpack.c.bf16 %v993, %v992
      %v1032 = vpack.c.bf16 %v995, %v994
      %v1033 = vpack.c.bf16 %v997, %v996
      %v1034 = vpack.c.bf16 %v999, %v998
      %v1035 = vpack.c.bf16 %v1001, %v1000
      %v1036 = vpack.c.bf16 %v1003, %v1002
      %v1037 = vpack.c.bf16 %v1005, %v1004
      %v1038 = vpack.c.bf16 %v1007, %v1006
      %v1039 = vpack.c.bf16 %v1009, %v1008
      %v1040 = vpack.c.bf16 %v1011, %v1010
      %v1041 = vpack.c.bf16 %v1013, %v1012
      %v1042 = vpack.c.bf16 %v1015, %v1014
      %v1043 = vpack.c.bf16 %v1017, %v1016
      %v1044 = vpack.c.bf16 %v1019, %v1018
      %v1045 = vpack.c.bf16 %v1021, %v1020
      %v1046 = vld [vmem:[%s4] sm:$0xf]
      %v1047 = vld [vmem:[#allocation2 + $0x8] sm:$0xff]
      %v1048 = vld [vmem:[#allocation2 + $0x10] sm:$0xff]
      %v1049 = vld [vmem:[#allocation2 + $0x18] sm:$0xff]
      %v1050 = vld [vmem:[#allocation2 + $0x20] sm:$0xff]
      %v1051 = vld [vmem:[#allocation2 + $0x28] sm:$0xff]
      %v1052 = vld [vmem:[#allocation2 + $0x30] sm:$0xff]
      %v1053 = vld [vmem:[#allocation2 + $0x38] sm:$0xff]
      %v1054 = vld [vmem:[#allocation2 + $0x40] sm:$0xff]
      %v1055 = vld [vmem:[#allocation2 + $0x48] sm:$0xff]
      %v1056 = vld [vmem:[#allocation2 + $0x50] sm:$0xff]
      %v1057 = vld [vmem:[#allocation2 + $0x58] sm:$0xff]
      %v1058 = vld [vmem:[#allocation2 + $0x60] sm:$0xff]
      %v1059 = vld [vmem:[#allocation2 + $0x68] sm:$0xff]
      %v1060 = vld [vmem:[#allocation2 + $0x70] sm:$0xff]
      %v1061 = vld [vmem:[#allocation2 + $0x78] sm:$0xff]
      %v1062 = vld [vmem:[#allocation2 + $0x80] sm:$0xff]
      %v1063 = vld [vmem:[#allocation2 + $0x88] sm:$0xff]
      %v1064 = vld [vmem:[#allocation2 + $0x90] sm:$0xff]
      %v1065 = vld [vmem:[#allocation2 + $0x98] sm:$0xff]
      %v1066 = vld [vmem:[#allocation2 + $0xa0] sm:$0xff]
      %v1067 = vld [vmem:[#allocation2 + $0xa8] sm:$0xff]
      %v1068 = vld [vmem:[#allocation2 + $0xb0] sm:$0xff]
      %v1069 = vld [vmem:[#allocation2 + $0xb8] sm:$0xff]
      %v1070 = vld [vmem:[#allocation2 + $0xc0] sm:$0xff]
      %v1071 = vld [vmem:[#allocation2 + $0xc8] sm:$0xff]
      %v1072 = vld [vmem:[#allocation2 + $0xd0] sm:$0xff]
      %v1073 = vld [vmem:[#allocation2 + $0xd8] sm:$0xff]
      %v1074 = vld [vmem:[#allocation2 + $0xe0] sm:$0xff]
      %v1075 = vld [vmem:[#allocation2 + $0xe8] sm:$0xff]
      %v1076 = vld [vmem:[#allocation2 + $0xf0] sm:$0xff]
      %v1077 = vld [vmem:[#allocation2 + $0xf8] sm:$0xff]
      %v1078 = vld [vmem:[#allocation2 + $0x100] sm:$0xff]
      %v1079 = vld [vmem:[#allocation2 + $0x108] sm:$0xff]
      %v1080 = vld [vmem:[#allocation2 + $0x110] sm:$0xff]
      %v1081 = vld [vmem:[#allocation2 + $0x118] sm:$0xff]
      %v1082 = vld [vmem:[#allocation2 + $0x120] sm:$0xff]
      %v1083 = vld [vmem:[#allocation2 + $0x128] sm:$0xff]
      %v1084 = vld [vmem:[#allocation2 + $0x130] sm:$0xff]
      %v1085 = vld [vmem:[#allocation2 + $0x138] sm:$0xff]
      %v1086 = vld [vmem:[#allocation2 + $0x140] sm:$0xff]
      %v1087 = vld [vmem:[#allocation2 + $0x148] sm:$0xff]
      %v1088 = vld [vmem:[#allocation2 + $0x150] sm:$0xff]
      %v1089 = vld [vmem:[#allocation2 + $0x158] sm:$0xff]
      %v1090 = vld [vmem:[#allocation2 + $0x160] sm:$0xff]
      %v1091 = vld [vmem:[#allocation2 + $0x168] sm:$0xff]
      %v1092 = vld [vmem:[#allocation2 + $0x170] sm:$0xff]
      %v1093 = vld [vmem:[#allocation2 + $0x178] sm:$0xff]
      %v1094 = vld [vmem:[#allocation2 + $0x180] sm:$0xff]
      %v1095 = vpack.c.bf16 %v1048, %v1047
      %v1096 = vpack.c.bf16 %v1050, %v1049
      %v1097 = vpack.c.bf16 %v1052, %v1051
      %v1098 = vpack.c.bf16 %v1054, %v1053
      %v1099 = vpack.c.bf16 %v1056, %v1055
      %v1100 = vpack.c.bf16 %v1058, %v1057
      %v1101 = vpack.c.bf16 %v1060, %v1059
      %v1102 = vpack.c.bf16 %v1062, %v1061
      %v1103 = vpack.c.bf16 %v1064, %v1063
      %v1104 = vpack.c.bf16 %v1066, %v1065
      %v1105 = vpack.c.bf16 %v1068, %v1067
      %v1106 = vpack.c.bf16 %v1070, %v1069
      %v1107 = vpack.c.bf16 %v1072, %v1071
      %v1108 = vpack.c.bf16 %v1074, %v1073
      %v1109 = vpack.c.bf16 %v1076, %v1075
      %v1110 = vpack.c.bf16 %v1078, %v1077
      %v1111 = vpack.c.bf16 %v1080, %v1079
      %v1112 = vpack.c.bf16 %v1082, %v1081
      %v1113 = vpack.c.bf16 %v1084, %v1083
      %v1114 = vpack.c.bf16 %v1086, %v1085
      %v1115 = vpack.c.bf16 %v1088, %v1087
      %v1116 = vpack.c.bf16 %v1090, %v1089
      %v1117 = vpack.c.bf16 %v1092, %v1091
      %v1118 = vpack.c.bf16 %v1094, %v1093
      %s1119 = scalar_lea.vmem %s4, 4
      %v1120 = vld [vmem:[%s1119] sm:$0xf]
      %v1122 = vsel %vm917, %v1095, 0
      %v1125 = vsel %vm917, %v1096, 0
      %v1128 = vsel %vm917, %v1097, 0
      %v1131 = vsel %vm917, %v1098, 0
      %v1134 = vsel %vm917, %v1099, 0
      %v1137 = vsel %vm917, %v1100, 0
      %v1140 = vsel %vm917, %v1101, 0
      %v1143 = vsel %vm917, %v1102, 0
      %v1146 = vsel %vm917, %v1103, 0
      %v1149 = vsel %vm917, %v1104, 0
      %v1152 = vsel %vm917, %v1105, 0
      %v1155 = vsel %vm917, %v1106, 0
      %v1158 = vsel %vm917, %v1107, 0
      %v1161 = vsel %vm917, %v1108, 0
      %v1164 = vsel %vm917, %v1109, 0
      %v1167 = vsel %vm917, %v1110, 0
      %v1170 = vsel %vm917, %v1111, 0
      %v1173 = vsel %vm917, %v1112, 0
      %v1176 = vsel %vm917, %v1113, 0
      %v1179 = vsel %vm917, %v1114, 0
      %v1182 = vsel %vm917, %v1115, 0
      %v1185 = vsel %vm917, %v1116, 0
      %v1188 = vsel %vm917, %v1117, 0
      %v1191 = vsel %vm917, %v1118, 0
      %vm1193 = vcmask 1043456
      %v1195 = vsel %vm1193, %v1120, 0
      %1197 = vmatprep.subr.bf16.mxu0 0
      %1198 = vmatpush1.bf16.msra.mxu0 %v1195
      %1199 = vmatprep.subr.bf16.mxu0 0
      %1200 = vmatpush1.bf16.msra.mxu0 0
      %1201 = vmatprep.subr.bf16.mxu0 0
      %1202 = vmatpush1.bf16.msra.mxu0 0
      %1203 = vmatprep.subr.bf16.mxu0 0
      %1204 = vmatpush1.bf16.msra.mxu0 0
      %1205 = vmatprep.subr.bf16.mxu0 0
      %1206 = vmatpush1.bf16.msra.mxu0 0
      %1207 = vmatprep.subr.bf16.mxu0 0
      %1208 = vmatpush1.bf16.msra.mxu0 0
      %1209 = vmatprep.subr.bf16.mxu0 0
      %1210 = vmatpush1.bf16.msra.mxu0 0
      %1211 = vmatprep.subr.bf16.mxu0 0
      %1212 = vmatpush1.bf16.msra.mxu0 0
      %1213 = vmatprep.subr.bf16.mxu0 0
      %1214 = vmatpush1.bf16.msra.mxu0 0
      %1215 = vmatprep.subr.bf16.mxu0 0
      %1216 = vmatpush1.bf16.msra.mxu0 0
      %1217 = vmatprep.subr.bf16.mxu0 0
      %1218 = vmatpush1.bf16.msra.mxu0 0
      %1219 = vmatprep.subr.bf16.mxu0 0
      %1220 = vmatpush1.bf16.msra.mxu0 0
      %1221 = vmatprep.subr.bf16.mxu0 0
      %1222 = vmatpush1.bf16.msra.mxu0 0
      %1223 = vmatprep.subr.bf16.mxu0 0
      %1224 = vmatpush1.bf16.msra.mxu0 0
      %1225 = vmatprep.subr.bf16.mxu0 0
      %1226 = vmatpush1.bf16.msra.mxu0 0
      %1227 = vmatprep.subr.bf16.mxu0 0
      %1228 = vmatpush1.bf16.msra.mxu0 0
      %1229 = vmatprep.mubr.bf16.mxu0 0
      %1230 = vmatmul.mubr.bf16.gmra.mrb[0].mxu0 %v1122
      %v1231 = vpop.f32.mrb[0].mxu0
      %v1232 = vadd.f32 0.0, %v1231
      %v1233 = vpop.f32.mrb[0].mxu0
      %v1234 = vpop.f32.mrb[0].mxu0
      %v1235 = vadd.f32 0.0, %v1234
      %v1236 = vpop.f32.mrb[0].mxu0
      %1237 = vmatprep.mubr.bf16.mxu0 0
      %1238 = vmatmul.mubr.bf16.gmra.mrb[0].mxu0 %v1125
      %v1239 = vpop.f32.mrb[0].mxu0
      %v1240 = vadd.f32 0.0, %v1239
      %v1241 = vpop.f32.mrb[0].mxu0
      %v1242 = vpop.f32.mrb[0].mxu0
      %v1243 = vadd.f32 0.0, %v1242
      %v1244 = vpop.f32.mrb[0].mxu0
      %1245 = vmatprep.mubr.bf16.mxu0 0
      %1246 = vmatmul.mubr.bf16.gmra.mrb[0].mxu0 %v1128
      %v1247 = vpop.f32.mrb[0].mxu0
      %v1248 = vadd.f32 0.0, %v1247
      %v1249 = vpop.f32.mrb[0].mxu0
      %v1250 = vpop.f32.mrb[0].mxu0
      %v1251 = vadd.f32 0.0, %v1250
      %v1252 = vpop.f32.mrb[0].mxu0
      %1253 = vmatprep.mubr.bf16.mxu0 0
      %1254 = vmatmul.mubr.bf16.gmra.mrb[0].mxu0 %v1131
      %v1255 = vpop.f32.mrb[0].mxu0
      %v1256 = vadd.f32 0.0, %v1255
      %v1257 = vpop.f32.mrb[0].mxu0
      %v1258 = vpop.f32.mrb[0].mxu0
      %v1259 = vadd.f32 0.0, %v1258
      %v1260 = vpop.f32.mrb[0].mxu0
      %1261 = vmatprep.mubr.bf16.mxu0 0
      %1262 = vmatmul.mubr.bf16.gmra.mrb[0].mxu0 %v1134
      %v1263 = vpop.f32.mrb[0].mxu0
      %v1264 = vadd.f32 0.0, %v1263
      %v1265 = vpop.f32.mrb[0].mxu0
      %v1266 = vpop.f32.mrb[0].mxu0
      %v1267 = vadd.f32 0.0, %v1266
      %v1268 = vpop.f32.mrb[0].mxu0
      %1269 = vmatprep.mubr.bf16.mxu0 0
      %1270 = vmatmul.mubr.bf16.gmra.mrb[0].mxu0 %v1137
      %v1271 = vpop.f32.mrb[0].mxu0
      %v1272 = vadd.f32 0.0, %v1271
      %v1273 = vpop.f32.mrb[0].mxu0
      %v1274 = vpop.f32.mrb[0].mxu0
      %v1275 = vadd.f32 0.0, %v1274
      %v1276 = vpop.f32.mrb[0].mxu0
      %1277 = vmatprep.mubr.bf16.mxu0 0
      %1278 = vmatmul.mubr.bf16.gmra.mrb[0].mxu0 %v1140
      %v1279 = vpop.f32.mrb[0].mxu0
      %v1280 = vadd.f32 0.0, %v1279
      %v1281 = vpop.f32.mrb[0].mxu0
      %v1282 = vpop.f32.mrb[0].mxu0
      %v1283 = vadd.f32 0.0, %v1282
      %v1284 = vpop.f32.mrb[0].mxu0
      %1285 = vmatprep.mubr.bf16.mxu0 0
      %1286 = vmatmul.mubr.bf16.gmra.mrb[0].mxu0 %v1143
      %v1287 = vpop.f32.mrb[0].mxu0
      %v1288 = vadd.f32 0.0, %v1287
      %v1289 = vpop.f32.mrb[0].mxu0
      %v1290 = vpop.f32.mrb[0].mxu0
      %v1291 = vadd.f32 0.0, %v1290
      %v1292 = vpop.f32.mrb[0].mxu0
      %1293 = vmatprep.mubr.bf16.mxu0 0
      %1294 = vmatmul.mubr.bf16.gmra.mrb[0].mxu0 %v1146
      %v1295 = vpop.f32.mrb[0].mxu0
      %v1296 = vadd.f32 0.0, %v1295
      %v1297 = vpop.f32.mrb[0].mxu0
      %v1298 = vpop.f32.mrb[0].mxu0
      %v1299 = vadd.f32 0.0, %v1298
      %v1300 = vpop.f32.mrb[0].mxu0
      %1301 = vmatprep.mubr.bf16.mxu0 0
      %1302 = vmatmul.mubr.bf16.gmra.mrb[0].mxu0 %v1149
      %v1303 = vpop.f32.mrb[0].mxu0
      %v1304 = vadd.f32 0.0, %v1303
      %v1305 = vpop.f32.mrb[0].mxu0
      %v1306 = vpop.f32.mrb[0].mxu0
      %v1307 = vadd.f32 0.0, %v1306
      %v1308 = vpop.f32.mrb[0].mxu0
      %1309 = vmatprep.mubr.bf16.mxu0 0
      %1310 = vmatmul.mubr.bf16.gmra.mrb[0].mxu0 %v1152
      %v1311 = vpop.f32.mrb[0].mxu0
      %v1312 = vadd.f32 0.0, %v1311
      %v1313 = vpop.f32.mrb[0].mxu0
      %v1314 = vpop.f32.mrb[0].mxu0
      %v1315 = vadd.f32 0.0, %v1314
      %v1316 = vpop.f32.mrb[0].mxu0
      %1317 = vmatprep.mubr.bf16.mxu0 0
      %1318 = vmatmul.mubr.bf16.gmra.mrb[0].mxu0 %v1155
      %v1319 = vpop.f32.mrb[0].mxu0
      %v1320 = vadd.f32 0.0, %v1319
      %v1321 = vpop.f32.mrb[0].mxu0
      %v1322 = vpop.f32.mrb[0].mxu0
      %v1323 = vadd.f32 0.0, %v1322
      %v1324 = vpop.f32.mrb[0].mxu0
      %1325 = vmatprep.mubr.bf16.mxu0 0
      %1326 = vmatmul.mubr.bf16.gmra.mrb[0].mxu0 %v1158
      %v1327 = vpop.f32.mrb[0].mxu0
      %v1328 = vadd.f32 0.0, %v1327
      %v1329 = vpop.f32.mrb[0].mxu0
      %v1330 = vpop.f32.mrb[0].mxu0
      %v1331 = vadd.f32 0.0, %v1330
      %v1332 = vpop.f32.mrb[0].mxu0
      %1333 = vmatprep.mubr.bf16.mxu0 0
      %1334 = vmatmul.mubr.bf16.gmra.mrb[0].mxu0 %v1161
      %v1335 = vpop.f32.mrb[0].mxu0
      %v1336 = vadd.f32 0.0, %v1335
      %v1337 = vpop.f32.mrb[0].mxu0
      %v1338 = vpop.f32.mrb[0].mxu0
      %v1339 = vadd.f32 0.0, %v1338
      %v1340 = vpop.f32.mrb[0].mxu0
      %1341 = vmatprep.mubr.bf16.mxu0 0
      %1342 = vmatmul.mubr.bf16.gmra.mrb[0].mxu0 %v1164
      %v1343 = vpop.f32.mrb[0].mxu0
      %v1344 = vadd.f32 0.0, %v1343
      %v1345 = vpop.f32.mrb[0].mxu0
      %v1346 = vpop.f32.mrb[0].mxu0
      %v1347 = vadd.f32 0.0, %v1346
      %v1348 = vpop.f32.mrb[0].mxu0
      %1349 = vmatprep.mubr.bf16.mxu0 0
      %1350 = vmatmul.mubr.bf16.gmra.mrb[0].mxu0 %v1167
      %v1351 = vpop.f32.mrb[0].mxu0
      %v1352 = vadd.f32 0.0, %v1351
      %v1353 = vpop.f32.mrb[0].mxu0
      %v1354 = vpop.f32.mrb[0].mxu0
      %v1355 = vadd.f32 0.0, %v1354
      %v1356 = vpop.f32.mrb[0].mxu0
      %1357 = vmatprep.mubr.bf16.mxu0 0
      %1358 = vmatmul.mubr.bf16.gmra.mrb[0].mxu0 %v1170
      %v1359 = vpop.f32.mrb[0].mxu0
      %v1360 = vadd.f32 0.0, %v1359
      %v1361 = vpop.f32.mrb[0].mxu0
      %v1362 = vpop.f32.mrb[0].mxu0
      %v1363 = vadd.f32 0.0, %v1362
      %v1364 = vpop.f32.mrb[0].mxu0
      %1365 = vmatprep.mubr.bf16.mxu0 0
      %1366 = vmatmul.mubr.bf16.gmra.mrb[0].mxu0 %v1173
      %v1367 = vpop.f32.mrb[0].mxu0
      %v1368 = vadd.f32 0.0, %v1367
      %v1369 = vpop.f32.mrb[0].mxu0
      %v1370 = vpop.f32.mrb[0].mxu0
      %v1371 = vadd.f32 0.0, %v1370
      %v1372 = vpop.f32.mrb[0].mxu0
      %1373 = vmatprep.mubr.bf16.mxu0 0
      %1374 = vmatmul.mubr.bf16.gmra.mrb[0].mxu0 %v1176
      %v1375 = vpop.f32.mrb[0].mxu0
      %v1376 = vadd.f32 0.0, %v1375
      %v1377 = vpop.f32.mrb[0].mxu0
      %v1378 = vpop.f32.mrb[0].mxu0
      %v1379 = vadd.f32 0.0, %v1378
      %v1380 = vpop.f32.mrb[0].mxu0
      %1381 = vmatprep.mubr.bf16.mxu0 0
      %1382 = vmatmul.mubr.bf16.gmra.mrb[0].mxu0 %v1179
      %v1383 = vpop.f32.mrb[0].mxu0
      %v1384 = vadd.f32 0.0, %v1383
      %v1385 = vpop.f32.mrb[0].mxu0
      %v1386 = vpop.f32.mrb[0].mxu0
      %v1387 = vadd.f32 0.0, %v1386
      %v1388 = vpop.f32.mrb[0].mxu0
      %1389 = vmatprep.mubr.bf16.mxu0 0
      %1390 = vmatmul.mubr.bf16.gmra.mrb[0].mxu0 %v1182
      %v1391 = vpop.f32.mrb[0].mxu0
      %v1392 = vadd.f32 0.0, %v1391
      %v1393 = vpop.f32.mrb[0].mxu0
      %v1394 = vpop.f32.mrb[0].mxu0
      %v1395 = vadd.f32 0.0, %v1394
      %v1396 = vpop.f32.mrb[0].mxu0
      %1397 = vmatprep.mubr.bf16.mxu0 0
      %1398 = vmatmul.mubr.bf16.gmra.mrb[0].mxu0 %v1185
      %v1399 = vpop.f32.mrb[0].mxu0
      %v1400 = vadd.f32 0.0, %v1399
      %v1401 = vpop.f32.mrb[0].mxu0
      %v1402 = vpop.f32.mrb[0].mxu0
      %v1403 = vadd.f32 0.0, %v1402
      %v1404 = vpop.f32.mrb[0].mxu0
      %1405 = vmatprep.mubr.bf16.mxu0 0
      %1406 = vmatmul.mubr.bf16.gmra.mrb[0].mxu0 %v1188
      %v1407 = vpop.f32.mrb[0].mxu0
      %v1408 = vadd.f32 0.0, %v1407
      %v1409 = vpop.f32.mrb[0].mxu0
      %v1410 = vpop.f32.mrb[0].mxu0
      %v1411 = vadd.f32 0.0, %v1410
      %v1412 = vpop.f32.mrb[0].mxu0
      %1413 = vmatprep.mubr.bf16.mxu0 0
      %1414 = vmatmul.mubr.bf16.gmra.mrb[0].mxu0 %v1191
      %v1415 = vpop.f32.mrb[0].mxu0
      %v1416 = vadd.f32 0.0, %v1415
      %v1417 = vpop.f32.mrb[0].mxu0
      %v1418 = vpop.f32.mrb[0].mxu0
      %v1419 = vadd.f32 0.0, %v1418
      %v1420 = vpop.f32.mrb[0].mxu0
      %1421 = vdwg.mxu0
      %v1423 = vsel %vm917, %v1022, 0
      %v1426 = vsel %vm917, %v1023, 0
      %v1429 = vsel %vm917, %v1024, 0
      %v1432 = vsel %vm917, %v1025, 0
      %v1435 = vsel %vm917, %v1026, 0
      %v1438 = vsel %vm917, %v1027, 0
      %v1441 = vsel %vm917, %v1028, 0
      %v1444 = vsel %vm917, %v1029, 0
      %v1447 = vsel %vm917, %v1030, 0
      %v1450 = vsel %vm917, %v1031, 0
      %v1453 = vsel %vm917, %v1032, 0
      %v1456 = vsel %vm917, %v1033, 0
      %v1459 = vsel %vm917, %v1034, 0
      %v1462 = vsel %vm917, %v1035, 0
      %v1465 = vsel %vm917, %v1036, 0
      %v1468 = vsel %vm917, %v1037, 0
      %v1471 = vsel %vm917, %v1038, 0
      %v1474 = vsel %vm917, %v1039, 0
      %v1477 = vsel %vm917, %v1040, 0
      %v1480 = vsel %vm917, %v1041, 0
      %v1483 = vsel %vm917, %v1042, 0
      %v1486 = vsel %vm917, %v1043, 0
      %v1489 = vsel %vm917, %v1044, 0
      %v1492 = vsel %vm917, %v1045, 0
      %v1495 = vsel %vm1193, %v1046, 0
      %1497 = vmatprep.subr.bf16.mxu0 0
      %1498 = vmatpush1.bf16.msra.mxu0 %v1495
      %1499 = vmatprep.subr.bf16.mxu0 0
      %1500 = vmatpush1.bf16.msra.mxu0 0
      %1501 = vmatprep.subr.bf16.mxu0 0
      %1502 = vmatpush1.bf16.msra.mxu0 0
      %1503 = vmatprep.subr.bf16.mxu0 0
      %1504 = vmatpush1.bf16.msra.mxu0 0
      %1505 = vmatprep.subr.bf16.mxu0 0
      %1506 = vmatpush1.bf16.msra.mxu0 0
      %1507 = vmatprep.subr.bf16.mxu0 0
      %1508 = vmatpush1.bf16.msra.mxu0 0
      %1509 = vmatprep.subr.bf16.mxu0 0
      %1510 = vmatpush1.bf16.msra.mxu0 0
      %1511 = vmatprep.subr.bf16.mxu0 0
      %1512 = vmatpush1.bf16.msra.mxu0 0
      %1513 = vmatprep.subr.bf16.mxu0 0
      %1514 = vmatpush1.bf16.msra.mxu0 0
      %1515 = vmatprep.subr.bf16.mxu0 0
      %1516 = vmatpush1.bf16.msra.mxu0 0
      %1517 = vmatprep.subr.bf16.mxu0 0
      %1518 = vmatpush1.bf16.msra.mxu0 0
      %1519 = vmatprep.subr.bf16.mxu0 0
      %1520 = vmatpush1.bf16.msra.mxu0 0
      %1521 = vmatprep.subr.bf16.mxu0 0
      %1522 = vmatpush1.bf16.msra.mxu0 0
      %1523 = vmatprep.subr.bf16.mxu0 0
      %1524 = vmatpush1.bf16.msra.mxu0 0
      %1525 = vmatprep.subr.bf16.mxu0 0
      %1526 = vmatpush1.bf16.msra.mxu0 0
      %1527 = vmatprep.subr.bf16.mxu0 0
      %1528 = vmatpush1.bf16.msra.mxu0 0
      %1529 = vmatprep.mubr.bf16.mxu0 0
      %1530 = vmatmul.mubr.bf16.gmra.mrb[0].mxu0 %v1423
      %v1531 = vpop.f32.mrb[0].mxu0
      %v1532 = vadd.f32 %v1232, %v1531
      %v1533 = vpop.f32.mrb[0].mxu0
      %v1534 = vpop.f32.mrb[0].mxu0
      %v1535 = vadd.f32 %v1235, %v1534
      %v1536 = vpop.f32.mrb[0].mxu0
      %1537 = vmatprep.mubr.bf16.mxu0 0
      %1538 = vmatmul.mubr.bf16.gmra.mrb[0].mxu0 %v1426
      %v1539 = vpop.f32.mrb[0].mxu0
      %v1540 = vadd.f32 %v1240, %v1539
      %v1541 = vpop.f32.mrb[0].mxu0
      %v1542 = vpop.f32.mrb[0].mxu0
      %v1543 = vadd.f32 %v1243, %v1542
      %v1544 = vpop.f32.mrb[0].mxu0
      %1545 = vmatprep.mubr.bf16.mxu0 0
      %1546 = vmatmul.mubr.bf16.gmra.mrb[0].mxu0 %v1429
      %v1547 = vpop.f32.mrb[0].mxu0
      %v1548 = vadd.f32 %v1248, %v1547
      %v1549 = vpop.f32.mrb[0].mxu0
      %v1550 = vpop.f32.mrb[0].mxu0
      %v1551 = vadd.f32 %v1251, %v1550
      %v1552 = vpop.f32.mrb[0].mxu0
      %1553 = vmatprep.mubr.bf16.mxu0 0
      %1554 = vmatmul.mubr.bf16.gmra.mrb[0].mxu0 %v1432
      %v1555 = vpop.f32.mrb[0].mxu0
      %v1556 = vadd.f32 %v1256, %v1555
      %v1557 = vpop.f32.mrb[0].mxu0
      %v1558 = vpop.f32.mrb[0].mxu0
      %v1559 = vadd.f32 %v1259, %v1558
      %v1560 = vpop.f32.mrb[0].mxu0
      %1561 = vmatprep.mubr.bf16.mxu0 0
      %1562 = vmatmul.mubr.bf16.gmra.mrb[0].mxu0 %v1435
      %v1563 = vpop.f32.mrb[0].mxu0
      %v1564 = vadd.f32 %v1264, %v1563
      %v1565 = vpop.f32.mrb[0].mxu0
      %v1566 = vpop.f32.mrb[0].mxu0
      %v1567 = vadd.f32 %v1267, %v1566
      %v1568 = vpop.f32.mrb[0].mxu0
      %1569 = vmatprep.mubr.bf16.mxu0 0
      %1570 = vmatmul.mubr.bf16.gmra.mrb[0].mxu0 %v1438
      %v1571 = vpop.f32.mrb[0].mxu0
      %v1572 = vadd.f32 %v1272, %v1571
      %v1573 = vpop.f32.mrb[0].mxu0
      %v1574 = vpop.f32.mrb[0].mxu0
      %v1575 = vadd.f32 %v1275, %v1574
      %v1576 = vpop.f32.mrb[0].mxu0
      %1577 = vmatprep.mubr.bf16.mxu0 0
      %1578 = vmatmul.mubr.bf16.gmra.mrb[0].mxu0 %v1441
      %v1579 = vpop.f32.mrb[0].mxu0
      %v1580 = vadd.f32 %v1280, %v1579
      %v1581 = vpop.f32.mrb[0].mxu0
      %v1582 = vpop.f32.mrb[0].mxu0
      %v1583 = vadd.f32 %v1283, %v1582
      %v1584 = vpop.f32.mrb[0].mxu0
      %1585 = vmatprep.mubr.bf16.mxu0 0
      %1586 = vmatmul.mubr.bf16.gmra.mrb[0].mxu0 %v1444
      %v1587 = vpop.f32.mrb[0].mxu0
      %v1588 = vadd.f32 %v1288, %v1587
      %v1589 = vpop.f32.mrb[0].mxu0
      %v1590 = vpop.f32.mrb[0].mxu0
      %v1591 = vadd.f32 %v1291, %v1590
      %v1592 = vpop.f32.mrb[0].mxu0
      %1593 = vmatprep.mubr.bf16.mxu0 0
      %1594 = vmatmul.mubr.bf16.gmra.mrb[0].mxu0 %v1447
      %v1595 = vpop.f32.mrb[0].mxu0
      %v1596 = vadd.f32 %v1296, %v1595
      %v1597 = vpop.f32.mrb[0].mxu0
      %v1598 = vpop.f32.mrb[0].mxu0
      %v1599 = vadd.f32 %v1299, %v1598
      %v1600 = vpop.f32.mrb[0].mxu0
      %1601 = vmatprep.mubr.bf16.mxu0 0
      %1602 = vmatmul.mubr.bf16.gmra.mrb[0].mxu0 %v1450
      %v1603 = vpop.f32.mrb[0].mxu0
      %v1604 = vadd.f32 %v1304, %v1603
      %v1605 = vpop.f32.mrb[0].mxu0
      %v1606 = vpop.f32.mrb[0].mxu0
      %v1607 = vadd.f32 %v1307, %v1606
      %v1608 = vpop.f32.mrb[0].mxu0
      %1609 = vmatprep.mubr.bf16.mxu0 0
      %1610 = vmatmul.mubr.bf16.gmra.mrb[0].mxu0 %v1453
      %v1611 = vpop.f32.mrb[0].mxu0
      %v1612 = vadd.f32 %v1312, %v1611
      %v1613 = vpop.f32.mrb[0].mxu0
      %v1614 = vpop.f32.mrb[0].mxu0
      %v1615 = vadd.f32 %v1315, %v1614
      %v1616 = vpop.f32.mrb[0].mxu0
      %1617 = vmatprep.mubr.bf16.mxu0 0
      %1618 = vmatmul.mubr.bf16.gmra.mrb[0].mxu0 %v1456
      %v1619 = vpop.f32.mrb[0].mxu0
      %v1620 = vadd.f32 %v1320, %v1619
      %v1621 = vpop.f32.mrb[0].mxu0
      %v1622 = vpop.f32.mrb[0].mxu0
      %v1623 = vadd.f32 %v1323, %v1622
      %v1624 = vpop.f32.mrb[0].mxu0
      %1625 = vmatprep.mubr.bf16.mxu0 0
      %1626 = vmatmul.mubr.bf16.gmra.mrb[0].mxu0 %v1459
      %v1627 = vpop.f32.mrb[0].mxu0
      %v1628 = vadd.f32 %v1328, %v1627
      %v1629 = vpop.f32.mrb[0].mxu0
      %v1630 = vpop.f32.mrb[0].mxu0
      %v1631 = vadd.f32 %v1331, %v1630
      %v1632 = vpop.f32.mrb[0].mxu0
      %1633 = vmatprep.mubr.bf16.mxu0 0
      %1634 = vmatmul.mubr.bf16.gmra.mrb[0].mxu0 %v1462
      %v1635 = vpop.f32.mrb[0].mxu0
      %v1636 = vadd.f32 %v1336, %v1635
      %v1637 = vpop.f32.mrb[0].mxu0
      %v1638 = vpop.f32.mrb[0].mxu0
      %v1639 = vadd.f32 %v1339, %v1638
      %v1640 = vpop.f32.mrb[0].mxu0
      %1641 = vmatprep.mubr.bf16.mxu0 0
      %1642 = vmatmul.mubr.bf16.gmra.mrb[0].mxu0 %v1465
      %v1643 = vpop.f32.mrb[0].mxu0
      %v1644 = vadd.f32 %v1344, %v1643
      %v1645 = vpop.f32.mrb[0].mxu0
      %v1646 = vpop.f32.mrb[0].mxu0
      %v1647 = vadd.f32 %v1347, %v1646
      %v1648 = vpop.f32.mrb[0].mxu0
      %1649 = vmatprep.mubr.bf16.mxu0 0
      %1650 = vmatmul.mubr.bf16.gmra.mrb[0].mxu0 %v1468
      %v1651 = vpop.f32.mrb[0].mxu0
      %v1652 = vadd.f32 %v1352, %v1651
      %v1653 = vpop.f32.mrb[0].mxu0
      %v1654 = vpop.f32.mrb[0].mxu0
      %v1655 = vadd.f32 %v1355, %v1654
      %v1656 = vpop.f32.mrb[0].mxu0
      %1657 = vmatprep.mubr.bf16.mxu0 0
      %1658 = vmatmul.mubr.bf16.gmra.mrb[0].mxu0 %v1471
      %v1659 = vpop.f32.mrb[0].mxu0
      %v1660 = vadd.f32 %v1360, %v1659
      %v1661 = vpop.f32.mrb[0].mxu0
      %v1662 = vpop.f32.mrb[0].mxu0
      %v1663 = vadd.f32 %v1363, %v1662
      %v1664 = vpop.f32.mrb[0].mxu0
      %1665 = vmatprep.mubr.bf16.mxu0 0
      %1666 = vmatmul.mubr.bf16.gmra.mrb[0].mxu0 %v1474
      %v1667 = vpop.f32.mrb[0].mxu0
      %v1668 = vadd.f32 %v1368, %v1667
      %v1669 = vpop.f32.mrb[0].mxu0
      %v1670 = vpop.f32.mrb[0].mxu0
      %v1671 = vadd.f32 %v1371, %v1670
      %v1672 = vpop.f32.mrb[0].mxu0
      %1673 = vmatprep.mubr.bf16.mxu0 0
      %1674 = vmatmul.mubr.bf16.gmra.mrb[0].mxu0 %v1477
      %v1675 = vpop.f32.mrb[0].mxu0
      %v1676 = vadd.f32 %v1376, %v1675
      %v1677 = vpop.f32.mrb[0].mxu0
      %v1678 = vpop.f32.mrb[0].mxu0
      %v1679 = vadd.f32 %v1379, %v1678
      %v1680 = vpop.f32.mrb[0].mxu0
      %1681 = vmatprep.mubr.bf16.mxu0 0
      %1682 = vmatmul.mubr.bf16.gmra.mrb[0].mxu0 %v1480
      %v1683 = vpop.f32.mrb[0].mxu0
      %v1684 = vadd.f32 %v1384, %v1683
      %v1685 = vpop.f32.mrb[0].mxu0
      %v1686 = vpop.f32.mrb[0].mxu0
      %v1687 = vadd.f32 %v1387, %v1686
      %v1688 = vpop.f32.mrb[0].mxu0
      %1689 = vmatprep.mubr.bf16.mxu0 0
      %1690 = vmatmul.mubr.bf16.gmra.mrb[0].mxu0 %v1483
      %v1691 = vpop.f32.mrb[0].mxu0
      %v1692 = vadd.f32 %v1392, %v1691
      %v1693 = vpop.f32.mrb[0].mxu0
      %v1694 = vpop.f32.mrb[0].mxu0
      %v1695 = vadd.f32 %v1395, %v1694
      %v1696 = vpop.f32.mrb[0].mxu0
      %1697 = vmatprep.mubr.bf16.mxu0 0
      %1698 = vmatmul.mubr.bf16.gmra.mrb[0].mxu0 %v1486
      %v1699 = vpop.f32.mrb[0].mxu0
      %v1700 = vadd.f32 %v1400, %v1699
      %v1701 = vpop.f32.mrb[0].mxu0
      %v1702 = vpop.f32.mrb[0].mxu0
      %v1703 = vadd.f32 %v1403, %v1702
      %v1704 = vpop.f32.mrb[0].mxu0
      %1705 = vmatprep.mubr.bf16.mxu0 0
      %1706 = vmatmul.mubr.bf16.gmra.mrb[0].mxu0 %v1489
      %v1707 = vpop.f32.mrb[0].mxu0
      %v1708 = vadd.f32 %v1408, %v1707
      %v1709 = vpop.f32.mrb[0].mxu0
      %v1710 = vpop.f32.mrb[0].mxu0
      %v1711 = vadd.f32 %v1411, %v1710
      %v1712 = vpop.f32.mrb[0].mxu0
      %1713 = vmatprep.mubr.bf16.mxu0 0
      %1714 = vmatmul.mubr.bf16.gmra.mrb[0].mxu0 %v1492
      %v1715 = vpop.f32.mrb[0].mxu0
      %v1716 = vadd.f32 %v1416, %v1715
      %v1717 = vpop.f32.mrb[0].mxu0
      %v1718 = vpop.f32.mrb[0].mxu0
      %v1719 = vadd.f32 %v1419, %v1718
      %v1720 = vpop.f32.mrb[0].mxu0
      %1721 = vdwg.mxu0
      %v1722 = vld [vmem:[#allocation2 + $0x9] sm:$0xff]
      %v1723 = vld [vmem:[#allocation2 + $0x11] sm:$0xff]
      %v1724 = vld [vmem:[#allocation2 + $0x19] sm:$0xff]
      %v1725 = vld [vmem:[#allocation2 + $0x21] sm:$0xff]
      %v1726 = vld [vmem:[#allocation2 + $0x29] sm:$0xff]
      %v1727 = vld [vmem:[#allocation2 + $0x31] sm:$0xff]
      %v1728 = vld [vmem:[#allocation2 + $0x39] sm:$0xff]
      %v1729 = vld [vmem:[#allocation2 + $0x41] sm:$0xff]
      %v1730 = vld [vmem:[#allocation2 + $0x49] sm:$0xff]
      %v1731 = vld [vmem:[#allocation2 + $0x51] sm:$0xff]
      %v1732 = vld [vmem:[#allocation2 + $0x59] sm:$0xff]
      %v1733 = vld [vmem:[#allocation2 + $0x61] sm:$0xff]
      %v1734 = vld [vmem:[#allocation2 + $0x69] sm:$0xff]
      %v1735 = vld [vmem:[#allocation2 + $0x71] sm:$0xff]
      %v1736 = vld [vmem:[#allocation2 + $0x79] sm:$0xff]
      %v1737 = vld [vmem:[#allocation2 + $0x81] sm:$0xff]
      %v1738 = vld [vmem:[#allocation2 + $0x89] sm:$0xff]
      %v1739 = vld [vmem:[#allocation2 + $0x91] sm:$0xff]
      %v1740 = vld [vmem:[#allocation2 + $0x99] sm:$0xff]
      %v1741 = vld [vmem:[#allocation2 + $0xa1] sm:$0xff]
      %v1742 = vld [vmem:[#allocation2 + $0xa9] sm:$0xff]
      %v1743 = vld [vmem:[#allocation2 + $0xb1] sm:$0xff]
      %v1744 = vld [vmem:[#allocation2 + $0xb9] sm:$0xff]
      %v1745 = vld [vmem:[#allocation2 + $0xc1] sm:$0xff]
      %v1746 = vld [vmem:[#allocation2 + $0xc9] sm:$0xff]
      %v1747 = vld [vmem:[#allocation2 + $0xd1] sm:$0xff]
      %v1748 = vld [vmem:[#allocation2 + $0xd9] sm:$0xff]
      %v1749 = vld [vmem:[#allocation2 + $0xe1] sm:$0xff]
      %v1750 = vld [vmem:[#allocation2 + $0xe9] sm:$0xff]
      %v1751 = vld [vmem:[#allocation2 + $0xf1] sm:$0xff]
      %v1752 = vld [vmem:[#allocation2 + $0xf9] sm:$0xff]
      %v1753 = vld [vmem:[#allocation2 + $0x101] sm:$0xff]
      %v1754 = vld [vmem:[#allocation2 + $0x109] sm:$0xff]
      %v1755 = vld [vmem:[#allocation2 + $0x111] sm:$0xff]
      %v1756 = vld [vmem:[#allocation2 + $0x119] sm:$0xff]
      %v1757 = vld [vmem:[#allocation2 + $0x121] sm:$0xff]
      %v1758 = vld [vmem:[#allocation2 + $0x129] sm:$0xff]
      %v1759 = vld [vmem:[#allocation2 + $0x131] sm:$0xff]
      %v1760 = vld [vmem:[#allocation2 + $0x139] sm:$0xff]
      %v1761 = vld [vmem:[#allocation2 + $0x141] sm:$0xff]
      %v1762 = vld [vmem:[#allocation2 + $0x149] sm:$0xff]
      %v1763 = vld [vmem:[#allocation2 + $0x151] sm:$0xff]
      %v1764 = vld [vmem:[#allocation2 + $0x159] sm:$0xff]
      %v1765 = vld [vmem:[#allocation2 + $0x161] sm:$0xff]
      %v1766 = vld [vmem:[#allocation2 + $0x169] sm:$0xff]
      %v1767 = vld [vmem:[#allocation2 + $0x171] sm:$0xff]
      %v1768 = vld [vmem:[#allocation2 + $0x179] sm:$0xff]
      %v1769 = vld [vmem:[#allocation2 + $0x181] sm:$0xff]
      %v1770 = vpack.c.bf16 %v1723, %v1722
      %v1771 = vpack.c.bf16 %v1725, %v1724
      %v1772 = vpack.c.bf16 %v1727, %v1726
      %v1773 = vpack.c.bf16 %v1729, %v1728
      %v1774 = vpack.c.bf16 %v1731, %v1730
      %v1775 = vpack.c.bf16 %v1733, %v1732
      %v1776 = vpack.c.bf16 %v1735, %v1734
      %v1777 = vpack.c.bf16 %v1737, %v1736
      %v1778 = vpack.c.bf16 %v1739, %v1738
      %v1779 = vpack.c.bf16 %v1741, %v1740
      %v1780 = vpack.c.bf16 %v1743, %v1742
      %v1781 = vpack.c.bf16 %v1745, %v1744
      %v1782 = vpack.c.bf16 %v1747, %v1746
      %v1783 = vpack.c.bf16 %v1749, %v1748
      %v1784 = vpack.c.bf16 %v1751, %v1750
      %v1785 = vpack.c.bf16 %v1753, %v1752
      %v1786 = vpack.c.bf16 %v1755, %v1754
      %v1787 = vpack.c.bf16 %v1757, %v1756
      %v1788 = vpack.c.bf16 %v1759, %v1758
      %v1789 = vpack.c.bf16 %v1761, %v1760
      %v1790 = vpack.c.bf16 %v1763, %v1762
      %v1791 = vpack.c.bf16 %v1765, %v1764
      %v1792 = vpack.c.bf16 %v1767, %v1766
      %v1793 = vpack.c.bf16 %v1769, %v1768
      %s1794 = scalar_lea.vmem %s4, 8
      %v1795 = vld [vmem:[%s1794] sm:$0xf]
      %v1797 = vsel %vm917, %v1770, 0
      %v1800 = vsel %vm917, %v1771, 0
      %v1803 = vsel %vm917, %v1772, 0
      %v1806 = vsel %vm917, %v1773, 0
      %v1809 = vsel %vm917, %v1774, 0
      %v1812 = vsel %vm917, %v1775, 0
      %v1815 = vsel %vm917, %v1776, 0
      %v1818 = vsel %vm917, %v1777, 0
      %v1821 = vsel %vm917, %v1778, 0
      %v1824 = vsel %vm917, %v1779, 0
      %v1827 = vsel %vm917, %v1780, 0
      %v1830 = vsel %vm917, %v1781, 0
      %v1833 = vsel %vm917, %v1782, 0
      %v1836 = vsel %vm917, %v1783, 0
      %v1839 = vsel %vm917, %v1784, 0
      %v1842 = vsel %vm917, %v1785, 0
      %v1845 = vsel %vm917, %v1786, 0
      %v1848 = vsel %vm917, %v1787, 0
      %v1851 = vsel %vm917, %v1788, 0
      %v1854 = vsel %vm917, %v1789, 0
      %v1857 = vsel %vm917, %v1790, 0
      %v1860 = vsel %vm917, %v1791, 0
      %v1863 = vsel %vm917, %v1792, 0
      %v1866 = vsel %vm917, %v1793, 0
      %v1869 = vsel %vm1193, %v1795, 0
      %1871 = vmatprep.subr.bf16.mxu0 0
      %1872 = vmatpush1.bf16.msra.mxu0 %v1869
      %1873 = vmatprep.subr.bf16.mxu0 0
      %1874 = vmatpush1.bf16.msra.mxu0 0
      %1875 = vmatprep.subr.bf16.mxu0 0
      %1876 = vmatpush1.bf16.msra.mxu0 0
      %1877 = vmatprep.subr.bf16.mxu0 0
      %1878 = vmatpush1.bf16.msra.mxu0 0
      %1879 = vmatprep.subr.bf16.mxu0 0
      %1880 = vmatpush1.bf16.msra.mxu0 0
      %1881 = vmatprep.subr.bf16.mxu0 0
      %1882 = vmatpush1.bf16.msra.mxu0 0
      %1883 = vmatprep.subr.bf16.mxu0 0
      %1884 = vmatpush1.bf16.msra.mxu0 0
      %1885 = vmatprep.subr.bf16.mxu0 0
      %1886 = vmatpush1.bf16.msra.mxu0 0
      %1887 = vmatprep.subr.bf16.mxu0 0
      %1888 = vmatpush1.bf16.msra.mxu0 0
      %1889 = vmatprep.subr.bf16.mxu0 0
      %1890 = vmatpush1.bf16.msra.mxu0 0
      %1891 = vmatprep.subr.bf16.mxu0 0
      %1892 = vmatpush1.bf16.msra.mxu0 0
      %1893 = vmatprep.subr.bf16.mxu0 0
      %1894 = vmatpush1.bf16.msra.mxu0 0
      %1895 = vmatprep.subr.bf16.mxu0 0
      %1896 = vmatpush1.bf16.msra.mxu0 0
      %1897 = vmatprep.subr.bf16.mxu0 0
      %1898 = vmatpush1.bf16.msra.mxu0 0
      %1899 = vmatprep.subr.bf16.mxu0 0
      %1900 = vmatpush1.bf16.msra.mxu0 0
      %1901 = vmatprep.subr.bf16.mxu0 0
      %1902 = vmatpush1.bf16.msra.mxu0 0
      %1903 = vmatprep.mubr.bf16.mxu0 0
      %1904 = vmatmul.mubr.bf16.gmra.mrb[0].mxu0 %v1797
      %v1905 = vpop.f32.mrb[0].mxu0
      %v1906 = vadd.f32 0.0, %v1905
      %v1907 = vpop.f32.mrb[0].mxu0
      %v1908 = vpop.f32.mrb[0].mxu0
      %v1909 = vadd.f32 0.0, %v1908
      %v1910 = vpop.f32.mrb[0].mxu0
      %1911 = vmatprep.mubr.bf16.mxu0 0
      %1912 = vmatmul.mubr.bf16.gmra.mrb[0].mxu0 %v1800
      %v1913 = vpop.f32.mrb[0].mxu0
      %v1914 = vadd.f32 0.0, %v1913
      %v1915 = vpop.f32.mrb[0].mxu0
      %v1916 = vpop.f32.mrb[0].mxu0
      %v1917 = vadd.f32 0.0, %v1916
      %v1918 = vpop.f32.mrb[0].mxu0
      %1919 = vmatprep.mubr.bf16.mxu0 0
      %1920 = vmatmul.mubr.bf16.gmra.mrb[0].mxu0 %v1803
      %v1921 = vpop.f32.mrb[0].mxu0
      %v1922 = vadd.f32 0.0, %v1921
      %v1923 = vpop.f32.mrb[0].mxu0
      %v1924 = vpop.f32.mrb[0].mxu0
      %v1925 = vadd.f32 0.0, %v1924
      %v1926 = vpop.f32.mrb[0].mxu0
      %1927 = vmatprep.mubr.bf16.mxu0 0
      %1928 = vmatmul.mubr.bf16.gmra.mrb[0].mxu0 %v1806
      %v1929 = vpop.f32.mrb[0].mxu0
      %v1930 = vadd.f32 0.0, %v1929
      %v1931 = vpop.f32.mrb[0].mxu0
      %v1932 = vpop.f32.mrb[0].mxu0
      %v1933 = vadd.f32 0.0, %v1932
      %v1934 = vpop.f32.mrb[0].mxu0
      %1935 = vmatprep.mubr.bf16.mxu0 0
      %1936 = vmatmul.mubr.bf16.gmra.mrb[0].mxu0 %v1809
      %v1937 = vpop.f32.mrb[0].mxu0
      %v1938 = vadd.f32 0.0, %v1937
      %v1939 = vpop.f32.mrb[0].mxu0
      %v1940 = vpop.f32.mrb[0].mxu0
      %v1941 = vadd.f32 0.0, %v1940
      %v1942 = vpop.f32.mrb[0].mxu0
      %1943 = vmatprep.mubr.bf16.mxu0 0
      %1944 = vmatmul.mubr.bf16.gmra.mrb[0].mxu0 %v1812
      %v1945 = vpop.f32.mrb[0].mxu0
      %v1946 = vadd.f32 0.0, %v1945
      %v1947 = vpop.f32.mrb[0].mxu0
      %v1948 = vpop.f32.mrb[0].mxu0
      %v1949 = vadd.f32 0.0, %v1948
      %v1950 = vpop.f32.mrb[0].mxu0
      %1951 = vmatprep.mubr.bf16.mxu0 0
      %1952 = vmatmul.mubr.bf16.gmra.mrb[0].mxu0 %v1815
      %v1953 = vpop.f32.mrb[0].mxu0
      %v1954 = vadd.f32 0.0, %v1953
      %v1955 = vpop.f32.mrb[0].mxu0
      %v1956 = vpop.f32.mrb[0].mxu0
      %v1957 = vadd.f32 0.0, %v1956
      %v1958 = vpop.f32.mrb[0].mxu0
      %1959 = vmatprep.mubr.bf16.mxu0 0
      %1960 = vmatmul.mubr.bf16.gmra.mrb[0].mxu0 %v1818
      %v1961 = vpop.f32.mrb[0].mxu0
      %v1962 = vadd.f32 0.0, %v1961
      %v1963 = vpop.f32.mrb[0].mxu0
      %v1964 = vpop.f32.mrb[0].mxu0
      %v1965 = vadd.f32 0.0, %v1964
      %v1966 = vpop.f32.mrb[0].mxu0
      %1967 = vmatprep.mubr.bf16.mxu0 0
      %1968 = vmatmul.mubr.bf16.gmra.mrb[0].mxu0 %v1821
      %v1969 = vpop.f32.mrb[0].mxu0
      %v1970 = vadd.f32 0.0, %v1969
      %v1971 = vpop.f32.mrb[0].mxu0
      %v1972 = vpop.f32.mrb[0].mxu0
      %v1973 = vadd.f32 0.0, %v1972
      %v1974 = vpop.f32.mrb[0].mxu0
      %1975 = vmatprep.mubr.bf16.mxu0 0
      %1976 = vmatmul.mubr.bf16.gmra.mrb[0].mxu0 %v1824
      %v1977 = vpop.f32.mrb[0].mxu0
      %v1978 = vadd.f32 0.0, %v1977
      %v1979 = vpop.f32.mrb[0].mxu0
      %v1980 = vpop.f32.mrb[0].mxu0
      %v1981 = vadd.f32 0.0, %v1980
      %v1982 = vpop.f32.mrb[0].mxu0
      %1983 = vmatprep.mubr.bf16.mxu0 0
      %1984 = vmatmul.mubr.bf16.gmra.mrb[0].mxu0 %v1827
      %v1985 = vpop.f32.mrb[0].mxu0
      %v1986 = vadd.f32 0.0, %v1985
      %v1987 = vpop.f32.mrb[0].mxu0
      %v1988 = vpop.f32.mrb[0].mxu0
      %v1989 = vadd.f32 0.0, %v1988
      %v1990 = vpop.f32.mrb[0].mxu0
      %1991 = vmatprep.mubr.bf16.mxu0 0
      %1992 = vmatmul.mubr.bf16.gmra.mrb[0].mxu0 %v1830
      %v1993 = vpop.f32.mrb[0].mxu0
      %v1994 = vadd.f32 0.0, %v1993
      %v1995 = vpop.f32.mrb[0].mxu0
      %v1996 = vpop.f32.mrb[0].mxu0
      %v1997 = vadd.f32 0.0, %v1996
      %v1998 = vpop.f32.mrb[0].mxu0
      %1999 = vmatprep.mubr.bf16.mxu0 0
      %2000 = vmatmul.mubr.bf16.gmra.mrb[0].mxu0 %v1833
      %v2001 = vpop.f32.mrb[0].mxu0
      %v2002 = vadd.f32 0.0, %v2001
      %v2003 = vpop.f32.mrb[0].mxu0
      %v2004 = vpop.f32.mrb[0].mxu0
      %v2005 = vadd.f32 0.0, %v2004
      %v2006 = vpop.f32.mrb[0].mxu0
      %2007 = vmatprep.mubr.bf16.mxu0 0
      %2008 = vmatmul.mubr.bf16.gmra.mrb[0].mxu0 %v1836
      %v2009 = vpop.f32.mrb[0].mxu0
      %v2010 = vadd.f32 0.0, %v2009
      %v2011 = vpop.f32.mrb[0].mxu0
      %v2012 = vpop.f32.mrb[0].mxu0
      %v2013 = vadd.f32 0.0, %v2012
      %v2014 = vpop.f32.mrb[0].mxu0
      %2015 = vmatprep.mubr.bf16.mxu0 0
      %2016 = vmatmul.mubr.bf16.gmra.mrb[0].mxu0 %v1839
      %v2017 = vpop.f32.mrb[0].mxu0
      %v2018 = vadd.f32 0.0, %v2017
      %v2019 = vpop.f32.mrb[0].mxu0
      %v2020 = vpop.f32.mrb[0].mxu0
      %v2021 = vadd.f32 0.0, %v2020
      %v2022 = vpop.f32.mrb[0].mxu0
      %2023 = vmatprep.mubr.bf16.mxu0 0
      %2024 = vmatmul.mubr.bf16.gmra.mrb[0].mxu0 %v1842
      %v2025 = vpop.f32.mrb[0].mxu0
      %v2026 = vadd.f32 0.0, %v2025
      %v2027 = vpop.f32.mrb[0].mxu0
      %v2028 = vpop.f32.mrb[0].mxu0
      %v2029 = vadd.f32 0.0, %v2028
      %v2030 = vpop.f32.mrb[0].mxu0
      %2031 = vmatprep.mubr.bf16.mxu0 0
      %2032 = vmatmul.mubr.bf16.gmra.mrb[0].mxu0 %v1845
      %v2033 = vpop.f32.mrb[0].mxu0
      %v2034 = vadd.f32 0.0, %v2033
      %v2035 = vpop.f32.mrb[0].mxu0
      %v2036 = vpop.f32.mrb[0].mxu0
      %v2037 = vadd.f32 0.0, %v2036
      %v2038 = vpop.f32.mrb[0].mxu0
      %2039 = vmatprep.mubr.bf16.mxu0 0
      %2040 = vmatmul.mubr.bf16.gmra.mrb[0].mxu0 %v1848
      %v2041 = vpop.f32.mrb[0].mxu0
      %v2042 = vadd.f32 0.0, %v2041
      %v2043 = vpop.f32.mrb[0].mxu0
      %v2044 = vpop.f32.mrb[0].mxu0
      %v2045 = vadd.f32 0.0, %v2044
      %v2046 = vpop.f32.mrb[0].mxu0
      %2047 = vmatprep.mubr.bf16.mxu0 0
      %2048 = vmatmul.mubr.bf16.gmra.mrb[0].mxu0 %v1851
      %v2049 = vpop.f32.mrb[0].mxu0
      %v2050 = vadd.f32 0.0, %v2049
      %v2051 = vpop.f32.mrb[0].mxu0
      %v2052 = vpop.f32.mrb[0].mxu0
      %v2053 = vadd.f32 0.0, %v2052
      %v2054 = vpop.f32.mrb[0].mxu0
      %2055 = vmatprep.mubr.bf16.mxu0 0
      %2056 = vmatmul.mubr.bf16.gmra.mrb[0].mxu0 %v1854
      %v2057 = vpop.f32.mrb[0].mxu0
      %v2058 = vadd.f32 0.0, %v2057
      %v2059 = vpop.f32.mrb[0].mxu0
      %v2060 = vpop.f32.mrb[0].mxu0
      %v2061 = vadd.f32 0.0, %v2060
      %v2062 = vpop.f32.mrb[0].mxu0
      %2063 = vmatprep.mubr.bf16.mxu0 0
      %2064 = vmatmul.mubr.bf16.gmra.mrb[0].mxu0 %v1857
      %v2065 = vpop.f32.mrb[0].mxu0
      %v2066 = vadd.f32 0.0, %v2065
      %v2067 = vpop.f32.mrb[0].mxu0
      %v2068 = vpop.f32.mrb[0].mxu0
      %v2069 = vadd.f32 0.0, %v2068
      %v2070 = vpop.f32.mrb[0].mxu0
      %2071 = vmatprep.mubr.bf16.mxu0 0
      %2072 = vmatmul.mubr.bf16.gmra.mrb[0].mxu0 %v1860
      %v2073 = vpop.f32.mrb[0].mxu0
      %v2074 = vadd.f32 0.0, %v2073
      %v2075 = vpop.f32.mrb[0].mxu0
      %v2076 = vpop.f32.mrb[0].mxu0
      %v2077 = vadd.f32 0.0, %v2076
      %v2078 = vpop.f32.mrb[0].mxu0
      %2079 = vmatprep.mubr.bf16.mxu0 0
      %2080 = vmatmul.mubr.bf16.gmra.mrb[0].mxu0 %v1863
      %v2081 = vpop.f32.mrb[0].mxu0
      %v2082 = vadd.f32 0.0, %v2081
      %v2083 = vpop.f32.mrb[0].mxu0
      %v2084 = vpop.f32.mrb[0].mxu0
      %v2085 = vadd.f32 0.0, %v2084
      %v2086 = vpop.f32.mrb[0].mxu0
      %2087 = vmatprep.mubr.bf16.mxu0 0
      %2088 = vmatmul.mubr.bf16.gmra.mrb[0].mxu0 %v1866
      %v2089 = vpop.f32.mrb[0].mxu0
      %v2090 = vadd.f32 0.0, %v2089
      %v2091 = vpop.f32.mrb[0].mxu0
      %v2092 = vpop.f32.mrb[0].mxu0
      %v2093 = vadd.f32 0.0, %v2092
      %v2094 = vpop.f32.mrb[0].mxu0
      %2095 = vdwg.mxu0
      %v2096 = vadd.f32 %v1532, %v1906
      %v2097 = vadd.f32 %v1535, %v1909
      %v2098 = vadd.f32 %v1540, %v1914
      %v2099 = vadd.f32 %v1543, %v1917
      %v2100 = vadd.f32 %v1548, %v1922
      %v2101 = vadd.f32 %v1551, %v1925
      %v2102 = vadd.f32 %v1556, %v1930
      %v2103 = vadd.f32 %v1559, %v1933
      %v2104 = vadd.f32 %v1564, %v1938
      %v2105 = vadd.f32 %v1567, %v1941
      %v2106 = vadd.f32 %v1572, %v1946
      %v2107 = vadd.f32 %v1575, %v1949
      %v2108 = vadd.f32 %v1580, %v1954
      %v2109 = vadd.f32 %v1583, %v1957
      %v2110 = vadd.f32 %v1588, %v1962
      %v2111 = vadd.f32 %v1591, %v1965
      %v2112 = vadd.f32 %v1596, %v1970
      %v2113 = vadd.f32 %v1599, %v1973
      %v2114 = vadd.f32 %v1604, %v1978
      %v2115 = vadd.f32 %v1607, %v1981
      %v2116 = vadd.f32 %v1612, %v1986
      %v2117 = vadd.f32 %v1615, %v1989
      %v2118 = vadd.f32 %v1620, %v1994
      %v2119 = vadd.f32 %v1623, %v1997
      %v2120 = vadd.f32 %v1628, %v2002
      %v2121 = vadd.f32 %v1631, %v2005
      %v2122 = vadd.f32 %v1636, %v2010
      %v2123 = vadd.f32 %v1639, %v2013
      %v2124 = vadd.f32 %v1644, %v2018
      %v2125 = vadd.f32 %v1647, %v2021
      %v2126 = vadd.f32 %v1652, %v2026
      %v2127 = vadd.f32 %v1655, %v2029
      %v2128 = vadd.f32 %v1660, %v2034
      %v2129 = vadd.f32 %v1663, %v2037
      %v2130 = vadd.f32 %v1668, %v2042
      %v2131 = vadd.f32 %v1671, %v2045
      %v2132 = vadd.f32 %v1676, %v2050
      %v2133 = vadd.f32 %v1679, %v2053
      %v2134 = vadd.f32 %v1684, %v2058
      %v2135 = vadd.f32 %v1687, %v2061
      %v2136 = vadd.f32 %v1692, %v2066
      %v2137 = vadd.f32 %v1695, %v2069
      %v2138 = vadd.f32 %v1700, %v2074
      %v2139 = vadd.f32 %v1703, %v2077
      %v2140 = vadd.f32 %v1708, %v2082
      %v2141 = vadd.f32 %v1711, %v2085
      %v2142 = vadd.f32 %v1716, %v2090
      %v2143 = vadd.f32 %v1719, %v2093
      %v2144 = vld [vmem:[#allocation2 + $0x1f] sm:$0xff]
      %v2145 = vld [vmem:[#allocation2 + $0x27] sm:$0xff]
      %v2146 = vld [vmem:[#allocation2 + $0x2f] sm:$0xff]
      %v2147 = vld [vmem:[#allocation2 + $0x37] sm:$0xff]
      %v2148 = vld [vmem:[#allocation2 + $0x3f] sm:$0xff]
      %v2149 = vld [vmem:[#allocation2 + $0x47] sm:$0xff]
      %v2150 = vld [vmem:[#allocation2 + $0x4f] sm:$0xff]
      %v2151 = vld [vmem:[#allocation2 + $0x57] sm:$0xff]
      %v2152 = vld [vmem:[#allocation2 + $0x5f] sm:$0xff]
      %v2153 = vld [vmem:[#allocation2 + $0x67] sm:$0xff]
      %v2154 = vld [vmem:[#allocation2 + $0x6f] sm:$0xff]
      %v2155 = vld [vmem:[#allocation2 + $0x77] sm:$0xff]
      %v2156 = vld [vmem:[#allocation2 + $0x7f] sm:$0xff]
      %v2157 = vld [vmem:[#allocation2 + $0x87] sm:$0xff]
      %v2158 = vld [vmem:[#allocation2 + $0x8f] sm:$0xff]
      %v2159 = vld [vmem:[#allocation2 + $0x97] sm:$0xff]
      %v2160 = vld [vmem:[#allocation2 + $0x9f] sm:$0xff]
      %v2161 = vld [vmem:[#allocation2 + $0xa7] sm:$0xff]
      %v2162 = vld [vmem:[#allocation2 + $0xaf] sm:$0xff]
      %v2163 = vld [vmem:[#allocation2 + $0xb7] sm:$0xff]
      %v2164 = vld [vmem:[#allocation2 + $0xbf] sm:$0xff]
      %v2165 = vld [vmem:[#allocation2 + $0xc7] sm:$0xff]
      %v2166 = vld [vmem:[#allocation2 + $0xcf] sm:$0xff]
      %v2167 = vld [vmem:[#allocation2 + $0xd7] sm:$0xff]
      %v2168 = vld [vmem:[#allocation2 + $0xdf] sm:$0xff]
      %v2169 = vld [vmem:[#allocation2 + $0xe7] sm:$0xff]
      %v2170 = vld [vmem:[#allocation2 + $0xef] sm:$0xff]
      %v2171 = vld [vmem:[#allocation2 + $0xf7] sm:$0xff]
      %v2172 = vld [vmem:[#allocation2 + $0xff] sm:$0xff]
      %v2173 = vld [vmem:[#allocation2 + $0x107] sm:$0xff]
      %v2174 = vld [vmem:[#allocation2 + $0x10f] sm:$0xff]
      %v2175 = vld [vmem:[#allocation2 + $0x117] sm:$0xff]
      %v2176 = vld [vmem:[#allocation2 + $0x11f] sm:$0xff]
      %v2177 = vld [vmem:[#allocation2 + $0x127] sm:$0xff]
      %v2178 = vld [vmem:[#allocation2 + $0x12f] sm:$0xff]
      %v2179 = vld [vmem:[#allocation2 + $0x137] sm:$0xff]
      %v2180 = vld [vmem:[#allocation2 + $0x13f] sm:$0xff]
      %v2181 = vld [vmem:[#allocation2 + $0x147] sm:$0xff]
      %v2182 = vld [vmem:[#allocation2 + $0x14f] sm:$0xff]
      %v2183 = vld [vmem:[#allocation2 + $0x157] sm:$0xff]
      %v2184 = vld [vmem:[#allocation2 + $0x15f] sm:$0xff]
      %v2185 = vld [vmem:[#allocation2 + $0x167] sm:$0xff]
      %v2186 = vld [vmem:[#allocation2 + $0x16f] sm:$0xff]
      %v2187 = vld [vmem:[#allocation2 + $0x177] sm:$0xff]
      %v2188 = vld [vmem:[#allocation2 + $0x17f] sm:$0xff]
      %v2189 = vld [vmem:[#allocation2 + $0x187] sm:$0xff]
      %v2190 = vld [vmem:[#allocation2 + $0x18f] sm:$0xff]
      %v2191 = vld [vmem:[#allocation2 + $0x197] sm:$0xff]
      %v2192 = vpack.c.bf16 %v2145, %v2144
      %v2193 = vpack.c.bf16 %v2147, %v2146
      %v2194 = vpack.c.bf16 %v2149, %v2148
      %v2195 = vpack.c.bf16 %v2151, %v2150
      %v2196 = vpack.c.bf16 %v2153, %v2152
      %v2197 = vpack.c.bf16 %v2155, %v2154
      %v2198 = vpack.c.bf16 %v2157, %v2156
      %v2199 = vpack.c.bf16 %v2159, %v2158
      %v2200 = vpack.c.bf16 %v2161, %v2160
      %v2201 = vpack.c.bf16 %v2163, %v2162
      %v2202 = vpack.c.bf16 %v2165, %v2164
      %v2203 = vpack.c.bf16 %v2167, %v2166
      %v2204 = vpack.c.bf16 %v2169, %v2168
      %v2205 = vpack.c.bf16 %v2171, %v2170
      %v2206 = vpack.c.bf16 %v2173, %v2172
      %v2207 = vpack.c.bf16 %v2175, %v2174
      %v2208 = vpack.c.bf16 %v2177, %v2176
      %v2209 = vpack.c.bf16 %v2179, %v2178
      %v2210 = vpack.c.bf16 %v2181, %v2180
      %v2211 = vpack.c.bf16 %v2183, %v2182
      %v2212 = vpack.c.bf16 %v2185, %v2184
      %v2213 = vpack.c.bf16 %v2187, %v2186
      %v2214 = vpack.c.bf16 %v2189, %v2188
      %v2215 = vpack.c.bf16 %v2191, %v2190
      %s2216 = scalar_lea.vmem %s4, 12
      %v2217 = vld [vmem:[%s2216] sm:$0xf]
      %v2219 = vsel %vm917, %v2192, 0
      %v2222 = vsel %vm917, %v2193, 0
      %v2225 = vsel %vm917, %v2194, 0
      %v2228 = vsel %vm917, %v2195, 0
      %v2231 = vsel %vm917, %v2196, 0
      %v2234 = vsel %vm917, %v2197, 0
      %v2237 = vsel %vm917, %v2198, 0
      %v2240 = vsel %vm917, %v2199, 0
      %v2243 = vsel %vm917, %v2200, 0
      %v2246 = vsel %vm917, %v2201, 0
      %v2249 = vsel %vm917, %v2202, 0
      %v2252 = vsel %vm917, %v2203, 0
      %v2255 = vsel %vm917, %v2204, 0
      %v2258 = vsel %vm917, %v2205, 0
      %v2261 = vsel %vm917, %v2206, 0
      %v2264 = vsel %vm917, %v2207, 0
      %v2267 = vsel %vm917, %v2208, 0
      %v2270 = vsel %vm917, %v2209, 0
      %v2273 = vsel %vm917, %v2210, 0
      %v2276 = vsel %vm917, %v2211, 0
      %v2279 = vsel %vm917, %v2212, 0
      %v2282 = vsel %vm917, %v2213, 0
      %v2285 = vsel %vm917, %v2214, 0
      %v2288 = vsel %vm917, %v2215, 0
      %v2291 = vsel %vm1193, %v2217, 0
      %2293 = vmatprep.subr.bf16.mxu0 0
      %2294 = vmatpush1.bf16.msra.mxu0 %v2291
      %2295 = vmatprep.subr.bf16.mxu0 0
      %2296 = vmatpush1.bf16.msra.mxu0 0
      %2297 = vmatprep.subr.bf16.mxu0 0
      %2298 = vmatpush1.bf16.msra.mxu0 0
      %2299 = vmatprep.subr.bf16.mxu0 0
      %2300 = vmatpush1.bf16.msra.mxu0 0
      %2301 = vmatprep.subr.bf16.mxu0 0
      %2302 = vmatpush1.bf16.msra.mxu0 0
      %2303 = vmatprep.subr.bf16.mxu0 0
      %2304 = vmatpush1.bf16.msra.mxu0 0
      %2305 = vmatprep.subr.bf16.mxu0 0
      %2306 = vmatpush1.bf16.msra.mxu0 0
      %2307 = vmatprep.subr.bf16.mxu0 0
      %2308 = vmatpush1.bf16.msra.mxu0 0
      %2309 = vmatprep.subr.bf16.mxu0 0
      %2310 = vmatpush1.bf16.msra.mxu0 0
      %2311 = vmatprep.subr.bf16.mxu0 0
      %2312 = vmatpush1.bf16.msra.mxu0 0
      %2313 = vmatprep.subr.bf16.mxu0 0
      %2314 = vmatpush1.bf16.msra.mxu0 0
      %2315 = vmatprep.subr.bf16.mxu0 0
      %2316 = vmatpush1.bf16.msra.mxu0 0
      %2317 = vmatprep.subr.bf16.mxu0 0
      %2318 = vmatpush1.bf16.msra.mxu0 0
      %2319 = vmatprep.subr.bf16.mxu0 0
      %2320 = vmatpush1.bf16.msra.mxu0 0
      %2321 = vmatprep.subr.bf16.mxu0 0
      %2322 = vmatpush1.bf16.msra.mxu0 0
      %2323 = vmatprep.subr.bf16.mxu0 0
      %2324 = vmatpush1.bf16.msra.mxu0 0
      %2325 = vmatprep.mubr.bf16.mxu0 0
      %2326 = vmatmul.mubr.bf16.gmra.mrb[0].mxu0 %v2219
      %v2327 = vpop.f32.mrb[0].mxu0
      %v2328 = vadd.f32 0.0, %v2327
      %v2329 = vpop.f32.mrb[0].mxu0
      %v2330 = vpop.f32.mrb[0].mxu0
      %v2331 = vadd.f32 0.0, %v2330
      %v2332 = vpop.f32.mrb[0].mxu0
      %2333 = vmatprep.mubr.bf16.mxu0 0
      %2334 = vmatmul.mubr.bf16.gmra.mrb[0].mxu0 %v2222
      %v2335 = vpop.f32.mrb[0].mxu0
      %v2336 = vadd.f32 0.0, %v2335
      %v2337 = vpop.f32.mrb[0].mxu0
      %v2338 = vpop.f32.mrb[0].mxu0
      %v2339 = vadd.f32 0.0, %v2338
      %v2340 = vpop.f32.mrb[0].mxu0
      %2341 = vmatprep.mubr.bf16.mxu0 0
      %2342 = vmatmul.mubr.bf16.gmra.mrb[0].mxu0 %v2225
      %v2343 = vpop.f32.mrb[0].mxu0
      %v2344 = vadd.f32 0.0, %v2343
      %v2345 = vpop.f32.mrb[0].mxu0
      %v2346 = vpop.f32.mrb[0].mxu0
      %v2347 = vadd.f32 0.0, %v2346
      %v2348 = vpop.f32.mrb[0].mxu0
      %2349 = vmatprep.mubr.bf16.mxu0 0
      %2350 = vmatmul.mubr.bf16.gmra.mrb[0].mxu0 %v2228
      %v2351 = vpop.f32.mrb[0].mxu0
      %v2352 = vadd.f32 0.0, %v2351
      %v2353 = vpop.f32.mrb[0].mxu0
      %v2354 = vpop.f32.mrb[0].mxu0
      %v2355 = vadd.f32 0.0, %v2354
      %v2356 = vpop.f32.mrb[0].mxu0
      %2357 = vmatprep.mubr.bf16.mxu0 0
      %2358 = vmatmul.mubr.bf16.gmra.mrb[0].mxu0 %v2231
      %v2359 = vpop.f32.mrb[0].mxu0
      %v2360 = vadd.f32 0.0, %v2359
      %v2361 = vpop.f32.mrb[0].mxu0
      %v2362 = vpop.f32.mrb[0].mxu0
      %v2363 = vadd.f32 0.0, %v2362
      %v2364 = vpop.f32.mrb[0].mxu0
      %2365 = vmatprep.mubr.bf16.mxu0 0
      %2366 = vmatmul.mubr.bf16.gmra.mrb[0].mxu0 %v2234
      %v2367 = vpop.f32.mrb[0].mxu0
      %v2368 = vadd.f32 0.0, %v2367
      %v2369 = vpop.f32.mrb[0].mxu0
      %v2370 = vpop.f32.mrb[0].mxu0
      %v2371 = vadd.f32 0.0, %v2370
      %v2372 = vpop.f32.mrb[0].mxu0
      %2373 = vmatprep.mubr.bf16.mxu0 0
      %2374 = vmatmul.mubr.bf16.gmra.mrb[0].mxu0 %v2237
      %v2375 = vpop.f32.mrb[0].mxu0
      %v2376 = vadd.f32 0.0, %v2375
      %v2377 = vpop.f32.mrb[0].mxu0
      %v2378 = vpop.f32.mrb[0].mxu0
      %v2379 = vadd.f32 0.0, %v2378
      %v2380 = vpop.f32.mrb[0].mxu0
      %2381 = vmatprep.mubr.bf16.mxu0 0
      %2382 = vmatmul.mubr.bf16.gmra.mrb[0].mxu0 %v2240
      %v2383 = vpop.f32.mrb[0].mxu0
      %v2384 = vadd.f32 0.0, %v2383
      %v2385 = vpop.f32.mrb[0].mxu0
      %v2386 = vpop.f32.mrb[0].mxu0
      %v2387 = vadd.f32 0.0, %v2386
      %v2388 = vpop.f32.mrb[0].mxu0
      %2389 = vmatprep.mubr.bf16.mxu0 0
      %2390 = vmatmul.mubr.bf16.gmra.mrb[0].mxu0 %v2243
      %v2391 = vpop.f32.mrb[0].mxu0
      %v2392 = vadd.f32 0.0, %v2391
      %v2393 = vpop.f32.mrb[0].mxu0
      %v2394 = vpop.f32.mrb[0].mxu0
      %v2395 = vadd.f32 0.0, %v2394
      %v2396 = vpop.f32.mrb[0].mxu0
      %2397 = vmatprep.mubr.bf16.mxu0 0
      %2398 = vmatmul.mubr.bf16.gmra.mrb[0].mxu0 %v2246
      %v2399 = vpop.f32.mrb[0].mxu0
      %v2400 = vadd.f32 0.0, %v2399
      %v2401 = vpop.f32.mrb[0].mxu0
      %v2402 = vpop.f32.mrb[0].mxu0
      %v2403 = vadd.f32 0.0, %v2402
      %v2404 = vpop.f32.mrb[0].mxu0
      %2405 = vmatprep.mubr.bf16.mxu0 0
      %2406 = vmatmul.mubr.bf16.gmra.mrb[0].mxu0 %v2249
      %v2407 = vpop.f32.mrb[0].mxu0
      %v2408 = vadd.f32 0.0, %v2407
      %v2409 = vpop.f32.mrb[0].mxu0
      %v2410 = vpop.f32.mrb[0].mxu0
      %v2411 = vadd.f32 0.0, %v2410
      %v2412 = vpop.f32.mrb[0].mxu0
      %2413 = vmatprep.mubr.bf16.mxu0 0
      %2414 = vmatmul.mubr.bf16.gmra.mrb[0].mxu0 %v2252
      %v2415 = vpop.f32.mrb[0].mxu0
      %v2416 = vadd.f32 0.0, %v2415
      %v2417 = vpop.f32.mrb[0].mxu0
      %v2418 = vpop.f32.mrb[0].mxu0
      %v2419 = vadd.f32 0.0, %v2418
      %v2420 = vpop.f32.mrb[0].mxu0
      %2421 = vmatprep.mubr.bf16.mxu0 0
      %2422 = vmatmul.mubr.bf16.gmra.mrb[0].mxu0 %v2255
      %v2423 = vpop.f32.mrb[0].mxu0
      %v2424 = vadd.f32 0.0, %v2423
      %v2425 = vpop.f32.mrb[0].mxu0
      %v2426 = vpop.f32.mrb[0].mxu0
      %v2427 = vadd.f32 0.0, %v2426
      %v2428 = vpop.f32.mrb[0].mxu0
      %2429 = vmatprep.mubr.bf16.mxu0 0
      %2430 = vmatmul.mubr.bf16.gmra.mrb[0].mxu0 %v2258
      %v2431 = vpop.f32.mrb[0].mxu0
      %v2432 = vadd.f32 0.0, %v2431
      %v2433 = vpop.f32.mrb[0].mxu0
      %v2434 = vpop.f32.mrb[0].mxu0
      %v2435 = vadd.f32 0.0, %v2434
      %v2436 = vpop.f32.mrb[0].mxu0
      %2437 = vmatprep.mubr.bf16.mxu0 0
      %2438 = vmatmul.mubr.bf16.gmra.mrb[0].mxu0 %v2261
      %v2439 = vpop.f32.mrb[0].mxu0
      %v2440 = vadd.f32 0.0, %v2439
      %v2441 = vpop.f32.mrb[0].mxu0
      %v2442 = vpop.f32.mrb[0].mxu0
      %v2443 = vadd.f32 0.0, %v2442
      %v2444 = vpop.f32.mrb[0].mxu0
      %2445 = vmatprep.mubr.bf16.mxu0 0
      %2446 = vmatmul.mubr.bf16.gmra.mrb[0].mxu0 %v2264
      %v2447 = vpop.f32.mrb[0].mxu0
      %v2448 = vadd.f32 0.0, %v2447
      %v2449 = vpop.f32.mrb[0].mxu0
      %v2450 = vpop.f32.mrb[0].mxu0
      %v2451 = vadd.f32 0.0, %v2450
      %v2452 = vpop.f32.mrb[0].mxu0
      %2453 = vmatprep.mubr.bf16.mxu0 0
      %2454 = vmatmul.mubr.bf16.gmra.mrb[0].mxu0 %v2267
      %v2455 = vpop.f32.mrb[0].mxu0
      %v2456 = vadd.f32 0.0, %v2455
      %v2457 = vpop.f32.mrb[0].mxu0
      %v2458 = vpop.f32.mrb[0].mxu0
      %v2459 = vadd.f32 0.0, %v2458
      %v2460 = vpop.f32.mrb[0].mxu0
      %2461 = vmatprep.mubr.bf16.mxu0 0
      %2462 = vmatmul.mubr.bf16.gmra.mrb[0].mxu0 %v2270
      %v2463 = vpop.f32.mrb[0].mxu0
      %v2464 = vadd.f32 0.0, %v2463
      %v2465 = vpop.f32.mrb[0].mxu0
      %v2466 = vpop.f32.mrb[0].mxu0
      %v2467 = vadd.f32 0.0, %v2466
      %v2468 = vpop.f32.mrb[0].mxu0
      %2469 = vmatprep.mubr.bf16.mxu0 0
      %2470 = vmatmul.mubr.bf16.gmra.mrb[0].mxu0 %v2273
      %v2471 = vpop.f32.mrb[0].mxu0
      %v2472 = vadd.f32 0.0, %v2471
      %v2473 = vpop.f32.mrb[0].mxu0
      %v2474 = vpop.f32.mrb[0].mxu0
      %v2475 = vadd.f32 0.0, %v2474
      %v2476 = vpop.f32.mrb[0].mxu0
      %2477 = vmatprep.mubr.bf16.mxu0 0
      %2478 = vmatmul.mubr.bf16.gmra.mrb[0].mxu0 %v2276
      %v2479 = vpop.f32.mrb[0].mxu0
      %v2480 = vadd.f32 0.0, %v2479
      %v2481 = vpop.f32.mrb[0].mxu0
      %v2482 = vpop.f32.mrb[0].mxu0
      %v2483 = vadd.f32 0.0, %v2482
      %v2484 = vpop.f32.mrb[0].mxu0
      %2485 = vmatprep.mubr.bf16.mxu0 0
      %2486 = vmatmul.mubr.bf16.gmra.mrb[0].mxu0 %v2279
      %v2487 = vpop.f32.mrb[0].mxu0
      %v2488 = vadd.f32 0.0, %v2487
      %v2489 = vpop.f32.mrb[0].mxu0
      %v2490 = vpop.f32.mrb[0].mxu0
      %v2491 = vadd.f32 0.0, %v2490
      %v2492 = vpop.f32.mrb[0].mxu0
      %2493 = vmatprep.mubr.bf16.mxu0 0
      %2494 = vmatmul.mubr.bf16.gmra.mrb[0].mxu0 %v2282
      %v2495 = vpop.f32.mrb[0].mxu0
      %v2496 = vadd.f32 0.0, %v2495
      %v2497 = vpop.f32.mrb[0].mxu0
      %v2498 = vpop.f32.mrb[0].mxu0
      %v2499 = vadd.f32 0.0, %v2498
      %v2500 = vpop.f32.mrb[0].mxu0
      %2501 = vmatprep.mubr.bf16.mxu0 0
      %2502 = vmatmul.mubr.bf16.gmra.mrb[0].mxu0 %v2285
      %v2503 = vpop.f32.mrb[0].mxu0
      %v2504 = vadd.f32 0.0, %v2503
      %v2505 = vpop.f32.mrb[0].mxu0
      %v2506 = vpop.f32.mrb[0].mxu0
      %v2507 = vadd.f32 0.0, %v2506
      %v2508 = vpop.f32.mrb[0].mxu0
      %2509 = vmatprep.mubr.bf16.mxu0 0
      %2510 = vmatmul.mubr.bf16.gmra.mrb[0].mxu0 %v2288
      %v2511 = vpop.f32.mrb[0].mxu0
      %v2512 = vadd.f32 0.0, %v2511
      %v2513 = vpop.f32.mrb[0].mxu0
      %v2514 = vpop.f32.mrb[0].mxu0
      %v2515 = vadd.f32 0.0, %v2514
      %v2516 = vpop.f32.mrb[0].mxu0
      %2517 = vdwg.mxu0
      %v2518 = vadd.f32 %v2096, %v2328
      %v2519 = vadd.f32 %v2097, %v2331
      %v2520 = vadd.f32 %v2098, %v2336
      %v2521 = vadd.f32 %v2099, %v2339
      %v2522 = vadd.f32 %v2100, %v2344
      %v2523 = vadd.f32 %v2101, %v2347
      %v2524 = vadd.f32 %v2102, %v2352
      %v2525 = vadd.f32 %v2103, %v2355
      %v2526 = vadd.f32 %v2104, %v2360
      %v2527 = vadd.f32 %v2105, %v2363
      %v2528 = vadd.f32 %v2106, %v2368
      %v2529 = vadd.f32 %v2107, %v2371
      %v2530 = vadd.f32 %v2108, %v2376
      %v2531 = vadd.f32 %v2109, %v2379
      %v2532 = vadd.f32 %v2110, %v2384
      %v2533 = vadd.f32 %v2111, %v2387
      %v2534 = vadd.f32 %v2112, %v2392
      %v2535 = vadd.f32 %v2113, %v2395
      %v2536 = vadd.f32 %v2114, %v2400
      %v2537 = vadd.f32 %v2115, %v2403
      %v2538 = vadd.f32 %v2116, %v2408
      %v2539 = vadd.f32 %v2117, %v2411
      %v2540 = vadd.f32 %v2118, %v2416
      %v2541 = vadd.f32 %v2119, %v2419
      %v2542 = vadd.f32 %v2120, %v2424
      %v2543 = vadd.f32 %v2121, %v2427
      %v2544 = vadd.f32 %v2122, %v2432
      %v2545 = vadd.f32 %v2123, %v2435
      %v2546 = vadd.f32 %v2124, %v2440
      %v2547 = vadd.f32 %v2125, %v2443
      %v2548 = vadd.f32 %v2126, %v2448
      %v2549 = vadd.f32 %v2127, %v2451
      %v2550 = vadd.f32 %v2128, %v2456
      %v2551 = vadd.f32 %v2129, %v2459
      %v2552 = vadd.f32 %v2130, %v2464
      %v2553 = vadd.f32 %v2131, %v2467
      %v2554 = vadd.f32 %v2132, %v2472
      %v2555 = vadd.f32 %v2133, %v2475
      %v2556 = vadd.f32 %v2134, %v2480
      %v2557 = vadd.f32 %v2135, %v2483
      %v2558 = vadd.f32 %v2136, %v2488
      %v2559 = vadd.f32 %v2137, %v2491
      %v2560 = vadd.f32 %v2138, %v2496
      %v2561 = vadd.f32 %v2139, %v2499
      %v2562 = vadd.f32 %v2140, %v2504
      %v2563 = vadd.f32 %v2141, %v2507
      %v2564 = vadd.f32 %v2142, %v2512
      %v2565 = vadd.f32 %v2143, %v2515
      %v2566 = vld [vmem:[#allocation2 + $0x20] sm:$0xff]
      %v2567 = vld [vmem:[#allocation2 + $0x28] sm:$0xff]
      %v2568 = vld [vmem:[#allocation2 + $0x30] sm:$0xff]
      %v2569 = vld [vmem:[#allocation2 + $0x38] sm:$0xff]
      %v2570 = vld [vmem:[#allocation2 + $0x40] sm:$0xff]
      %v2571 = vld [vmem:[#allocation2 + $0x48] sm:$0xff]
      %v2572 = vld [vmem:[#allocation2 + $0x50] sm:$0xff]
      %v2573 = vld [vmem:[#allocation2 + $0x58] sm:$0xff]
      %v2574 = vld [vmem:[#allocation2 + $0x60] sm:$0xff]
      %v2575 = vld [vmem:[#allocation2 + $0x68] sm:$0xff]
      %v2576 = vld [vmem:[#allocation2 + $0x70] sm:$0xff]
      %v2577 = vld [vmem:[#allocation2 + $0x78] sm:$0xff]
      %v2578 = vld [vmem:[#allocation2 + $0x80] sm:$0xff]
      %v2579 = vld [vmem:[#allocation2 + $0x88] sm:$0xff]
      %v2580 = vld [vmem:[#allocation2 + $0x90] sm:$0xff]
      %v2581 = vld [vmem:[#allocation2 + $0x98] sm:$0xff]
      %v2582 = vld [vmem:[#allocation2 + $0xa0] sm:$0xff]
      %v2583 = vld [vmem:[#allocation2 + $0xa8] sm:$0xff]
      %v2584 = vld [vmem:[#allocation2 + $0xb0] sm:$0xff]
      %v2585 = vld [vmem:[#allocation2 + $0xb8] sm:$0xff]
      %v2586 = vld [vmem:[#allocation2 + $0xc0] sm:$0xff]
      %v2587 = vld [vmem:[#allocation2 + $0xc8] sm:$0xff]
      %v2588 = vld [vmem:[#allocation2 + $0xd0] sm:$0xff]
      %v2589 = vld [vmem:[#allocation2 + $0xd8] sm:$0xff]
      %v2590 = vld [vmem:[#allocation2 + $0xe0] sm:$0xff]
      %v2591 = vld [vmem:[#allocation2 + $0xe8] sm:$0xff]
      %v2592 = vld [vmem:[#allocation2 + $0xf0] sm:$0xff]
      %v2593 = vld [vmem:[#allocation2 + $0xf8] sm:$0xff]
      %v2594 = vld [vmem:[#allocation2 + $0x100] sm:$0xff]
      %v2595 = vld [vmem:[#allocation2 + $0x108] sm:$0xff]
      %v2596 = vld [vmem:[#allocation2 + $0x110] sm:$0xff]
      %v2597 = vld [vmem:[#allocation2 + $0x118] sm:$0xff]
      %v2598 = vld [vmem:[#allocation2 + $0x120] sm:$0xff]
      %v2599 = vld [vmem:[#allocation2 + $0x128] sm:$0xff]
      %v2600 = vld [vmem:[#allocation2 + $0x130] sm:$0xff]
      %v2601 = vld [vmem:[#allocation2 + $0x138] sm:$0xff]
      %v2602 = vld [vmem:[#allocation2 + $0x140] sm:$0xff]
      %v2603 = vld [vmem:[#allocation2 + $0x148] sm:$0xff]
      %v2604 = vld [vmem:[#allocation2 + $0x150] sm:$0xff]
      %v2605 = vld [vmem:[#allocation2 + $0x158] sm:$0xff]
      %v2606 = vld [vmem:[#allocation2 + $0x160] sm:$0xff]
      %v2607 = vld [vmem:[#allocation2 + $0x168] sm:$0xff]
      %v2608 = vld [vmem:[#allocation2 + $0x170] sm:$0xff]
      %v2609 = vld [vmem:[#allocation2 + $0x178] sm:$0xff]
      %v2610 = vld [vmem:[#allocation2 + $0x180] sm:$0xff]
      %v2611 = vld [vmem:[#allocation2 + $0x188] sm:$0xff]
      %v2612 = vld [vmem:[#allocation2 + $0x190] sm:$0xff]
      %v2613 = vld [vmem:[#allocation2 + $0x198] sm:$0xff]
      %v2614 = vpack.c.bf16 %v2567, %v2566
      %v2615 = vpack.c.bf16 %v2569, %v2568
      %v2616 = vpack.c.bf16 %v2571, %v2570
      %v2617 = vpack.c.bf16 %v2573, %v2572
      %v2618 = vpack.c.bf16 %v2575, %v2574
      %v2619 = vpack.c.bf16 %v2577, %v2576
      %v2620 = vpack.c.bf16 %v2579, %v2578
      %v2621 = vpack.c.bf16 %v2581, %v2580
      %v2622 = vpack.c.bf16 %v2583, %v2582
      %v2623 = vpack.c.bf16 %v2585, %v2584
      %v2624 = vpack.c.bf16 %v2587, %v2586
      %v2625 = vpack.c.bf16 %v2589, %v2588
      %v2626 = vpack.c.bf16 %v2591, %v2590
      %v2627 = vpack.c.bf16 %v2593, %v2592
      %v2628 = vpack.c.bf16 %v2595, %v2594
      %v2629 = vpack.c.bf16 %v2597, %v2596
      %v2630 = vpack.c.bf16 %v2599, %v2598
      %v2631 = vpack.c.bf16 %v2601, %v2600
      %v2632 = vpack.c.bf16 %v2603, %v2602
      %v2633 = vpack.c.bf16 %v2605, %v2604
      %v2634 = vpack.c.bf16 %v2607, %v2606
      %v2635 = vpack.c.bf16 %v2609, %v2608
      %v2636 = vpack.c.bf16 %v2611, %v2610
      %v2637 = vpack.c.bf16 %v2613, %v2612
      %s2638 = scalar_lea.vmem %s4, 16
      %v2639 = vld [vmem:[%s2638] sm:$0xf]
      %v2641 = vsel %vm917, %v2614, 0
      %v2644 = vsel %vm917, %v2615, 0
      %v2647 = vsel %vm917, %v2616, 0
      %v2650 = vsel %vm917, %v2617, 0
      %v2653 = vsel %vm917, %v2618, 0
      %v2656 = vsel %vm917, %v2619, 0
      %v2659 = vsel %vm917, %v2620, 0
      %v2662 = vsel %vm917, %v2621, 0
      %v2665 = vsel %vm917, %v2622, 0
      %v2668 = vsel %vm917, %v2623, 0
      %v2671 = vsel %vm917, %v2624, 0
      %v2674 = vsel %vm917, %v2625, 0
      %v2677 = vsel %vm917, %v2626, 0
      %v2680 = vsel %vm917, %v2627, 0
      %v2683 = vsel %vm917, %v2628, 0
      %v2686 = vsel %vm917, %v2629, 0
      %v2689 = vsel %vm917, %v2630, 0
      %v2692 = vsel %vm917, %v2631, 0
      %v2695 = vsel %vm917, %v2632, 0
      %v2698 = vsel %vm917, %v2633, 0
      %v2701 = vsel %vm917, %v2634, 0
      %v2704 = vsel %vm917, %v2635, 0
      %v2707 = vsel %vm917, %v2636, 0
      %v2710 = vsel %vm917, %v2637, 0
      %v2713 = vsel %vm1193, %v2639, 0
      %2715 = vmatprep.subr.bf16.mxu0 0
      %2716 = vmatpush1.bf16.msra.mxu0 %v2713
      %2717 = vmatprep.subr.bf16.mxu0 0
      %2718 = vmatpush1.bf16.msra.mxu0 0
      %2719 = vmatprep.subr.bf16.mxu0 0
      %2720 = vmatpush1.bf16.msra.mxu0 0
      %2721 = vmatprep.subr.bf16.mxu0 0
      %2722 = vmatpush1.bf16.msra.mxu0 0
      %2723 = vmatprep.subr.bf16.mxu0 0
      %2724 = vmatpush1.bf16.msra.mxu0 0
      %2725 = vmatprep.subr.bf16.mxu0 0
      %2726 = vmatpush1.bf16.msra.mxu0 0
      %2727 = vmatprep.subr.bf16.mxu0 0
      %2728 = vmatpush1.bf16.msra.mxu0 0
      %2729 = vmatprep.subr.bf16.mxu0 0
      %2730 = vmatpush1.bf16.msra.mxu0 0
      %2731 = vmatprep.subr.bf16.mxu0 0
      %2732 = vmatpush1.bf16.msra.mxu0 0
      %2733 = vmatprep.subr.bf16.mxu0 0
      %2734 = vmatpush1.bf16.msra.mxu0 0
      %2735 = vmatprep.subr.bf16.mxu0 0
      %2736 = vmatpush1.bf16.msra.mxu0 0
      %2737 = vmatprep.subr.bf16.mxu0 0
      %2738 = vmatpush1.bf16.msra.mxu0 0
      %2739 = vmatprep.subr.bf16.mxu0 0
      %2740 = vmatpush1.bf16.msra.mxu0 0
      %2741 = vmatprep.subr.bf16.mxu0 0
      %2742 = vmatpush1.bf16.msra.mxu0 0
      %2743 = vmatprep.subr.bf16.mxu0 0
      %2744 = vmatpush1.bf16.msra.mxu0 0
      %2745 = vmatprep.subr.bf16.mxu0 0
      %2746 = vmatpush1.bf16.msra.mxu0 0
      %2747 = vmatprep.mubr.bf16.mxu0 0
      %2748 = vmatmul.mubr.bf16.gmra.mrb[0].mxu0 %v2641
      %v2749 = vpop.f32.mrb[0].mxu0
      %v2750 = vadd.f32 0.0, %v2749
      %v2751 = vpop.f32.mrb[0].mxu0
      %v2752 = vpop.f32.mrb[0].mxu0
      %v2753 = vadd.f32 0.0, %v2752
      %v2754 = vpop.f32.mrb[0].mxu0
      %2755 = vmatprep.mubr.bf16.mxu0 0
      %2756 = vmatmul.mubr.bf16.gmra.mrb[0].mxu0 %v2644
      %v2757 = vpop.f32.mrb[0].mxu0
      %v2758 = vadd.f32 0.0, %v2757
      %v2759 = vpop.f32.mrb[0].mxu0
      %v2760 = vpop.f32.mrb[0].mxu0
      %v2761 = vadd.f32 0.0, %v2760
      %v2762 = vpop.f32.mrb[0].mxu0
      %2763 = vmatprep.mubr.bf16.mxu0 0
      %2764 = vmatmul.mubr.bf16.gmra.mrb[0].mxu0 %v2647
      %v2765 = vpop.f32.mrb[0].mxu0
      %v2766 = vadd.f32 0.0, %v2765
      %v2767 = vpop.f32.mrb[0].mxu0
      %v2768 = vpop.f32.mrb[0].mxu0
      %v2769 = vadd.f32 0.0, %v2768
      %v2770 = vpop.f32.mrb[0].mxu0
      %2771 = vmatprep.mubr.bf16.mxu0 0
      %2772 = vmatmul.mubr.bf16.gmra.mrb[0].mxu0 %v2650
      %v2773 = vpop.f32.mrb[0].mxu0
      %v2774 = vadd.f32 0.0, %v2773
      %v2775 = vpop.f32.mrb[0].mxu0
      %v2776 = vpop.f32.mrb[0].mxu0
      %v2777 = vadd.f32 0.0, %v2776
      %v2778 = vpop.f32.mrb[0].mxu0
      %2779 = vmatprep.mubr.bf16.mxu0 0
      %2780 = vmatmul.mubr.bf16.gmra.mrb[0].mxu0 %v2653
      %v2781 = vpop.f32.mrb[0].mxu0
      %v2782 = vadd.f32 0.0, %v2781
      %v2783 = vpop.f32.mrb[0].mxu0
      %v2784 = vpop.f32.mrb[0].mxu0
      %v2785 = vadd.f32 0.0, %v2784
      %v2786 = vpop.f32.mrb[0].mxu0
      %2787 = vmatprep.mubr.bf16.mxu0 0
      %2788 = vmatmul.mubr.bf16.gmra.mrb[0].mxu0 %v2656
      %v2789 = vpop.f32.mrb[0].mxu0
      %v2790 = vadd.f32 0.0, %v2789
      %v2791 = vpop.f32.mrb[0].mxu0
      %v2792 = vpop.f32.mrb[0].mxu0
      %v2793 = vadd.f32 0.0, %v2792
      %v2794 = vpop.f32.mrb[0].mxu0
      %2795 = vmatprep.mubr.bf16.mxu0 0
      %2796 = vmatmul.mubr.bf16.gmra.mrb[0].mxu0 %v2659
      %v2797 = vpop.f32.mrb[0].mxu0
      %v2798 = vadd.f32 0.0, %v2797
      %v2799 = vpop.f32.mrb[0].mxu0
      %v2800 = vpop.f32.mrb[0].mxu0
      %v2801 = vadd.f32 0.0, %v2800
      %v2802 = vpop.f32.mrb[0].mxu0
      %2803 = vmatprep.mubr.bf16.mxu0 0
      %2804 = vmatmul.mubr.bf16.gmra.mrb[0].mxu0 %v2662
      %v2805 = vpop.f32.mrb[0].mxu0
      %v2806 = vadd.f32 0.0, %v2805
      %v2807 = vpop.f32.mrb[0].mxu0
      %v2808 = vpop.f32.mrb[0].mxu0
      %v2809 = vadd.f32 0.0, %v2808
      %v2810 = vpop.f32.mrb[0].mxu0
      %2811 = vmatprep.mubr.bf16.mxu0 0
      %2812 = vmatmul.mubr.bf16.gmra.mrb[0].mxu0 %v2665
      %v2813 = vpop.f32.mrb[0].mxu0
      %v2814 = vadd.f32 0.0, %v2813
      %v2815 = vpop.f32.mrb[0].mxu0
      %v2816 = vpop.f32.mrb[0].mxu0
      %v2817 = vadd.f32 0.0, %v2816
      %v2818 = vpop.f32.mrb[0].mxu0
      %2819 = vmatprep.mubr.bf16.mxu0 0
      %2820 = vmatmul.mubr.bf16.gmra.mrb[0].mxu0 %v2668
      %v2821 = vpop.f32.mrb[0].mxu0
      %v2822 = vadd.f32 0.0, %v2821
      %v2823 = vpop.f32.mrb[0].mxu0
      %v2824 = vpop.f32.mrb[0].mxu0
      %v2825 = vadd.f32 0.0, %v2824
      %v2826 = vpop.f32.mrb[0].mxu0
      %2827 = vmatprep.mubr.bf16.mxu0 0
      %2828 = vmatmul.mubr.bf16.gmra.mrb[0].mxu0 %v2671
      %v2829 = vpop.f32.mrb[0].mxu0
      %v2830 = vadd.f32 0.0, %v2829
      %v2831 = vpop.f32.mrb[0].mxu0
      %v2832 = vpop.f32.mrb[0].mxu0
      %v2833 = vadd.f32 0.0, %v2832
      %v2834 = vpop.f32.mrb[0].mxu0
      %2835 = vmatprep.mubr.bf16.mxu0 0
      %2836 = vmatmul.mubr.bf16.gmra.mrb[0].mxu0 %v2674
      %v2837 = vpop.f32.mrb[0].mxu0
      %v2838 = vadd.f32 0.0, %v2837
      %v2839 = vpop.f32.mrb[0].mxu0
      %v2840 = vpop.f32.mrb[0].mxu0
      %v2841 = vadd.f32 0.0, %v2840
      %v2842 = vpop.f32.mrb[0].mxu0
      %2843 = vmatprep.mubr.bf16.mxu0 0
      %2844 = vmatmul.mubr.bf16.gmra.mrb[0].mxu0 %v2677
      %v2845 = vpop.f32.mrb[0].mxu0
      %v2846 = vadd.f32 0.0, %v2845
      %v2847 = vpop.f32.mrb[0].mxu0
      %v2848 = vpop.f32.mrb[0].mxu0
      %v2849 = vadd.f32 0.0, %v2848
      %v2850 = vpop.f32.mrb[0].mxu0
      %2851 = vmatprep.mubr.bf16.mxu0 0
      %2852 = vmatmul.mubr.bf16.gmra.mrb[0].mxu0 %v2680
      %v2853 = vpop.f32.mrb[0].mxu0
      %v2854 = vadd.f32 0.0, %v2853
      %v2855 = vpop.f32.mrb[0].mxu0
      %v2856 = vpop.f32.mrb[0].mxu0
      %v2857 = vadd.f32 0.0, %v2856
      %v2858 = vpop.f32.mrb[0].mxu0
      %2859 = vmatprep.mubr.bf16.mxu0 0
      %2860 = vmatmul.mubr.bf16.gmra.mrb[0].mxu0 %v2683
      %v2861 = vpop.f32.mrb[0].mxu0
      %v2862 = vadd.f32 0.0, %v2861
      %v2863 = vpop.f32.mrb[0].mxu0
      %v2864 = vpop.f32.mrb[0].mxu0
      %v2865 = vadd.f32 0.0, %v2864
      %v2866 = vpop.f32.mrb[0].mxu0
      %2867 = vmatprep.mubr.bf16.mxu0 0
      %2868 = vmatmul.mubr.bf16.gmra.mrb[0].mxu0 %v2686
      %v2869 = vpop.f32.mrb[0].mxu0
      %v2870 = vadd.f32 0.0, %v2869
      %v2871 = vpop.f32.mrb[0].mxu0
      %v2872 = vpop.f32.mrb[0].mxu0
      %v2873 = vadd.f32 0.0, %v2872
      %v2874 = vpop.f32.mrb[0].mxu0
      %2875 = vmatprep.mubr.bf16.mxu0 0
      %2876 = vmatmul.mubr.bf16.gmra.mrb[0].mxu0 %v2689
      %v2877 = vpop.f32.mrb[0].mxu0
      %v2878 = vadd.f32 0.0, %v2877
      %v2879 = vpop.f32.mrb[0].mxu0
      %v2880 = vpop.f32.mrb[0].mxu0
      %v2881 = vadd.f32 0.0, %v2880
      %v2882 = vpop.f32.mrb[0].mxu0
      %2883 = vmatprep.mubr.bf16.mxu0 0
      %2884 = vmatmul.mubr.bf16.gmra.mrb[0].mxu0 %v2692
      %v2885 = vpop.f32.mrb[0].mxu0
      %v2886 = vadd.f32 0.0, %v2885
      %v2887 = vpop.f32.mrb[0].mxu0
      %v2888 = vpop.f32.mrb[0].mxu0
      %v2889 = vadd.f32 0.0, %v2888
      %v2890 = vpop.f32.mrb[0].mxu0
      %2891 = vmatprep.mubr.bf16.mxu0 0
      %2892 = vmatmul.mubr.bf16.gmra.mrb[0].mxu0 %v2695
      %v2893 = vpop.f32.mrb[0].mxu0
      %v2894 = vadd.f32 0.0, %v2893
      %v2895 = vpop.f32.mrb[0].mxu0
      %v2896 = vpop.f32.mrb[0].mxu0
      %v2897 = vadd.f32 0.0, %v2896
      %v2898 = vpop.f32.mrb[0].mxu0
      %2899 = vmatprep.mubr.bf16.mxu0 0
      %2900 = vmatmul.mubr.bf16.gmra.mrb[0].mxu0 %v2698
      %v2901 = vpop.f32.mrb[0].mxu0
      %v2902 = vadd.f32 0.0, %v2901
      %v2903 = vpop.f32.mrb[0].mxu0
      %v2904 = vpop.f32.mrb[0].mxu0
      %v2905 = vadd.f32 0.0, %v2904
      %v2906 = vpop.f32.mrb[0].mxu0
      %2907 = vmatprep.mubr.bf16.mxu0 0
      %2908 = vmatmul.mubr.bf16.gmra.mrb[0].mxu0 %v2701
      %v2909 = vpop.f32.mrb[0].mxu0
      %v2910 = vadd.f32 0.0, %v2909
      %v2911 = vpop.f32.mrb[0].mxu0
      %v2912 = vpop.f32.mrb[0].mxu0
      %v2913 = vadd.f32 0.0, %v2912
      %v2914 = vpop.f32.mrb[0].mxu0
      %2915 = vmatprep.mubr.bf16.mxu0 0
      %2916 = vmatmul.mubr.bf16.gmra.mrb[0].mxu0 %v2704
      %v2917 = vpop.f32.mrb[0].mxu0
      %v2918 = vadd.f32 0.0, %v2917
      %v2919 = vpop.f32.mrb[0].mxu0
      %v2920 = vpop.f32.mrb[0].mxu0
      %v2921 = vadd.f32 0.0, %v2920
      %v2922 = vpop.f32.mrb[0].mxu0
      %2923 = vmatprep.mubr.bf16.mxu0 0
      %2924 = vmatmul.mubr.bf16.gmra.mrb[0].mxu0 %v2707
      %v2925 = vpop.f32.mrb[0].mxu0
      %v2926 = vadd.f32 0.0, %v2925
      %v2927 = vpop.f32.mrb[0].mxu0
      %v2928 = vpop.f32.mrb[0].mxu0
      %v2929 = vadd.f32 0.0, %v2928
      %v2930 = vpop.f32.mrb[0].mxu0
      %2931 = vmatprep.mubr.bf16.mxu0 0
      %2932 = vmatmul.mubr.bf16.gmra.mrb[0].mxu0 %v2710
      %v2933 = vpop.f32.mrb[0].mxu0
      %v2934 = vadd.f32 0.0, %v2933
      %v2935 = vpop.f32.mrb[0].mxu0
      %v2936 = vpop.f32.mrb[0].mxu0
      %v2937 = vadd.f32 0.0, %v2936
      %v2938 = vpop.f32.mrb[0].mxu0
      %2939 = vdwg.mxu0
      %v2940 = vadd.f32 %v2518, %v2750
      %v2941 = vadd.f32 %v2519, %v2753
      %v2942 = vadd.f32 %v2520, %v2758
      %v2943 = vadd.f32 %v2521, %v2761
      %v2944 = vadd.f32 %v2522, %v2766
      %v2945 = vadd.f32 %v2523, %v2769
      %v2946 = vadd.f32 %v2524, %v2774
      %v2947 = vadd.f32 %v2525, %v2777
      %v2948 = vadd.f32 %v2526, %v2782
      %v2949 = vadd.f32 %v2527, %v2785
      %v2950 = vadd.f32 %v2528, %v2790
      %v2951 = vadd.f32 %v2529, %v2793
      %v2952 = vadd.f32 %v2530, %v2798
      %v2953 = vadd.f32 %v2531, %v2801
      %v2954 = vadd.f32 %v2532, %v2806
      %v2955 = vadd.f32 %v2533, %v2809
      %v2956 = vadd.f32 %v2534, %v2814
      %v2957 = vadd.f32 %v2535, %v2817
      %v2958 = vadd.f32 %v2536, %v2822
      %v2959 = vadd.f32 %v2537, %v2825
      %v2960 = vadd.f32 %v2538, %v2830
      %v2961 = vadd.f32 %v2539, %v2833
      %v2962 = vadd.f32 %v2540, %v2838
      %v2963 = vadd.f32 %v2541, %v2841
      %v2964 = vadd.f32 %v2542, %v2846
      %v2965 = vadd.f32 %v2543, %v2849
      %v2966 = vadd.f32 %v2544, %v2854
      %v2967 = vadd.f32 %v2545, %v2857
      %v2968 = vadd.f32 %v2546, %v2862
      %v2969 = vadd.f32 %v2547, %v2865
      %v2970 = vadd.f32 %v2548, %v2870
      %v2971 = vadd.f32 %v2549, %v2873
      %v2972 = vadd.f32 %v2550, %v2878
      %v2973 = vadd.f32 %v2551, %v2881
      %v2974 = vadd.f32 %v2552, %v2886
      %v2975 = vadd.f32 %v2553, %v2889
      %v2976 = vadd.f32 %v2554, %v2894
      %v2977 = vadd.f32 %v2555, %v2897
      %v2978 = vadd.f32 %v2556, %v2902
      %v2979 = vadd.f32 %v2557, %v2905
      %v2980 = vadd.f32 %v2558, %v2910
      %v2981 = vadd.f32 %v2559, %v2913
      %v2982 = vadd.f32 %v2560, %v2918
      %v2983 = vadd.f32 %v2561, %v2921
      %v2984 = vadd.f32 %v2562, %v2926
      %v2985 = vadd.f32 %v2563, %v2929
      %v2986 = vadd.f32 %v2564, %v2934
      %v2987 = vadd.f32 %v2565, %v2937
      %v2988 = vld [vmem:[#allocation2 + $0x21] sm:$0xff]
      %v2989 = vld [vmem:[#allocation2 + $0x29] sm:$0xff]
      %v2990 = vld [vmem:[#allocation2 + $0x31] sm:$0xff]
      %v2991 = vld [vmem:[#allocation2 + $0x39] sm:$0xff]
      %v2992 = vld [vmem:[#allocation2 + $0x41] sm:$0xff]
      %v2993 = vld [vmem:[#allocation2 + $0x49] sm:$0xff]
      %v2994 = vld [vmem:[#allocation2 + $0x51] sm:$0xff]
      %v2995 = vld [vmem:[#allocation2 + $0x59] sm:$0xff]
      %v2996 = vld [vmem:[#allocation2 + $0x61] sm:$0xff]
      %v2997 = vld [vmem:[#allocation2 + $0x69] sm:$0xff]
      %v2998 = vld [vmem:[#allocation2 + $0x71] sm:$0xff]
      %v2999 = vld [vmem:[#allocation2 + $0x79] sm:$0xff]
      %v3000 = vld [vmem:[#allocation2 + $0x81] sm:$0xff]
      %v3001 = vld [vmem:[#allocation2 + $0x89] sm:$0xff]
      %v3002 = vld [vmem:[#allocation2 + $0x91] sm:$0xff]
      %v3003 = vld [vmem:[#allocation2 + $0x99] sm:$0xff]
      %v3004 = vld [vmem:[#allocation2 + $0xa1] sm:$0xff]
      %v3005 = vld [vmem:[#allocation2 + $0xa9] sm:$0xff]
      %v3006 = vld [vmem:[#allocation2 + $0xb1] sm:$0xff]
      %v3007 = vld [vmem:[#allocation2 + $0xb9] sm:$0xff]
      %v3008 = vld [vmem:[#allocation2 + $0xc1] sm:$0xff]
      %v3009 = vld [vmem:[#allocation2 + $0xc9] sm:$0xff]
      %v3010 = vld [vmem:[#allocation2 + $0xd1] sm:$0xff]
      %v3011 = vld [vmem:[#allocation2 + $0xd9] sm:$0xff]
      %v3012 = vld [vmem:[#allocation2 + $0xe1] sm:$0xff]
      %v3013 = vld [vmem:[#allocation2 + $0xe9] sm:$0xff]
      %v3014 = vld [vmem:[#allocation2 + $0xf1] sm:$0xff]
      %v3015 = vld [vmem:[#allocation2 + $0xf9] sm:$0xff]
      %v3016 = vld [vmem:[#allocation2 + $0x101] sm:$0xff]
      %v3017 = vld [vmem:[#allocation2 + $0x109] sm:$0xff]
      %v3018 = vld [vmem:[#allocation2 + $0x111] sm:$0xff]
      %v3019 = vld [vmem:[#allocation2 + $0x119] sm:$0xff]
      %v3020 = vld [vmem:[#allocation2 + $0x121] sm:$0xff]
      %v3021 = vld [vmem:[#allocation2 + $0x129] sm:$0xff]
      %v3022 = vld [vmem:[#allocation2 + $0x131] sm:$0xff]
      %v3023 = vld [vmem:[#allocation2 + $0x139] sm:$0xff]
      %v3024 = vld [vmem:[#allocation2 + $0x141] sm:$0xff]
      %v3025 = vld [vmem:[#allocation2 + $0x149] sm:$0xff]
      %v3026 = vld [vmem:[#allocation2 + $0x151] sm:$0xff]
      %v3027 = vld [vmem:[#allocation2 + $0x159] sm:$0xff]
      %v3028 = vld [vmem:[#allocation2 + $0x161] sm:$0xff]
      %v3029 = vld [vmem:[#allocation2 + $0x169] sm:$0xff]
      %v3030 = vld [vmem:[#allocation2 + $0x171] sm:$0xff]
      %v3031 = vld [vmem:[#allocation2 + $0x179] sm:$0xff]
      %v3032 = vld [vmem:[#allocation2 + $0x181] sm:$0xff]
      %v3033 = vld [vmem:[#allocation2 + $0x189] sm:$0xff]
      %v3034 = vld [vmem:[#allocation2 + $0x191] sm:$0xff]
      %v3035 = vld [vmem:[#allocation2 + $0x199] sm:$0xff]
      %v3036 = vpack.c.bf16 %v2989, %v2988
      %v3037 = vpack.c.bf16 %v2991, %v2990
      %v3038 = vpack.c.bf16 %v2993, %v2992
      %v3039 = vpack.c.bf16 %v2995, %v2994
      %v3040 = vpack.c.bf16 %v2997, %v2996
      %v3041 = vpack.c.bf16 %v2999, %v2998
      %v3042 = vpack.c.bf16 %v3001, %v3000
      %v3043 = vpack.c.bf16 %v3003, %v3002
      %v3044 = vpack.c.bf16 %v3005, %v3004
      %v3045 = vpack.c.bf16 %v3007, %v3006
      %v3046 = vpack.c.bf16 %v3009, %v3008
      %v3047 = vpack.c.bf16 %v3011, %v3010
      %v3048 = vpack.c.bf16 %v3013, %v3012
      %v3049 = vpack.c.bf16 %v3015, %v3014
      %v3050 = vpack.c.bf16 %v3017, %v3016
      %v3051 = vpack.c.bf16 %v3019, %v3018
      %v3052 = vpack.c.bf16 %v3021, %v3020
      %v3053 = vpack.c.bf16 %v3023, %v3022
      %v3054 = vpack.c.bf16 %v3025, %v3024
      %v3055 = vpack.c.bf16 %v3027, %v3026
      %v3056 = vpack.c.bf16 %v3029, %v3028
      %v3057 = vpack.c.bf16 %v3031, %v3030
      %v3058 = vpack.c.bf16 %v3033, %v3032
      %v3059 = vpack.c.bf16 %v3035, %v3034
      %s3060 = scalar_lea.vmem %s4, 20
      %v3061 = vld [vmem:[%s3060] sm:$0xf]
      %v3063 = vsel %vm917, %v3036, 0
      %v3066 = vsel %vm917, %v3037, 0
      %v3069 = vsel %vm917, %v3038, 0
      %v3072 = vsel %vm917, %v3039, 0
      %v3075 = vsel %vm917, %v3040, 0
      %v3078 = vsel %vm917, %v3041, 0
      %v3081 = vsel %vm917, %v3042, 0
      %v3084 = vsel %vm917, %v3043, 0
      %v3087 = vsel %vm917, %v3044, 0
      %v3090 = vsel %vm917, %v3045, 0
      %v3093 = vsel %vm917, %v3046, 0
      %v3096 = vsel %vm917, %v3047, 0
      %v3099 = vsel %vm917, %v3048, 0
      %v3102 = vsel %vm917, %v3049, 0
      %v3105 = vsel %vm917, %v3050, 0
      %v3108 = vsel %vm917, %v3051, 0
      %v3111 = vsel %vm917, %v3052, 0
      %v3114 = vsel %vm917, %v3053, 0
      %v3117 = vsel %vm917, %v3054, 0
      %v3120 = vsel %vm917, %v3055, 0
      %v3123 = vsel %vm917, %v3056, 0
      %v3126 = vsel %vm917, %v3057, 0
      %v3129 = vsel %vm917, %v3058, 0
      %v3132 = vsel %vm917, %v3059, 0
      %v3135 = vsel %vm1193, %v3061, 0
      %3137 = vmatprep.subr.bf16.mxu0 0
      %3138 = vmatpush1.bf16.msra.mxu0 %v3135
      %3139 = vmatprep.subr.bf16.mxu0 0
      %3140 = vmatpush1.bf16.msra.mxu0 0
      %3141 = vmatprep.subr.bf16.mxu0 0
      %3142 = vmatpush1.bf16.msra.mxu0 0
      %3143 = vmatprep.subr.bf16.mxu0 0
      %3144 = vmatpush1.bf16.msra.mxu0 0
      %3145 = vmatprep.subr.bf16.mxu0 0
      %3146 = vmatpush1.bf16.msra.mxu0 0
      %3147 = vmatprep.subr.bf16.mxu0 0
      %3148 = vmatpush1.bf16.msra.mxu0 0
      %3149 = vmatprep.subr.bf16.mxu0 0
      %3150 = vmatpush1.bf16.msra.mxu0 0
      %3151 = vmatprep.subr.bf16.mxu0 0
      %3152 = vmatpush1.bf16.msra.mxu0 0
      %3153 = vmatprep.subr.bf16.mxu0 0
      %3154 = vmatpush1.bf16.msra.mxu0 0
      %3155 = vmatprep.subr.bf16.mxu0 0
      %3156 = vmatpush1.bf16.msra.mxu0 0
      %3157 = vmatprep.subr.bf16.mxu0 0
      %3158 = vmatpush1.bf16.msra.mxu0 0
      %3159 = vmatprep.subr.bf16.mxu0 0
      %3160 = vmatpush1.bf16.msra.mxu0 0
      %3161 = vmatprep.subr.bf16.mxu0 0
      %3162 = vmatpush1.bf16.msra.mxu0 0
      %3163 = vmatprep.subr.bf16.mxu0 0
      %3164 = vmatpush1.bf16.msra.mxu0 0
      %3165 = vmatprep.subr.bf16.mxu0 0
      %3166 = vmatpush1.bf16.msra.mxu0 0
      %3167 = vmatprep.subr.bf16.mxu0 0
      %3168 = vmatpush1.bf16.msra.mxu0 0
      %3169 = vmatprep.mubr.bf16.mxu0 0
      %3170 = vmatmul.mubr.bf16.gmra.mrb[0].mxu0 %v3063
      %v3171 = vpop.f32.mrb[0].mxu0
      %v3172 = vadd.f32 0.0, %v3171
      %v3173 = vpop.f32.mrb[0].mxu0
      %v3174 = vpop.f32.mrb[0].mxu0
      %v3175 = vadd.f32 0.0, %v3174
      %v3176 = vpop.f32.mrb[0].mxu0
      %3177 = vmatprep.mubr.bf16.mxu0 0
      %3178 = vmatmul.mubr.bf16.gmra.mrb[0].mxu0 %v3066
      %v3179 = vpop.f32.mrb[0].mxu0
      %v3180 = vadd.f32 0.0, %v3179
      %v3181 = vpop.f32.mrb[0].mxu0
      %v3182 = vpop.f32.mrb[0].mxu0
      %v3183 = vadd.f32 0.0, %v3182
      %v3184 = vpop.f32.mrb[0].mxu0
      %3185 = vmatprep.mubr.bf16.mxu0 0
      %3186 = vmatmul.mubr.bf16.gmra.mrb[0].mxu0 %v3069
      %v3187 = vpop.f32.mrb[0].mxu0
      %v3188 = vadd.f32 0.0, %v3187
      %v3189 = vpop.f32.mrb[0].mxu0
      %v3190 = vpop.f32.mrb[0].mxu0
      %v3191 = vadd.f32 0.0, %v3190
      %v3192 = vpop.f32.mrb[0].mxu0
      %3193 = vmatprep.mubr.bf16.mxu0 0
      %3194 = vmatmul.mubr.bf16.gmra.mrb[0].mxu0 %v3072
      %v3195 = vpop.f32.mrb[0].mxu0
      %v3196 = vadd.f32 0.0, %v3195
      %v3197 = vpop.f32.mrb[0].mxu0
      %v3198 = vpop.f32.mrb[0].mxu0
      %v3199 = vadd.f32 0.0, %v3198
      %v3200 = vpop.f32.mrb[0].mxu0
      %3201 = vmatprep.mubr.bf16.mxu0 0
      %3202 = vmatmul.mubr.bf16.gmra.mrb[0].mxu0 %v3075
      %v3203 = vpop.f32.mrb[0].mxu0
      %v3204 = vadd.f32 0.0, %v3203
      %v3205 = vpop.f32.mrb[0].mxu0
      %v3206 = vpop.f32.mrb[0].mxu0
      %v3207 = vadd.f32 0.0, %v3206
      %v3208 = vpop.f32.mrb[0].mxu0
      %3209 = vmatprep.mubr.bf16.mxu0 0
      %3210 = vmatmul.mubr.bf16.gmra.mrb[0].mxu0 %v3078
      %v3211 = vpop.f32.mrb[0].mxu0
      %v3212 = vadd.f32 0.0, %v3211
      %v3213 = vpop.f32.mrb[0].mxu0
      %v3214 = vpop.f32.mrb[0].mxu0
      %v3215 = vadd.f32 0.0, %v3214
      %v3216 = vpop.f32.mrb[0].mxu0
      %3217 = vmatprep.mubr.bf16.mxu0 0
      %3218 = vmatmul.mubr.bf16.gmra.mrb[0].mxu0 %v3081
      %v3219 = vpop.f32.mrb[0].mxu0
      %v3220 = vadd.f32 0.0, %v3219
      %v3221 = vpop.f32.mrb[0].mxu0
      %v3222 = vpop.f32.mrb[0].mxu0
      %v3223 = vadd.f32 0.0, %v3222
      %v3224 = vpop.f32.mrb[0].mxu0
      %3225 = vmatprep.mubr.bf16.mxu0 0
      %3226 = vmatmul.mubr.bf16.gmra.mrb[0].mxu0 %v3084
      %v3227 = vpop.f32.mrb[0].mxu0
      %v3228 = vadd.f32 0.0, %v3227
      %v3229 = vpop.f32.mrb[0].mxu0
      %v3230 = vpop.f32.mrb[0].mxu0
      %v3231 = vadd.f32 0.0, %v3230
      %v3232 = vpop.f32.mrb[0].mxu0
      %3233 = vmatprep.mubr.bf16.mxu0 0
      %3234 = vmatmul.mubr.bf16.gmra.mrb[0].mxu0 %v3087
      %v3235 = vpop.f32.mrb[0].mxu0
      %v3236 = vadd.f32 0.0, %v3235
      %v3237 = vpop.f32.mrb[0].mxu0
      %v3238 = vpop.f32.mrb[0].mxu0
      %v3239 = vadd.f32 0.0, %v3238
      %v3240 = vpop.f32.mrb[0].mxu0
      %3241 = vmatprep.mubr.bf16.mxu0 0
      %3242 = vmatmul.mubr.bf16.gmra.mrb[0].mxu0 %v3090
      %v3243 = vpop.f32.mrb[0].mxu0
      %v3244 = vadd.f32 0.0, %v3243
      %v3245 = vpop.f32.mrb[0].mxu0
      %v3246 = vpop.f32.mrb[0].mxu0
      %v3247 = vadd.f32 0.0, %v3246
      %v3248 = vpop.f32.mrb[0].mxu0
      %3249 = vmatprep.mubr.bf16.mxu0 0
      %3250 = vmatmul.mubr.bf16.gmra.mrb[0].mxu0 %v3093
      %v3251 = vpop.f32.mrb[0].mxu0
      %v3252 = vadd.f32 0.0, %v3251
      %v3253 = vpop.f32.mrb[0].mxu0
      %v3254 = vpop.f32.mrb[0].mxu0
      %v3255 = vadd.f32 0.0, %v3254
      %v3256 = vpop.f32.mrb[0].mxu0
      %3257 = vmatprep.mubr.bf16.mxu0 0
      %3258 = vmatmul.mubr.bf16.gmra.mrb[0].mxu0 %v3096
      %v3259 = vpop.f32.mrb[0].mxu0
      %v3260 = vadd.f32 0.0, %v3259
      %v3261 = vpop.f32.mrb[0].mxu0
      %v3262 = vpop.f32.mrb[0].mxu0
      %v3263 = vadd.f32 0.0, %v3262
      %v3264 = vpop.f32.mrb[0].mxu0
      %3265 = vmatprep.mubr.bf16.mxu0 0
      %3266 = vmatmul.mubr.bf16.gmra.mrb[0].mxu0 %v3099
      %v3267 = vpop.f32.mrb[0].mxu0
      %v3268 = vadd.f32 0.0, %v3267
      %v3269 = vpop.f32.mrb[0].mxu0
      %v3270 = vpop.f32.mrb[0].mxu0
      %v3271 = vadd.f32 0.0, %v3270
      %v3272 = vpop.f32.mrb[0].mxu0
      %3273 = vmatprep.mubr.bf16.mxu0 0
      %3274 = vmatmul.mubr.bf16.gmra.mrb[0].mxu0 %v3102
      %v3275 = vpop.f32.mrb[0].mxu0
      %v3276 = vadd.f32 0.0, %v3275
      %v3277 = vpop.f32.mrb[0].mxu0
      %v3278 = vpop.f32.mrb[0].mxu0
      %v3279 = vadd.f32 0.0, %v3278
      %v3280 = vpop.f32.mrb[0].mxu0
      %3281 = vmatprep.mubr.bf16.mxu0 0
      %3282 = vmatmul.mubr.bf16.gmra.mrb[0].mxu0 %v3105
      %v3283 = vpop.f32.mrb[0].mxu0
      %v3284 = vadd.f32 0.0, %v3283
      %v3285 = vpop.f32.mrb[0].mxu0
      %v3286 = vpop.f32.mrb[0].mxu0
      %v3287 = vadd.f32 0.0, %v3286
      %v3288 = vpop.f32.mrb[0].mxu0
      %3289 = vmatprep.mubr.bf16.mxu0 0
      %3290 = vmatmul.mubr.bf16.gmra.mrb[0].mxu0 %v3108
      %v3291 = vpop.f32.mrb[0].mxu0
      %v3292 = vadd.f32 0.0, %v3291
      %v3293 = vpop.f32.mrb[0].mxu0
      %v3294 = vpop.f32.mrb[0].mxu0
      %v3295 = vadd.f32 0.0, %v3294
      %v3296 = vpop.f32.mrb[0].mxu0
      %3297 = vmatprep.mubr.bf16.mxu0 0
      %3298 = vmatmul.mubr.bf16.gmra.mrb[0].mxu0 %v3111
      %v3299 = vpop.f32.mrb[0].mxu0
      %v3300 = vadd.f32 0.0, %v3299
      %v3301 = vpop.f32.mrb[0].mxu0
      %v3302 = vpop.f32.mrb[0].mxu0
      %v3303 = vadd.f32 0.0, %v3302
      %v3304 = vpop.f32.mrb[0].mxu0
      %3305 = vmatprep.mubr.bf16.mxu0 0
      %3306 = vmatmul.mubr.bf16.gmra.mrb[0].mxu0 %v3114
      %v3307 = vpop.f32.mrb[0].mxu0
      %v3308 = vadd.f32 0.0, %v3307
      %v3309 = vpop.f32.mrb[0].mxu0
      %v3310 = vpop.f32.mrb[0].mxu0
      %v3311 = vadd.f32 0.0, %v3310
      %v3312 = vpop.f32.mrb[0].mxu0
      %3313 = vmatprep.mubr.bf16.mxu0 0
      %3314 = vmatmul.mubr.bf16.gmra.mrb[0].mxu0 %v3117
      %v3315 = vpop.f32.mrb[0].mxu0
      %v3316 = vadd.f32 0.0, %v3315
      %v3317 = vpop.f32.mrb[0].mxu0
      %v3318 = vpop.f32.mrb[0].mxu0
      %v3319 = vadd.f32 0.0, %v3318
      %v3320 = vpop.f32.mrb[0].mxu0
      %3321 = vmatprep.mubr.bf16.mxu0 0
      %3322 = vmatmul.mubr.bf16.gmra.mrb[0].mxu0 %v3120
      %v3323 = vpop.f32.mrb[0].mxu0
      %v3324 = vadd.f32 0.0, %v3323
      %v3325 = vpop.f32.mrb[0].mxu0
      %v3326 = vpop.f32.mrb[0].mxu0
      %v3327 = vadd.f32 0.0, %v3326
      %v3328 = vpop.f32.mrb[0].mxu0
      %3329 = vmatprep.mubr.bf16.mxu0 0
      %3330 = vmatmul.mubr.bf16.gmra.mrb[0].mxu0 %v3123
      %v3331 = vpop.f32.mrb[0].mxu0
      %v3332 = vadd.f32 0.0, %v3331
      %v3333 = vpop.f32.mrb[0].mxu0
      %v3334 = vpop.f32.mrb[0].mxu0
      %v3335 = vadd.f32 0.0, %v3334
      %v3336 = vpop.f32.mrb[0].mxu0
      %3337 = vmatprep.mubr.bf16.mxu0 0
      %3338 = vmatmul.mubr.bf16.gmra.mrb[0].mxu0 %v3126
      %v3339 = vpop.f32.mrb[0].mxu0
      %v3340 = vadd.f32 0.0, %v3339
      %v3341 = vpop.f32.mrb[0].mxu0
      %v3342 = vpop.f32.mrb[0].mxu0
      %v3343 = vadd.f32 0.0, %v3342
      %v3344 = vpop.f32.mrb[0].mxu0
      %3345 = vmatprep.mubr.bf16.mxu0 0
      %3346 = vmatmul.mubr.bf16.gmra.mrb[0].mxu0 %v3129
      %v3347 = vpop.f32.mrb[0].mxu0
      %v3348 = vadd.f32 0.0, %v3347
      %v3349 = vpop.f32.mrb[0].mxu0
      %v3350 = vpop.f32.mrb[0].mxu0
      %v3351 = vadd.f32 0.0, %v3350
      %v3352 = vpop.f32.mrb[0].mxu0
      %3353 = vmatprep.mubr.bf16.mxu0 0
      %3354 = vmatmul.mubr.bf16.gmra.mrb[0].mxu0 %v3132
      %v3355 = vpop.f32.mrb[0].mxu0
      %v3356 = vadd.f32 0.0, %v3355
      %v3357 = vpop.f32.mrb[0].mxu0
      %v3358 = vpop.f32.mrb[0].mxu0
      %v3359 = vadd.f32 0.0, %v3358
      %v3360 = vpop.f32.mrb[0].mxu0
      %3361 = vdwg.mxu0
      %v3362 = vadd.f32 %v2940, %v3172
      %v3363 = vadd.f32 %v2941, %v3175
      %v3364 = vadd.f32 %v2942, %v3180
      %v3365 = vadd.f32 %v2943, %v3183
      %v3366 = vadd.f32 %v2944, %v3188
      %v3367 = vadd.f32 %v2945, %v3191
      %v3368 = vadd.f32 %v2946, %v3196
      %v3369 = vadd.f32 %v2947, %v3199
      %v3370 = vadd.f32 %v2948, %v3204
      %v3371 = vadd.f32 %v2949, %v3207
      %v3372 = vadd.f32 %v2950, %v3212
      %v3373 = vadd.f32 %v2951, %v3215
      %v3374 = vadd.f32 %v2952, %v3220
      %v3375 = vadd.f32 %v2953, %v3223
      %v3376 = vadd.f32 %v2954, %v3228
      %v3377 = vadd.f32 %v2955, %v3231
      %v3378 = vadd.f32 %v2956, %v3236
      %v3379 = vadd.f32 %v2957, %v3239
      %v3380 = vadd.f32 %v2958, %v3244
      %v3381 = vadd.f32 %v2959, %v3247
      %v3382 = vadd.f32 %v2960, %v3252
      %v3383 = vadd.f32 %v2961, %v3255
      %v3384 = vadd.f32 %v2962, %v3260
      %v3385 = vadd.f32 %v2963, %v3263
      %v3386 = vadd.f32 %v2964, %v3268
      %v3387 = vadd.f32 %v2965, %v3271
      %v3388 = vadd.f32 %v2966, %v3276
      %v3389 = vadd.f32 %v2967, %v3279
      %v3390 = vadd.f32 %v2968, %v3284
      %v3391 = vadd.f32 %v2969, %v3287
      %v3392 = vadd.f32 %v2970, %v3292
      %v3393 = vadd.f32 %v2971, %v3295
      %v3394 = vadd.f32 %v2972, %v3300
      %v3395 = vadd.f32 %v2973, %v3303
      %v3396 = vadd.f32 %v2974, %v3308
      %v3397 = vadd.f32 %v2975, %v3311
      %v3398 = vadd.f32 %v2976, %v3316
      %v3399 = vadd.f32 %v2977, %v3319
      %v3400 = vadd.f32 %v2978, %v3324
      %v3401 = vadd.f32 %v2979, %v3327
      %v3402 = vadd.f32 %v2980, %v3332
      %v3403 = vadd.f32 %v2981, %v3335
      %v3404 = vadd.f32 %v2982, %v3340
      %v3405 = vadd.f32 %v2983, %v3343
      %v3406 = vadd.f32 %v2984, %v3348
      %v3407 = vadd.f32 %v2985, %v3351
      %v3408 = vadd.f32 %v2986, %v3356
      %v3409 = vadd.f32 %v2987, %v3359
      %v3410 = vld [vmem:[#allocation2 + $0x37] sm:$0xff]
      %v3411 = vld [vmem:[#allocation2 + $0x3f] sm:$0xff]
      %v3412 = vld [vmem:[#allocation2 + $0x47] sm:$0xff]
      %v3413 = vld [vmem:[#allocation2 + $0x4f] sm:$0xff]
      %v3414 = vld [vmem:[#allocation2 + $0x57] sm:$0xff]
      %v3415 = vld [vmem:[#allocation2 + $0x5f] sm:$0xff]
      %v3416 = vld [vmem:[#allocation2 + $0x67] sm:$0xff]
      %v3417 = vld [vmem:[#allocation2 + $0x6f] sm:$0xff]
      %v3418 = vld [vmem:[#allocation2 + $0x77] sm:$0xff]
      %v3419 = vld [vmem:[#allocation2 + $0x7f] sm:$0xff]
      %v3420 = vld [vmem:[#allocation2 + $0x87] sm:$0xff]
      %v3421 = vld [vmem:[#allocation2 + $0x8f] sm:$0xff]
      %v3422 = vld [vmem:[#allocation2 + $0x97] sm:$0xff]
      %v3423 = vld [vmem:[#allocation2 + $0x9f] sm:$0xff]
      %v3424 = vld [vmem:[#allocation2 + $0xa7] sm:$0xff]
      %v3425 = vld [vmem:[#allocation2 + $0xaf] sm:$0xff]
      %v3426 = vld [vmem:[#allocation2 + $0xb7] sm:$0xff]
      %v3427 = vld [vmem:[#allocation2 + $0xbf] sm:$0xff]
      %v3428 = vld [vmem:[#allocation2 + $0xc7] sm:$0xff]
      %v3429 = vld [vmem:[#allocation2 + $0xcf] sm:$0xff]
      %v3430 = vld [vmem:[#allocation2 + $0xd7] sm:$0xff]
      %v3431 = vld [vmem:[#allocation2 + $0xdf] sm:$0xff]
      %v3432 = vld [vmem:[#allocation2 + $0xe7] sm:$0xff]
      %v3433 = vld [vmem:[#allocation2 + $0xef] sm:$0xff]
      %v3434 = vld [vmem:[#allocation2 + $0xf7] sm:$0xff]
      %v3435 = vld [vmem:[#allocation2 + $0xff] sm:$0xff]
      %v3436 = vld [vmem:[#allocation2 + $0x107] sm:$0xff]
      %v3437 = vld [vmem:[#allocation2 + $0x10f] sm:$0xff]
      %v3438 = vld [vmem:[#allocation2 + $0x117] sm:$0xff]
      %v3439 = vld [vmem:[#allocation2 + $0x11f] sm:$0xff]
      %v3440 = vld [vmem:[#allocation2 + $0x127] sm:$0xff]
      %v3441 = vld [vmem:[#allocation2 + $0x12f] sm:$0xff]
      %v3442 = vld [vmem:[#allocation2 + $0x137] sm:$0xff]
      %v3443 = vld [vmem:[#allocation2 + $0x13f] sm:$0xff]
      %v3444 = vld [vmem:[#allocation2 + $0x147] sm:$0xff]
      %v3445 = vld [vmem:[#allocation2 + $0x14f] sm:$0xff]
      %v3446 = vld [vmem:[#allocation2 + $0x157] sm:$0xff]
      %v3447 = vld [vmem:[#allocation2 + $0x15f] sm:$0xff]
      %v3448 = vld [vmem:[#allocation2 + $0x167] sm:$0xff]
      %v3449 = vld [vmem:[#allocation2 + $0x16f] sm:$0xff]
      %v3450 = vld [vmem:[#allocation2 + $0x177] sm:$0xff]
      %v3451 = vld [vmem:[#allocation2 + $0x17f] sm:$0xff]
      %v3452 = vld [vmem:[#allocation2 + $0x187] sm:$0xff]
      %v3453 = vld [vmem:[#allocation2 + $0x18f] sm:$0xff]
      %v3454 = vld [vmem:[#allocation2 + $0x197] sm:$0xff]
      %v3455 = vld [vmem:[#allocation2 + $0x19f] sm:$0xff]
      %v3456 = vld [vmem:[#allocation2 + $0x1a7] sm:$0xff]
      %v3457 = vld [vmem:[#allocation2 + $0x1af] sm:$0xff]
      %v3458 = vpack.c.bf16 %v3411, %v3410
      %v3459 = vpack.c.bf16 %v3413, %v3412
      %v3460 = vpack.c.bf16 %v3415, %v3414
      %v3461 = vpack.c.bf16 %v3417, %v3416
      %v3462 = vpack.c.bf16 %v3419, %v3418
      %v3463 = vpack.c.bf16 %v3421, %v3420
      %v3464 = vpack.c.bf16 %v3423, %v3422
      %v3465 = vpack.c.bf16 %v3425, %v3424
      %v3466 = vpack.c.bf16 %v3427, %v3426
      %v3467 = vpack.c.bf16 %v3429, %v3428
      %v3468 = vpack.c.bf16 %v3431, %v3430
      %v3469 = vpack.c.bf16 %v3433, %v3432
      %v3470 = vpack.c.bf16 %v3435, %v3434
      %v3471 = vpack.c.bf16 %v3437, %v3436
      %v3472 = vpack.c.bf16 %v3439, %v3438
      %v3473 = vpack.c.bf16 %v3441, %v3440
      %v3474 = vpack.c.bf16 %v3443, %v3442
      %v3475 = vpack.c.bf16 %v3445, %v3444
      %v3476 = vpack.c.bf16 %v3447, %v3446
      %v3477 = vpack.c.bf16 %v3449, %v3448
      %v3478 = vpack.c.bf16 %v3451, %v3450
      %v3479 = vpack.c.bf16 %v3453, %v3452
      %v3480 = vpack.c.bf16 %v3455, %v3454
      %v3481 = vpack.c.bf16 %v3457, %v3456
      %s3482 = scalar_lea.vmem %s4, 24
      %v3483 = vld [vmem:[%s3482] sm:$0xf]
      %v3485 = vsel %vm917, %v3458, 0
      %v3488 = vsel %vm917, %v3459, 0
      %v3491 = vsel %vm917, %v3460, 0
      %v3494 = vsel %vm917, %v3461, 0
      %v3497 = vsel %vm917, %v3462, 0
      %v3500 = vsel %vm917, %v3463, 0
      %v3503 = vsel %vm917, %v3464, 0
      %v3506 = vsel %vm917, %v3465, 0
      %v3509 = vsel %vm917, %v3466, 0
      %v3512 = vsel %vm917, %v3467, 0
      %v3515 = vsel %vm917, %v3468, 0
      %v3518 = vsel %vm917, %v3469, 0
      %v3521 = vsel %vm917, %v3470, 0
      %v3524 = vsel %vm917, %v3471, 0
      %v3527 = vsel %vm917, %v3472, 0
      %v3530 = vsel %vm917, %v3473, 0
      %v3533 = vsel %vm917, %v3474, 0
      %v3536 = vsel %vm917, %v3475, 0
      %v3539 = vsel %vm917, %v3476, 0
      %v3542 = vsel %vm917, %v3477, 0
      %v3545 = vsel %vm917, %v3478, 0
      %v3548 = vsel %vm917, %v3479, 0
      %v3551 = vsel %vm917, %v3480, 0
      %v3554 = vsel %vm917, %v3481, 0
      %v3557 = vsel %vm1193, %v3483, 0
      %3559 = vmatprep.subr.bf16.mxu0 0
      %3560 = vmatpush1.bf16.msra.mxu0 %v3557
      %3561 = vmatprep.subr.bf16.mxu0 0
      %3562 = vmatpush1.bf16.msra.mxu0 0
      %3563 = vmatprep.subr.bf16.mxu0 0
      %3564 = vmatpush1.bf16.msra.mxu0 0
      %3565 = vmatprep.subr.bf16.mxu0 0
      %3566 = vmatpush1.bf16.msra.mxu0 0
      %3567 = vmatprep.subr.bf16.mxu0 0
      %3568 = vmatpush1.bf16.msra.mxu0 0
      %3569 = vmatprep.subr.bf16.mxu0 0
      %3570 = vmatpush1.bf16.msra.mxu0 0
      %3571 = vmatprep.subr.bf16.mxu0 0
      %3572 = vmatpush1.bf16.msra.mxu0 0
      %3573 = vmatprep.subr.bf16.mxu0 0
      %3574 = vmatpush1.bf16.msra.mxu0 0
      %3575 = vmatprep.subr.bf16.mxu0 0
      %3576 = vmatpush1.bf16.msra.mxu0 0
      %3577 = vmatprep.subr.bf16.mxu0 0
      %3578 = vmatpush1.bf16.msra.mxu0 0
      %3579 = vmatprep.subr.bf16.mxu0 0
      %3580 = vmatpush1.bf16.msra.mxu0 0
      %3581 = vmatprep.subr.bf16.mxu0 0
      %3582 = vmatpush1.bf16.msra.mxu0 0
      %3583 = vmatprep.subr.bf16.mxu0 0
      %3584 = vmatpush1.bf16.msra.mxu0 0
      %3585 = vmatprep.subr.bf16.mxu0 0
      %3586 = vmatpush1.bf16.msra.mxu0 0
      %3587 = vmatprep.subr.bf16.mxu0 0
      %3588 = vmatpush1.bf16.msra.mxu0 0
      %3589 = vmatprep.subr.bf16.mxu0 0
      %3590 = vmatpush1.bf16.msra.mxu0 0
      %3591 = vmatprep.mubr.bf16.mxu0 0
      %3592 = vmatmul.mubr.bf16.gmra.mrb[0].mxu0 %v3485
      %v3593 = vpop.f32.mrb[0].mxu0
      %v3594 = vadd.f32 0.0, %v3593
      %v3595 = vpop.f32.mrb[0].mxu0
      %v3596 = vpop.f32.mrb[0].mxu0
      %v3597 = vadd.f32 0.0, %v3596
      %v3598 = vpop.f32.mrb[0].mxu0
      %3599 = vmatprep.mubr.bf16.mxu0 0
      %3600 = vmatmul.mubr.bf16.gmra.mrb[0].mxu0 %v3488
      %v3601 = vpop.f32.mrb[0].mxu0
      %v3602 = vadd.f32 0.0, %v3601
      %v3603 = vpop.f32.mrb[0].mxu0
      %v3604 = vpop.f32.mrb[0].mxu0
      %v3605 = vadd.f32 0.0, %v3604
      %v3606 = vpop.f32.mrb[0].mxu0
      %3607 = vmatprep.mubr.bf16.mxu0 0
      %3608 = vmatmul.mubr.bf16.gmra.mrb[0].mxu0 %v3491
      %v3609 = vpop.f32.mrb[0].mxu0
      %v3610 = vadd.f32 0.0, %v3609
      %v3611 = vpop.f32.mrb[0].mxu0
      %v3612 = vpop.f32.mrb[0].mxu0
      %v3613 = vadd.f32 0.0, %v3612
      %v3614 = vpop.f32.mrb[0].mxu0
      %3615 = vmatprep.mubr.bf16.mxu0 0
      %3616 = vmatmul.mubr.bf16.gmra.mrb[0].mxu0 %v3494
      %v3617 = vpop.f32.mrb[0].mxu0
      %v3618 = vadd.f32 0.0, %v3617
      %v3619 = vpop.f32.mrb[0].mxu0
      %v3620 = vpop.f32.mrb[0].mxu0
      %v3621 = vadd.f32 0.0, %v3620
      %v3622 = vpop.f32.mrb[0].mxu0
      %3623 = vmatprep.mubr.bf16.mxu0 0
      %3624 = vmatmul.mubr.bf16.gmra.mrb[0].mxu0 %v3497
      %v3625 = vpop.f32.mrb[0].mxu0
      %v3626 = vadd.f32 0.0, %v3625
      %v3627 = vpop.f32.mrb[0].mxu0
      %v3628 = vpop.f32.mrb[0].mxu0
      %v3629 = vadd.f32 0.0, %v3628
      %v3630 = vpop.f32.mrb[0].mxu0
      %3631 = vmatprep.mubr.bf16.mxu0 0
      %3632 = vmatmul.mubr.bf16.gmra.mrb[0].mxu0 %v3500
      %v3633 = vpop.f32.mrb[0].mxu0
      %v3634 = vadd.f32 0.0, %v3633
      %v3635 = vpop.f32.mrb[0].mxu0
      %v3636 = vpop.f32.mrb[0].mxu0
      %v3637 = vadd.f32 0.0, %v3636
      %v3638 = vpop.f32.mrb[0].mxu0
      %3639 = vmatprep.mubr.bf16.mxu0 0
      %3640 = vmatmul.mubr.bf16.gmra.mrb[0].mxu0 %v3503
      %v3641 = vpop.f32.mrb[0].mxu0
      %v3642 = vadd.f32 0.0, %v3641
      %v3643 = vpop.f32.mrb[0].mxu0
      %v3644 = vpop.f32.mrb[0].mxu0
      %v3645 = vadd.f32 0.0, %v3644
      %v3646 = vpop.f32.mrb[0].mxu0
      %3647 = vmatprep.mubr.bf16.mxu0 0
      %3648 = vmatmul.mubr.bf16.gmra.mrb[0].mxu0 %v3506
      %v3649 = vpop.f32.mrb[0].mxu0
      %v3650 = vadd.f32 0.0, %v3649
      %v3651 = vpop.f32.mrb[0].mxu0
      %v3652 = vpop.f32.mrb[0].mxu0
      %v3653 = vadd.f32 0.0, %v3652
      %v3654 = vpop.f32.mrb[0].mxu0
      %3655 = vmatprep.mubr.bf16.mxu0 0
      %3656 = vmatmul.mubr.bf16.gmra.mrb[0].mxu0 %v3509
      %v3657 = vpop.f32.mrb[0].mxu0
      %v3658 = vadd.f32 0.0, %v3657
      %v3659 = vpop.f32.mrb[0].mxu0
      %v3660 = vpop.f32.mrb[0].mxu0
      %v3661 = vadd.f32 0.0, %v3660
      %v3662 = vpop.f32.mrb[0].mxu0
      %3663 = vmatprep.mubr.bf16.mxu0 0
      %3664 = vmatmul.mubr.bf16.gmra.mrb[0].mxu0 %v3512
      %v3665 = vpop.f32.mrb[0].mxu0
      %v3666 = vadd.f32 0.0, %v3665
      %v3667 = vpop.f32.mrb[0].mxu0
      %v3668 = vpop.f32.mrb[0].mxu0
      %v3669 = vadd.f32 0.0, %v3668
      %v3670 = vpop.f32.mrb[0].mxu0
      %3671 = vmatprep.mubr.bf16.mxu0 0
      %3672 = vmatmul.mubr.bf16.gmra.mrb[0].mxu0 %v3515
      %v3673 = vpop.f32.mrb[0].mxu0
      %v3674 = vadd.f32 0.0, %v3673
      %v3675 = vpop.f32.mrb[0].mxu0
      %v3676 = vpop.f32.mrb[0].mxu0
      %v3677 = vadd.f32 0.0, %v3676
      %v3678 = vpop.f32.mrb[0].mxu0
      %3679 = vmatprep.mubr.bf16.mxu0 0
      %3680 = vmatmul.mubr.bf16.gmra.mrb[0].mxu0 %v3518
      %v3681 = vpop.f32.mrb[0].mxu0
      %v3682 = vadd.f32 0.0, %v3681
      %v3683 = vpop.f32.mrb[0].mxu0
      %v3684 = vpop.f32.mrb[0].mxu0
      %v3685 = vadd.f32 0.0, %v3684
      %v3686 = vpop.f32.mrb[0].mxu0
      %3687 = vmatprep.mubr.bf16.mxu0 0
      %3688 = vmatmul.mubr.bf16.gmra.mrb[0].mxu0 %v3521
      %v3689 = vpop.f32.mrb[0].mxu0
      %v3690 = vadd.f32 0.0, %v3689
      %v3691 = vpop.f32.mrb[0].mxu0
      %v3692 = vpop.f32.mrb[0].mxu0
      %v3693 = vadd.f32 0.0, %v3692
      %v3694 = vpop.f32.mrb[0].mxu0
      %3695 = vmatprep.mubr.bf16.mxu0 0
      %3696 = vmatmul.mubr.bf16.gmra.mrb[0].mxu0 %v3524
      %v3697 = vpop.f32.mrb[0].mxu0
      %v3698 = vadd.f32 0.0, %v3697
      %v3699 = vpop.f32.mrb[0].mxu0
      %v3700 = vpop.f32.mrb[0].mxu0
      %v3701 = vadd.f32 0.0, %v3700
      %v3702 = vpop.f32.mrb[0].mxu0
      %3703 = vmatprep.mubr.bf16.mxu0 0
      %3704 = vmatmul.mubr.bf16.gmra.mrb[0].mxu0 %v3527
      %v3705 = vpop.f32.mrb[0].mxu0
      %v3706 = vadd.f32 0.0, %v3705
      %v3707 = vpop.f32.mrb[0].mxu0
      %v3708 = vpop.f32.mrb[0].mxu0
      %v3709 = vadd.f32 0.0, %v3708
      %v3710 = vpop.f32.mrb[0].mxu0
      %3711 = vmatprep.mubr.bf16.mxu0 0
      %3712 = vmatmul.mubr.bf16.gmra.mrb[0].mxu0 %v3530
      %v3713 = vpop.f32.mrb[0].mxu0
      %v3714 = vadd.f32 0.0, %v3713
      %v3715 = vpop.f32.mrb[0].mxu0
      %v3716 = vpop.f32.mrb[0].mxu0
      %v3717 = vadd.f32 0.0, %v3716
      %v3718 = vpop.f32.mrb[0].mxu0
      %3719 = vmatprep.mubr.bf16.mxu0 0
      %3720 = vmatmul.mubr.bf16.gmra.mrb[0].mxu0 %v3533
      %v3721 = vpop.f32.mrb[0].mxu0
      %v3722 = vadd.f32 0.0, %v3721
      %v3723 = vpop.f32.mrb[0].mxu0
      %v3724 = vpop.f32.mrb[0].mxu0
      %v3725 = vadd.f32 0.0, %v3724
      %v3726 = vpop.f32.mrb[0].mxu0
      %3727 = vmatprep.mubr.bf16.mxu0 0
      %3728 = vmatmul.mubr.bf16.gmra.mrb[0].mxu0 %v3536
      %v3729 = vpop.f32.mrb[0].mxu0
      %v3730 = vadd.f32 0.0, %v3729
      %v3731 = vpop.f32.mrb[0].mxu0
      %v3732 = vpop.f32.mrb[0].mxu0
      %v3733 = vadd.f32 0.0, %v3732
      %v3734 = vpop.f32.mrb[0].mxu0
      %3735 = vmatprep.mubr.bf16.mxu0 0
      %3736 = vmatmul.mubr.bf16.gmra.mrb[0].mxu0 %v3539
      %v3737 = vpop.f32.mrb[0].mxu0
      %v3738 = vadd.f32 0.0, %v3737
      %v3739 = vpop.f32.mrb[0].mxu0
      %v3740 = vpop.f32.mrb[0].mxu0
      %v3741 = vadd.f32 0.0, %v3740
      %v3742 = vpop.f32.mrb[0].mxu0
      %3743 = vmatprep.mubr.bf16.mxu0 0
      %3744 = vmatmul.mubr.bf16.gmra.mrb[0].mxu0 %v3542
      %v3745 = vpop.f32.mrb[0].mxu0
      %v3746 = vadd.f32 0.0, %v3745
      %v3747 = vpop.f32.mrb[0].mxu0
      %v3748 = vpop.f32.mrb[0].mxu0
      %v3749 = vadd.f32 0.0, %v3748
      %v3750 = vpop.f32.mrb[0].mxu0
      %3751 = vmatprep.mubr.bf16.mxu0 0
      %3752 = vmatmul.mubr.bf16.gmra.mrb[0].mxu0 %v3545
      %v3753 = vpop.f32.mrb[0].mxu0
      %v3754 = vadd.f32 0.0, %v3753
      %v3755 = vpop.f32.mrb[0].mxu0
      %v3756 = vpop.f32.mrb[0].mxu0
      %v3757 = vadd.f32 0.0, %v3756
      %v3758 = vpop.f32.mrb[0].mxu0
      %3759 = vmatprep.mubr.bf16.mxu0 0
      %3760 = vmatmul.mubr.bf16.gmra.mrb[0].mxu0 %v3548
      %v3761 = vpop.f32.mrb[0].mxu0
      %v3762 = vadd.f32 0.0, %v3761
      %v3763 = vpop.f32.mrb[0].mxu0
      %v3764 = vpop.f32.mrb[0].mxu0
      %v3765 = vadd.f32 0.0, %v3764
      %v3766 = vpop.f32.mrb[0].mxu0
      %3767 = vmatprep.mubr.bf16.mxu0 0
      %3768 = vmatmul.mubr.bf16.gmra.mrb[0].mxu0 %v3551
      %v3769 = vpop.f32.mrb[0].mxu0
      %v3770 = vadd.f32 0.0, %v3769
      %v3771 = vpop.f32.mrb[0].mxu0
      %v3772 = vpop.f32.mrb[0].mxu0
      %v3773 = vadd.f32 0.0, %v3772
      %v3774 = vpop.f32.mrb[0].mxu0
      %3775 = vmatprep.mubr.bf16.mxu0 0
      %3776 = vmatmul.mubr.bf16.gmra.mrb[0].mxu0 %v3554
      %v3777 = vpop.f32.mrb[0].mxu0
      %v3778 = vadd.f32 0.0, %v3777
      %v3779 = vpop.f32.mrb[0].mxu0
      %v3780 = vpop.f32.mrb[0].mxu0
      %v3781 = vadd.f32 0.0, %v3780
      %v3782 = vpop.f32.mrb[0].mxu0
      %3783 = vdwg.mxu0
      %v3784 = vadd.f32 %v3362, %v3594
      %v3785 = vadd.f32 %v3363, %v3597
      %v3786 = vadd.f32 %v3364, %v3602
      %v3787 = vadd.f32 %v3365, %v3605
      %v3788 = vadd.f32 %v3366, %v3610
      %v3789 = vadd.f32 %v3367, %v3613
      %v3790 = vadd.f32 %v3368, %v3618
      %v3791 = vadd.f32 %v3369, %v3621
      %v3792 = vadd.f32 %v3370, %v3626
      %v3793 = vadd.f32 %v3371, %v3629
      %v3794 = vadd.f32 %v3372, %v3634
      %v3795 = vadd.f32 %v3373, %v3637
      %v3796 = vadd.f32 %v3374, %v3642
      %v3797 = vadd.f32 %v3375, %v3645
      %v3798 = vadd.f32 %v3376, %v3650
      %v3799 = vadd.f32 %v3377, %v3653
      %v3800 = vadd.f32 %v3378, %v3658
      %v3801 = vadd.f32 %v3379, %v3661
      %v3802 = vadd.f32 %v3380, %v3666
      %v3803 = vadd.f32 %v3381, %v3669
      %v3804 = vadd.f32 %v3382, %v3674
      %v3805 = vadd.f32 %v3383, %v3677
      %v3806 = vadd.f32 %v3384, %v3682
      %v3807 = vadd.f32 %v3385, %v3685
      %v3808 = vadd.f32 %v3386, %v3690
      %v3809 = vadd.f32 %v3387, %v3693
      %v3810 = vadd.f32 %v3388, %v3698
      %v3811 = vadd.f32 %v3389, %v3701
      %v3812 = vadd.f32 %v3390, %v3706
      %v3813 = vadd.f32 %v3391, %v3709
      %v3814 = vadd.f32 %v3392, %v3714
      %v3815 = vadd.f32 %v3393, %v3717
      %v3816 = vadd.f32 %v3394, %v3722
      %v3817 = vadd.f32 %v3395, %v3725
      %v3818 = vadd.f32 %v3396, %v3730
      %v3819 = vadd.f32 %v3397, %v3733
      %v3820 = vadd.f32 %v3398, %v3738
      %v3821 = vadd.f32 %v3399, %v3741
      %v3822 = vadd.f32 %v3400, %v3746
      %v3823 = vadd.f32 %v3401, %v3749
      %v3824 = vadd.f32 %v3402, %v3754
      %v3825 = vadd.f32 %v3403, %v3757
      %v3826 = vadd.f32 %v3404, %v3762
      %v3827 = vadd.f32 %v3405, %v3765
      %v3828 = vadd.f32 %v3406, %v3770
      %v3829 = vadd.f32 %v3407, %v3773
      %v3830 = vadd.f32 %v3408, %v3778
      %v3831 = vadd.f32 %v3409, %v3781
      %v3832 = vld [vmem:[#allocation2 + $0x38] sm:$0xff]
      %v3833 = vld [vmem:[#allocation2 + $0x40] sm:$0xff]
      %v3834 = vld [vmem:[#allocation2 + $0x48] sm:$0xff]
      %v3835 = vld [vmem:[#allocation2 + $0x50] sm:$0xff]
      %v3836 = vld [vmem:[#allocation2 + $0x58] sm:$0xff]
      %v3837 = vld [vmem:[#allocation2 + $0x60] sm:$0xff]
      %v3838 = vld [vmem:[#allocation2 + $0x68] sm:$0xff]
      %v3839 = vld [vmem:[#allocation2 + $0x70] sm:$0xff]
      %v3840 = vld [vmem:[#allocation2 + $0x78] sm:$0xff]
      %v3841 = vld [vmem:[#allocation2 + $0x80] sm:$0xff]
      %v3842 = vld [vmem:[#allocation2 + $0x88] sm:$0xff]
      %v3843 = vld [vmem:[#allocation2 + $0x90] sm:$0xff]
      %v3844 = vld [vmem:[#allocation2 + $0x98] sm:$0xff]
      %v3845 = vld [vmem:[#allocation2 + $0xa0] sm:$0xff]
      %v3846 = vld [vmem:[#allocation2 + $0xa8] sm:$0xff]
      %v3847 = vld [vmem:[#allocation2 + $0xb0] sm:$0xff]
      %v3848 = vld [vmem:[#allocation2 + $0xb8] sm:$0xff]
      %v3849 = vld [vmem:[#allocation2 + $0xc0] sm:$0xff]
      %v3850 = vld [vmem:[#allocation2 + $0xc8] sm:$0xff]
      %v3851 = vld [vmem:[#allocation2 + $0xd0] sm:$0xff]
      %v3852 = vld [vmem:[#allocation2 + $0xd8] sm:$0xff]
      %v3853 = vld [vmem:[#allocation2 + $0xe0] sm:$0xff]
      %v3854 = vld [vmem:[#allocation2 + $0xe8] sm:$0xff]
      %v3855 = vld [vmem:[#allocation2 + $0xf0] sm:$0xff]
      %v3856 = vld [vmem:[#allocation2 + $0xf8] sm:$0xff]
      %v3857 = vld [vmem:[#allocation2 + $0x100] sm:$0xff]
      %v3858 = vld [vmem:[#allocation2 + $0x108] sm:$0xff]
      %v3859 = vld [vmem:[#allocation2 + $0x110] sm:$0xff]
      %v3860 = vld [vmem:[#allocation2 + $0x118] sm:$0xff]
      %v3861 = vld [vmem:[#allocation2 + $0x120] sm:$0xff]
      %v3862 = vld [vmem:[#allocation2 + $0x128] sm:$0xff]
      %v3863 = vld [vmem:[#allocation2 + $0x130] sm:$0xff]
      %v3864 = vld [vmem:[#allocation2 + $0x138] sm:$0xff]
      %v3865 = vld [vmem:[#allocation2 + $0x140] sm:$0xff]
      %v3866 = vld [vmem:[#allocation2 + $0x148] sm:$0xff]
      %v3867 = vld [vmem:[#allocation2 + $0x150] sm:$0xff]
      %v3868 = vld [vmem:[#allocation2 + $0x158] sm:$0xff]
      %v3869 = vld [vmem:[#allocation2 + $0x160] sm:$0xff]
      %v3870 = vld [vmem:[#allocation2 + $0x168] sm:$0xff]
      %v3871 = vld [vmem:[#allocation2 + $0x170] sm:$0xff]
      %v3872 = vld [vmem:[#allocation2 + $0x178] sm:$0xff]
      %v3873 = vld [vmem:[#allocation2 + $0x180] sm:$0xff]
      %v3874 = vld [vmem:[#allocation2 + $0x188] sm:$0xff]
      %v3875 = vld [vmem:[#allocation2 + $0x190] sm:$0xff]
      %v3876 = vld [vmem:[#allocation2 + $0x198] sm:$0xff]
      %v3877 = vld [vmem:[#allocation2 + $0x1a0] sm:$0xff]
      %v3878 = vld [vmem:[#allocation2 + $0x1a8] sm:$0xff]
      %v3879 = vld [vmem:[#allocation2 + $0x1b0] sm:$0xff]
      %v3880 = vpack.c.bf16 %v3833, %v3832
      %v3881 = vpack.c.bf16 %v3835, %v3834
      %v3882 = vpack.c.bf16 %v3837, %v3836
      %v3883 = vpack.c.bf16 %v3839, %v3838
      %v3884 = vpack.c.bf16 %v3841, %v3840
      %v3885 = vpack.c.bf16 %v3843, %v3842
      %v3886 = vpack.c.bf16 %v3845, %v3844
      %v3887 = vpack.c.bf16 %v3847, %v3846
      %v3888 = vpack.c.bf16 %v3849, %v3848
      %v3889 = vpack.c.bf16 %v3851, %v3850
      %v3890 = vpack.c.bf16 %v3853, %v3852
      %v3891 = vpack.c.bf16 %v3855, %v3854
      %v3892 = vpack.c.bf16 %v3857, %v3856
      %v3893 = vpack.c.bf16 %v3859, %v3858
      %v3894 = vpack.c.bf16 %v3861, %v3860
      %v3895 = vpack.c.bf16 %v3863, %v3862
      %v3896 = vpack.c.bf16 %v3865, %v3864
      %v3897 = vpack.c.bf16 %v3867, %v3866
      %v3898 = vpack.c.bf16 %v3869, %v3868
      %v3899 = vpack.c.bf16 %v3871, %v3870
      %v3900 = vpack.c.bf16 %v3873, %v3872
      %v3901 = vpack.c.bf16 %v3875, %v3874
      %v3902 = vpack.c.bf16 %v3877, %v3876
      %v3903 = vpack.c.bf16 %v3879, %v3878
      %s3904 = scalar_lea.vmem %s4, 28
      %v3905 = vld [vmem:[%s3904] sm:$0xf]
      %v3907 = vsel %vm917, %v3880, 0
      %v3910 = vsel %vm917, %v3881, 0
      %v3913 = vsel %vm917, %v3882, 0
      %v3916 = vsel %vm917, %v3883, 0
      %v3919 = vsel %vm917, %v3884, 0
      %v3922 = vsel %vm917, %v3885, 0
      %v3925 = vsel %vm917, %v3886, 0
      %v3928 = vsel %vm917, %v3887, 0
      %v3931 = vsel %vm917, %v3888, 0
      %v3934 = vsel %vm917, %v3889, 0
      %v3937 = vsel %vm917, %v3890, 0
      %v3940 = vsel %vm917, %v3891, 0
      %v3943 = vsel %vm917, %v3892, 0
      %v3946 = vsel %vm917, %v3893, 0
      %v3949 = vsel %vm917, %v3894, 0
      %v3952 = vsel %vm917, %v3895, 0
      %v3955 = vsel %vm917, %v3896, 0
      %v3958 = vsel %vm917, %v3897, 0
      %v3961 = vsel %vm917, %v3898, 0
      %v3964 = vsel %vm917, %v3899, 0
      %v3967 = vsel %vm917, %v3900, 0
      %v3970 = vsel %vm917, %v3901, 0
      %v3973 = vsel %vm917, %v3902, 0
      %v3976 = vsel %vm917, %v3903, 0
      %v3979 = vsel %vm1193, %v3905, 0
      %3981 = vmatprep.subr.bf16.mxu0 0
      %3982 = vmatpush1.bf16.msra.mxu0 %v3979
      %3983 = vmatprep.subr.bf16.mxu0 0
      %3984 = vmatpush1.bf16.msra.mxu0 0
      %3985 = vmatprep.subr.bf16.mxu0 0
      %3986 = vmatpush1.bf16.msra.mxu0 0
      %3987 = vmatprep.subr.bf16.mxu0 0
      %3988 = vmatpush1.bf16.msra.mxu0 0
      %3989 = vmatprep.subr.bf16.mxu0 0
      %3990 = vmatpush1.bf16.msra.mxu0 0
      %3991 = vmatprep.subr.bf16.mxu0 0
      %3992 = vmatpush1.bf16.msra.mxu0 0
      %3993 = vmatprep.subr.bf16.mxu0 0
      %3994 = vmatpush1.bf16.msra.mxu0 0
      %3995 = vmatprep.subr.bf16.mxu0 0
      %3996 = vmatpush1.bf16.msra.mxu0 0
      %3997 = vmatprep.subr.bf16.mxu0 0
      %3998 = vmatpush1.bf16.msra.mxu0 0
      %3999 = vmatprep.subr.bf16.mxu0 0
      %4000 = vmatpush1.bf16.msra.mxu0 0
      %4001 = vmatprep.subr.bf16.mxu0 0
      %4002 = vmatpush1.bf16.msra.mxu0 0
      %4003 = vmatprep.subr.bf16.mxu0 0
      %4004 = vmatpush1.bf16.msra.mxu0 0
      %4005 = vmatprep.subr.bf16.mxu0 0
      %4006 = vmatpush1.bf16.msra.mxu0 0
      %4007 = vmatprep.subr.bf16.mxu0 0
      %4008 = vmatpush1.bf16.msra.mxu0 0
      %4009 = vmatprep.subr.bf16.mxu0 0
      %4010 = vmatpush1.bf16.msra.mxu0 0
      %4011 = vmatprep.subr.bf16.mxu0 0
      %4012 = vmatpush1.bf16.msra.mxu0 0
      %4013 = vmatprep.mubr.bf16.mxu0 0
      %4014 = vmatmul.mubr.bf16.gmra.mrb[0].mxu0 %v3907
      %v4015 = vpop.f32.mrb[0].mxu0
      %v4016 = vadd.f32 0.0, %v4015
      %v4017 = vpop.f32.mrb[0].mxu0
      %v4018 = vpop.f32.mrb[0].mxu0
      %v4019 = vadd.f32 0.0, %v4018
      %v4020 = vpop.f32.mrb[0].mxu0
      %4021 = vmatprep.mubr.bf16.mxu0 0
      %4022 = vmatmul.mubr.bf16.gmra.mrb[0].mxu0 %v3910
      %v4023 = vpop.f32.mrb[0].mxu0
      %v4024 = vadd.f32 0.0, %v4023
      %v4025 = vpop.f32.mrb[0].mxu0
      %v4026 = vpop.f32.mrb[0].mxu0
      %v4027 = vadd.f32 0.0, %v4026
      %v4028 = vpop.f32.mrb[0].mxu0
      %4029 = vmatprep.mubr.bf16.mxu0 0
      %4030 = vmatmul.mubr.bf16.gmra.mrb[0].mxu0 %v3913
      %v4031 = vpop.f32.mrb[0].mxu0
      %v4032 = vadd.f32 0.0, %v4031
      %v4033 = vpop.f32.mrb[0].mxu0
      %v4034 = vpop.f32.mrb[0].mxu0
      %v4035 = vadd.f32 0.0, %v4034
      %v4036 = vpop.f32.mrb[0].mxu0
      %4037 = vmatprep.mubr.bf16.mxu0 0
      %4038 = vmatmul.mubr.bf16.gmra.mrb[0].mxu0 %v3916
      %v4039 = vpop.f32.mrb[0].mxu0
      %v4040 = vadd.f32 0.0, %v4039
      %v4041 = vpop.f32.mrb[0].mxu0
      %v4042 = vpop.f32.mrb[0].mxu0
      %v4043 = vadd.f32 0.0, %v4042
      %v4044 = vpop.f32.mrb[0].mxu0
      %4045 = vmatprep.mubr.bf16.mxu0 0
      %4046 = vmatmul.mubr.bf16.gmra.mrb[0].mxu0 %v3919
      %v4047 = vpop.f32.mrb[0].mxu0
      %v4048 = vadd.f32 0.0, %v4047
      %v4049 = vpop.f32.mrb[0].mxu0
      %v4050 = vpop.f32.mrb[0].mxu0
      %v4051 = vadd.f32 0.0, %v4050
      %v4052 = vpop.f32.mrb[0].mxu0
      %4053 = vmatprep.mubr.bf16.mxu0 0
      %4054 = vmatmul.mubr.bf16.gmra.mrb[0].mxu0 %v3922
      %v4055 = vpop.f32.mrb[0].mxu0
      %v4056 = vadd.f32 0.0, %v4055
      %v4057 = vpop.f32.mrb[0].mxu0
      %v4058 = vpop.f32.mrb[0].mxu0
      %v4059 = vadd.f32 0.0, %v4058
      %v4060 = vpop.f32.mrb[0].mxu0
      %4061 = vmatprep.mubr.bf16.mxu0 0
      %4062 = vmatmul.mubr.bf16.gmra.mrb[0].mxu0 %v3925
      %v4063 = vpop.f32.mrb[0].mxu0
      %v4064 = vadd.f32 0.0, %v4063
      %v4065 = vpop.f32.mrb[0].mxu0
      %v4066 = vpop.f32.mrb[0].mxu0
      %v4067 = vadd.f32 0.0, %v4066
      %v4068 = vpop.f32.mrb[0].mxu0
      %4069 = vmatprep.mubr.bf16.mxu0 0
      %4070 = vmatmul.mubr.bf16.gmra.mrb[0].mxu0 %v3928
      %v4071 = vpop.f32.mrb[0].mxu0
      %v4072 = vadd.f32 0.0, %v4071
      %v4073 = vpop.f32.mrb[0].mxu0
      %v4074 = vpop.f32.mrb[0].mxu0
      %v4075 = vadd.f32 0.0, %v4074
      %v4076 = vpop.f32.mrb[0].mxu0
      %4077 = vmatprep.mubr.bf16.mxu0 0
      %4078 = vmatmul.mubr.bf16.gmra.mrb[0].mxu0 %v3931
      %v4079 = vpop.f32.mrb[0].mxu0
      %v4080 = vadd.f32 0.0, %v4079
      %v4081 = vpop.f32.mrb[0].mxu0
      %v4082 = vpop.f32.mrb[0].mxu0
      %v4083 = vadd.f32 0.0, %v4082
      %v4084 = vpop.f32.mrb[0].mxu0
      %4085 = vmatprep.mubr.bf16.mxu0 0
      %4086 = vmatmul.mubr.bf16.gmra.mrb[0].mxu0 %v3934
      %v4087 = vpop.f32.mrb[0].mxu0
      %v4088 = vadd.f32 0.0, %v4087
      %v4089 = vpop.f32.mrb[0].mxu0
      %v4090 = vpop.f32.mrb[0].mxu0
      %v4091 = vadd.f32 0.0, %v4090
      %v4092 = vpop.f32.mrb[0].mxu0
      %4093 = vmatprep.mubr.bf16.mxu0 0
      %4094 = vmatmul.mubr.bf16.gmra.mrb[0].mxu0 %v3937
      %v4095 = vpop.f32.mrb[0].mxu0
      %v4096 = vadd.f32 0.0, %v4095
      %v4097 = vpop.f32.mrb[0].mxu0
      %v4098 = vpop.f32.mrb[0].mxu0
      %v4099 = vadd.f32 0.0, %v4098
      %v4100 = vpop.f32.mrb[0].mxu0
      %4101 = vmatprep.mubr.bf16.mxu0 0
      %4102 = vmatmul.mubr.bf16.gmra.mrb[0].mxu0 %v3940
      %v4103 = vpop.f32.mrb[0].mxu0
      %v4104 = vadd.f32 0.0, %v4103
      %v4105 = vpop.f32.mrb[0].mxu0
      %v4106 = vpop.f32.mrb[0].mxu0
      %v4107 = vadd.f32 0.0, %v4106
      %v4108 = vpop.f32.mrb[0].mxu0
      %4109 = vmatprep.mubr.bf16.mxu0 0
      %4110 = vmatmul.mubr.bf16.gmra.mrb[0].mxu0 %v3943
      %v4111 = vpop.f32.mrb[0].mxu0
      %v4112 = vadd.f32 0.0, %v4111
      %v4113 = vpop.f32.mrb[0].mxu0
      %v4114 = vpop.f32.mrb[0].mxu0
      %v4115 = vadd.f32 0.0, %v4114
      %v4116 = vpop.f32.mrb[0].mxu0
      %4117 = vmatprep.mubr.bf16.mxu0 0
      %4118 = vmatmul.mubr.bf16.gmra.mrb[0].mxu0 %v3946
      %v4119 = vpop.f32.mrb[0].mxu0
      %v4120 = vadd.f32 0.0, %v4119
      %v4121 = vpop.f32.mrb[0].mxu0
      %v4122 = vpop.f32.mrb[0].mxu0
      %v4123 = vadd.f32 0.0, %v4122
      %v4124 = vpop.f32.mrb[0].mxu0
      %4125 = vmatprep.mubr.bf16.mxu0 0
      %4126 = vmatmul.mubr.bf16.gmra.mrb[0].mxu0 %v3949
      %v4127 = vpop.f32.mrb[0].mxu0
      %v4128 = vadd.f32 0.0, %v4127
      %v4129 = vpop.f32.mrb[0].mxu0
      %v4130 = vpop.f32.mrb[0].mxu0
      %v4131 = vadd.f32 0.0, %v4130
      %v4132 = vpop.f32.mrb[0].mxu0
      %4133 = vmatprep.mubr.bf16.mxu0 0
      %4134 = vmatmul.mubr.bf16.gmra.mrb[0].mxu0 %v3952
      %v4135 = vpop.f32.mrb[0].mxu0
      %v4136 = vadd.f32 0.0, %v4135
      %v4137 = vpop.f32.mrb[0].mxu0
      %v4138 = vpop.f32.mrb[0].mxu0
      %v4139 = vadd.f32 0.0, %v4138
      %v4140 = vpop.f32.mrb[0].mxu0
      %4141 = vmatprep.mubr.bf16.mxu0 0
      %4142 = vmatmul.mubr.bf16.gmra.mrb[0].mxu0 %v3955
      %v4143 = vpop.f32.mrb[0].mxu0
      %v4144 = vadd.f32 0.0, %v4143
      %v4145 = vpop.f32.mrb[0].mxu0
      %v4146 = vpop.f32.mrb[0].mxu0
      %v4147 = vadd.f32 0.0, %v4146
      %v4148 = vpop.f32.mrb[0].mxu0
      %4149 = vmatprep.mubr.bf16.mxu0 0
      %4150 = vmatmul.mubr.bf16.gmra.mrb[0].mxu0 %v3958
      %v4151 = vpop.f32.mrb[0].mxu0
      %v4152 = vadd.f32 0.0, %v4151
      %v4153 = vpop.f32.mrb[0].mxu0
      %v4154 = vpop.f32.mrb[0].mxu0
      %v4155 = vadd.f32 0.0, %v4154
      %v4156 = vpop.f32.mrb[0].mxu0
      %4157 = vmatprep.mubr.bf16.mxu0 0
      %4158 = vmatmul.mubr.bf16.gmra.mrb[0].mxu0 %v3961
      %v4159 = vpop.f32.mrb[0].mxu0
      %v4160 = vadd.f32 0.0, %v4159
      %v4161 = vpop.f32.mrb[0].mxu0
      %v4162 = vpop.f32.mrb[0].mxu0
      %v4163 = vadd.f32 0.0, %v4162
      %v4164 = vpop.f32.mrb[0].mxu0
      %4165 = vmatprep.mubr.bf16.mxu0 0
      %4166 = vmatmul.mubr.bf16.gmra.mrb[0].mxu0 %v3964
      %v4167 = vpop.f32.mrb[0].mxu0
      %v4168 = vadd.f32 0.0, %v4167
      %v4169 = vpop.f32.mrb[0].mxu0
      %v4170 = vpop.f32.mrb[0].mxu0
      %v4171 = vadd.f32 0.0, %v4170
      %v4172 = vpop.f32.mrb[0].mxu0
      %4173 = vmatprep.mubr.bf16.mxu0 0
      %4174 = vmatmul.mubr.bf16.gmra.mrb[0].mxu0 %v3967
      %v4175 = vpop.f32.mrb[0].mxu0
      %v4176 = vadd.f32 0.0, %v4175
      %v4177 = vpop.f32.mrb[0].mxu0
      %v4178 = vpop.f32.mrb[0].mxu0
      %v4179 = vadd.f32 0.0, %v4178
      %v4180 = vpop.f32.mrb[0].mxu0
      %4181 = vmatprep.mubr.bf16.mxu0 0
      %4182 = vmatmul.mubr.bf16.gmra.mrb[0].mxu0 %v3970
      %v4183 = vpop.f32.mrb[0].mxu0
      %v4184 = vadd.f32 0.0, %v4183
      %v4185 = vpop.f32.mrb[0].mxu0
      %v4186 = vpop.f32.mrb[0].mxu0
      %v4187 = vadd.f32 0.0, %v4186
      %v4188 = vpop.f32.mrb[0].mxu0
      %4189 = vmatprep.mubr.bf16.mxu0 0
      %4190 = vmatmul.mubr.bf16.gmra.mrb[0].mxu0 %v3973
      %v4191 = vpop.f32.mrb[0].mxu0
      %v4192 = vadd.f32 0.0, %v4191
      %v4193 = vpop.f32.mrb[0].mxu0
      %v4194 = vpop.f32.mrb[0].mxu0
      %v4195 = vadd.f32 0.0, %v4194
      %v4196 = vpop.f32.mrb[0].mxu0
      %4197 = vmatprep.mubr.bf16.mxu0 0
      %4198 = vmatmul.mubr.bf16.gmra.mrb[0].mxu0 %v3976
      %v4199 = vpop.f32.mrb[0].mxu0
      %v4200 = vadd.f32 0.0, %v4199
      %v4201 = vpop.f32.mrb[0].mxu0
      %v4202 = vpop.f32.mrb[0].mxu0
      %v4203 = vadd.f32 0.0, %v4202
      %v4204 = vpop.f32.mrb[0].mxu0
      %4205 = vdwg.mxu0
      %v4206 = vadd.f32 %v3784, %v4016
      %v4207 = vadd.f32 %v3785, %v4019
      %v4208 = vadd.f32 %v3786, %v4024
      %v4209 = vadd.f32 %v3787, %v4027
      %v4210 = vadd.f32 %v3788, %v4032
      %v4211 = vadd.f32 %v3789, %v4035
      %v4212 = vadd.f32 %v3790, %v4040
      %v4213 = vadd.f32 %v3791, %v4043
      %v4214 = vadd.f32 %v3792, %v4048
      %v4215 = vadd.f32 %v3793, %v4051
      %v4216 = vadd.f32 %v3794, %v4056
      %v4217 = vadd.f32 %v3795, %v4059
      %v4218 = vadd.f32 %v3796, %v4064
      %v4219 = vadd.f32 %v3797, %v4067
      %v4220 = vadd.f32 %v3798, %v4072
      %v4221 = vadd.f32 %v3799, %v4075
      %v4222 = vadd.f32 %v3800, %v4080
      %v4223 = vadd.f32 %v3801, %v4083
      %v4224 = vadd.f32 %v3802, %v4088
      %v4225 = vadd.f32 %v3803, %v4091
      %v4226 = vadd.f32 %v3804, %v4096
      %v4227 = vadd.f32 %v3805, %v4099
      %v4228 = vadd.f32 %v3806, %v4104
      %v4229 = vadd.f32 %v3807, %v4107
      %v4230 = vadd.f32 %v3808, %v4112
      %v4231 = vadd.f32 %v3809, %v4115
      %v4232 = vadd.f32 %v3810, %v4120
      %v4233 = vadd.f32 %v3811, %v4123
      %v4234 = vadd.f32 %v3812, %v4128
      %v4235 = vadd.f32 %v3813, %v4131
      %v4236 = vadd.f32 %v3814, %v4136
      %v4237 = vadd.f32 %v3815, %v4139
      %v4238 = vadd.f32 %v3816, %v4144
      %v4239 = vadd.f32 %v3817, %v4147
      %v4240 = vadd.f32 %v3818, %v4152
      %v4241 = vadd.f32 %v3819, %v4155
      %v4242 = vadd.f32 %v3820, %v4160
      %v4243 = vadd.f32 %v3821, %v4163
      %v4244 = vadd.f32 %v3822, %v4168
      %v4245 = vadd.f32 %v3823, %v4171
      %v4246 = vadd.f32 %v3824, %v4176
      %v4247 = vadd.f32 %v3825, %v4179
      %v4248 = vadd.f32 %v3826, %v4184
      %v4249 = vadd.f32 %v3827, %v4187
      %v4250 = vadd.f32 %v3828, %v4192
      %v4251 = vadd.f32 %v3829, %v4195
      %v4252 = vadd.f32 %v3830, %v4200
      %v4253 = vadd.f32 %v3831, %v4203
      %v4254 = vld [vmem:[#allocation2 + $0x39] sm:$0xff]
      %v4255 = vld [vmem:[#allocation2 + $0x41] sm:$0xff]
      %v4256 = vld [vmem:[#allocation2 + $0x49] sm:$0xff]
      %v4257 = vld [vmem:[#allocation2 + $0x51] sm:$0xff]
      %v4258 = vld [vmem:[#allocation2 + $0x59] sm:$0xff]
      %v4259 = vld [vmem:[#allocation2 + $0x61] sm:$0xff]
      %v4260 = vld [vmem:[#allocation2 + $0x69] sm:$0xff]
      %v4261 = vld [vmem:[#allocation2 + $0x71] sm:$0xff]
      %v4262 = vld [vmem:[#allocation2 + $0x79] sm:$0xff]
      %v4263 = vld [vmem:[#allocation2 + $0x81] sm:$0xff]
      %v4264 = vld [vmem:[#allocation2 + $0x89] sm:$0xff]
      %v4265 = vld [vmem:[#allocation2 + $0x91] sm:$0xff]
      %v4266 = vld [vmem:[#allocation2 + $0x99] sm:$0xff]
      %v4267 = vld [vmem:[#allocation2 + $0xa1] sm:$0xff]
      %v4268 = vld [vmem:[#allocation2 + $0xa9] sm:$0xff]
      %v4269 = vld [vmem:[#allocation2 + $0xb1] sm:$0xff]
      %v4270 = vld [vmem:[#allocation2 + $0xb9] sm:$0xff]
      %v4271 = vld [vmem:[#allocation2 + $0xc1] sm:$0xff]
      %v4272 = vld [vmem:[#allocation2 + $0xc9] sm:$0xff]
      %v4273 = vld [vmem:[#allocation2 + $0xd1] sm:$0xff]
      %v4274 = vld [vmem:[#allocation2 + $0xd9] sm:$0xff]
      %v4275 = vld [vmem:[#allocation2 + $0xe1] sm:$0xff]
      %v4276 = vld [vmem:[#allocation2 + $0xe9] sm:$0xff]
      %v4277 = vld [vmem:[#allocation2 + $0xf1] sm:$0xff]
      %v4278 = vld [vmem:[#allocation2 + $0xf9] sm:$0xff]
      %v4279 = vld [vmem:[#allocation2 + $0x101] sm:$0xff]
      %v4280 = vld [vmem:[#allocation2 + $0x109] sm:$0xff]
      %v4281 = vld [vmem:[#allocation2 + $0x111] sm:$0xff]
      %v4282 = vld [vmem:[#allocation2 + $0x119] sm:$0xff]
      %v4283 = vld [vmem:[#allocation2 + $0x121] sm:$0xff]
      %v4284 = vld [vmem:[#allocation2 + $0x129] sm:$0xff]
      %v4285 = vld [vmem:[#allocation2 + $0x131] sm:$0xff]
      %v4286 = vld [vmem:[#allocation2 + $0x139] sm:$0xff]
      %v4287 = vld [vmem:[#allocation2 + $0x141] sm:$0xff]
      %v4288 = vld [vmem:[#allocation2 + $0x149] sm:$0xff]
      %v4289 = vld [vmem:[#allocation2 + $0x151] sm:$0xff]
      %v4290 = vld [vmem:[#allocation2 + $0x159] sm:$0xff]
      %v4291 = vld [vmem:[#allocation2 + $0x161] sm:$0xff]
      %v4292 = vld [vmem:[#allocation2 + $0x169] sm:$0xff]
      %v4293 = vld [vmem:[#allocation2 + $0x171] sm:$0xff]
      %v4294 = vld [vmem:[#allocation2 + $0x179] sm:$0xff]
      %v4295 = vld [vmem:[#allocation2 + $0x181] sm:$0xff]
      %v4296 = vld [vmem:[#allocation2 + $0x189] sm:$0xff]
      %v4297 = vld [vmem:[#allocation2 + $0x191] sm:$0xff]
      %v4298 = vld [vmem:[#allocation2 + $0x199] sm:$0xff]
      %v4299 = vld [vmem:[#allocation2 + $0x1a1] sm:$0xff]
      %v4300 = vld [vmem:[#allocation2 + $0x1a9] sm:$0xff]
      %v4301 = vld [vmem:[#allocation2 + $0x1b1] sm:$0xff]
      %v4302 = vpack.c.bf16 %v4255, %v4254
      %v4303 = vpack.c.bf16 %v4257, %v4256
      %v4304 = vpack.c.bf16 %v4259, %v4258
      %v4305 = vpack.c.bf16 %v4261, %v4260
      %v4306 = vpack.c.bf16 %v4263, %v4262
      %v4307 = vpack.c.bf16 %v4265, %v4264
      %v4308 = vpack.c.bf16 %v4267, %v4266
      %v4309 = vpack.c.bf16 %v4269, %v4268
      %v4310 = vpack.c.bf16 %v4271, %v4270
      %v4311 = vpack.c.bf16 %v4273, %v4272
      %v4312 = vpack.c.bf16 %v4275, %v4274
      %v4313 = vpack.c.bf16 %v4277, %v4276
      %v4314 = vpack.c.bf16 %v4279, %v4278
      %v4315 = vpack.c.bf16 %v4281, %v4280
      %v4316 = vpack.c.bf16 %v4283, %v4282
      %v4317 = vpack.c.bf16 %v4285, %v4284
      %v4318 = vpack.c.bf16 %v4287, %v4286
      %v4319 = vpack.c.bf16 %v4289, %v4288
      %v4320 = vpack.c.bf16 %v4291, %v4290
      %v4321 = vpack.c.bf16 %v4293, %v4292
      %v4322 = vpack.c.bf16 %v4295, %v4294
      %v4323 = vpack.c.bf16 %v4297, %v4296
      %v4324 = vpack.c.bf16 %v4299, %v4298
      %v4325 = vpack.c.bf16 %v4301, %v4300
      %s4326 = scalar_lea.vmem %s4, 32
      %v4327 = vld [vmem:[%s4326] sm:$0xf]
      %v4329 = vsel %vm917, %v4302, 0
      %v4332 = vsel %vm917, %v4303, 0
      %v4335 = vsel %vm917, %v4304, 0
      %v4338 = vsel %vm917, %v4305, 0
      %v4341 = vsel %vm917, %v4306, 0
      %v4344 = vsel %vm917, %v4307, 0
      %v4347 = vsel %vm917, %v4308, 0
      %v4350 = vsel %vm917, %v4309, 0
      %v4353 = vsel %vm917, %v4310, 0
      %v4356 = vsel %vm917, %v4311, 0
      %v4359 = vsel %vm917, %v4312, 0
      %v4362 = vsel %vm917, %v4313, 0
      %v4365 = vsel %vm917, %v4314, 0
      %v4368 = vsel %vm917, %v4315, 0
      %v4371 = vsel %vm917, %v4316, 0
      %v4374 = vsel %vm917, %v4317, 0
      %v4377 = vsel %vm917, %v4318, 0
      %v4380 = vsel %vm917, %v4319, 0
      %v4383 = vsel %vm917, %v4320, 0
      %v4386 = vsel %vm917, %v4321, 0
      %v4389 = vsel %vm917, %v4322, 0
      %v4392 = vsel %vm917, %v4323, 0
      %v4395 = vsel %vm917, %v4324, 0
      %v4398 = vsel %vm917, %v4325, 0
      %v4401 = vsel %vm1193, %v4327, 0
      %4403 = vmatprep.subr.bf16.mxu0 0
      %4404 = vmatpush1.bf16.msra.mxu0 %v4401
      %4405 = vmatprep.subr.bf16.mxu0 0
      %4406 = vmatpush1.bf16.msra.mxu0 0
      %4407 = vmatprep.subr.bf16.mxu0 0
      %4408 = vmatpush1.bf16.msra.mxu0 0
      %4409 = vmatprep.subr.bf16.mxu0 0
      %4410 = vmatpush1.bf16.msra.mxu0 0
      %4411 = vmatprep.subr.bf16.mxu0 0
      %4412 = vmatpush1.bf16.msra.mxu0 0
      %4413 = vmatprep.subr.bf16.mxu0 0
      %4414 = vmatpush1.bf16.msra.mxu0 0
      %4415 = vmatprep.subr.bf16.mxu0 0
      %4416 = vmatpush1.bf16.msra.mxu0 0
      %4417 = vmatprep.subr.bf16.mxu0 0
      %4418 = vmatpush1.bf16.msra.mxu0 0
      %4419 = vmatprep.subr.bf16.mxu0 0
      %4420 = vmatpush1.bf16.msra.mxu0 0
      %4421 = vmatprep.subr.bf16.mxu0 0
      %4422 = vmatpush1.bf16.msra.mxu0 0
      %4423 = vmatprep.subr.bf16.mxu0 0
      %4424 = vmatpush1.bf16.msra.mxu0 0
      %4425 = vmatprep.subr.bf16.mxu0 0
      %4426 = vmatpush1.bf16.msra.mxu0 0
      %4427 = vmatprep.subr.bf16.mxu0 0
      %4428 = vmatpush1.bf16.msra.mxu0 0
      %4429 = vmatprep.subr.bf16.mxu0 0
      %4430 = vmatpush1.bf16.msra.mxu0 0
      %4431 = vmatprep.subr.bf16.mxu0 0
      %4432 = vmatpush1.bf16.msra.mxu0 0
      %4433 = vmatprep.subr.bf16.mxu0 0
      %4434 = vmatpush1.bf16.msra.mxu0 0
      %4435 = vmatprep.mubr.bf16.mxu0 0
      %4436 = vmatmul.mubr.bf16.gmra.mrb[0].mxu0 %v4329
      %v4437 = vpop.f32.mrb[0].mxu0
      %v4438 = vadd.f32 0.0, %v4437
      %v4439 = vpop.f32.mrb[0].mxu0
      %v4440 = vpop.f32.mrb[0].mxu0
      %v4441 = vadd.f32 0.0, %v4440
      %v4442 = vpop.f32.mrb[0].mxu0
      %4443 = vmatprep.mubr.bf16.mxu0 0
      %4444 = vmatmul.mubr.bf16.gmra.mrb[0].mxu0 %v4332
      %v4445 = vpop.f32.mrb[0].mxu0
      %v4446 = vadd.f32 0.0, %v4445
      %v4447 = vpop.f32.mrb[0].mxu0
      %v4448 = vpop.f32.mrb[0].mxu0
      %v4449 = vadd.f32 0.0, %v4448
      %v4450 = vpop.f32.mrb[0].mxu0
      %4451 = vmatprep.mubr.bf16.mxu0 0
      %4452 = vmatmul.mubr.bf16.gmra.mrb[0].mxu0 %v4335
      %v4453 = vpop.f32.mrb[0].mxu0
      %v4454 = vadd.f32 0.0, %v4453
      %v4455 = vpop.f32.mrb[0].mxu0
      %v4456 = vpop.f32.mrb[0].mxu0
      %v4457 = vadd.f32 0.0, %v4456
      %v4458 = vpop.f32.mrb[0].mxu0
      %4459 = vmatprep.mubr.bf16.mxu0 0
      %4460 = vmatmul.mubr.bf16.gmra.mrb[0].mxu0 %v4338
      %v4461 = vpop.f32.mrb[0].mxu0
      %v4462 = vadd.f32 0.0, %v4461
      %v4463 = vpop.f32.mrb[0].mxu0
      %v4464 = vpop.f32.mrb[0].mxu0
      %v4465 = vadd.f32 0.0, %v4464
      %v4466 = vpop.f32.mrb[0].mxu0
      %4467 = vmatprep.mubr.bf16.mxu0 0
      %4468 = vmatmul.mubr.bf16.gmra.mrb[0].mxu0 %v4341
      %v4469 = vpop.f32.mrb[0].mxu0
      %v4470 = vadd.f32 0.0, %v4469
      %v4471 = vpop.f32.mrb[0].mxu0
      %v4472 = vpop.f32.mrb[0].mxu0
      %v4473 = vadd.f32 0.0, %v4472
      %v4474 = vpop.f32.mrb[0].mxu0
      %4475 = vmatprep.mubr.bf16.mxu0 0
      %4476 = vmatmul.mubr.bf16.gmra.mrb[0].mxu0 %v4344
      %v4477 = vpop.f32.mrb[0].mxu0
      %v4478 = vadd.f32 0.0, %v4477
      %v4479 = vpop.f32.mrb[0].mxu0
      %v4480 = vpop.f32.mrb[0].mxu0
      %v4481 = vadd.f32 0.0, %v4480
      %v4482 = vpop.f32.mrb[0].mxu0
      %4483 = vmatprep.mubr.bf16.mxu0 0
      %4484 = vmatmul.mubr.bf16.gmra.mrb[0].mxu0 %v4347
      %v4485 = vpop.f32.mrb[0].mxu0
      %v4486 = vadd.f32 0.0, %v4485
      %v4487 = vpop.f32.mrb[0].mxu0
      %v4488 = vpop.f32.mrb[0].mxu0
      %v4489 = vadd.f32 0.0, %v4488
      %v4490 = vpop.f32.mrb[0].mxu0
      %4491 = vmatprep.mubr.bf16.mxu0 0
      %4492 = vmatmul.mubr.bf16.gmra.mrb[0].mxu0 %v4350
      %v4493 = vpop.f32.mrb[0].mxu0
      %v4494 = vadd.f32 0.0, %v4493
      %v4495 = vpop.f32.mrb[0].mxu0
      %v4496 = vpop.f32.mrb[0].mxu0
      %v4497 = vadd.f32 0.0, %v4496
      %v4498 = vpop.f32.mrb[0].mxu0
      %4499 = vmatprep.mubr.bf16.mxu0 0
      %4500 = vmatmul.mubr.bf16.gmra.mrb[0].mxu0 %v4353
      %v4501 = vpop.f32.mrb[0].mxu0
      %v4502 = vadd.f32 0.0, %v4501
      %v4503 = vpop.f32.mrb[0].mxu0
      %v4504 = vpop.f32.mrb[0].mxu0
      %v4505 = vadd.f32 0.0, %v4504
      %v4506 = vpop.f32.mrb[0].mxu0
      %4507 = vmatprep.mubr.bf16.mxu0 0
      %4508 = vmatmul.mubr.bf16.gmra.mrb[0].mxu0 %v4356
      %v4509 = vpop.f32.mrb[0].mxu0
      %v4510 = vadd.f32 0.0, %v4509
      %v4511 = vpop.f32.mrb[0].mxu0
      %v4512 = vpop.f32.mrb[0].mxu0
      %v4513 = vadd.f32 0.0, %v4512
      %v4514 = vpop.f32.mrb[0].mxu0
      %4515 = vmatprep.mubr.bf16.mxu0 0
      %4516 = vmatmul.mubr.bf16.gmra.mrb[0].mxu0 %v4359
      %v4517 = vpop.f32.mrb[0].mxu0
      %v4518 = vadd.f32 0.0, %v4517
      %v4519 = vpop.f32.mrb[0].mxu0
      %v4520 = vpop.f32.mrb[0].mxu0
      %v4521 = vadd.f32 0.0, %v4520
      %v4522 = vpop.f32.mrb[0].mxu0
      %4523 = vmatprep.mubr.bf16.mxu0 0
      %4524 = vmatmul.mubr.bf16.gmra.mrb[0].mxu0 %v4362
      %v4525 = vpop.f32.mrb[0].mxu0
      %v4526 = vadd.f32 0.0, %v4525
      %v4527 = vpop.f32.mrb[0].mxu0
      %v4528 = vpop.f32.mrb[0].mxu0
      %v4529 = vadd.f32 0.0, %v4528
      %v4530 = vpop.f32.mrb[0].mxu0
      %4531 = vmatprep.mubr.bf16.mxu0 0
      %4532 = vmatmul.mubr.bf16.gmra.mrb[0].mxu0 %v4365
      %v4533 = vpop.f32.mrb[0].mxu0
      %v4534 = vadd.f32 0.0, %v4533
      %v4535 = vpop.f32.mrb[0].mxu0
      %v4536 = vpop.f32.mrb[0].mxu0
      %v4537 = vadd.f32 0.0, %v4536
      %v4538 = vpop.f32.mrb[0].mxu0
      %4539 = vmatprep.mubr.bf16.mxu0 0
      %4540 = vmatmul.mubr.bf16.gmra.mrb[0].mxu0 %v4368
      %v4541 = vpop.f32.mrb[0].mxu0
      %v4542 = vadd.f32 0.0, %v4541
      %v4543 = vpop.f32.mrb[0].mxu0
      %v4544 = vpop.f32.mrb[0].mxu0
      %v4545 = vadd.f32 0.0, %v4544
      %v4546 = vpop.f32.mrb[0].mxu0
      %4547 = vmatprep.mubr.bf16.mxu0 0
      %4548 = vmatmul.mubr.bf16.gmra.mrb[0].mxu0 %v4371
      %v4549 = vpop.f32.mrb[0].mxu0
      %v4550 = vadd.f32 0.0, %v4549
      %v4551 = vpop.f32.mrb[0].mxu0
      %v4552 = vpop.f32.mrb[0].mxu0
      %v4553 = vadd.f32 0.0, %v4552
      %v4554 = vpop.f32.mrb[0].mxu0
      %4555 = vmatprep.mubr.bf16.mxu0 0
      %4556 = vmatmul.mubr.bf16.gmra.mrb[0].mxu0 %v4374
      %v4557 = vpop.f32.mrb[0].mxu0
      %v4558 = vadd.f32 0.0, %v4557
      %v4559 = vpop.f32.mrb[0].mxu0
      %v4560 = vpop.f32.mrb[0].mxu0
      %v4561 = vadd.f32 0.0, %v4560
      %v4562 = vpop.f32.mrb[0].mxu0
      %4563 = vmatprep.mubr.bf16.mxu0 0
      %4564 = vmatmul.mubr.bf16.gmra.mrb[0].mxu0 %v4377
      %v4565 = vpop.f32.mrb[0].mxu0
      %v4566 = vadd.f32 0.0, %v4565
      %v4567 = vpop.f32.mrb[0].mxu0
      %v4568 = vpop.f32.mrb[0].mxu0
      %v4569 = vadd.f32 0.0, %v4568
      %v4570 = vpop.f32.mrb[0].mxu0
      %4571 = vmatprep.mubr.bf16.mxu0 0
      %4572 = vmatmul.mubr.bf16.gmra.mrb[0].mxu0 %v4380
      %v4573 = vpop.f32.mrb[0].mxu0
      %v4574 = vadd.f32 0.0, %v4573
      %v4575 = vpop.f32.mrb[0].mxu0
      %v4576 = vpop.f32.mrb[0].mxu0
      %v4577 = vadd.f32 0.0, %v4576
      %v4578 = vpop.f32.mrb[0].mxu0
      %4579 = vmatprep.mubr.bf16.mxu0 0
      %4580 = vmatmul.mubr.bf16.gmra.mrb[0].mxu0 %v4383
      %v4581 = vpop.f32.mrb[0].mxu0
      %v4582 = vadd.f32 0.0, %v4581
      %v4583 = vpop.f32.mrb[0].mxu0
      %v4584 = vpop.f32.mrb[0].mxu0
      %v4585 = vadd.f32 0.0, %v4584
      %v4586 = vpop.f32.mrb[0].mxu0
      %4587 = vmatprep.mubr.bf16.mxu0 0
      %4588 = vmatmul.mubr.bf16.gmra.mrb[0].mxu0 %v4386
      %v4589 = vpop.f32.mrb[0].mxu0
      %v4590 = vadd.f32 0.0, %v4589
      %v4591 = vpop.f32.mrb[0].mxu0
      %v4592 = vpop.f32.mrb[0].mxu0
      %v4593 = vadd.f32 0.0, %v4592
      %v4594 = vpop.f32.mrb[0].mxu0
      %4595 = vmatprep.mubr.bf16.mxu0 0
      %4596 = vmatmul.mubr.bf16.gmra.mrb[0].mxu0 %v4389
      %v4597 = vpop.f32.mrb[0].mxu0
      %v4598 = vadd.f32 0.0, %v4597
      %v4599 = vpop.f32.mrb[0].mxu0
      %v4600 = vpop.f32.mrb[0].mxu0
      %v4601 = vadd.f32 0.0, %v4600
      %v4602 = vpop.f32.mrb[0].mxu0
      %4603 = vmatprep.mubr.bf16.mxu0 0
      %4604 = vmatmul.mubr.bf16.gmra.mrb[0].mxu0 %v4392
      %v4605 = vpop.f32.mrb[0].mxu0
      %v4606 = vadd.f32 0.0, %v4605
      %v4607 = vpop.f32.mrb[0].mxu0
      %v4608 = vpop.f32.mrb[0].mxu0
      %v4609 = vadd.f32 0.0, %v4608
      %v4610 = vpop.f32.mrb[0].mxu0
      %4611 = vmatprep.mubr.bf16.mxu0 0
      %4612 = vmatmul.mubr.bf16.gmra.mrb[0].mxu0 %v4395
      %v4613 = vpop.f32.mrb[0].mxu0
      %v4614 = vadd.f32 0.0, %v4613
      %v4615 = vpop.f32.mrb[0].mxu0
      %v4616 = vpop.f32.mrb[0].mxu0
      %v4617 = vadd.f32 0.0, %v4616
      %v4618 = vpop.f32.mrb[0].mxu0
      %4619 = vmatprep.mubr.bf16.mxu0 0
      %4620 = vmatmul.mubr.bf16.gmra.mrb[0].mxu0 %v4398
      %v4621 = vpop.f32.mrb[0].mxu0
      %v4622 = vadd.f32 0.0, %v4621
      %v4623 = vpop.f32.mrb[0].mxu0
      %v4624 = vpop.f32.mrb[0].mxu0
      %v4625 = vadd.f32 0.0, %v4624
      %v4626 = vpop.f32.mrb[0].mxu0
      %4627 = vdwg.mxu0
      %v4628 = vadd.f32 %v4206, %v4438
      %v4629 = vadd.f32 %v4207, %v4441
      %v4630 = vadd.f32 %v4208, %v4446
      %v4631 = vadd.f32 %v4209, %v4449
      %v4632 = vadd.f32 %v4210, %v4454
      %v4633 = vadd.f32 %v4211, %v4457
      %v4634 = vadd.f32 %v4212, %v4462
      %v4635 = vadd.f32 %v4213, %v4465
      %v4636 = vadd.f32 %v4214, %v4470
      %v4637 = vadd.f32 %v4215, %v4473
      %v4638 = vadd.f32 %v4216, %v4478
      %v4639 = vadd.f32 %v4217, %v4481
      %v4640 = vadd.f32 %v4218, %v4486
      %v4641 = vadd.f32 %v4219, %v4489
      %v4642 = vadd.f32 %v4220, %v4494
      %v4643 = vadd.f32 %v4221, %v4497
      %v4644 = vadd.f32 %v4222, %v4502
      %v4645 = vadd.f32 %v4223, %v4505
      %v4646 = vadd.f32 %v4224, %v4510
      %v4647 = vadd.f32 %v4225, %v4513
      %v4648 = vadd.f32 %v4226, %v4518
      %v4649 = vadd.f32 %v4227, %v4521
      %v4650 = vadd.f32 %v4228, %v4526
      %v4651 = vadd.f32 %v4229, %v4529
      %v4652 = vadd.f32 %v4230, %v4534
      %v4653 = vadd.f32 %v4231, %v4537
      %v4654 = vadd.f32 %v4232, %v4542
      %v4655 = vadd.f32 %v4233, %v4545
      %v4656 = vadd.f32 %v4234, %v4550
      %v4657 = vadd.f32 %v4235, %v4553
      %v4658 = vadd.f32 %v4236, %v4558
      %v4659 = vadd.f32 %v4237, %v4561
      %v4660 = vadd.f32 %v4238, %v4566
      %v4661 = vadd.f32 %v4239, %v4569
      %v4662 = vadd.f32 %v4240, %v4574
      %v4663 = vadd.f32 %v4241, %v4577
      %v4664 = vadd.f32 %v4242, %v4582
      %v4665 = vadd.f32 %v4243, %v4585
      %v4666 = vadd.f32 %v4244, %v4590
      %v4667 = vadd.f32 %v4245, %v4593
      %v4668 = vadd.f32 %v4246, %v4598
      %v4669 = vadd.f32 %v4247, %v4601
      %v4670 = vadd.f32 %v4248, %v4606
      %v4671 = vadd.f32 %v4249, %v4609
      %v4672 = vadd.f32 %v4250, %v4614
      %v4673 = vadd.f32 %v4251, %v4617
      %v4674 = vadd.f32 %v4252, %v4622
      %v4675 = vadd.f32 %v4253, %v4625
      %v4676 = vmul.f32 %v4628, %v632
      %v4677 = vmul.f32 %v4629, %v637
      %v4678 = vmul.f32 %v4630, %v642
      %v4679 = vmul.f32 %v4631, %v647
      %v4680 = vmul.f32 %v4632, %v652
      %v4681 = vmul.f32 %v4633, %v657
      %v4682 = vmul.f32 %v4634, %v662
      %v4683 = vmul.f32 %v4635, %v667
      %v4684 = vmul.f32 %v4636, %v672
      %v4685 = vmul.f32 %v4637, %v677
      %v4686 = vmul.f32 %v4638, %v682
      %v4687 = vmul.f32 %v4639, %v687
      %v4688 = vmul.f32 %v4640, %v692
      %v4689 = vmul.f32 %v4641, %v697
      %v4690 = vmul.f32 %v4642, %v702
      %v4691 = vmul.f32 %v4643, %v707
      %v4692 = vmul.f32 %v4644, %v712
      %v4693 = vmul.f32 %v4645, %v717
      %v4694 = vmul.f32 %v4646, %v722
      %v4695 = vmul.f32 %v4647, %v727
      %v4696 = vmul.f32 %v4648, %v732
      %v4697 = vmul.f32 %v4649, %v737
      %v4698 = vmul.f32 %v4650, %v742
      %v4699 = vmul.f32 %v4651, %v747
      %v4700 = vmul.f32 %v4652, %v752
      %v4701 = vmul.f32 %v4653, %v757
      %v4702 = vmul.f32 %v4654, %v762
      %v4703 = vmul.f32 %v4655, %v767
      %v4704 = vmul.f32 %v4656, %v772
      %v4705 = vmul.f32 %v4657, %v777
      %v4706 = vmul.f32 %v4658, %v782
      %v4707 = vmul.f32 %v4659, %v787
      %v4708 = vmul.f32 %v4660, %v792
      %v4709 = vmul.f32 %v4661, %v797
      %v4710 = vmul.f32 %v4662, %v802
      %v4711 = vmul.f32 %v4663, %v807
      %v4712 = vmul.f32 %v4664, %v812
      %v4713 = vmul.f32 %v4665, %v817
      %v4714 = vmul.f32 %v4666, %v822
      %v4715 = vmul.f32 %v4667, %v827
      %v4716 = vmul.f32 %v4668, %v832
      %v4717 = vmul.f32 %v4669, %v837
      %v4718 = vmul.f32 %v4670, %v842
      %v4719 = vmul.f32 %v4671, %v847
      %v4720 = vmul.f32 %v4672, %v852
      %v4721 = vmul.f32 %v4673, %v857
      %v4722 = vmul.f32 %v4674, %v862
      %v4723 = vmul.f32 %v4675, %v867
      %v4724 = vadd.f32 %v4676, %v4677
      %v4725 = vadd.f32 %v4724, %v4678
      %v4726 = vadd.f32 %v4725, %v4679
      %v4727 = vadd.f32 %v4726, %v4680
      %v4728 = vadd.f32 %v4727, %v4681
      %v4729 = vadd.f32 %v4728, %v4682
      %v4730 = vadd.f32 %v4729, %v4683
      %v4731 = vadd.f32 %v4730, %v4684
      %v4732 = vadd.f32 %v4731, %v4685
      %v4733 = vadd.f32 %v4732, %v4686
      %v4734 = vadd.f32 %v4733, %v4687
      %v4735 = vadd.f32 %v4734, %v4688
      %v4736 = vadd.f32 %v4735, %v4689
      %v4737 = vadd.f32 %v4736, %v4690
      %v4738 = vadd.f32 %v4737, %v4691
      %v4739 = vadd.f32 %v4738, %v4692
      %v4740 = vadd.f32 %v4739, %v4693
      %v4741 = vadd.f32 %v4740, %v4694
      %v4742 = vadd.f32 %v4741, %v4695
      %v4743 = vadd.f32 %v4742, %v4696
      %v4744 = vadd.f32 %v4743, %v4697
      %v4745 = vadd.f32 %v4744, %v4698
      %v4746 = vadd.f32 %v4745, %v4699
      %v4747 = vadd.f32 %v4746, %v4700
      %v4748 = vadd.f32 %v4747, %v4701
      %v4749 = vadd.f32 %v4748, %v4702
      %v4750 = vadd.f32 %v4749, %v4703
      %v4751 = vadd.f32 %v4750, %v4704
      %v4752 = vadd.f32 %v4751, %v4705
      %v4753 = vadd.f32 %v4752, %v4706
      %v4754 = vadd.f32 %v4753, %v4707
      %v4755 = vadd.f32 %v4754, %v4708
      %v4756 = vadd.f32 %v4755, %v4709
      %v4757 = vadd.f32 %v4756, %v4710
      %v4758 = vadd.f32 %v4757, %v4711
      %v4759 = vadd.f32 %v4758, %v4712
      %v4760 = vadd.f32 %v4759, %v4713
      %v4761 = vadd.f32 %v4760, %v4714
      %v4762 = vadd.f32 %v4761, %v4715
      %v4763 = vadd.f32 %v4762, %v4716
      %v4764 = vadd.f32 %v4763, %v4717
      %v4765 = vadd.f32 %v4764, %v4718
      %v4766 = vadd.f32 %v4765, %v4719
      %v4767 = vadd.f32 %v4766, %v4720
      %v4768 = vadd.f32 %v4767, %v4721
      %v4769 = vadd.f32 %v4768, %v4722
      %v4770 = vadd.f32 %v4769, %v4723
      %v4771 = vrot.slane %v4770, 4
      %v4772 = vadd.f32 %v4770, %v4771
      %v4773 = vrot.slane %v4772, 2
      %v4774 = vadd.f32 %v4772, %v4773
      %v4775 = vrot.slane %v4774, 1
      %v4776 = vadd.f32 %v4774, %v4775
      %v4777 = vmul.f32 %v4628, %v4676
      %v4778 = vmul.f32 %v4629, %v4677
      %v4779 = vmul.f32 %v4630, %v4678
      %v4780 = vmul.f32 %v4631, %v4679
      %v4781 = vmul.f32 %v4632, %v4680
      %v4782 = vmul.f32 %v4633, %v4681
      %v4783 = vmul.f32 %v4634, %v4682
      %v4784 = vmul.f32 %v4635, %v4683
      %v4785 = vmul.f32 %v4636, %v4684
      %v4786 = vmul.f32 %v4637, %v4685
      %v4787 = vmul.f32 %v4638, %v4686
      %v4788 = vmul.f32 %v4639, %v4687
      %v4789 = vmul.f32 %v4640, %v4688
      %v4790 = vmul.f32 %v4641, %v4689
      %v4791 = vmul.f32 %v4642, %v4690
      %v4792 = vmul.f32 %v4643, %v4691
      %v4793 = vmul.f32 %v4644, %v4692
      %v4794 = vmul.f32 %v4645, %v4693
      %v4795 = vmul.f32 %v4646, %v4694
      %v4796 = vmul.f32 %v4647, %v4695
      %v4797 = vmul.f32 %v4648, %v4696
      %v4798 = vmul.f32 %v4649, %v4697
      %v4799 = vmul.f32 %v4650, %v4698
      %v4800 = vmul.f32 %v4651, %v4699
      %v4801 = vmul.f32 %v4652, %v4700
      %v4802 = vmul.f32 %v4653, %v4701
      %v4803 = vmul.f32 %v4654, %v4702
      %v4804 = vmul.f32 %v4655, %v4703
      %v4805 = vmul.f32 %v4656, %v4704
      %v4806 = vmul.f32 %v4657, %v4705
      %v4807 = vmul.f32 %v4658, %v4706
      %v4808 = vmul.f32 %v4659, %v4707
      %v4809 = vmul.f32 %v4660, %v4708
      %v4810 = vmul.f32 %v4661, %v4709
      %v4811 = vmul.f32 %v4662, %v4710
      %v4812 = vmul.f32 %v4663, %v4711
      %v4813 = vmul.f32 %v4664, %v4712
      %v4814 = vmul.f32 %v4665, %v4713
      %v4815 = vmul.f32 %v4666, %v4714
      %v4816 = vmul.f32 %v4667, %v4715
      %v4817 = vmul.f32 %v4668, %v4716
      %v4818 = vmul.f32 %v4669, %v4717
      %v4819 = vmul.f32 %v4670, %v4718
      %v4820 = vmul.f32 %v4671, %v4719
      %v4821 = vmul.f32 %v4672, %v4720
      %v4822 = vmul.f32 %v4673, %v4721
      %v4823 = vmul.f32 %v4674, %v4722
      %v4824 = vmul.f32 %v4675, %v4723
      %v4825 = vadd.f32 %v4777, %v4778
      %v4826 = vadd.f32 %v4825, %v4779
      %v4827 = vadd.f32 %v4826, %v4780
      %v4828 = vadd.f32 %v4827, %v4781
      %v4829 = vadd.f32 %v4828, %v4782
      %v4830 = vadd.f32 %v4829, %v4783
      %v4831 = vadd.f32 %v4830, %v4784
      %v4832 = vadd.f32 %v4831, %v4785
      %v4833 = vadd.f32 %v4832, %v4786
      %v4834 = vadd.f32 %v4833, %v4787
      %v4835 = vadd.f32 %v4834, %v4788
      %v4836 = vadd.f32 %v4835, %v4789
      %v4837 = vadd.f32 %v4836, %v4790
      %v4838 = vadd.f32 %v4837, %v4791
      %v4839 = vadd.f32 %v4838, %v4792
      %v4840 = vadd.f32 %v4839, %v4793
      %v4841 = vadd.f32 %v4840, %v4794
      %v4842 = vadd.f32 %v4841, %v4795
      %v4843 = vadd.f32 %v4842, %v4796
      %v4844 = vadd.f32 %v4843, %v4797
      %v4845 = vadd.f32 %v4844, %v4798
      %v4846 = vadd.f32 %v4845, %v4799
      %v4847 = vadd.f32 %v4846, %v4800
      %v4848 = vadd.f32 %v4847, %v4801
      %v4849 = vadd.f32 %v4848, %v4802
      %v4850 = vadd.f32 %v4849, %v4803
      %v4851 = vadd.f32 %v4850, %v4804
      %v4852 = vadd.f32 %v4851, %v4805
      %v4853 = vadd.f32 %v4852, %v4806
      %v4854 = vadd.f32 %v4853, %v4807
      %v4855 = vadd.f32 %v4854, %v4808
      %v4856 = vadd.f32 %v4855, %v4809
      %v4857 = vadd.f32 %v4856, %v4810
      %v4858 = vadd.f32 %v4857, %v4811
      %v4859 = vadd.f32 %v4858, %v4812
      %v4860 = vadd.f32 %v4859, %v4813
      %v4861 = vadd.f32 %v4860, %v4814
      %v4862 = vadd.f32 %v4861, %v4815
      %v4863 = vadd.f32 %v4862, %v4816
      %v4864 = vadd.f32 %v4863, %v4817
      %v4865 = vadd.f32 %v4864, %v4818
      %v4866 = vadd.f32 %v4865, %v4819
      %v4867 = vadd.f32 %v4866, %v4820
      %v4868 = vadd.f32 %v4867, %v4821
      %v4869 = vadd.f32 %v4868, %v4822
      %v4870 = vadd.f32 %v4869, %v4823
      %v4871 = vadd.f32 %v4870, %v4824
      %v4872 = vrot.slane %v4871, 4
      %v4873 = vadd.f32 %v4871, %v4872
      %v4874 = vrot.slane %v4873, 2
      %v4875 = vadd.f32 %v4873, %v4874
      %v4876 = vrot.slane %v4875, 1
      %v4877 = vadd.f32 %v4875, %v4876
      %v4878 = vpack.c.bf16 %v4629, %v4628
      %v4879 = vpack.c.bf16 %v4631, %v4630
      %v4880 = vpack.c.bf16 %v4633, %v4632
      %v4881 = vpack.c.bf16 %v4635, %v4634
      %v4882 = vpack.c.bf16 %v4637, %v4636
      %v4883 = vpack.c.bf16 %v4639, %v4638
      %v4884 = vpack.c.bf16 %v4641, %v4640
      %v4885 = vpack.c.bf16 %v4643, %v4642
      %v4886 = vpack.c.bf16 %v4645, %v4644
      %v4887 = vpack.c.bf16 %v4647, %v4646
      %v4888 = vpack.c.bf16 %v4649, %v4648
      %v4889 = vpack.c.bf16 %v4651, %v4650
      %v4890 = vpack.c.bf16 %v4653, %v4652
      %v4891 = vpack.c.bf16 %v4655, %v4654
      %v4892 = vpack.c.bf16 %v4657, %v4656
      %v4893 = vpack.c.bf16 %v4659, %v4658
      %v4894 = vpack.c.bf16 %v4661, %v4660
      %v4895 = vpack.c.bf16 %v4663, %v4662
      %v4896 = vpack.c.bf16 %v4665, %v4664
      %v4897 = vpack.c.bf16 %v4667, %v4666
      %v4898 = vpack.c.bf16 %v4669, %v4668
      %v4899 = vpack.c.bf16 %v4671, %v4670
      %v4900 = vpack.c.bf16 %v4673, %v4672
      %v4901 = vpack.c.bf16 %v4675, %v4674
      %v4926 = vunpack.c.l.b16 %v4878
      %v4927 = vunpack.c.h.b16 %v4878
      %v4928 = vunpack.c.l.b16 %v4879
      %v4929 = vunpack.c.h.b16 %v4879
      %v4930 = vunpack.c.l.b16 %v4880
      %v4931 = vunpack.c.h.b16 %v4880
      %v4932 = vunpack.c.l.b16 %v4881
      %v4933 = vunpack.c.h.b16 %v4881
      %v4934 = vunpack.c.l.b16 %v4882
      %v4935 = vunpack.c.h.b16 %v4882
      %v4936 = vunpack.c.l.b16 %v4883
      %v4937 = vunpack.c.h.b16 %v4883
      %v4938 = vunpack.c.l.b16 %v4884
      %v4939 = vunpack.c.h.b16 %v4884
      %v4940 = vunpack.c.l.b16 %v4885
      %v4941 = vunpack.c.h.b16 %v4885
      %v4942 = vunpack.c.l.b16 %v4886
      %v4943 = vunpack.c.h.b16 %v4886
      %v4944 = vunpack.c.l.b16 %v4887
      %v4945 = vunpack.c.h.b16 %v4887
      %v4946 = vunpack.c.l.b16 %v4888
      %v4947 = vunpack.c.h.b16 %v4888
      %v4948 = vunpack.c.l.b16 %v4889
      %v4949 = vunpack.c.h.b16 %v4889
      %v4950 = vunpack.c.l.b16 %v4890
      %v4951 = vunpack.c.h.b16 %v4890
      %v4952 = vunpack.c.l.b16 %v4891
      %v4953 = vunpack.c.h.b16 %v4891
      %v4954 = vunpack.c.l.b16 %v4892
      %v4955 = vunpack.c.h.b16 %v4892
      %v4956 = vunpack.c.l.b16 %v4893
      %v4957 = vunpack.c.h.b16 %v4893
      %v4958 = vunpack.c.l.b16 %v4894
      %v4959 = vunpack.c.h.b16 %v4894
      %v4960 = vunpack.c.l.b16 %v4895
      %v4961 = vunpack.c.h.b16 %v4895
      %v4962 = vunpack.c.l.b16 %v4896
      %v4963 = vunpack.c.h.b16 %v4896
      %v4964 = vunpack.c.l.b16 %v4897
      %v4965 = vunpack.c.h.b16 %v4897
      %v4966 = vunpack.c.l.b16 %v4898
      %v4967 = vunpack.c.h.b16 %v4898
      %v4968 = vunpack.c.l.b16 %v4899
      %v4969 = vunpack.c.h.b16 %v4899
      %v4970 = vunpack.c.l.b16 %v4900
      %v4971 = vunpack.c.h.b16 %v4900
      %v4972 = vunpack.c.l.b16 %v4901
      %v4973 = vunpack.c.h.b16 %v4901
      %v4974 = vpack.c.b16 %v4926, %v4926
      %v4975 = vpack.c.b16 %v4927, %v4927
      %v4976 = vpack.c.b16 %v4928, %v4928
      %v4977 = vpack.c.b16 %v4929, %v4929
      %v4978 = vpack.c.b16 %v4930, %v4930
      %v4979 = vpack.c.b16 %v4931, %v4931
      %v4980 = vpack.c.b16 %v4932, %v4932
      %v4981 = vpack.c.b16 %v4933, %v4933
      %v4982 = vpack.c.b16 %v4934, %v4934
      %v4983 = vpack.c.b16 %v4935, %v4935
      %v4984 = vpack.c.b16 %v4936, %v4936
      %v4985 = vpack.c.b16 %v4937, %v4937
      %v4986 = vpack.c.b16 %v4938, %v4938
      %v4987 = vpack.c.b16 %v4939, %v4939
      %v4988 = vpack.c.b16 %v4940, %v4940
      %v4989 = vpack.c.b16 %v4941, %v4941
      %v4990 = vpack.c.b16 %v4942, %v4942
      %v4991 = vpack.c.b16 %v4943, %v4943
      %v4992 = vpack.c.b16 %v4944, %v4944
      %v4993 = vpack.c.b16 %v4945, %v4945
      %v4994 = vpack.c.b16 %v4946, %v4946
      %v4995 = vpack.c.b16 %v4947, %v4947
      %v4996 = vpack.c.b16 %v4948, %v4948
      %v4997 = vpack.c.b16 %v4949, %v4949
      %v4998 = vpack.c.b16 %v4950, %v4950
      %v4999 = vpack.c.b16 %v4951, %v4951
      %v5000 = vpack.c.b16 %v4952, %v4952
      %v5001 = vpack.c.b16 %v4953, %v4953
      %v5002 = vpack.c.b16 %v4954, %v4954
      %v5003 = vpack.c.b16 %v4955, %v4955
      %v5004 = vpack.c.b16 %v4956, %v4956
      %v5005 = vpack.c.b16 %v4957, %v4957
      %v5006 = vpack.c.b16 %v4958, %v4958
      %v5007 = vpack.c.b16 %v4959, %v4959
      %v5008 = vpack.c.b16 %v4960, %v4960
      %v5009 = vpack.c.b16 %v4961, %v4961
      %v5010 = vpack.c.b16 %v4962, %v4962
      %v5011 = vpack.c.b16 %v4963, %v4963
      %v5012 = vpack.c.b16 %v4964, %v4964
      %v5013 = vpack.c.b16 %v4965, %v4965
      %v5014 = vpack.c.b16 %v4966, %v4966
      %v5015 = vpack.c.b16 %v4967, %v4967
      %v5016 = vpack.c.b16 %v4968, %v4968
      %v5017 = vpack.c.b16 %v4969, %v4969
      %v5018 = vpack.c.b16 %v4970, %v4970
      %v5019 = vpack.c.b16 %v4971, %v4971
      %v5020 = vpack.c.b16 %v4972, %v4972
      %v5021 = vpack.c.b16 %v4973, %v4973
      %5070 = vst [vmem:[%s285] sm:$0xf] %v4974
      %5071 = vst [vmem:[%s285 + $0x4] sm:$0xf] %v4975
      %5072 = vst [vmem:[%s285 + $0x8] sm:$0xf] %v4976
      %5073 = vst [vmem:[%s285 + $0xc] sm:$0xf] %v4977
      %5074 = vst [vmem:[%s285 + $0x10] sm:$0xf] %v4978
      %5075 = vst [vmem:[%s285 + $0x14] sm:$0xf] %v4979
      %5076 = vst [vmem:[%s285 + $0x18] sm:$0xf] %v4980
      %5077 = vst [vmem:[%s285 + $0x1c] sm:$0xf] %v4981
      %5078 = vst [vmem:[%s285 + $0x20] sm:$0xf] %v4982
      %5079 = vst [vmem:[%s285 + $0x24] sm:$0xf] %v4983
      %5080 = vst [vmem:[%s285 + $0x28] sm:$0xf] %v4984
      %5081 = vst [vmem:[%s285 + $0x2c] sm:$0xf] %v4985
      %5082 = vst [vmem:[%s285 + $0x30] sm:$0xf] %v4986
      %5083 = vst [vmem:[%s285 + $0x34] sm:$0xf] %v4987
      %5084 = vst [vmem:[%s285 + $0x38] sm:$0xf] %v4988
      %5085 = vst [vmem:[%s285 + $0x3c] sm:$0xf] %v4989
      %5086 = vst [vmem:[%s285 + $0x40] sm:$0xf] %v4990
      %5087 = vst [vmem:[%s285 + $0x44] sm:$0xf] %v4991
      %5088 = vst [vmem:[%s285 + $0x48] sm:$0xf] %v4992
      %5089 = vst [vmem:[%s285 + $0x4c] sm:$0xf] %v4993
      %5090 = vst [vmem:[%s285 + $0x50] sm:$0xf] %v4994
      %5091 = vst [vmem:[%s285 + $0x54] sm:$0xf] %v4995
      %5092 = vst [vmem:[%s285 + $0x58] sm:$0xf] %v4996
      %5093 = vst [vmem:[%s285 + $0x5c] sm:$0xf] %v4997
      %5094 = vst [vmem:[%s285 + $0x60] sm:$0xf] %v4998
      %5095 = vst [vmem:[%s285 + $0x64] sm:$0xf] %v4999
      %5096 = vst [vmem:[%s285 + $0x68] sm:$0xf] %v5000
      %5097 = vst [vmem:[%s285 + $0x6c] sm:$0xf] %v5001
      %5098 = vst [vmem:[%s285 + $0x70] sm:$0xf] %v5002
      %5099 = vst [vmem:[%s285 + $0x74] sm:$0xf] %v5003
      %5100 = vst [vmem:[%s285 + $0x78] sm:$0xf] %v5004
      %5101 = vst [vmem:[%s285 + $0x7c] sm:$0xf] %v5005
      %5102 = vst [vmem:[%s285 + $0x80] sm:$0xf] %v5006
      %5103 = vst [vmem:[%s285 + $0x84] sm:$0xf] %v5007
      %5104 = vst [vmem:[%s285 + $0x88] sm:$0xf] %v5008
      %5105 = vst [vmem:[%s285 + $0x8c] sm:$0xf] %v5009
      %5106 = vst [vmem:[%s285 + $0x90] sm:$0xf] %v5010
      %5107 = vst [vmem:[%s285 + $0x94] sm:$0xf] %v5011
      %5108 = vst [vmem:[%s285 + $0x98] sm:$0xf] %v5012
      %5109 = vst [vmem:[%s285 + $0x9c] sm:$0xf] %v5013
      %5110 = vst [vmem:[%s285 + $0xa0] sm:$0xf] %v5014
      %5111 = vst [vmem:[%s285 + $0xa4] sm:$0xf] %v5015
      %5112 = vst [vmem:[%s285 + $0xa8] sm:$0xf] %v5016
      %5113 = vst [vmem:[%s285 + $0xac] sm:$0xf] %v5017
      %5114 = vst [vmem:[%s285 + $0xb0] sm:$0xf] %v5018
      %5115 = vst [vmem:[%s285 + $0xb4] sm:$0xf] %v5019
      %5116 = vst [vmem:[%s285 + $0xb8] sm:$0xf] %v5020
      %5117 = vst [vmem:[%s285 + $0xbc] sm:$0xf] %v5021
      %5118 = vst [vmem:[%s289] sm:$0x1] %v4776
      %5119 = vst [vmem:[%s289 + $0x1] sm:$0x1] %v4877
      %p5120 = scmp.lt.s32.totalorder %s19, 1
      %s5121 = scalar_select %p5120, %s19, 1
      %s5122 = smul.addr %s5121, 48
      %s5123 = smul.addr %s5122, 4
      %s5124 = scalar_lea.vmem %s6, %s5123
      %p5125 = scmp.lt.s32.totalorder %s19, 1
      %s5126 = scalar_select %p5125, %s19, 1
      %s5127 = smul.addr %s5126, 2
      %s5128 = scalar_lea.vmem %s7, %s5127
      // Predicated region
      $region45: #{_forward_impl.4} parent=43 // pred_check
        %p5129 = pneg %p168
      $region46: #{_forward_impl.4} parent=43 // pred_check_branch
        %5131 = sbr.rel (%p5129) target = $region48
      $region47: #{_forward_impl.4} parent=43 // pred_region
        _
      $region48: #{_forward_impl.4} parent=43 // pred_fallthru
        _
      // Predicated region
      $region49: #{_forward_impl.4} parent=43 // pred_check
        %p5132 = pneg %p194
      $region50: #{_forward_impl.4} parent=43 // pred_check_branch
        %5134 = sbr.rel (%p5132) target = $region52
      $region51: #{_forward_impl.4} parent=43 // pred_region
        _
      $region52: #{_forward_impl.4} parent=43 // pred_fallthru
        _
    $region44: #{_forward_impl.4} parent=5 // pred_fallthru
      _
    %p5135 = scmp.le.s32.totalorder 2, %s14
    // Predicated region
    $region53: #{_forward_impl.4} parent=5 // pred_check
      %p5136 = pneg %p5135
    $region54: #{_forward_impl.4} parent=5 // pred_check_branch
      %5138 = sbr.rel (%p5136) target = $region56
    $region55: #{_forward_impl.4} parent=5 // pred_region
      %s5139 = ssub.s32 %s14, 2
      // Predicated region
      $region57: #{_forward_impl.4} parent=55 // pred_check
        %p5140 = pneg %p174
      $region58: #{_forward_impl.4} parent=55 // pred_check_branch
        %5142 = sbr.rel (%p5140) target = $region60
      $region59: #{_forward_impl.4} parent=55 // pred_region
        %p5143 = scmp.lt.s32.totalorder %s20, 1
        %s5144 = scalar_select %p5143, %s20, 1
        %s5145 = smul.addr %s5144, 48
        %s5146 = smul.addr %s5145, 4
        %s5147 = scalar_lea.vmem %s6, %s5146
      $region60: #{_forward_impl.4} parent=55 // pred_fallthru
        _
      // Predicated region
      $region61: #{_forward_impl.4} parent=55 // pred_check
        %p5148 = pneg %p200
      $region62: #{_forward_impl.4} parent=55 // pred_check_branch
        %5150 = sbr.rel (%p5148) target = $region64
      $region63: #{_forward_impl.4} parent=55 // pred_region
        %p5151 = scmp.lt.s32.totalorder %s20, 1
        %s5152 = scalar_select %p5151, %s20, 1
        %s5153 = smul.addr %s5152, 2
        %s5154 = scalar_lea.vmem %s7, %s5153
      $region64: #{_forward_impl.4} parent=55 // pred_fallthru
        _
    $region56: #{_forward_impl.4} parent=5 // pred_fallthru
      _
  $region6: #{_forward_impl.4} parent=0 // loop_footer
    %s18 = sadd.s32 1, %s14
  $region7: #{_forward_impl.4} parent=0 // loop_footer_branch
    %13 = sbr.rel target = $region3
  $region8: #{_forward_impl.4} parent=0 // loop_exit
    _

// kernel: _forward_impl.3
$region0: #{_forward_impl.3}
  #allocation0 [shape = 'u32[]', space=smem, size = 0x4, offset = 0x4, fixed_abs, tag = 'smem constant byte address 0x4 - core index']
  #allocation1 [shape = 'u32[144,128]{1,0:T(1,128)}', space=vmem, size = 0x12000, scoped, tag = 'internal scratch']
  #allocation2 [shape = 'f32[448,8]{1,0:T(8,128)}', space=vmem, size = 0x38000, scoped, tag = 'scratch operand']
  %s0 = inlined_call_operand.vmem [shape: f32[2,256,8], index: 0, kind: input, shape index: {}]
  %s1 = inlined_call_operand.vmem [shape: bf16[9,8,128], index: 1, kind: input, shape index: {}]
  %s2 = inlined_call_operand.vmem [shape: f32[384,1], index: 2, kind: input, shape index: {}]
  %s3 = inlined_call_operand.vmem [shape: bf16[2,384,128], index: 3, kind: output, shape index: {0}]
  %s4 = inlined_call_operand.vmem [shape: f32[2,2,128], index: 4, kind: output, shape index: {1}]
  %5 = xla_tuple %s3, %s4
  %s6 = sld [smem:[#allocation0]]
  $region53: #{_forward_impl.3} parent=0
    _
  %s8 = ssub.s32 1, %s6
  %s9 = scalar_select 0, %s8, %s6
  loop: start=0, step=1, limit=4
  $region2: #{_forward_impl.3} parent=0 // loop_pre_header
    _
  $region3: #{_forward_impl.3} parent=0 // loop_header
    %s11 = sphi 0, %s15
    %p12 = scmp.ge.s32.totalorder %s11, 4
    %s21 = sphi 0, %s23
    %s24 = sphi 0, %s21
    %s25 = sphi 0, %s24
    %s41 = sphi 0, %s25
    %s45 = sphi 0, %s45
    %s47 = sphi 0, %s45
    %s48 = sphi 0, %s47
    %s62 = sphi 0, %s48
    %s66 = sphi 0, %s66
    %s68 = sphi 0, %s66
    %s69 = sphi 0, %s68
    %s83 = sphi 0, %s69
    %s89 = sphi 0, %s91
    %s92 = sphi 0, %s89
    %s93 = sphi 0, %s92
    %s109 = sphi 0, %s93
    %s115 = sphi 0, %s117
    %s118 = sphi 0, %s115
    %s119 = sphi 0, %s118
    %s135 = sphi 0, %s119
  $region4: #{_forward_impl.3} parent=0 // loop_header_branch
    %14 = sbr.rel (%p12) target = $region8
  $region5: #{_forward_impl.3} parent=0 // loop_body
    %s16 = ssub.s32 %s11, 1
    %s17 = ssub.s32 %s11, 2
    %s18 = sadd.s32 %s11, 1
    %s19 = ssub.s32 %s11, %s18
    %p20 = scmp.eq.s32.totalorder %s19, 0
    %s22 = sadd.s32 %s21, 1
    %s23 = scalar_select %p20, %s21, %s22
    %p26 = pneg %p20
    %p27 = scmp.eq.s32.totalorder %s11, 1
    %p28 = por %p26, %p27
    %p29 = scmp.ne.s32.totalorder %s21, %s24
    %p30 = scmp.eq.s32.totalorder %s11, 0
    %p31 = por %p29, %p30
    %p32 = scmp.ne.s32.totalorder %s21, %s24
    %p33 = scmp.eq.s32.totalorder %s16, 1
    %p34 = por %p32, %p33
    %p35 = scmp.ne.s32.totalorder %s24, %s25
    %p36 = scmp.eq.s32.totalorder %s16, 0
    %p37 = por %p35, %p36
    %p38 = scmp.ne.s32.totalorder %s24, %s25
    %p39 = scmp.eq.s32.totalorder %s17, 1
    %p40 = por %p38, %p39
    %p42 = scmp.ne.s32.totalorder %s25, %s41
    %p43 = scmp.eq.s32.totalorder %s17, 0
    %p44 = por %p42, %p43
    %s46 = sadd.s32 %s45, 1
    %p49 = scmp.eq.s32.totalorder %s11, 1
    %p50 = scmp.ne.s32.totalorder %s45, %s47
    %p51 = scmp.eq.s32.totalorder %s11, 0
    %p52 = por %p50, %p51
    %p53 = scmp.ne.s32.totalorder %s45, %s47
    %p54 = scmp.eq.s32.totalorder %s16, 1
    %p55 = por %p53, %p54
    %p56 = scmp.ne.s32.totalorder %s47, %s48
    %p57 = scmp.eq.s32.totalorder %s16, 0
    %p58 = por %p56, %p57
    %p59 = scmp.ne.s32.totalorder %s47, %s48
    %p60 = scmp.eq.s32.totalorder %s17, 1
    %p61 = por %p59, %p60
    %p63 = scmp.ne.s32.totalorder %s48, %s62
    %p64 = scmp.eq.s32.totalorder %s17, 0
    %p65 = por %p63, %p64
    %s67 = sadd.s32 %s66, 1
    %p70 = scmp.eq.s32.totalorder %s11, 1
    %p71 = scmp.ne.s32.totalorder %s66, %s68
    %p72 = scmp.eq.s32.totalorder %s11, 0
    %p73 = por %p71, %p72
    %p74 = scmp.ne.s32.totalorder %s66, %s68
    %p75 = scmp.eq.s32.totalorder %s16, 1
    %p76 = por %p74, %p75
    %p77 = scmp.ne.s32.totalorder %s68, %s69
    %p78 = scmp.eq.s32.totalorder %s16, 0
    %p79 = por %p77, %p78
    %p80 = scmp.ne.s32.totalorder %s68, %s69
    %p81 = scmp.eq.s32.totalorder %s17, 1
    %p82 = por %p80, %p81
    %p84 = scmp.ne.s32.totalorder %s69, %s83
    %p85 = scmp.eq.s32.totalorder %s17, 0
    %p86 = por %p84, %p85
    %s87 = ssub.s32 %s11, %s18
    %p88 = scmp.eq.s32.totalorder %s87, 0
    %s90 = sadd.s32 %s89, 1
    %s91 = scalar_select %p88, %s89, %s90
    %p94 = pneg %p88
    %p95 = scmp.eq.s32.totalorder %s11, 1
    %p96 = por %p94, %p95
    %p97 = scmp.ne.s32.totalorder %s89, %s92
    %p98 = scmp.eq.s32.totalorder %s11, 0
    %p99 = por %p97, %p98
    %p100 = scmp.ne.s32.totalorder %s89, %s92
    %p101 = scmp.eq.s32.totalorder %s16, 1
    %p102 = por %p100, %p101
    %p103 = scmp.ne.s32.totalorder %s92, %s93
    %p104 = scmp.eq.s32.totalorder %s16, 0
    %p105 = por %p103, %p104
    %p106 = scmp.ne.s32.totalorder %s92, %s93
    %p107 = scmp.eq.s32.totalorder %s17, 1
    %p108 = por %p106, %p107
    %p110 = scmp.ne.s32.totalorder %s93, %s109
    %p111 = scmp.eq.s32.totalorder %s17, 0
    %p112 = por %p110, %p111
    %s113 = ssub.s32 %s11, %s18
    %p114 = scmp.eq.s32.totalorder %s113, 0
    %s116 = sadd.s32 %s115, 1
    %s117 = scalar_select %p114, %s115, %s116
    %p120 = pneg %p114
    %p121 = scmp.eq.s32.totalorder %s11, 1
    %p122 = por %p120, %p121
    %p123 = scmp.ne.s32.totalorder %s115, %s118
    %p124 = scmp.eq.s32.totalorder %s11, 0
    %p125 = por %p123, %p124
    %p126 = scmp.ne.s32.totalorder %s115, %s118
    %p127 = scmp.eq.s32.totalorder %s16, 1
    %p128 = por %p126, %p127
    %p129 = scmp.ne.s32.totalorder %s118, %s119
    %p130 = scmp.eq.s32.totalorder %s16, 0
    %p131 = por %p129, %p130
    %p132 = scmp.ne.s32.totalorder %s118, %s119
    %p133 = scmp.eq.s32.totalorder %s17, 1
    %p134 = por %p132, %p133
    %p136 = scmp.ne.s32.totalorder %s119, %s135
    %p137 = scmp.eq.s32.totalorder %s17, 0
    %p138 = por %p136, %p137
    %p139 = scmp.le.s32.totalorder 1, %s11
    %p140 = scmp.lt.s32.totalorder %s11, 3
    %p141 = pnand %p139, %p140
    %p142 = pneg %p141
    // Predicated region
    $region9: #{_forward_impl.3} parent=5 // pred_check
      _
    $region10: #{_forward_impl.3} parent=5 // pred_check_branch
      %144 = sbr.rel (%p141) target = $region12
    $region11: #{_forward_impl.3} parent=5 // pred_region
      %s145 = ssub.s32 %s11, 1
      // Predicated region
      $region13: #{_forward_impl.3} parent=11 // pred_check
        %p146 = pneg %p58
      $region14: #{_forward_impl.3} parent=11 // pred_check_branch
        %148 = sbr.rel (%p146) target = $region16
      $region15: #{_forward_impl.3} parent=11 // pred_region
        _
      $region16: #{_forward_impl.3} parent=11 // pred_fallthru
        _
      // Predicated region
      $region17: #{_forward_impl.3} parent=11 // pred_check
        %p149 = pneg %p79
      $region18: #{_forward_impl.3} parent=11 // pred_check_branch
        %151 = sbr.rel (%p149) target = $region20
      $region19: #{_forward_impl.3} parent=11 // pred_region
        _
      $region20: #{_forward_impl.3} parent=11 // pred_fallthru
        _
    $region12: #{_forward_impl.3} parent=5 // pred_fallthru
      _
    %p152 = scmp.lt.s32.totalorder %s11, 2
    // Predicated region
    $region21: #{_forward_impl.3} parent=5 // pred_check
      %p153 = pneg %p152
    $region22: #{_forward_impl.3} parent=5 // pred_check_branch
      %155 = sbr.rel (%p153) target = $region24
    $region23: #{_forward_impl.3} parent=5 // pred_region
      // Predicated region
      $region25: #{_forward_impl.3} parent=23 // pred_check
        %p156 = pneg %p31
      $region26: #{_forward_impl.3} parent=23 // pred_check_branch
        %158 = sbr.rel (%p156) target = $region28
      $region27: #{_forward_impl.3} parent=23 // pred_region
        %p159 = scmp.lt.s32.totalorder %s11, 1
        %s160 = scalar_select %p159, %s11, 1
        %s161 = smul.addr %s160, 32
        %s162 = smul.addr %s161, 8
        %s163 = scalar_lea.vmem %s0, %s162
      $region28: #{_forward_impl.3} parent=23 // pred_fallthru
        _
    $region24: #{_forward_impl.3} parent=5 // pred_fallthru
      _
    %p164 = scmp.le.s32.totalorder 1, %s11
    %p165 = scmp.lt.s32.totalorder %s11, 3
    %p166 = pnand %p164, %p165
    %p167 = pneg %p166
    // Predicated region
    $region29: #{_forward_impl.3} parent=5 // pred_check
      _
    $region30: #{_forward_impl.3} parent=5 // pred_check_branch
      %169 = sbr.rel (%p166) target = $region32
    $region31: #{_forward_impl.3} parent=5 // pred_region
      %s170 = ssub.s32 %s11, 1
      %p171 = scmp.lt.s32.totalorder %s16, 1
      %s172 = scalar_select %p171, %s16, 1
      %s173 = smul.addr %s172, 32
      %s174 = smul.addr %s173, 8
      %s175 = scalar_lea.vmem %s0, %s174
      %p176 = pneg %p37
      %p177 = pneg %p34
      %p178 = pneg %p58
      %p179 = pneg %p55
      %p180 = pneg %p79
      %p181 = pneg %p76
      %p182 = pneg %p105
      %p183 = pneg %p102
      %p184 = scmp.lt.s32.totalorder %s16, 1
      %s185 = scalar_select %p184, %s16, 1
      %s186 = smul.addr %s185, 48
      %s187 = smul.addr %s186, 4
      %s188 = scalar_lea.vmem %s3, %s187
      %p189 = pneg %p131
      %p190 = pneg %p128
      %p191 = scmp.lt.s32.totalorder %s16, 1
      %s192 = scalar_select %p191, %s16, 1
      %s193 = smul.addr %s192, 2
      %s194 = scalar_lea.vmem %s4, %s193
      %p195 = scmp.lt.s32.totalorder %s16, 1
      %s196 = scalar_select %p195, %s16, 1
      %s197 = smul.addr %s196, 32
      %s198 = smul.addr %s197, 8
      %s199 = scalar_lea.vmem %s0, %s198
      %p200 = scmp.lt.s32.totalorder %s16, 1
      %s201 = scalar_select %p200, %s16, 1
      %s202 = smul.addr %s201, 48
      %s203 = smul.addr %s202, 4
      %s204 = scalar_lea.vmem %s3, %s203
      %p205 = scmp.lt.s32.totalorder %s16, 1
      %s206 = scalar_select %p205, %s16, 1
      %s207 = smul.addr %s206, 2
      %s208 = scalar_lea.vmem %s4, %s207
      %vm210 = vcmask 64512
      %211 = vst.msk [vmem:[#allocation2] sm:$0xff] %vm210, 0.0
      %212 = vst.msk [vmem:[#allocation2 + $0x8] sm:$0xff] %vm210, 0.0
      %213 = vst.msk [vmem:[#allocation2 + $0x10] sm:$0xff] %vm210, 0.0
      %214 = vst.msk [vmem:[#allocation2 + $0x18] sm:$0xff] %vm210, 0.0
      %215 = vst.msk [vmem:[#allocation2 + $0x1a0] sm:$0xff] %vm210, 0.0
      %216 = vst.msk [vmem:[#allocation2 + $0x1a8] sm:$0xff] %vm210, 0.0
      %217 = vst.msk [vmem:[#allocation2 + $0x1b0] sm:$0xff] %vm210, 0.0
      %218 = vst.msk [vmem:[#allocation2 + $0x1b8] sm:$0xff] %vm210, 0.0
      %219 = vst.msk [vmem:[#allocation2 + $0x30] sm:$0xff] %vm210, 0.0
      %v220 = vld [vmem:[%s199] sm:$0xff]
      %v221 = vld [vmem:[%s199 + $0x8] sm:$0xff]
      %222 = vst.msk [vmem:[#allocation2 + $0x20] sm:$0xff] %vm210, %v220
      %223 = vst.msk [vmem:[#allocation2 + $0x28] sm:$0xff] %vm210, %v221
      %224 = vst.msk [vmem:[#allocation2 + $0x48] sm:$0xff] %vm210, 0.0
      %v225 = vld [vmem:[%s199 + $0x10] sm:$0xff]
      %v226 = vld [vmem:[%s199 + $0x18] sm:$0xff]
      %227 = vst.msk [vmem:[#allocation2 + $0x38] sm:$0xff] %vm210, %v225
      %228 = vst.msk [vmem:[#allocation2 + $0x40] sm:$0xff] %vm210, %v226
      %229 = vst.msk [vmem:[#allocation2 + $0x60] sm:$0xff] %vm210, 0.0
      %v230 = vld [vmem:[%s199 + $0x20] sm:$0xff]
      %v231 = vld [vmem:[%s199 + $0x28] sm:$0xff]
      %232 = vst.msk [vmem:[#allocation2 + $0x50] sm:$0xff] %vm210, %v230
      %233 = vst.msk [vmem:[#allocation2 + $0x58] sm:$0xff] %vm210, %v231
      %234 = vst.msk [vmem:[#allocation2 + $0x78] sm:$0xff] %vm210, 0.0
      %v235 = vld [vmem:[%s199 + $0x30] sm:$0xff]
      %v236 = vld [vmem:[%s199 + $0x38] sm:$0xff]
      %237 = vst.msk [vmem:[#allocation2 + $0x68] sm:$0xff] %vm210, %v235
      %238 = vst.msk [vmem:[#allocation2 + $0x70] sm:$0xff] %vm210, %v236
      %239 = vst.msk [vmem:[#allocation2 + $0x90] sm:$0xff] %vm210, 0.0
      %v240 = vld [vmem:[%s199 + $0x40] sm:$0xff]
      %v241 = vld [vmem:[%s199 + $0x48] sm:$0xff]
      %242 = vst.msk [vmem:[#allocation2 + $0x80] sm:$0xff] %vm210, %v240
      %243 = vst.msk [vmem:[#allocation2 + $0x88] sm:$0xff] %vm210, %v241
      %244 = vst.msk [vmem:[#allocation2 + $0xa8] sm:$0xff] %vm210, 0.0
      %v245 = vld [vmem:[%s199 + $0x50] sm:$0xff]
      %v246 = vld [vmem:[%s199 + $0x58] sm:$0xff]
      %247 = vst.msk [vmem:[#allocation2 + $0x98] sm:$0xff] %vm210, %v245
      %248 = vst.msk [vmem:[#allocation2 + $0xa0] sm:$0xff] %vm210, %v246
      %249 = vst.msk [vmem:[#allocation2 + $0xc0] sm:$0xff] %vm210, 0.0
      %v250 = vld [vmem:[%s199 + $0x60] sm:$0xff]
      %v251 = vld [vmem:[%s199 + $0x68] sm:$0xff]
      %252 = vst.msk [vmem:[#allocation2 + $0xb0] sm:$0xff] %vm210, %v250
      %253 = vst.msk [vmem:[#allocation2 + $0xb8] sm:$0xff] %vm210, %v251
      %254 = vst.msk [vmem:[#allocation2 + $0xd8] sm:$0xff] %vm210, 0.0
      %v255 = vld [vmem:[%s199 + $0x70] sm:$0xff]
      %v256 = vld [vmem:[%s199 + $0x78] sm:$0xff]
      %257 = vst.msk [vmem:[#allocation2 + $0xc8] sm:$0xff] %vm210, %v255
      %258 = vst.msk [vmem:[#allocation2 + $0xd0] sm:$0xff] %vm210, %v256
      %259 = vst.msk [vmem:[#allocation2 + $0xf0] sm:$0xff] %vm210, 0.0
      %v260 = vld [vmem:[%s199 + $0x80] sm:$0xff]
      %v261 = vld [vmem:[%s199 + $0x88] sm:$0xff]
      %262 = vst.msk [vmem:[#allocation2 + $0xe0] sm:$0xff] %vm210, %v260
      %263 = vst.msk [vmem:[#allocation2 + $0xe8] sm:$0xff] %vm210, %v261
      %264 = vst.msk [vmem:[#allocation2 + $0x108] sm:$0xff] %vm210, 0.0
      %v265 = vld [vmem:[%s199 + $0x90] sm:$0xff]
      %v266 = vld [vmem:[%s199 + $0x98] sm:$0xff]
      %267 = vst.msk [vmem:[#allocation2 + $0xf8] sm:$0xff] %vm210, %v265
      %268 = vst.msk [vmem:[#allocation2 + $0x100] sm:$0xff] %vm210, %v266
      %269 = vst.msk [vmem:[#allocation2 + $0x120] sm:$0xff] %vm210, 0.0
      %v270 = vld [vmem:[%s199 + $0xa0] sm:$0xff]
      %v271 = vld [vmem:[%s199 + $0xa8] sm:$0xff]
      %272 = vst.msk [vmem:[#allocation2 + $0x110] sm:$0xff] %vm210, %v270
      %273 = vst.msk [vmem:[#allocation2 + $0x118] sm:$0xff] %vm210, %v271
      %274 = vst.msk [vmem:[#allocation2 + $0x138] sm:$0xff] %vm210, 0.0
      %v275 = vld [vmem:[%s199 + $0xb0] sm:$0xff]
      %v276 = vld [vmem:[%s199 + $0xb8] sm:$0xff]
      %277 = vst.msk [vmem:[#allocation2 + $0x128] sm:$0xff] %vm210, %v275
      %278 = vst.msk [vmem:[#allocation2 + $0x130] sm:$0xff] %vm210, %v276
      %279 = vst.msk [vmem:[#allocation2 + $0x150] sm:$0xff] %vm210, 0.0
      %v280 = vld [vmem:[%s199 + $0xc0] sm:$0xff]
      %v281 = vld [vmem:[%s199 + $0xc8] sm:$0xff]
      %282 = vst.msk [vmem:[#allocation2 + $0x140] sm:$0xff] %vm210, %v280
      %283 = vst.msk [vmem:[#allocation2 + $0x148] sm:$0xff] %vm210, %v281
      %284 = vst.msk [vmem:[#allocation2 + $0x168] sm:$0xff] %vm210, 0.0
      %v285 = vld [vmem:[%s199 + $0xd0] sm:$0xff]
      %v286 = vld [vmem:[%s199 + $0xd8] sm:$0xff]
      %287 = vst.msk [vmem:[#allocation2 + $0x158] sm:$0xff] %vm210, %v285
      %288 = vst.msk [vmem:[#allocation2 + $0x160] sm:$0xff] %vm210, %v286
      %289 = vst.msk [vmem:[#allocation2 + $0x180] sm:$0xff] %vm210, 0.0
      %v290 = vld [vmem:[%s199 + $0xe0] sm:$0xff]
      %v291 = vld [vmem:[%s199 + $0xe8] sm:$0xff]
      %292 = vst.msk [vmem:[#allocation2 + $0x170] sm:$0xff] %vm210, %v290
      %293 = vst.msk [vmem:[#allocation2 + $0x178] sm:$0xff] %vm210, %v291
      %294 = vst.msk [vmem:[#allocation2 + $0x198] sm:$0xff] %vm210, 0.0
      %v295 = vld [vmem:[%s199 + $0xf0] sm:$0xff]
      %v296 = vld [vmem:[%s199 + $0xf8] sm:$0xff]
      %297 = vst.msk [vmem:[#allocation2 + $0x188] sm:$0xff] %vm210, %v295
      %298 = vst.msk [vmem:[#allocation2 + $0x190] sm:$0xff] %vm210, %v296
      %v299 = vld [vmem:[%s2] sm:$0xff]
      %v300 = vld [vmem:[%s2 + $0x8] sm:$0xff]
      %v301 = vld [vmem:[%s2 + $0x10] sm:$0xff]
      %v302 = vld [vmem:[%s2 + $0x18] sm:$0xff]
      %v303 = vld [vmem:[%s2 + $0x20] sm:$0xff]
      %v304 = vld [vmem:[%s2 + $0x28] sm:$0xff]
      %v305 = vld [vmem:[%s2 + $0x30] sm:$0xff]
      %v306 = vld [vmem:[%s2 + $0x38] sm:$0xff]
      %v307 = vld [vmem:[%s2 + $0x40] sm:$0xff]
      %v308 = vld [vmem:[%s2 + $0x48] sm:$0xff]
      %v309 = vld [vmem:[%s2 + $0x50] sm:$0xff]
      %v310 = vld [vmem:[%s2 + $0x58] sm:$0xff]
      %v311 = vld [vmem:[%s2 + $0x60] sm:$0xff]
      %v312 = vld [vmem:[%s2 + $0x68] sm:$0xff]
      %v313 = vld [vmem:[%s2 + $0x70] sm:$0xff]
      %v314 = vld [vmem:[%s2 + $0x78] sm:$0xff]
      %v315 = vld [vmem:[%s2 + $0x80] sm:$0xff]
      %v316 = vld [vmem:[%s2 + $0x88] sm:$0xff]
      %v317 = vld [vmem:[%s2 + $0x90] sm:$0xff]
      %v318 = vld [vmem:[%s2 + $0x98] sm:$0xff]
      %v319 = vld [vmem:[%s2 + $0xa0] sm:$0xff]
      %v320 = vld [vmem:[%s2 + $0xa8] sm:$0xff]
      %v321 = vld [vmem:[%s2 + $0xb0] sm:$0xff]
      %v322 = vld [vmem:[%s2 + $0xb8] sm:$0xff]
      %v323 = vld [vmem:[%s2 + $0xc0] sm:$0xff]
      %v324 = vld [vmem:[%s2 + $0xc8] sm:$0xff]
      %v325 = vld [vmem:[%s2 + $0xd0] sm:$0xff]
      %v326 = vld [vmem:[%s2 + $0xd8] sm:$0xff]
      %v327 = vld [vmem:[%s2 + $0xe0] sm:$0xff]
      %v328 = vld [vmem:[%s2 + $0xe8] sm:$0xff]
      %v329 = vld [vmem:[%s2 + $0xf0] sm:$0xff]
      %v330 = vld [vmem:[%s2 + $0xf8] sm:$0xff]
      %v331 = vld [vmem:[%s2 + $0x100] sm:$0xff]
      %v332 = vld [vmem:[%s2 + $0x108] sm:$0xff]
      %v333 = vld [vmem:[%s2 + $0x110] sm:$0xff]
      %v334 = vld [vmem:[%s2 + $0x118] sm:$0xff]
      %v335 = vld [vmem:[%s2 + $0x120] sm:$0xff]
      %v336 = vld [vmem:[%s2 + $0x128] sm:$0xff]
      %v337 = vld [vmem:[%s2 + $0x130] sm:$0xff]
      %v338 = vld [vmem:[%s2 + $0x138] sm:$0xff]
      %v339 = vld [vmem:[%s2 + $0x140] sm:$0xff]
      %v340 = vld [vmem:[%s2 + $0x148] sm:$0xff]
      %v341 = vld [vmem:[%s2 + $0x150] sm:$0xff]
      %v342 = vld [vmem:[%s2 + $0x158] sm:$0xff]
      %v343 = vld [vmem:[%s2 + $0x160] sm:$0xff]
      %v344 = vld [vmem:[%s2 + $0x168] sm:$0xff]
      %v345 = vld [vmem:[%s2 + $0x170] sm:$0xff]
      %v346 = vld [vmem:[%s2 + $0x178] sm:$0xff]
      %v347 = vld [vmem:[#allocation2 + $0x7] sm:$0xff]
      %v348 = vld [vmem:[#allocation2 + $0xf] sm:$0xff]
      %v349 = vld [vmem:[#allocation2 + $0x17] sm:$0xff]
      %v350 = vld [vmem:[#allocation2 + $0x1f] sm:$0xff]
      %v351 = vld [vmem:[#allocation2 + $0x27] sm:$0xff]
      %v352 = vld [vmem:[#allocation2 + $0x2f] sm:$0xff]
      %v353 = vld [vmem:[#allocation2 + $0x37] sm:$0xff]
      %v354 = vld [vmem:[#allocation2 + $0x3f] sm:$0xff]
      %v355 = vld [vmem:[#allocation2 + $0x47] sm:$0xff]
      %v356 = vld [vmem:[#allocation2 + $0x4f] sm:$0xff]
      %v357 = vld [vmem:[#allocation2 + $0x57] sm:$0xff]
      %v358 = vld [vmem:[#allocation2 + $0x5f] sm:$0xff]
      %v359 = vld [vmem:[#allocation2 + $0x67] sm:$0xff]
      %v360 = vld [vmem:[#allocation2 + $0x6f] sm:$0xff]
      %v361 = vld [vmem:[#allocation2 + $0x77] sm:$0xff]
      %v362 = vld [vmem:[#allocation2 + $0x7f] sm:$0xff]
      %v363 = vld [vmem:[#allocation2 + $0x87] sm:$0xff]
      %v364 = vld [vmem:[#allocation2 + $0x8f] sm:$0xff]
      %v365 = vld [vmem:[#allocation2 + $0x97] sm:$0xff]
      %v366 = vld [vmem:[#allocation2 + $0x9f] sm:$0xff]
      %v367 = vld [vmem:[#allocation2 + $0xa7] sm:$0xff]
      %v368 = vld [vmem:[#allocation2 + $0xaf] sm:$0xff]
      %v369 = vld [vmem:[#allocation2 + $0xb7] sm:$0xff]
      %v370 = vld [vmem:[#allocation2 + $0xbf] sm:$0xff]
      %v371 = vld [vmem:[#allocation2 + $0xc7] sm:$0xff]
      %v372 = vld [vmem:[#allocation2 + $0xcf] sm:$0xff]
      %v373 = vld [vmem:[#allocation2 + $0xd7] sm:$0xff]
      %v374 = vld [vmem:[#allocation2 + $0xdf] sm:$0xff]
      %v375 = vld [vmem:[#allocation2 + $0xe7] sm:$0xff]
      %v376 = vld [vmem:[#allocation2 + $0xef] sm:$0xff]
      %v377 = vld [vmem:[#allocation2 + $0xf7] sm:$0xff]
      %v378 = vld [vmem:[#allocation2 + $0xff] sm:$0xff]
      %v379 = vld [vmem:[#allocation2 + $0x107] sm:$0xff]
      %v380 = vld [vmem:[#allocation2 + $0x10f] sm:$0xff]
      %v381 = vld [vmem:[#allocation2 + $0x117] sm:$0xff]
      %v382 = vld [vmem:[#allocation2 + $0x11f] sm:$0xff]
      %v383 = vld [vmem:[#allocation2 + $0x127] sm:$0xff]
      %v384 = vld [vmem:[#allocation2 + $0x12f] sm:$0xff]
      %v385 = vld [vmem:[#allocation2 + $0x137] sm:$0xff]
      %v386 = vld [vmem:[#allocation2 + $0x13f] sm:$0xff]
      %v387 = vld [vmem:[#allocation2 + $0x147] sm:$0xff]
      %v388 = vld [vmem:[#allocation2 + $0x14f] sm:$0xff]
      %v389 = vld [vmem:[#allocation2 + $0x157] sm:$0xff]
      %v390 = vld [vmem:[#allocation2 + $0x15f] sm:$0xff]
      %v391 = vld [vmem:[#allocation2 + $0x167] sm:$0xff]
      %v392 = vld [vmem:[#allocation2 + $0x16f] sm:$0xff]
      %v393 = vld [vmem:[#allocation2 + $0x177] sm:$0xff]
      %v394 = vld [vmem:[#allocation2 + $0x17f] sm:$0xff]
      %v395 = vpack.c.bf16 %v348, %v347
      %v396 = vpack.c.bf16 %v350, %v349
      %v397 = vpack.c.bf16 %v352, %v351
      %v398 = vpack.c.bf16 %v354, %v353
      %v399 = vpack.c.bf16 %v356, %v355
      %v400 = vpack.c.bf16 %v358, %v357
      %v401 = vpack.c.bf16 %v360, %v359
      %v402 = vpack.c.bf16 %v362, %v361
      %v403 = vpack.c.bf16 %v364, %v363
      %v404 = vpack.c.bf16 %v366, %v365
      %v405 = vpack.c.bf16 %v368, %v367
      %v406 = vpack.c.bf16 %v370, %v369
      %v407 = vpack.c.bf16 %v372, %v371
      %v408 = vpack.c.bf16 %v374, %v373
      %v409 = vpack.c.bf16 %v376, %v375
      %v410 = vpack.c.bf16 %v378, %v377
      %v411 = vpack.c.bf16 %v380, %v379
      %v412 = vpack.c.bf16 %v382, %v381
      %v413 = vpack.c.bf16 %v384, %v383
      %v414 = vpack.c.bf16 %v386, %v385
      %v415 = vpack.c.bf16 %v388, %v387
      %v416 = vpack.c.bf16 %v390, %v389
      %v417 = vpack.c.bf16 %v392, %v391
      %v418 = vpack.c.bf16 %v394, %v393
      %v419 = vld [vmem:[%s1] sm:$0xf]
      %v420 = vld [vmem:[#allocation2 + $0x8] sm:$0xff]
      %v421 = vld [vmem:[#allocation2 + $0x10] sm:$0xff]
      %v422 = vld [vmem:[#allocation2 + $0x18] sm:$0xff]
      %v423 = vld [vmem:[#allocation2 + $0x20] sm:$0xff]
      %v424 = vld [vmem:[#allocation2 + $0x28] sm:$0xff]
      %v425 = vld [vmem:[#allocation2 + $0x30] sm:$0xff]
      %v426 = vld [vmem:[#allocation2 + $0x38] sm:$0xff]
      %v427 = vld [vmem:[#allocation2 + $0x40] sm:$0xff]
      %v428 = vld [vmem:[#allocation2 + $0x48] sm:$0xff]
      %v429 = vld [vmem:[#allocation2 + $0x50] sm:$0xff]
      %v430 = vld [vmem:[#allocation2 + $0x58] sm:$0xff]
      %v431 = vld [vmem:[#allocation2 + $0x60] sm:$0xff]
      %v432 = vld [vmem:[#allocation2 + $0x68] sm:$0xff]
      %v433 = vld [vmem:[#allocation2 + $0x70] sm:$0xff]
      %v434 = vld [vmem:[#allocation2 + $0x78] sm:$0xff]
      %v435 = vld [vmem:[#allocation2 + $0x80] sm:$0xff]
      %v436 = vld [vmem:[#allocation2 + $0x88] sm:$0xff]
      %v437 = vld [vmem:[#allocation2 + $0x90] sm:$0xff]
      %v438 = vld [vmem:[#allocation2 + $0x98] sm:$0xff]
      %v439 = vld [vmem:[#allocation2 + $0xa0] sm:$0xff]
      %v440 = vld [vmem:[#allocation2 + $0xa8] sm:$0xff]
      %v441 = vld [vmem:[#allocation2 + $0xb0] sm:$0xff]
      %v442 = vld [vmem:[#allocation2 + $0xb8] sm:$0xff]
      %v443 = vld [vmem:[#allocation2 + $0xc0] sm:$0xff]
      %v444 = vld [vmem:[#allocation2 + $0xc8] sm:$0xff]
      %v445 = vld [vmem:[#allocation2 + $0xd0] sm:$0xff]
      %v446 = vld [vmem:[#allocation2 + $0xd8] sm:$0xff]
      %v447 = vld [vmem:[#allocation2 + $0xe0] sm:$0xff]
      %v448 = vld [vmem:[#allocation2 + $0xe8] sm:$0xff]
      %v449 = vld [vmem:[#allocation2 + $0xf0] sm:$0xff]
      %v450 = vld [vmem:[#allocation2 + $0xf8] sm:$0xff]
      %v451 = vld [vmem:[#allocation2 + $0x100] sm:$0xff]
      %v452 = vld [vmem:[#allocation2 + $0x108] sm:$0xff]
      %v453 = vld [vmem:[#allocation2 + $0x110] sm:$0xff]
      %v454 = vld [vmem:[#allocation2 + $0x118] sm:$0xff]
      %v455 = vld [vmem:[#allocation2 + $0x120] sm:$0xff]
      %v456 = vld [vmem:[#allocation2 + $0x128] sm:$0xff]
      %v457 = vld [vmem:[#allocation2 + $0x130] sm:$0xff]
      %v458 = vld [vmem:[#allocation2 + $0x138] sm:$0xff]
      %v459 = vld [vmem:[#allocation2 + $0x140] sm:$0xff]
      %v460 = vld [vmem:[#allocation2 + $0x148] sm:$0xff]
      %v461 = vld [vmem:[#allocation2 + $0x150] sm:$0xff]
      %v462 = vld [vmem:[#allocation2 + $0x158] sm:$0xff]
      %v463 = vld [vmem:[#allocation2 + $0x160] sm:$0xff]
      %v464 = vld [vmem:[#allocation2 + $0x168] sm:$0xff]
      %v465 = vld [vmem:[#allocation2 + $0x170] sm:$0xff]
      %v466 = vld [vmem:[#allocation2 + $0x178] sm:$0xff]
      %v467 = vld [vmem:[#allocation2 + $0x180] sm:$0xff]
      %v468 = vpack.c.bf16 %v421, %v420
      %v469 = vpack.c.bf16 %v423, %v422
      %v470 = vpack.c.bf16 %v425, %v424
      %v471 = vpack.c.bf16 %v427, %v426
      %v472 = vpack.c.bf16 %v429, %v428
      %v473 = vpack.c.bf16 %v431, %v430
      %v474 = vpack.c.bf16 %v433, %v432
      %v475 = vpack.c.bf16 %v435, %v434
      %v476 = vpack.c.bf16 %v437, %v436
      %v477 = vpack.c.bf16 %v439, %v438
      %v478 = vpack.c.bf16 %v441, %v440
      %v479 = vpack.c.bf16 %v443, %v442
      %v480 = vpack.c.bf16 %v445, %v444
      %v481 = vpack.c.bf16 %v447, %v446
      %v482 = vpack.c.bf16 %v449, %v448
      %v483 = vpack.c.bf16 %v451, %v450
      %v484 = vpack.c.bf16 %v453, %v452
      %v485 = vpack.c.bf16 %v455, %v454
      %v486 = vpack.c.bf16 %v457, %v456
      %v487 = vpack.c.bf16 %v459, %v458
      %v488 = vpack.c.bf16 %v461, %v460
      %v489 = vpack.c.bf16 %v463, %v462
      %v490 = vpack.c.bf16 %v465, %v464
      %v491 = vpack.c.bf16 %v467, %v466
      %s492 = scalar_lea.vmem %s1, 4
      %v493 = vld [vmem:[%s492] sm:$0xf]
      %v495 = vsel %vm210, %v468, 0
      %v498 = vsel %vm210, %v469, 0
      %v501 = vsel %vm210, %v470, 0
      %v504 = vsel %vm210, %v471, 0
      %v507 = vsel %vm210, %v472, 0
      %v510 = vsel %vm210, %v473, 0
      %v513 = vsel %vm210, %v474, 0
      %v516 = vsel %vm210, %v475, 0
      %v519 = vsel %vm210, %v476, 0
      %v522 = vsel %vm210, %v477, 0
      %v525 = vsel %vm210, %v478, 0
      %v528 = vsel %vm210, %v479, 0
      %v531 = vsel %vm210, %v480, 0
      %v534 = vsel %vm210, %v481, 0
      %v537 = vsel %vm210, %v482, 0
      %v540 = vsel %vm210, %v483, 0
      %v543 = vsel %vm210, %v484, 0
      %v546 = vsel %vm210, %v485, 0
      %v549 = vsel %vm210, %v486, 0
      %v552 = vsel %vm210, %v487, 0
      %v555 = vsel %vm210, %v488, 0
      %v558 = vsel %vm210, %v489, 0
      %v561 = vsel %vm210, %v490, 0
      %v564 = vsel %vm210, %v491, 0
      %vm566 = vcmask 1043456
      %v568 = vsel %vm566, %v493, 0
      %570 = vmatprep.subr.bf16.mxu0 0
      %571 = vmatpush1.bf16.msra.mxu0 %v568
      %572 = vmatprep.subr.bf16.mxu0 0
      %573 = vmatpush1.bf16.msra.mxu0 0
      %574 = vmatprep.subr.bf16.mxu0 0
      %575 = vmatpush1.bf16.msra.mxu0 0
      %576 = vmatprep.subr.bf16.mxu0 0
      %577 = vmatpush1.bf16.msra.mxu0 0
      %578 = vmatprep.subr.bf16.mxu0 0
      %579 = vmatpush1.bf16.msra.mxu0 0
      %580 = vmatprep.subr.bf16.mxu0 0
      %581 = vmatpush1.bf16.msra.mxu0 0
      %582 = vmatprep.subr.bf16.mxu0 0
      %583 = vmatpush1.bf16.msra.mxu0 0
      %584 = vmatprep.subr.bf16.mxu0 0
      %585 = vmatpush1.bf16.msra.mxu0 0
      %586 = vmatprep.subr.bf16.mxu0 0
      %587 = vmatpush1.bf16.msra.mxu0 0
      %588 = vmatprep.subr.bf16.mxu0 0
      %589 = vmatpush1.bf16.msra.mxu0 0
      %590 = vmatprep.subr.bf16.mxu0 0
      %591 = vmatpush1.bf16.msra.mxu0 0
      %592 = vmatprep.subr.bf16.mxu0 0
      %593 = vmatpush1.bf16.msra.mxu0 0
      %594 = vmatprep.subr.bf16.mxu0 0
      %595 = vmatpush1.bf16.msra.mxu0 0
      %596 = vmatprep.subr.bf16.mxu0 0
      %597 = vmatpush1.bf16.msra.mxu0 0
      %598 = vmatprep.subr.bf16.mxu0 0
      %599 = vmatpush1.bf16.msra.mxu0 0
      %600 = vmatprep.subr.bf16.mxu0 0
      %601 = vmatpush1.bf16.msra.mxu0 0
      %602 = vmatprep.mubr.bf16.mxu0 0
      %603 = vmatmul.mubr.bf16.gmra.mrb[0].mxu0 %v495
      %v604 = vpop.f32.mrb[0].mxu0
      %v605 = vadd.f32 0.0, %v604
      %v606 = vpop.f32.mrb[0].mxu0
      %v607 = vpop.f32.mrb[0].mxu0
      %v608 = vadd.f32 0.0, %v607
      %v609 = vpop.f32.mrb[0].mxu0
      %610 = vmatprep.mubr.bf16.mxu0 0
      %611 = vmatmul.mubr.bf16.gmra.mrb[0].mxu0 %v498
      %v612 = vpop.f32.mrb[0].mxu0
      %v613 = vadd.f32 0.0, %v612
      %v614 = vpop.f32.mrb[0].mxu0
      %v615 = vpop.f32.mrb[0].mxu0
      %v616 = vadd.f32 0.0, %v615
      %v617 = vpop.f32.mrb[0].mxu0
      %618 = vmatprep.mubr.bf16.mxu0 0
      %619 = vmatmul.mubr.bf16.gmra.mrb[0].mxu0 %v501
      %v620 = vpop.f32.mrb[0].mxu0
      %v621 = vadd.f32 0.0, %v620
      %v622 = vpop.f32.mrb[0].mxu0
      %v623 = vpop.f32.mrb[0].mxu0
      %v624 = vadd.f32 0.0, %v623
      %v625 = vpop.f32.mrb[0].mxu0
      %626 = vmatprep.mubr.bf16.mxu0 0
      %627 = vmatmul.mubr.bf16.gmra.mrb[0].mxu0 %v504
      %v628 = vpop.f32.mrb[0].mxu0
      %v629 = vadd.f32 0.0, %v628
      %v630 = vpop.f32.mrb[0].mxu0
      %v631 = vpop.f32.mrb[0].mxu0
      %v632 = vadd.f32 0.0, %v631
      %v633 = vpop.f32.mrb[0].mxu0
      %634 = vmatprep.mubr.bf16.mxu0 0
      %635 = vmatmul.mubr.bf16.gmra.mrb[0].mxu0 %v507
      %v636 = vpop.f32.mrb[0].mxu0
      %v637 = vadd.f32 0.0, %v636
      %v638 = vpop.f32.mrb[0].mxu0
      %v639 = vpop.f32.mrb[0].mxu0
      %v640 = vadd.f32 0.0, %v639
      %v641 = vpop.f32.mrb[0].mxu0
      %642 = vmatprep.mubr.bf16.mxu0 0
      %643 = vmatmul.mubr.bf16.gmra.mrb[0].mxu0 %v510
      %v644 = vpop.f32.mrb[0].mxu0
      %v645 = vadd.f32 0.0, %v644
      %v646 = vpop.f32.mrb[0].mxu0
      %v647 = vpop.f32.mrb[0].mxu0
      %v648 = vadd.f32 0.0, %v647
      %v649 = vpop.f32.mrb[0].mxu0
      %650 = vmatprep.mubr.bf16.mxu0 0
      %651 = vmatmul.mubr.bf16.gmra.mrb[0].mxu0 %v513
      %v652 = vpop.f32.mrb[0].mxu0
      %v653 = vadd.f32 0.0, %v652
      %v654 = vpop.f32.mrb[0].mxu0
      %v655 = vpop.f32.mrb[0].mxu0
      %v656 = vadd.f32 0.0, %v655
      %v657 = vpop.f32.mrb[0].mxu0
      %658 = vmatprep.mubr.bf16.mxu0 0
      %659 = vmatmul.mubr.bf16.gmra.mrb[0].mxu0 %v516
      %v660 = vpop.f32.mrb[0].mxu0
      %v661 = vadd.f32 0.0, %v660
      %v662 = vpop.f32.mrb[0].mxu0
      %v663 = vpop.f32.mrb[0].mxu0
      %v664 = vadd.f32 0.0, %v663
      %v665 = vpop.f32.mrb[0].mxu0
      %666 = vmatprep.mubr.bf16.mxu0 0
      %667 = vmatmul.mubr.bf16.gmra.mrb[0].mxu0 %v519
      %v668 = vpop.f32.mrb[0].mxu0
      %v669 = vadd.f32 0.0, %v668
      %v670 = vpop.f32.mrb[0].mxu0
      %v671 = vpop.f32.mrb[0].mxu0
      %v672 = vadd.f32 0.0, %v671
      %v673 = vpop.f32.mrb[0].mxu0
      %674 = vmatprep.mubr.bf16.mxu0 0
      %675 = vmatmul.mubr.bf16.gmra.mrb[0].mxu0 %v522
      %v676 = vpop.f32.mrb[0].mxu0
      %v677 = vadd.f32 0.0, %v676
      %v678 = vpop.f32.mrb[0].mxu0
      %v679 = vpop.f32.mrb[0].mxu0
      %v680 = vadd.f32 0.0, %v679
      %v681 = vpop.f32.mrb[0].mxu0
      %682 = vmatprep.mubr.bf16.mxu0 0
      %683 = vmatmul.mubr.bf16.gmra.mrb[0].mxu0 %v525
      %v684 = vpop.f32.mrb[0].mxu0
      %v685 = vadd.f32 0.0, %v684
      %v686 = vpop.f32.mrb[0].mxu0
      %v687 = vpop.f32.mrb[0].mxu0
      %v688 = vadd.f32 0.0, %v687
      %v689 = vpop.f32.mrb[0].mxu0
      %690 = vmatprep.mubr.bf16.mxu0 0
      %691 = vmatmul.mubr.bf16.gmra.mrb[0].mxu0 %v528
      %v692 = vpop.f32.mrb[0].mxu0
      %v693 = vadd.f32 0.0, %v692
      %v694 = vpop.f32.mrb[0].mxu0
      %v695 = vpop.f32.mrb[0].mxu0
      %v696 = vadd.f32 0.0, %v695
      %v697 = vpop.f32.mrb[0].mxu0
      %698 = vmatprep.mubr.bf16.mxu0 0
      %699 = vmatmul.mubr.bf16.gmra.mrb[0].mxu0 %v531
      %v700 = vpop.f32.mrb[0].mxu0
      %v701 = vadd.f32 0.0, %v700
      %v702 = vpop.f32.mrb[0].mxu0
      %v703 = vpop.f32.mrb[0].mxu0
      %v704 = vadd.f32 0.0, %v703
      %v705 = vpop.f32.mrb[0].mxu0
      %706 = vmatprep.mubr.bf16.mxu0 0
      %707 = vmatmul.mubr.bf16.gmra.mrb[0].mxu0 %v534
      %v708 = vpop.f32.mrb[0].mxu0
      %v709 = vadd.f32 0.0, %v708
      %v710 = vpop.f32.mrb[0].mxu0
      %v711 = vpop.f32.mrb[0].mxu0
      %v712 = vadd.f32 0.0, %v711
      %v713 = vpop.f32.mrb[0].mxu0
      %714 = vmatprep.mubr.bf16.mxu0 0
      %715 = vmatmul.mubr.bf16.gmra.mrb[0].mxu0 %v537
      %v716 = vpop.f32.mrb[0].mxu0
      %v717 = vadd.f32 0.0, %v716
      %v718 = vpop.f32.mrb[0].mxu0
      %v719 = vpop.f32.mrb[0].mxu0
      %v720 = vadd.f32 0.0, %v719
      %v721 = vpop.f32.mrb[0].mxu0
      %722 = vmatprep.mubr.bf16.mxu0 0
      %723 = vmatmul.mubr.bf16.gmra.mrb[0].mxu0 %v540
      %v724 = vpop.f32.mrb[0].mxu0
      %v725 = vadd.f32 0.0, %v724
      %v726 = vpop.f32.mrb[0].mxu0
      %v727 = vpop.f32.mrb[0].mxu0
      %v728 = vadd.f32 0.0, %v727
      %v729 = vpop.f32.mrb[0].mxu0
      %730 = vmatprep.mubr.bf16.mxu0 0
      %731 = vmatmul.mubr.bf16.gmra.mrb[0].mxu0 %v543
      %v732 = vpop.f32.mrb[0].mxu0
      %v733 = vadd.f32 0.0, %v732
      %v734 = vpop.f32.mrb[0].mxu0
      %v735 = vpop.f32.mrb[0].mxu0
      %v736 = vadd.f32 0.0, %v735
      %v737 = vpop.f32.mrb[0].mxu0
      %738 = vmatprep.mubr.bf16.mxu0 0
      %739 = vmatmul.mubr.bf16.gmra.mrb[0].mxu0 %v546
      %v740 = vpop.f32.mrb[0].mxu0
      %v741 = vadd.f32 0.0, %v740
      %v742 = vpop.f32.mrb[0].mxu0
      %v743 = vpop.f32.mrb[0].mxu0
      %v744 = vadd.f32 0.0, %v743
      %v745 = vpop.f32.mrb[0].mxu0
      %746 = vmatprep.mubr.bf16.mxu0 0
      %747 = vmatmul.mubr.bf16.gmra.mrb[0].mxu0 %v549
      %v748 = vpop.f32.mrb[0].mxu0
      %v749 = vadd.f32 0.0, %v748
      %v750 = vpop.f32.mrb[0].mxu0
      %v751 = vpop.f32.mrb[0].mxu0
      %v752 = vadd.f32 0.0, %v751
      %v753 = vpop.f32.mrb[0].mxu0
      %754 = vmatprep.mubr.bf16.mxu0 0
      %755 = vmatmul.mubr.bf16.gmra.mrb[0].mxu0 %v552
      %v756 = vpop.f32.mrb[0].mxu0
      %v757 = vadd.f32 0.0, %v756
      %v758 = vpop.f32.mrb[0].mxu0
      %v759 = vpop.f32.mrb[0].mxu0
      %v760 = vadd.f32 0.0, %v759
      %v761 = vpop.f32.mrb[0].mxu0
      %762 = vmatprep.mubr.bf16.mxu0 0
      %763 = vmatmul.mubr.bf16.gmra.mrb[0].mxu0 %v555
      %v764 = vpop.f32.mrb[0].mxu0
      %v765 = vadd.f32 0.0, %v764
      %v766 = vpop.f32.mrb[0].mxu0
      %v767 = vpop.f32.mrb[0].mxu0
      %v768 = vadd.f32 0.0, %v767
      %v769 = vpop.f32.mrb[0].mxu0
      %770 = vmatprep.mubr.bf16.mxu0 0
      %771 = vmatmul.mubr.bf16.gmra.mrb[0].mxu0 %v558
      %v772 = vpop.f32.mrb[0].mxu0
      %v773 = vadd.f32 0.0, %v772
      %v774 = vpop.f32.mrb[0].mxu0
      %v775 = vpop.f32.mrb[0].mxu0
      %v776 = vadd.f32 0.0, %v775
      %v777 = vpop.f32.mrb[0].mxu0
      %778 = vmatprep.mubr.bf16.mxu0 0
      %779 = vmatmul.mubr.bf16.gmra.mrb[0].mxu0 %v561
      %v780 = vpop.f32.mrb[0].mxu0
      %v781 = vadd.f32 0.0, %v780
      %v782 = vpop.f32.mrb[0].mxu0
      %v783 = vpop.f32.mrb[0].mxu0
      %v784 = vadd.f32 0.0, %v783
      %v785 = vpop.f32.mrb[0].mxu0
      %786 = vmatprep.mubr.bf16.mxu0 0
      %787 = vmatmul.mubr.bf16.gmra.mrb[0].mxu0 %v564
      %v788 = vpop.f32.mrb[0].mxu0
      %v789 = vadd.f32 0.0, %v788
      %v790 = vpop.f32.mrb[0].mxu0
      %v791 = vpop.f32.mrb[0].mxu0
      %v792 = vadd.f32 0.0, %v791
      %v793 = vpop.f32.mrb[0].mxu0
      %794 = vdwg.mxu0
      %v796 = vsel %vm210, %v395, 0
      %v799 = vsel %vm210, %v396, 0
      %v802 = vsel %vm210, %v397, 0
      %v805 = vsel %vm210, %v398, 0
      %v808 = vsel %vm210, %v399, 0
      %v811 = vsel %vm210, %v400, 0
      %v814 = vsel %vm210, %v401, 0
      %v817 = vsel %vm210, %v402, 0
      %v820 = vsel %vm210, %v403, 0
      %v823 = vsel %vm210, %v404, 0
      %v826 = vsel %vm210, %v405, 0
      %v829 = vsel %vm210, %v406, 0
      %v832 = vsel %vm210, %v407, 0
      %v835 = vsel %vm210, %v408, 0
      %v838 = vsel %vm210, %v409, 0
      %v841 = vsel %vm210, %v410, 0
      %v844 = vsel %vm210, %v411, 0
      %v847 = vsel %vm210, %v412, 0
      %v850 = vsel %vm210, %v413, 0
      %v853 = vsel %vm210, %v414, 0
      %v856 = vsel %vm210, %v415, 0
      %v859 = vsel %vm210, %v416, 0
      %v862 = vsel %vm210, %v417, 0
      %v865 = vsel %vm210, %v418, 0
      %v868 = vsel %vm566, %v419, 0
      %870 = vmatprep.subr.bf16.mxu0 0
      %871 = vmatpush1.bf16.msra.mxu0 %v868
      %872 = vmatprep.subr.bf16.mxu0 0
      %873 = vmatpush1.bf16.msra.mxu0 0
      %874 = vmatprep.subr.bf16.mxu0 0
      %875 = vmatpush1.bf16.msra.mxu0 0
      %876 = vmatprep.subr.bf16.mxu0 0
      %877 = vmatpush1.bf16.msra.mxu0 0
      %878 = vmatprep.subr.bf16.mxu0 0
      %879 = vmatpush1.bf16.msra.mxu0 0
      %880 = vmatprep.subr.bf16.mxu0 0
      %881 = vmatpush1.bf16.msra.mxu0 0
      %882 = vmatprep.subr.bf16.mxu0 0
      %883 = vmatpush1.bf16.msra.mxu0 0
      %884 = vmatprep.subr.bf16.mxu0 0
      %885 = vmatpush1.bf16.msra.mxu0 0
      %886 = vmatprep.subr.bf16.mxu0 0
      %887 = vmatpush1.bf16.msra.mxu0 0
      %888 = vmatprep.subr.bf16.mxu0 0
      %889 = vmatpush1.bf16.msra.mxu0 0
      %890 = vmatprep.subr.bf16.mxu0 0
      %891 = vmatpush1.bf16.msra.mxu0 0
      %892 = vmatprep.subr.bf16.mxu0 0
      %893 = vmatpush1.bf16.msra.mxu0 0
      %894 = vmatprep.subr.bf16.mxu0 0
      %895 = vmatpush1.bf16.msra.mxu0 0
      %896 = vmatprep.subr.bf16.mxu0 0
      %897 = vmatpush1.bf16.msra.mxu0 0
      %898 = vmatprep.subr.bf16.mxu0 0
      %899 = vmatpush1.bf16.msra.mxu0 0
      %900 = vmatprep.subr.bf16.mxu0 0
      %901 = vmatpush1.bf16.msra.mxu0 0
      %902 = vmatprep.mubr.bf16.mxu0 0
      %903 = vmatmul.mubr.bf16.gmra.mrb[0].mxu0 %v796
      %v904 = vpop.f32.mrb[0].mxu0
      %v905 = vadd.f32 %v605, %v904
      %v906 = vpop.f32.mrb[0].mxu0
      %v907 = vpop.f32.mrb[0].mxu0
      %v908 = vadd.f32 %v608, %v907
      %v909 = vpop.f32.mrb[0].mxu0
      %910 = vmatprep.mubr.bf16.mxu0 0
      %911 = vmatmul.mubr.bf16.gmra.mrb[0].mxu0 %v799
      %v912 = vpop.f32.mrb[0].mxu0
      %v913 = vadd.f32 %v613, %v912
      %v914 = vpop.f32.mrb[0].mxu0
      %v915 = vpop.f32.mrb[0].mxu0
      %v916 = vadd.f32 %v616, %v915
      %v917 = vpop.f32.mrb[0].mxu0
      %918 = vmatprep.mubr.bf16.mxu0 0
      %919 = vmatmul.mubr.bf16.gmra.mrb[0].mxu0 %v802
      %v920 = vpop.f32.mrb[0].mxu0
      %v921 = vadd.f32 %v621, %v920
      %v922 = vpop.f32.mrb[0].mxu0
      %v923 = vpop.f32.mrb[0].mxu0
      %v924 = vadd.f32 %v624, %v923
      %v925 = vpop.f32.mrb[0].mxu0
      %926 = vmatprep.mubr.bf16.mxu0 0
      %927 = vmatmul.mubr.bf16.gmra.mrb[0].mxu0 %v805
      %v928 = vpop.f32.mrb[0].mxu0
      %v929 = vadd.f32 %v629, %v928
      %v930 = vpop.f32.mrb[0].mxu0
      %v931 = vpop.f32.mrb[0].mxu0
      %v932 = vadd.f32 %v632, %v931
      %v933 = vpop.f32.mrb[0].mxu0
      %934 = vmatprep.mubr.bf16.mxu0 0
      %935 = vmatmul.mubr.bf16.gmra.mrb[0].mxu0 %v808
      %v936 = vpop.f32.mrb[0].mxu0
      %v937 = vadd.f32 %v637, %v936
      %v938 = vpop.f32.mrb[0].mxu0
      %v939 = vpop.f32.mrb[0].mxu0
      %v940 = vadd.f32 %v640, %v939
      %v941 = vpop.f32.mrb[0].mxu0
      %942 = vmatprep.mubr.bf16.mxu0 0
      %943 = vmatmul.mubr.bf16.gmra.mrb[0].mxu0 %v811
      %v944 = vpop.f32.mrb[0].mxu0
      %v945 = vadd.f32 %v645, %v944
      %v946 = vpop.f32.mrb[0].mxu0
      %v947 = vpop.f32.mrb[0].mxu0
      %v948 = vadd.f32 %v648, %v947
      %v949 = vpop.f32.mrb[0].mxu0
      %950 = vmatprep.mubr.bf16.mxu0 0
      %951 = vmatmul.mubr.bf16.gmra.mrb[0].mxu0 %v814
      %v952 = vpop.f32.mrb[0].mxu0
      %v953 = vadd.f32 %v653, %v952
      %v954 = vpop.f32.mrb[0].mxu0
      %v955 = vpop.f32.mrb[0].mxu0
      %v956 = vadd.f32 %v656, %v955
      %v957 = vpop.f32.mrb[0].mxu0
      %958 = vmatprep.mubr.bf16.mxu0 0
      %959 = vmatmul.mubr.bf16.gmra.mrb[0].mxu0 %v817
      %v960 = vpop.f32.mrb[0].mxu0
      %v961 = vadd.f32 %v661, %v960
      %v962 = vpop.f32.mrb[0].mxu0
      %v963 = vpop.f32.mrb[0].mxu0
      %v964 = vadd.f32 %v664, %v963
      %v965 = vpop.f32.mrb[0].mxu0
      %966 = vmatprep.mubr.bf16.mxu0 0
      %967 = vmatmul.mubr.bf16.gmra.mrb[0].mxu0 %v820
      %v968 = vpop.f32.mrb[0].mxu0
      %v969 = vadd.f32 %v669, %v968
      %v970 = vpop.f32.mrb[0].mxu0
      %v971 = vpop.f32.mrb[0].mxu0
      %v972 = vadd.f32 %v672, %v971
      %v973 = vpop.f32.mrb[0].mxu0
      %974 = vmatprep.mubr.bf16.mxu0 0
      %975 = vmatmul.mubr.bf16.gmra.mrb[0].mxu0 %v823
      %v976 = vpop.f32.mrb[0].mxu0
      %v977 = vadd.f32 %v677, %v976
      %v978 = vpop.f32.mrb[0].mxu0
      %v979 = vpop.f32.mrb[0].mxu0
      %v980 = vadd.f32 %v680, %v979
      %v981 = vpop.f32.mrb[0].mxu0
      %982 = vmatprep.mubr.bf16.mxu0 0
      %983 = vmatmul.mubr.bf16.gmra.mrb[0].mxu0 %v826
      %v984 = vpop.f32.mrb[0].mxu0
      %v985 = vadd.f32 %v685, %v984
      %v986 = vpop.f32.mrb[0].mxu0
      %v987 = vpop.f32.mrb[0].mxu0
      %v988 = vadd.f32 %v688, %v987
      %v989 = vpop.f32.mrb[0].mxu0
      %990 = vmatprep.mubr.bf16.mxu0 0
      %991 = vmatmul.mubr.bf16.gmra.mrb[0].mxu0 %v829
      %v992 = vpop.f32.mrb[0].mxu0
      %v993 = vadd.f32 %v693, %v992
      %v994 = vpop.f32.mrb[0].mxu0
      %v995 = vpop.f32.mrb[0].mxu0
      %v996 = vadd.f32 %v696, %v995
      %v997 = vpop.f32.mrb[0].mxu0
      %998 = vmatprep.mubr.bf16.mxu0 0
      %999 = vmatmul.mubr.bf16.gmra.mrb[0].mxu0 %v832
      %v1000 = vpop.f32.mrb[0].mxu0
      %v1001 = vadd.f32 %v701, %v1000
      %v1002 = vpop.f32.mrb[0].mxu0
      %v1003 = vpop.f32.mrb[0].mxu0
      %v1004 = vadd.f32 %v704, %v1003
      %v1005 = vpop.f32.mrb[0].mxu0
      %1006 = vmatprep.mubr.bf16.mxu0 0
      %1007 = vmatmul.mubr.bf16.gmra.mrb[0].mxu0 %v835
      %v1008 = vpop.f32.mrb[0].mxu0
      %v1009 = vadd.f32 %v709, %v1008
      %v1010 = vpop.f32.mrb[0].mxu0
      %v1011 = vpop.f32.mrb[0].mxu0
      %v1012 = vadd.f32 %v712, %v1011
      %v1013 = vpop.f32.mrb[0].mxu0
      %1014 = vmatprep.mubr.bf16.mxu0 0
      %1015 = vmatmul.mubr.bf16.gmra.mrb[0].mxu0 %v838
      %v1016 = vpop.f32.mrb[0].mxu0
      %v1017 = vadd.f32 %v717, %v1016
      %v1018 = vpop.f32.mrb[0].mxu0
      %v1019 = vpop.f32.mrb[0].mxu0
      %v1020 = vadd.f32 %v720, %v1019
      %v1021 = vpop.f32.mrb[0].mxu0
      %1022 = vmatprep.mubr.bf16.mxu0 0
      %1023 = vmatmul.mubr.bf16.gmra.mrb[0].mxu0 %v841
      %v1024 = vpop.f32.mrb[0].mxu0
      %v1025 = vadd.f32 %v725, %v1024
      %v1026 = vpop.f32.mrb[0].mxu0
      %v1027 = vpop.f32.mrb[0].mxu0
      %v1028 = vadd.f32 %v728, %v1027
      %v1029 = vpop.f32.mrb[0].mxu0
      %1030 = vmatprep.mubr.bf16.mxu0 0
      %1031 = vmatmul.mubr.bf16.gmra.mrb[0].mxu0 %v844
      %v1032 = vpop.f32.mrb[0].mxu0
      %v1033 = vadd.f32 %v733, %v1032
      %v1034 = vpop.f32.mrb[0].mxu0
      %v1035 = vpop.f32.mrb[0].mxu0
      %v1036 = vadd.f32 %v736, %v1035
      %v1037 = vpop.f32.mrb[0].mxu0
      %1038 = vmatprep.mubr.bf16.mxu0 0
      %1039 = vmatmul.mubr.bf16.gmra.mrb[0].mxu0 %v847
      %v1040 = vpop.f32.mrb[0].mxu0
      %v1041 = vadd.f32 %v741, %v1040
      %v1042 = vpop.f32.mrb[0].mxu0
      %v1043 = vpop.f32.mrb[0].mxu0
      %v1044 = vadd.f32 %v744, %v1043
      %v1045 = vpop.f32.mrb[0].mxu0
      %1046 = vmatprep.mubr.bf16.mxu0 0
      %1047 = vmatmul.mubr.bf16.gmra.mrb[0].mxu0 %v850
      %v1048 = vpop.f32.mrb[0].mxu0
      %v1049 = vadd.f32 %v749, %v1048
      %v1050 = vpop.f32.mrb[0].mxu0
      %v1051 = vpop.f32.mrb[0].mxu0
      %v1052 = vadd.f32 %v752, %v1051
      %v1053 = vpop.f32.mrb[0].mxu0
      %1054 = vmatprep.mubr.bf16.mxu0 0
      %1055 = vmatmul.mubr.bf16.gmra.mrb[0].mxu0 %v853
      %v1056 = vpop.f32.mrb[0].mxu0
      %v1057 = vadd.f32 %v757, %v1056
      %v1058 = vpop.f32.mrb[0].mxu0
      %v1059 = vpop.f32.mrb[0].mxu0
      %v1060 = vadd.f32 %v760, %v1059
      %v1061 = vpop.f32.mrb[0].mxu0
      %1062 = vmatprep.mubr.bf16.mxu0 0
      %1063 = vmatmul.mubr.bf16.gmra.mrb[0].mxu0 %v856
      %v1064 = vpop.f32.mrb[0].mxu0
      %v1065 = vadd.f32 %v765, %v1064
      %v1066 = vpop.f32.mrb[0].mxu0
      %v1067 = vpop.f32.mrb[0].mxu0
      %v1068 = vadd.f32 %v768, %v1067
      %v1069 = vpop.f32.mrb[0].mxu0
      %1070 = vmatprep.mubr.bf16.mxu0 0
      %1071 = vmatmul.mubr.bf16.gmra.mrb[0].mxu0 %v859
      %v1072 = vpop.f32.mrb[0].mxu0
      %v1073 = vadd.f32 %v773, %v1072
      %v1074 = vpop.f32.mrb[0].mxu0
      %v1075 = vpop.f32.mrb[0].mxu0
      %v1076 = vadd.f32 %v776, %v1075
      %v1077 = vpop.f32.mrb[0].mxu0
      %1078 = vmatprep.mubr.bf16.mxu0 0
      %1079 = vmatmul.mubr.bf16.gmra.mrb[0].mxu0 %v862
      %v1080 = vpop.f32.mrb[0].mxu0
      %v1081 = vadd.f32 %v781, %v1080
      %v1082 = vpop.f32.mrb[0].mxu0
      %v1083 = vpop.f32.mrb[0].mxu0
      %v1084 = vadd.f32 %v784, %v1083
      %v1085 = vpop.f32.mrb[0].mxu0
      %1086 = vmatprep.mubr.bf16.mxu0 0
      %1087 = vmatmul.mubr.bf16.gmra.mrb[0].mxu0 %v865
      %v1088 = vpop.f32.mrb[0].mxu0
      %v1089 = vadd.f32 %v789, %v1088
      %v1090 = vpop.f32.mrb[0].mxu0
      %v1091 = vpop.f32.mrb[0].mxu0
      %v1092 = vadd.f32 %v792, %v1091
      %v1093 = vpop.f32.mrb[0].mxu0
      %1094 = vdwg.mxu0
      %v1095 = vld [vmem:[#allocation2 + $0x9] sm:$0xff]
      %v1096 = vld [vmem:[#allocation2 + $0x11] sm:$0xff]
      %v1097 = vld [vmem:[#allocation2 + $0x19] sm:$0xff]
      %v1098 = vld [vmem:[#allocation2 + $0x21] sm:$0xff]
      %v1099 = vld [vmem:[#allocation2 + $0x29] sm:$0xff]
      %v1100 = vld [vmem:[#allocation2 + $0x31] sm:$0xff]
      %v1101 = vld [vmem:[#allocation2 + $0x39] sm:$0xff]
      %v1102 = vld [vmem:[#allocation2 + $0x41] sm:$0xff]
      %v1103 = vld [vmem:[#allocation2 + $0x49] sm:$0xff]
      %v1104 = vld [vmem:[#allocation2 + $0x51] sm:$0xff]
      %v1105 = vld [vmem:[#allocation2 + $0x59] sm:$0xff]
      %v1106 = vld [vmem:[#allocation2 + $0x61] sm:$0xff]
      %v1107 = vld [vmem:[#allocation2 + $0x69] sm:$0xff]
      %v1108 = vld [vmem:[#allocation2 + $0x71] sm:$0xff]
      %v1109 = vld [vmem:[#allocation2 + $0x79] sm:$0xff]
      %v1110 = vld [vmem:[#allocation2 + $0x81] sm:$0xff]
      %v1111 = vld [vmem:[#allocation2 + $0x89] sm:$0xff]
      %v1112 = vld [vmem:[#allocation2 + $0x91] sm:$0xff]
      %v1113 = vld [vmem:[#allocation2 + $0x99] sm:$0xff]
      %v1114 = vld [vmem:[#allocation2 + $0xa1] sm:$0xff]
      %v1115 = vld [vmem:[#allocation2 + $0xa9] sm:$0xff]
      %v1116 = vld [vmem:[#allocation2 + $0xb1] sm:$0xff]
      %v1117 = vld [vmem:[#allocation2 + $0xb9] sm:$0xff]
      %v1118 = vld [vmem:[#allocation2 + $0xc1] sm:$0xff]
      %v1119 = vld [vmem:[#allocation2 + $0xc9] sm:$0xff]
      %v1120 = vld [vmem:[#allocation2 + $0xd1] sm:$0xff]
      %v1121 = vld [vmem:[#allocation2 + $0xd9] sm:$0xff]
      %v1122 = vld [vmem:[#allocation2 + $0xe1] sm:$0xff]
      %v1123 = vld [vmem:[#allocation2 + $0xe9] sm:$0xff]
      %v1124 = vld [vmem:[#allocation2 + $0xf1] sm:$0xff]
      %v1125 = vld [vmem:[#allocation2 + $0xf9] sm:$0xff]
      %v1126 = vld [vmem:[#allocation2 + $0x101] sm:$0xff]
      %v1127 = vld [vmem:[#allocation2 + $0x109] sm:$0xff]
      %v1128 = vld [vmem:[#allocation2 + $0x111] sm:$0xff]
      %v1129 = vld [vmem:[#allocation2 + $0x119] sm:$0xff]
      %v1130 = vld [vmem:[#allocation2 + $0x121] sm:$0xff]
      %v1131 = vld [vmem:[#allocation2 + $0x129] sm:$0xff]
      %v1132 = vld [vmem:[#allocation2 + $0x131] sm:$0xff]
      %v1133 = vld [vmem:[#allocation2 + $0x139] sm:$0xff]
      %v1134 = vld [vmem:[#allocation2 + $0x141] sm:$0xff]
      %v1135 = vld [vmem:[#allocation2 + $0x149] sm:$0xff]
      %v1136 = vld [vmem:[#allocation2 + $0x151] sm:$0xff]
      %v1137 = vld [vmem:[#allocation2 + $0x159] sm:$0xff]
      %v1138 = vld [vmem:[#allocation2 + $0x161] sm:$0xff]
      %v1139 = vld [vmem:[#allocation2 + $0x169] sm:$0xff]
      %v1140 = vld [vmem:[#allocation2 + $0x171] sm:$0xff]
      %v1141 = vld [vmem:[#allocation2 + $0x179] sm:$0xff]
      %v1142 = vld [vmem:[#allocation2 + $0x181] sm:$0xff]
      %v1143 = vpack.c.bf16 %v1096, %v1095
      %v1144 = vpack.c.bf16 %v1098, %v1097
      %v1145 = vpack.c.bf16 %v1100, %v1099
      %v1146 = vpack.c.bf16 %v1102, %v1101
      %v1147 = vpack.c.bf16 %v1104, %v1103
      %v1148 = vpack.c.bf16 %v1106, %v1105
      %v1149 = vpack.c.bf16 %v1108, %v1107
      %v1150 = vpack.c.bf16 %v1110, %v1109
      %v1151 = vpack.c.bf16 %v1112, %v1111
      %v1152 = vpack.c.bf16 %v1114, %v1113
      %v1153 = vpack.c.bf16 %v1116, %v1115
      %v1154 = vpack.c.bf16 %v1118, %v1117
      %v1155 = vpack.c.bf16 %v1120, %v1119
      %v1156 = vpack.c.bf16 %v1122, %v1121
      %v1157 = vpack.c.bf16 %v1124, %v1123
      %v1158 = vpack.c.bf16 %v1126, %v1125
      %v1159 = vpack.c.bf16 %v1128, %v1127
      %v1160 = vpack.c.bf16 %v1130, %v1129
      %v1161 = vpack.c.bf16 %v1132, %v1131
      %v1162 = vpack.c.bf16 %v1134, %v1133
      %v1163 = vpack.c.bf16 %v1136, %v1135
      %v1164 = vpack.c.bf16 %v1138, %v1137
      %v1165 = vpack.c.bf16 %v1140, %v1139
      %v1166 = vpack.c.bf16 %v1142, %v1141
      %s1167 = scalar_lea.vmem %s1, 8
      %v1168 = vld [vmem:[%s1167] sm:$0xf]
      %v1170 = vsel %vm210, %v1143, 0
      %v1173 = vsel %vm210, %v1144, 0
      %v1176 = vsel %vm210, %v1145, 0
      %v1179 = vsel %vm210, %v1146, 0
      %v1182 = vsel %vm210, %v1147, 0
      %v1185 = vsel %vm210, %v1148, 0
      %v1188 = vsel %vm210, %v1149, 0
      %v1191 = vsel %vm210, %v1150, 0
      %v1194 = vsel %vm210, %v1151, 0
      %v1197 = vsel %vm210, %v1152, 0
      %v1200 = vsel %vm210, %v1153, 0
      %v1203 = vsel %vm210, %v1154, 0
      %v1206 = vsel %vm210, %v1155, 0
      %v1209 = vsel %vm210, %v1156, 0
      %v1212 = vsel %vm210, %v1157, 0
      %v1215 = vsel %vm210, %v1158, 0
      %v1218 = vsel %vm210, %v1159, 0
      %v1221 = vsel %vm210, %v1160, 0
      %v1224 = vsel %vm210, %v1161, 0
      %v1227 = vsel %vm210, %v1162, 0
      %v1230 = vsel %vm210, %v1163, 0
      %v1233 = vsel %vm210, %v1164, 0
      %v1236 = vsel %vm210, %v1165, 0
      %v1239 = vsel %vm210, %v1166, 0
      %v1242 = vsel %vm566, %v1168, 0
      %1244 = vmatprep.subr.bf16.mxu0 0
      %1245 = vmatpush1.bf16.msra.mxu0 %v1242
      %1246 = vmatprep.subr.bf16.mxu0 0
      %1247 = vmatpush1.bf16.msra.mxu0 0
      %1248 = vmatprep.subr.bf16.mxu0 0
      %1249 = vmatpush1.bf16.msra.mxu0 0
      %1250 = vmatprep.subr.bf16.mxu0 0
      %1251 = vmatpush1.bf16.msra.mxu0 0
      %1252 = vmatprep.subr.bf16.mxu0 0
      %1253 = vmatpush1.bf16.msra.mxu0 0
      %1254 = vmatprep.subr.bf16.mxu0 0
      %1255 = vmatpush1.bf16.msra.mxu0 0
      %1256 = vmatprep.subr.bf16.mxu0 0
      %1257 = vmatpush1.bf16.msra.mxu0 0
      %1258 = vmatprep.subr.bf16.mxu0 0
      %1259 = vmatpush1.bf16.msra.mxu0 0
      %1260 = vmatprep.subr.bf16.mxu0 0
      %1261 = vmatpush1.bf16.msra.mxu0 0
      %1262 = vmatprep.subr.bf16.mxu0 0
      %1263 = vmatpush1.bf16.msra.mxu0 0
      %1264 = vmatprep.subr.bf16.mxu0 0
      %1265 = vmatpush1.bf16.msra.mxu0 0
      %1266 = vmatprep.subr.bf16.mxu0 0
      %1267 = vmatpush1.bf16.msra.mxu0 0
      %1268 = vmatprep.subr.bf16.mxu0 0
      %1269 = vmatpush1.bf16.msra.mxu0 0
      %1270 = vmatprep.subr.bf16.mxu0 0
      %1271 = vmatpush1.bf16.msra.mxu0 0
      %1272 = vmatprep.subr.bf16.mxu0 0
      %1273 = vmatpush1.bf16.msra.mxu0 0
      %1274 = vmatprep.subr.bf16.mxu0 0
      %1275 = vmatpush1.bf16.msra.mxu0 0
      %1276 = vmatprep.mubr.bf16.mxu0 0
      %1277 = vmatmul.mubr.bf16.gmra.mrb[0].mxu0 %v1170
      %v1278 = vpop.f32.mrb[0].mxu0
      %v1279 = vadd.f32 0.0, %v1278
      %v1280 = vpop.f32.mrb[0].mxu0
      %v1281 = vpop.f32.mrb[0].mxu0
      %v1282 = vadd.f32 0.0, %v1281
      %v1283 = vpop.f32.mrb[0].mxu0
      %1284 = vmatprep.mubr.bf16.mxu0 0
      %1285 = vmatmul.mubr.bf16.gmra.mrb[0].mxu0 %v1173
      %v1286 = vpop.f32.mrb[0].mxu0
      %v1287 = vadd.f32 0.0, %v1286
      %v1288 = vpop.f32.mrb[0].mxu0
      %v1289 = vpop.f32.mrb[0].mxu0
      %v1290 = vadd.f32 0.0, %v1289
      %v1291 = vpop.f32.mrb[0].mxu0
      %1292 = vmatprep.mubr.bf16.mxu0 0
      %1293 = vmatmul.mubr.bf16.gmra.mrb[0].mxu0 %v1176
      %v1294 = vpop.f32.mrb[0].mxu0
      %v1295 = vadd.f32 0.0, %v1294
      %v1296 = vpop.f32.mrb[0].mxu0
      %v1297 = vpop.f32.mrb[0].mxu0
      %v1298 = vadd.f32 0.0, %v1297
      %v1299 = vpop.f32.mrb[0].mxu0
      %1300 = vmatprep.mubr.bf16.mxu0 0
      %1301 = vmatmul.mubr.bf16.gmra.mrb[0].mxu0 %v1179
      %v1302 = vpop.f32.mrb[0].mxu0
      %v1303 = vadd.f32 0.0, %v1302
      %v1304 = vpop.f32.mrb[0].mxu0
      %v1305 = vpop.f32.mrb[0].mxu0
      %v1306 = vadd.f32 0.0, %v1305
      %v1307 = vpop.f32.mrb[0].mxu0
      %1308 = vmatprep.mubr.bf16.mxu0 0
      %1309 = vmatmul.mubr.bf16.gmra.mrb[0].mxu0 %v1182
      %v1310 = vpop.f32.mrb[0].mxu0
      %v1311 = vadd.f32 0.0, %v1310
      %v1312 = vpop.f32.mrb[0].mxu0
      %v1313 = vpop.f32.mrb[0].mxu0
      %v1314 = vadd.f32 0.0, %v1313
      %v1315 = vpop.f32.mrb[0].mxu0
      %1316 = vmatprep.mubr.bf16.mxu0 0
      %1317 = vmatmul.mubr.bf16.gmra.mrb[0].mxu0 %v1185
      %v1318 = vpop.f32.mrb[0].mxu0
      %v1319 = vadd.f32 0.0, %v1318
      %v1320 = vpop.f32.mrb[0].mxu0
      %v1321 = vpop.f32.mrb[0].mxu0
      %v1322 = vadd.f32 0.0, %v1321
      %v1323 = vpop.f32.mrb[0].mxu0
      %1324 = vmatprep.mubr.bf16.mxu0 0
      %1325 = vmatmul.mubr.bf16.gmra.mrb[0].mxu0 %v1188
      %v1326 = vpop.f32.mrb[0].mxu0
      %v1327 = vadd.f32 0.0, %v1326
      %v1328 = vpop.f32.mrb[0].mxu0
      %v1329 = vpop.f32.mrb[0].mxu0
      %v1330 = vadd.f32 0.0, %v1329
      %v1331 = vpop.f32.mrb[0].mxu0
      %1332 = vmatprep.mubr.bf16.mxu0 0
      %1333 = vmatmul.mubr.bf16.gmra.mrb[0].mxu0 %v1191
      %v1334 = vpop.f32.mrb[0].mxu0
      %v1335 = vadd.f32 0.0, %v1334
      %v1336 = vpop.f32.mrb[0].mxu0
      %v1337 = vpop.f32.mrb[0].mxu0
      %v1338 = vadd.f32 0.0, %v1337
      %v1339 = vpop.f32.mrb[0].mxu0
      %1340 = vmatprep.mubr.bf16.mxu0 0
      %1341 = vmatmul.mubr.bf16.gmra.mrb[0].mxu0 %v1194
      %v1342 = vpop.f32.mrb[0].mxu0
      %v1343 = vadd.f32 0.0, %v1342
      %v1344 = vpop.f32.mrb[0].mxu0
      %v1345 = vpop.f32.mrb[0].mxu0
      %v1346 = vadd.f32 0.0, %v1345
      %v1347 = vpop.f32.mrb[0].mxu0
      %1348 = vmatprep.mubr.bf16.mxu0 0
      %1349 = vmatmul.mubr.bf16.gmra.mrb[0].mxu0 %v1197
      %v1350 = vpop.f32.mrb[0].mxu0
      %v1351 = vadd.f32 0.0, %v1350
      %v1352 = vpop.f32.mrb[0].mxu0
      %v1353 = vpop.f32.mrb[0].mxu0
      %v1354 = vadd.f32 0.0, %v1353
      %v1355 = vpop.f32.mrb[0].mxu0
      %1356 = vmatprep.mubr.bf16.mxu0 0
      %1357 = vmatmul.mubr.bf16.gmra.mrb[0].mxu0 %v1200
      %v1358 = vpop.f32.mrb[0].mxu0
      %v1359 = vadd.f32 0.0, %v1358
      %v1360 = vpop.f32.mrb[0].mxu0
      %v1361 = vpop.f32.mrb[0].mxu0
      %v1362 = vadd.f32 0.0, %v1361
      %v1363 = vpop.f32.mrb[0].mxu0
      %1364 = vmatprep.mubr.bf16.mxu0 0
      %1365 = vmatmul.mubr.bf16.gmra.mrb[0].mxu0 %v1203
      %v1366 = vpop.f32.mrb[0].mxu0
      %v1367 = vadd.f32 0.0, %v1366
      %v1368 = vpop.f32.mrb[0].mxu0
      %v1369 = vpop.f32.mrb[0].mxu0
      %v1370 = vadd.f32 0.0, %v1369
      %v1371 = vpop.f32.mrb[0].mxu0
      %1372 = vmatprep.mubr.bf16.mxu0 0
      %1373 = vmatmul.mubr.bf16.gmra.mrb[0].mxu0 %v1206
      %v1374 = vpop.f32.mrb[0].mxu0
      %v1375 = vadd.f32 0.0, %v1374
      %v1376 = vpop.f32.mrb[0].mxu0
      %v1377 = vpop.f32.mrb[0].mxu0
      %v1378 = vadd.f32 0.0, %v1377
      %v1379 = vpop.f32.mrb[0].mxu0
      %1380 = vmatprep.mubr.bf16.mxu0 0
      %1381 = vmatmul.mubr.bf16.gmra.mrb[0].mxu0 %v1209
      %v1382 = vpop.f32.mrb[0].mxu0
      %v1383 = vadd.f32 0.0, %v1382
      %v1384 = vpop.f32.mrb[0].mxu0
      %v1385 = vpop.f32.mrb[0].mxu0
      %v1386 = vadd.f32 0.0, %v1385
      %v1387 = vpop.f32.mrb[0].mxu0
      %1388 = vmatprep.mubr.bf16.mxu0 0
      %1389 = vmatmul.mubr.bf16.gmra.mrb[0].mxu0 %v1212
      %v1390 = vpop.f32.mrb[0].mxu0
      %v1391 = vadd.f32 0.0, %v1390
      %v1392 = vpop.f32.mrb[0].mxu0
      %v1393 = vpop.f32.mrb[0].mxu0
      %v1394 = vadd.f32 0.0, %v1393
      %v1395 = vpop.f32.mrb[0].mxu0
      %1396 = vmatprep.mubr.bf16.mxu0 0
      %1397 = vmatmul.mubr.bf16.gmra.mrb[0].mxu0 %v1215
      %v1398 = vpop.f32.mrb[0].mxu0
      %v1399 = vadd.f32 0.0, %v1398
      %v1400 = vpop.f32.mrb[0].mxu0
      %v1401 = vpop.f32.mrb[0].mxu0
      %v1402 = vadd.f32 0.0, %v1401
      %v1403 = vpop.f32.mrb[0].mxu0
      %1404 = vmatprep.mubr.bf16.mxu0 0
      %1405 = vmatmul.mubr.bf16.gmra.mrb[0].mxu0 %v1218
      %v1406 = vpop.f32.mrb[0].mxu0
      %v1407 = vadd.f32 0.0, %v1406
      %v1408 = vpop.f32.mrb[0].mxu0
      %v1409 = vpop.f32.mrb[0].mxu0
      %v1410 = vadd.f32 0.0, %v1409
      %v1411 = vpop.f32.mrb[0].mxu0
      %1412 = vmatprep.mubr.bf16.mxu0 0
      %1413 = vmatmul.mubr.bf16.gmra.mrb[0].mxu0 %v1221
      %v1414 = vpop.f32.mrb[0].mxu0
      %v1415 = vadd.f32 0.0, %v1414
      %v1416 = vpop.f32.mrb[0].mxu0
      %v1417 = vpop.f32.mrb[0].mxu0
      %v1418 = vadd.f32 0.0, %v1417
      %v1419 = vpop.f32.mrb[0].mxu0
      %1420 = vmatprep.mubr.bf16.mxu0 0
      %1421 = vmatmul.mubr.bf16.gmra.mrb[0].mxu0 %v1224
      %v1422 = vpop.f32.mrb[0].mxu0
      %v1423 = vadd.f32 0.0, %v1422
      %v1424 = vpop.f32.mrb[0].mxu0
      %v1425 = vpop.f32.mrb[0].mxu0
      %v1426 = vadd.f32 0.0, %v1425
      %v1427 = vpop.f32.mrb[0].mxu0
      %1428 = vmatprep.mubr.bf16.mxu0 0
      %1429 = vmatmul.mubr.bf16.gmra.mrb[0].mxu0 %v1227
      %v1430 = vpop.f32.mrb[0].mxu0
      %v1431 = vadd.f32 0.0, %v1430
      %v1432 = vpop.f32.mrb[0].mxu0
      %v1433 = vpop.f32.mrb[0].mxu0
      %v1434 = vadd.f32 0.0, %v1433
      %v1435 = vpop.f32.mrb[0].mxu0
      %1436 = vmatprep.mubr.bf16.mxu0 0
      %1437 = vmatmul.mubr.bf16.gmra.mrb[0].mxu0 %v1230
      %v1438 = vpop.f32.mrb[0].mxu0
      %v1439 = vadd.f32 0.0, %v1438
      %v1440 = vpop.f32.mrb[0].mxu0
      %v1441 = vpop.f32.mrb[0].mxu0
      %v1442 = vadd.f32 0.0, %v1441
      %v1443 = vpop.f32.mrb[0].mxu0
      %1444 = vmatprep.mubr.bf16.mxu0 0
      %1445 = vmatmul.mubr.bf16.gmra.mrb[0].mxu0 %v1233
      %v1446 = vpop.f32.mrb[0].mxu0
      %v1447 = vadd.f32 0.0, %v1446
      %v1448 = vpop.f32.mrb[0].mxu0
      %v1449 = vpop.f32.mrb[0].mxu0
      %v1450 = vadd.f32 0.0, %v1449
      %v1451 = vpop.f32.mrb[0].mxu0
      %1452 = vmatprep.mubr.bf16.mxu0 0
      %1453 = vmatmul.mubr.bf16.gmra.mrb[0].mxu0 %v1236
      %v1454 = vpop.f32.mrb[0].mxu0
      %v1455 = vadd.f32 0.0, %v1454
      %v1456 = vpop.f32.mrb[0].mxu0
      %v1457 = vpop.f32.mrb[0].mxu0
      %v1458 = vadd.f32 0.0, %v1457
      %v1459 = vpop.f32.mrb[0].mxu0
      %1460 = vmatprep.mubr.bf16.mxu0 0
      %1461 = vmatmul.mubr.bf16.gmra.mrb[0].mxu0 %v1239
      %v1462 = vpop.f32.mrb[0].mxu0
      %v1463 = vadd.f32 0.0, %v1462
      %v1464 = vpop.f32.mrb[0].mxu0
      %v1465 = vpop.f32.mrb[0].mxu0
      %v1466 = vadd.f32 0.0, %v1465
      %v1467 = vpop.f32.mrb[0].mxu0
      %1468 = vdwg.mxu0
      %v1469 = vadd.f32 %v905, %v1279
      %v1470 = vadd.f32 %v908, %v1282
      %v1471 = vadd.f32 %v913, %v1287
      %v1472 = vadd.f32 %v916, %v1290
      %v1473 = vadd.f32 %v921, %v1295
      %v1474 = vadd.f32 %v924, %v1298
      %v1475 = vadd.f32 %v929, %v1303
      %v1476 = vadd.f32 %v932, %v1306
      %v1477 = vadd.f32 %v937, %v1311
      %v1478 = vadd.f32 %v940, %v1314
      %v1479 = vadd.f32 %v945, %v1319
      %v1480 = vadd.f32 %v948, %v1322
      %v1481 = vadd.f32 %v953, %v1327
      %v1482 = vadd.f32 %v956, %v1330
      %v1483 = vadd.f32 %v961, %v1335
      %v1484 = vadd.f32 %v964, %v1338
      %v1485 = vadd.f32 %v969, %v1343
      %v1486 = vadd.f32 %v972, %v1346
      %v1487 = vadd.f32 %v977, %v1351
      %v1488 = vadd.f32 %v980, %v1354
      %v1489 = vadd.f32 %v985, %v1359
      %v1490 = vadd.f32 %v988, %v1362
      %v1491 = vadd.f32 %v993, %v1367
      %v1492 = vadd.f32 %v996, %v1370
      %v1493 = vadd.f32 %v1001, %v1375
      %v1494 = vadd.f32 %v1004, %v1378
      %v1495 = vadd.f32 %v1009, %v1383
      %v1496 = vadd.f32 %v1012, %v1386
      %v1497 = vadd.f32 %v1017, %v1391
      %v1498 = vadd.f32 %v1020, %v1394
      %v1499 = vadd.f32 %v1025, %v1399
      %v1500 = vadd.f32 %v1028, %v1402
      %v1501 = vadd.f32 %v1033, %v1407
      %v1502 = vadd.f32 %v1036, %v1410
      %v1503 = vadd.f32 %v1041, %v1415
      %v1504 = vadd.f32 %v1044, %v1418
      %v1505 = vadd.f32 %v1049, %v1423
      %v1506 = vadd.f32 %v1052, %v1426
      %v1507 = vadd.f32 %v1057, %v1431
      %v1508 = vadd.f32 %v1060, %v1434
      %v1509 = vadd.f32 %v1065, %v1439
      %v1510 = vadd.f32 %v1068, %v1442
      %v1511 = vadd.f32 %v1073, %v1447
      %v1512 = vadd.f32 %v1076, %v1450
      %v1513 = vadd.f32 %v1081, %v1455
      %v1514 = vadd.f32 %v1084, %v1458
      %v1515 = vadd.f32 %v1089, %v1463
      %v1516 = vadd.f32 %v1092, %v1466
      %v1517 = vld [vmem:[#allocation2 + $0x1f] sm:$0xff]
      %v1518 = vld [vmem:[#allocation2 + $0x27] sm:$0xff]
      %v1519 = vld [vmem:[#allocation2 + $0x2f] sm:$0xff]
      %v1520 = vld [vmem:[#allocation2 + $0x37] sm:$0xff]
      %v1521 = vld [vmem:[#allocation2 + $0x3f] sm:$0xff]
      %v1522 = vld [vmem:[#allocation2 + $0x47] sm:$0xff]
      %v1523 = vld [vmem:[#allocation2 + $0x4f] sm:$0xff]
      %v1524 = vld [vmem:[#allocation2 + $0x57] sm:$0xff]
      %v1525 = vld [vmem:[#allocation2 + $0x5f] sm:$0xff]
      %v1526 = vld [vmem:[#allocation2 + $0x67] sm:$0xff]
      %v1527 = vld [vmem:[#allocation2 + $0x6f] sm:$0xff]
      %v1528 = vld [vmem:[#allocation2 + $0x77] sm:$0xff]
      %v1529 = vld [vmem:[#allocation2 + $0x7f] sm:$0xff]
      %v1530 = vld [vmem:[#allocation2 + $0x87] sm:$0xff]
      %v1531 = vld [vmem:[#allocation2 + $0x8f] sm:$0xff]
      %v1532 = vld [vmem:[#allocation2 + $0x97] sm:$0xff]
      %v1533 = vld [vmem:[#allocation2 + $0x9f] sm:$0xff]
      %v1534 = vld [vmem:[#allocation2 + $0xa7] sm:$0xff]
      %v1535 = vld [vmem:[#allocation2 + $0xaf] sm:$0xff]
      %v1536 = vld [vmem:[#allocation2 + $0xb7] sm:$0xff]
      %v1537 = vld [vmem:[#allocation2 + $0xbf] sm:$0xff]
      %v1538 = vld [vmem:[#allocation2 + $0xc7] sm:$0xff]
      %v1539 = vld [vmem:[#allocation2 + $0xcf] sm:$0xff]
      %v1540 = vld [vmem:[#allocation2 + $0xd7] sm:$0xff]
      %v1541 = vld [vmem:[#allocation2 + $0xdf] sm:$0xff]
      %v1542 = vld [vmem:[#allocation2 + $0xe7] sm:$0xff]
      %v1543 = vld [vmem:[#allocation2 + $0xef] sm:$0xff]
      %v1544 = vld [vmem:[#allocation2 + $0xf7] sm:$0xff]
      %v1545 = vld [vmem:[#allocation2 + $0xff] sm:$0xff]
      %v1546 = vld [vmem:[#allocation2 + $0x107] sm:$0xff]
      %v1547 = vld [vmem:[#allocation2 + $0x10f] sm:$0xff]
      %v1548 = vld [vmem:[#allocation2 + $0x117] sm:$0xff]
      %v1549 = vld [vmem:[#allocation2 + $0x11f] sm:$0xff]
      %v1550 = vld [vmem:[#allocation2 + $0x127] sm:$0xff]
      %v1551 = vld [vmem:[#allocation2 + $0x12f] sm:$0xff]
      %v1552 = vld [vmem:[#allocation2 + $0x137] sm:$0xff]
      %v1553 = vld [vmem:[#allocation2 + $0x13f] sm:$0xff]
      %v1554 = vld [vmem:[#allocation2 + $0x147] sm:$0xff]
      %v1555 = vld [vmem:[#allocation2 + $0x14f] sm:$0xff]
      %v1556 = vld [vmem:[#allocation2 + $0x157] sm:$0xff]
      %v1557 = vld [vmem:[#allocation2 + $0x15f] sm:$0xff]
      %v1558 = vld [vmem:[#allocation2 + $0x167] sm:$0xff]
      %v1559 = vld [vmem:[#allocation2 + $0x16f] sm:$0xff]
      %v1560 = vld [vmem:[#allocation2 + $0x177] sm:$0xff]
      %v1561 = vld [vmem:[#allocation2 + $0x17f] sm:$0xff]
      %v1562 = vld [vmem:[#allocation2 + $0x187] sm:$0xff]
      %v1563 = vld [vmem:[#allocation2 + $0x18f] sm:$0xff]
      %v1564 = vld [vmem:[#allocation2 + $0x197] sm:$0xff]
      %v1565 = vpack.c.bf16 %v1518, %v1517
      %v1566 = vpack.c.bf16 %v1520, %v1519
      %v1567 = vpack.c.bf16 %v1522, %v1521
      %v1568 = vpack.c.bf16 %v1524, %v1523
      %v1569 = vpack.c.bf16 %v1526, %v1525
      %v1570 = vpack.c.bf16 %v1528, %v1527
      %v1571 = vpack.c.bf16 %v1530, %v1529
      %v1572 = vpack.c.bf16 %v1532, %v1531
      %v1573 = vpack.c.bf16 %v1534, %v1533
      %v1574 = vpack.c.bf16 %v1536, %v1535
      %v1575 = vpack.c.bf16 %v1538, %v1537
      %v1576 = vpack.c.bf16 %v1540, %v1539
      %v1577 = vpack.c.bf16 %v1542, %v1541
      %v1578 = vpack.c.bf16 %v1544, %v1543
      %v1579 = vpack.c.bf16 %v1546, %v1545
      %v1580 = vpack.c.bf16 %v1548, %v1547
      %v1581 = vpack.c.bf16 %v1550, %v1549
      %v1582 = vpack.c.bf16 %v1552, %v1551
      %v1583 = vpack.c.bf16 %v1554, %v1553
      %v1584 = vpack.c.bf16 %v1556, %v1555
      %v1585 = vpack.c.bf16 %v1558, %v1557
      %v1586 = vpack.c.bf16 %v1560, %v1559
      %v1587 = vpack.c.bf16 %v1562, %v1561
      %v1588 = vpack.c.bf16 %v1564, %v1563
      %s1589 = scalar_lea.vmem %s1, 12
      %v1590 = vld [vmem:[%s1589] sm:$0xf]
      %v1592 = vsel %vm210, %v1565, 0
      %v1595 = vsel %vm210, %v1566, 0
      %v1598 = vsel %vm210, %v1567, 0
      %v1601 = vsel %vm210, %v1568, 0
      %v1604 = vsel %vm210, %v1569, 0
      %v1607 = vsel %vm210, %v1570, 0
      %v1610 = vsel %vm210, %v1571, 0
      %v1613 = vsel %vm210, %v1572, 0
      %v1616 = vsel %vm210, %v1573, 0
      %v1619 = vsel %vm210, %v1574, 0
      %v1622 = vsel %vm210, %v1575, 0
      %v1625 = vsel %vm210, %v1576, 0
      %v1628 = vsel %vm210, %v1577, 0
      %v1631 = vsel %vm210, %v1578, 0
      %v1634 = vsel %vm210, %v1579, 0
      %v1637 = vsel %vm210, %v1580, 0
      %v1640 = vsel %vm210, %v1581, 0
      %v1643 = vsel %vm210, %v1582, 0
      %v1646 = vsel %vm210, %v1583, 0
      %v1649 = vsel %vm210, %v1584, 0
      %v1652 = vsel %vm210, %v1585, 0
      %v1655 = vsel %vm210, %v1586, 0
      %v1658 = vsel %vm210, %v1587, 0
      %v1661 = vsel %vm210, %v1588, 0
      %v1664 = vsel %vm566, %v1590, 0
      %1666 = vmatprep.subr.bf16.mxu0 0
      %1667 = vmatpush1.bf16.msra.mxu0 %v1664
      %1668 = vmatprep.subr.bf16.mxu0 0
      %1669 = vmatpush1.bf16.msra.mxu0 0
      %1670 = vmatprep.subr.bf16.mxu0 0
      %1671 = vmatpush1.bf16.msra.mxu0 0
      %1672 = vmatprep.subr.bf16.mxu0 0
      %1673 = vmatpush1.bf16.msra.mxu0 0
      %1674 = vmatprep.subr.bf16.mxu0 0
      %1675 = vmatpush1.bf16.msra.mxu0 0
      %1676 = vmatprep.subr.bf16.mxu0 0
      %1677 = vmatpush1.bf16.msra.mxu0 0
      %1678 = vmatprep.subr.bf16.mxu0 0
      %1679 = vmatpush1.bf16.msra.mxu0 0
      %1680 = vmatprep.subr.bf16.mxu0 0
      %1681 = vmatpush1.bf16.msra.mxu0 0
      %1682 = vmatprep.subr.bf16.mxu0 0
      %1683 = vmatpush1.bf16.msra.mxu0 0
      %1684 = vmatprep.subr.bf16.mxu0 0
      %1685 = vmatpush1.bf16.msra.mxu0 0
      %1686 = vmatprep.subr.bf16.mxu0 0
      %1687 = vmatpush1.bf16.msra.mxu0 0
      %1688 = vmatprep.subr.bf16.mxu0 0
      %1689 = vmatpush1.bf16.msra.mxu0 0
      %1690 = vmatprep.subr.bf16.mxu0 0
      %1691 = vmatpush1.bf16.msra.mxu0 0
      %1692 = vmatprep.subr.bf16.mxu0 0
      %1693 = vmatpush1.bf16.msra.mxu0 0
      %1694 = vmatprep.subr.bf16.mxu0 0
      %1695 = vmatpush1.bf16.msra.mxu0 0
      %1696 = vmatprep.subr.bf16.mxu0 0
      %1697 = vmatpush1.bf16.msra.mxu0 0
      %1698 = vmatprep.mubr.bf16.mxu0 0
      %1699 = vmatmul.mubr.bf16.gmra.mrb[0].mxu0 %v1592
      %v1700 = vpop.f32.mrb[0].mxu0
      %v1701 = vadd.f32 0.0, %v1700
      %v1702 = vpop.f32.mrb[0].mxu0
      %v1703 = vpop.f32.mrb[0].mxu0
      %v1704 = vadd.f32 0.0, %v1703
      %v1705 = vpop.f32.mrb[0].mxu0
      %1706 = vmatprep.mubr.bf16.mxu0 0
      %1707 = vmatmul.mubr.bf16.gmra.mrb[0].mxu0 %v1595
      %v1708 = vpop.f32.mrb[0].mxu0
      %v1709 = vadd.f32 0.0, %v1708
      %v1710 = vpop.f32.mrb[0].mxu0
      %v1711 = vpop.f32.mrb[0].mxu0
      %v1712 = vadd.f32 0.0, %v1711
      %v1713 = vpop.f32.mrb[0].mxu0
      %1714 = vmatprep.mubr.bf16.mxu0 0
      %1715 = vmatmul.mubr.bf16.gmra.mrb[0].mxu0 %v1598
      %v1716 = vpop.f32.mrb[0].mxu0
      %v1717 = vadd.f32 0.0, %v1716
      %v1718 = vpop.f32.mrb[0].mxu0
      %v1719 = vpop.f32.mrb[0].mxu0
      %v1720 = vadd.f32 0.0, %v1719
      %v1721 = vpop.f32.mrb[0].mxu0
      %1722 = vmatprep.mubr.bf16.mxu0 0
      %1723 = vmatmul.mubr.bf16.gmra.mrb[0].mxu0 %v1601
      %v1724 = vpop.f32.mrb[0].mxu0
      %v1725 = vadd.f32 0.0, %v1724
      %v1726 = vpop.f32.mrb[0].mxu0
      %v1727 = vpop.f32.mrb[0].mxu0
      %v1728 = vadd.f32 0.0, %v1727
      %v1729 = vpop.f32.mrb[0].mxu0
      %1730 = vmatprep.mubr.bf16.mxu0 0
      %1731 = vmatmul.mubr.bf16.gmra.mrb[0].mxu0 %v1604
      %v1732 = vpop.f32.mrb[0].mxu0
      %v1733 = vadd.f32 0.0, %v1732
      %v1734 = vpop.f32.mrb[0].mxu0
      %v1735 = vpop.f32.mrb[0].mxu0
      %v1736 = vadd.f32 0.0, %v1735
      %v1737 = vpop.f32.mrb[0].mxu0
      %1738 = vmatprep.mubr.bf16.mxu0 0
      %1739 = vmatmul.mubr.bf16.gmra.mrb[0].mxu0 %v1607
      %v1740 = vpop.f32.mrb[0].mxu0
      %v1741 = vadd.f32 0.0, %v1740
      %v1742 = vpop.f32.mrb[0].mxu0
      %v1743 = vpop.f32.mrb[0].mxu0
      %v1744 = vadd.f32 0.0, %v1743
      %v1745 = vpop.f32.mrb[0].mxu0
      %1746 = vmatprep.mubr.bf16.mxu0 0
      %1747 = vmatmul.mubr.bf16.gmra.mrb[0].mxu0 %v1610
      %v1748 = vpop.f32.mrb[0].mxu0
      %v1749 = vadd.f32 0.0, %v1748
      %v1750 = vpop.f32.mrb[0].mxu0
      %v1751 = vpop.f32.mrb[0].mxu0
      %v1752 = vadd.f32 0.0, %v1751
      %v1753 = vpop.f32.mrb[0].mxu0
      %1754 = vmatprep.mubr.bf16.mxu0 0
      %1755 = vmatmul.mubr.bf16.gmra.mrb[0].mxu0 %v1613
      %v1756 = vpop.f32.mrb[0].mxu0
      %v1757 = vadd.f32 0.0, %v1756
      %v1758 = vpop.f32.mrb[0].mxu0
      %v1759 = vpop.f32.mrb[0].mxu0
      %v1760 = vadd.f32 0.0, %v1759
      %v1761 = vpop.f32.mrb[0].mxu0
      %1762 = vmatprep.mubr.bf16.mxu0 0
      %1763 = vmatmul.mubr.bf16.gmra.mrb[0].mxu0 %v1616
      %v1764 = vpop.f32.mrb[0].mxu0
      %v1765 = vadd.f32 0.0, %v1764
      %v1766 = vpop.f32.mrb[0].mxu0
      %v1767 = vpop.f32.mrb[0].mxu0
      %v1768 = vadd.f32 0.0, %v1767
      %v1769 = vpop.f32.mrb[0].mxu0
      %1770 = vmatprep.mubr.bf16.mxu0 0
      %1771 = vmatmul.mubr.bf16.gmra.mrb[0].mxu0 %v1619
      %v1772 = vpop.f32.mrb[0].mxu0
      %v1773 = vadd.f32 0.0, %v1772
      %v1774 = vpop.f32.mrb[0].mxu0
      %v1775 = vpop.f32.mrb[0].mxu0
      %v1776 = vadd.f32 0.0, %v1775
      %v1777 = vpop.f32.mrb[0].mxu0
      %1778 = vmatprep.mubr.bf16.mxu0 0
      %1779 = vmatmul.mubr.bf16.gmra.mrb[0].mxu0 %v1622
      %v1780 = vpop.f32.mrb[0].mxu0
      %v1781 = vadd.f32 0.0, %v1780
      %v1782 = vpop.f32.mrb[0].mxu0
      %v1783 = vpop.f32.mrb[0].mxu0
      %v1784 = vadd.f32 0.0, %v1783
      %v1785 = vpop.f32.mrb[0].mxu0
      %1786 = vmatprep.mubr.bf16.mxu0 0
      %1787 = vmatmul.mubr.bf16.gmra.mrb[0].mxu0 %v1625
      %v1788 = vpop.f32.mrb[0].mxu0
      %v1789 = vadd.f32 0.0, %v1788
      %v1790 = vpop.f32.mrb[0].mxu0
      %v1791 = vpop.f32.mrb[0].mxu0
      %v1792 = vadd.f32 0.0, %v1791
      %v1793 = vpop.f32.mrb[0].mxu0
      %1794 = vmatprep.mubr.bf16.mxu0 0
      %1795 = vmatmul.mubr.bf16.gmra.mrb[0].mxu0 %v1628
      %v1796 = vpop.f32.mrb[0].mxu0
      %v1797 = vadd.f32 0.0, %v1796
      %v1798 = vpop.f32.mrb[0].mxu0
      %v1799 = vpop.f32.mrb[0].mxu0
      %v1800 = vadd.f32 0.0, %v1799
      %v1801 = vpop.f32.mrb[0].mxu0
      %1802 = vmatprep.mubr.bf16.mxu0 0
      %1803 = vmatmul.mubr.bf16.gmra.mrb[0].mxu0 %v1631
      %v1804 = vpop.f32.mrb[0].mxu0
      %v1805 = vadd.f32 0.0, %v1804
      %v1806 = vpop.f32.mrb[0].mxu0
      %v1807 = vpop.f32.mrb[0].mxu0
      %v1808 = vadd.f32 0.0, %v1807
      %v1809 = vpop.f32.mrb[0].mxu0
      %1810 = vmatprep.mubr.bf16.mxu0 0
      %1811 = vmatmul.mubr.bf16.gmra.mrb[0].mxu0 %v1634
      %v1812 = vpop.f32.mrb[0].mxu0
      %v1813 = vadd.f32 0.0, %v1812
      %v1814 = vpop.f32.mrb[0].mxu0
      %v1815 = vpop.f32.mrb[0].mxu0
      %v1816 = vadd.f32 0.0, %v1815
      %v1817 = vpop.f32.mrb[0].mxu0
      %1818 = vmatprep.mubr.bf16.mxu0 0
      %1819 = vmatmul.mubr.bf16.gmra.mrb[0].mxu0 %v1637
      %v1820 = vpop.f32.mrb[0].mxu0
      %v1821 = vadd.f32 0.0, %v1820
      %v1822 = vpop.f32.mrb[0].mxu0
      %v1823 = vpop.f32.mrb[0].mxu0
      %v1824 = vadd.f32 0.0, %v1823
      %v1825 = vpop.f32.mrb[0].mxu0
      %1826 = vmatprep.mubr.bf16.mxu0 0
      %1827 = vmatmul.mubr.bf16.gmra.mrb[0].mxu0 %v1640
      %v1828 = vpop.f32.mrb[0].mxu0
      %v1829 = vadd.f32 0.0, %v1828
      %v1830 = vpop.f32.mrb[0].mxu0
      %v1831 = vpop.f32.mrb[0].mxu0
      %v1832 = vadd.f32 0.0, %v1831
      %v1833 = vpop.f32.mrb[0].mxu0
      %1834 = vmatprep.mubr.bf16.mxu0 0
      %1835 = vmatmul.mubr.bf16.gmra.mrb[0].mxu0 %v1643
      %v1836 = vpop.f32.mrb[0].mxu0
      %v1837 = vadd.f32 0.0, %v1836
      %v1838 = vpop.f32.mrb[0].mxu0
      %v1839 = vpop.f32.mrb[0].mxu0
      %v1840 = vadd.f32 0.0, %v1839
      %v1841 = vpop.f32.mrb[0].mxu0
      %1842 = vmatprep.mubr.bf16.mxu0 0
      %1843 = vmatmul.mubr.bf16.gmra.mrb[0].mxu0 %v1646
      %v1844 = vpop.f32.mrb[0].mxu0
      %v1845 = vadd.f32 0.0, %v1844
      %v1846 = vpop.f32.mrb[0].mxu0
      %v1847 = vpop.f32.mrb[0].mxu0
      %v1848 = vadd.f32 0.0, %v1847
      %v1849 = vpop.f32.mrb[0].mxu0
      %1850 = vmatprep.mubr.bf16.mxu0 0
      %1851 = vmatmul.mubr.bf16.gmra.mrb[0].mxu0 %v1649
      %v1852 = vpop.f32.mrb[0].mxu0
      %v1853 = vadd.f32 0.0, %v1852
      %v1854 = vpop.f32.mrb[0].mxu0
      %v1855 = vpop.f32.mrb[0].mxu0
      %v1856 = vadd.f32 0.0, %v1855
      %v1857 = vpop.f32.mrb[0].mxu0
      %1858 = vmatprep.mubr.bf16.mxu0 0
      %1859 = vmatmul.mubr.bf16.gmra.mrb[0].mxu0 %v1652
      %v1860 = vpop.f32.mrb[0].mxu0
      %v1861 = vadd.f32 0.0, %v1860
      %v1862 = vpop.f32.mrb[0].mxu0
      %v1863 = vpop.f32.mrb[0].mxu0
      %v1864 = vadd.f32 0.0, %v1863
      %v1865 = vpop.f32.mrb[0].mxu0
      %1866 = vmatprep.mubr.bf16.mxu0 0
      %1867 = vmatmul.mubr.bf16.gmra.mrb[0].mxu0 %v1655
      %v1868 = vpop.f32.mrb[0].mxu0
      %v1869 = vadd.f32 0.0, %v1868
      %v1870 = vpop.f32.mrb[0].mxu0
      %v1871 = vpop.f32.mrb[0].mxu0
      %v1872 = vadd.f32 0.0, %v1871
      %v1873 = vpop.f32.mrb[0].mxu0
      %1874 = vmatprep.mubr.bf16.mxu0 0
      %1875 = vmatmul.mubr.bf16.gmra.mrb[0].mxu0 %v1658
      %v1876 = vpop.f32.mrb[0].mxu0
      %v1877 = vadd.f32 0.0, %v1876
      %v1878 = vpop.f32.mrb[0].mxu0
      %v1879 = vpop.f32.mrb[0].mxu0
      %v1880 = vadd.f32 0.0, %v1879
      %v1881 = vpop.f32.mrb[0].mxu0
      %1882 = vmatprep.mubr.bf16.mxu0 0
      %1883 = vmatmul.mubr.bf16.gmra.mrb[0].mxu0 %v1661
      %v1884 = vpop.f32.mrb[0].mxu0
      %v1885 = vadd.f32 0.0, %v1884
      %v1886 = vpop.f32.mrb[0].mxu0
      %v1887 = vpop.f32.mrb[0].mxu0
      %v1888 = vadd.f32 0.0, %v1887
      %v1889 = vpop.f32.mrb[0].mxu0
      %1890 = vdwg.mxu0
      %v1891 = vadd.f32 %v1469, %v1701
      %v1892 = vadd.f32 %v1470, %v1704
      %v1893 = vadd.f32 %v1471, %v1709
      %v1894 = vadd.f32 %v1472, %v1712
      %v1895 = vadd.f32 %v1473, %v1717
      %v1896 = vadd.f32 %v1474, %v1720
      %v1897 = vadd.f32 %v1475, %v1725
      %v1898 = vadd.f32 %v1476, %v1728
      %v1899 = vadd.f32 %v1477, %v1733
      %v1900 = vadd.f32 %v1478, %v1736
      %v1901 = vadd.f32 %v1479, %v1741
      %v1902 = vadd.f32 %v1480, %v1744
      %v1903 = vadd.f32 %v1481, %v1749
      %v1904 = vadd.f32 %v1482, %v1752
      %v1905 = vadd.f32 %v1483, %v1757
      %v1906 = vadd.f32 %v1484, %v1760
      %v1907 = vadd.f32 %v1485, %v1765
      %v1908 = vadd.f32 %v1486, %v1768
      %v1909 = vadd.f32 %v1487, %v1773
      %v1910 = vadd.f32 %v1488, %v1776
      %v1911 = vadd.f32 %v1489, %v1781
      %v1912 = vadd.f32 %v1490, %v1784
      %v1913 = vadd.f32 %v1491, %v1789
      %v1914 = vadd.f32 %v1492, %v1792
      %v1915 = vadd.f32 %v1493, %v1797
      %v1916 = vadd.f32 %v1494, %v1800
      %v1917 = vadd.f32 %v1495, %v1805
      %v1918 = vadd.f32 %v1496, %v1808
      %v1919 = vadd.f32 %v1497, %v1813
      %v1920 = vadd.f32 %v1498, %v1816
      %v1921 = vadd.f32 %v1499, %v1821
      %v1922 = vadd.f32 %v1500, %v1824
      %v1923 = vadd.f32 %v1501, %v1829
      %v1924 = vadd.f32 %v1502, %v1832
      %v1925 = vadd.f32 %v1503, %v1837
      %v1926 = vadd.f32 %v1504, %v1840
      %v1927 = vadd.f32 %v1505, %v1845
      %v1928 = vadd.f32 %v1506, %v1848
      %v1929 = vadd.f32 %v1507, %v1853
      %v1930 = vadd.f32 %v1508, %v1856
      %v1931 = vadd.f32 %v1509, %v1861
      %v1932 = vadd.f32 %v1510, %v1864
      %v1933 = vadd.f32 %v1511, %v1869
      %v1934 = vadd.f32 %v1512, %v1872
      %v1935 = vadd.f32 %v1513, %v1877
      %v1936 = vadd.f32 %v1514, %v1880
      %v1937 = vadd.f32 %v1515, %v1885
      %v1938 = vadd.f32 %v1516, %v1888
      %v1939 = vld [vmem:[#allocation2 + $0x20] sm:$0xff]
      %v1940 = vld [vmem:[#allocation2 + $0x28] sm:$0xff]
      %v1941 = vld [vmem:[#allocation2 + $0x30] sm:$0xff]
      %v1942 = vld [vmem:[#allocation2 + $0x38] sm:$0xff]
      %v1943 = vld [vmem:[#allocation2 + $0x40] sm:$0xff]
      %v1944 = vld [vmem:[#allocation2 + $0x48] sm:$0xff]
      %v1945 = vld [vmem:[#allocation2 + $0x50] sm:$0xff]
      %v1946 = vld [vmem:[#allocation2 + $0x58] sm:$0xff]
      %v1947 = vld [vmem:[#allocation2 + $0x60] sm:$0xff]
      %v1948 = vld [vmem:[#allocation2 + $0x68] sm:$0xff]
      %v1949 = vld [vmem:[#allocation2 + $0x70] sm:$0xff]
      %v1950 = vld [vmem:[#allocation2 + $0x78] sm:$0xff]
      %v1951 = vld [vmem:[#allocation2 + $0x80] sm:$0xff]
      %v1952 = vld [vmem:[#allocation2 + $0x88] sm:$0xff]
      %v1953 = vld [vmem:[#allocation2 + $0x90] sm:$0xff]
      %v1954 = vld [vmem:[#allocation2 + $0x98] sm:$0xff]
      %v1955 = vld [vmem:[#allocation2 + $0xa0] sm:$0xff]
      %v1956 = vld [vmem:[#allocation2 + $0xa8] sm:$0xff]
      %v1957 = vld [vmem:[#allocation2 + $0xb0] sm:$0xff]
      %v1958 = vld [vmem:[#allocation2 + $0xb8] sm:$0xff]
      %v1959 = vld [vmem:[#allocation2 + $0xc0] sm:$0xff]
      %v1960 = vld [vmem:[#allocation2 + $0xc8] sm:$0xff]
      %v1961 = vld [vmem:[#allocation2 + $0xd0] sm:$0xff]
      %v1962 = vld [vmem:[#allocation2 + $0xd8] sm:$0xff]
      %v1963 = vld [vmem:[#allocation2 + $0xe0] sm:$0xff]
      %v1964 = vld [vmem:[#allocation2 + $0xe8] sm:$0xff]
      %v1965 = vld [vmem:[#allocation2 + $0xf0] sm:$0xff]
      %v1966 = vld [vmem:[#allocation2 + $0xf8] sm:$0xff]
      %v1967 = vld [vmem:[#allocation2 + $0x100] sm:$0xff]
      %v1968 = vld [vmem:[#allocation2 + $0x108] sm:$0xff]
      %v1969 = vld [vmem:[#allocation2 + $0x110] sm:$0xff]
      %v1970 = vld [vmem:[#allocation2 + $0x118] sm:$0xff]
      %v1971 = vld [vmem:[#allocation2 + $0x120] sm:$0xff]
      %v1972 = vld [vmem:[#allocation2 + $0x128] sm:$0xff]
      %v1973 = vld [vmem:[#allocation2 + $0x130] sm:$0xff]
      %v1974 = vld [vmem:[#allocation2 + $0x138] sm:$0xff]
      %v1975 = vld [vmem:[#allocation2 + $0x140] sm:$0xff]
      %v1976 = vld [vmem:[#allocation2 + $0x148] sm:$0xff]
      %v1977 = vld [vmem:[#allocation2 + $0x150] sm:$0xff]
      %v1978 = vld [vmem:[#allocation2 + $0x158] sm:$0xff]
      %v1979 = vld [vmem:[#allocation2 + $0x160] sm:$0xff]
      %v1980 = vld [vmem:[#allocation2 + $0x168] sm:$0xff]
      %v1981 = vld [vmem:[#allocation2 + $0x170] sm:$0xff]
      %v1982 = vld [vmem:[#allocation2 + $0x178] sm:$0xff]
      %v1983 = vld [vmem:[#allocation2 + $0x180] sm:$0xff]
      %v1984 = vld [vmem:[#allocation2 + $0x188] sm:$0xff]
      %v1985 = vld [vmem:[#allocation2 + $0x190] sm:$0xff]
      %v1986 = vld [vmem:[#allocation2 + $0x198] sm:$0xff]
      %v1987 = vpack.c.bf16 %v1940, %v1939
      %v1988 = vpack.c.bf16 %v1942, %v1941
      %v1989 = vpack.c.bf16 %v1944, %v1943
      %v1990 = vpack.c.bf16 %v1946, %v1945
      %v1991 = vpack.c.bf16 %v1948, %v1947
      %v1992 = vpack.c.bf16 %v1950, %v1949
      %v1993 = vpack.c.bf16 %v1952, %v1951
      %v1994 = vpack.c.bf16 %v1954, %v1953
      %v1995 = vpack.c.bf16 %v1956, %v1955
      %v1996 = vpack.c.bf16 %v1958, %v1957
      %v1997 = vpack.c.bf16 %v1960, %v1959
      %v1998 = vpack.c.bf16 %v1962, %v1961
      %v1999 = vpack.c.bf16 %v1964, %v1963
      %v2000 = vpack.c.bf16 %v1966, %v1965
      %v2001 = vpack.c.bf16 %v1968, %v1967
      %v2002 = vpack.c.bf16 %v1970, %v1969
      %v2003 = vpack.c.bf16 %v1972, %v1971
      %v2004 = vpack.c.bf16 %v1974, %v1973
      %v2005 = vpack.c.bf16 %v1976, %v1975
      %v2006 = vpack.c.bf16 %v1978, %v1977
      %v2007 = vpack.c.bf16 %v1980, %v1979
      %v2008 = vpack.c.bf16 %v1982, %v1981
      %v2009 = vpack.c.bf16 %v1984, %v1983
      %v2010 = vpack.c.bf16 %v1986, %v1985
      %s2011 = scalar_lea.vmem %s1, 16
      %v2012 = vld [vmem:[%s2011] sm:$0xf]
      %v2014 = vsel %vm210, %v1987, 0
      %v2017 = vsel %vm210, %v1988, 0
      %v2020 = vsel %vm210, %v1989, 0
      %v2023 = vsel %vm210, %v1990, 0
      %v2026 = vsel %vm210, %v1991, 0
      %v2029 = vsel %vm210, %v1992, 0
      %v2032 = vsel %vm210, %v1993, 0
      %v2035 = vsel %vm210, %v1994, 0
      %v2038 = vsel %vm210, %v1995, 0
      %v2041 = vsel %vm210, %v1996, 0
      %v2044 = vsel %vm210, %v1997, 0
      %v2047 = vsel %vm210, %v1998, 0
      %v2050 = vsel %vm210, %v1999, 0
      %v2053 = vsel %vm210, %v2000, 0
      %v2056 = vsel %vm210, %v2001, 0
      %v2059 = vsel %vm210, %v2002, 0
      %v2062 = vsel %vm210, %v2003, 0
      %v2065 = vsel %vm210, %v2004, 0
      %v2068 = vsel %vm210, %v2005, 0
      %v2071 = vsel %vm210, %v2006, 0
      %v2074 = vsel %vm210, %v2007, 0
      %v2077 = vsel %vm210, %v2008, 0
      %v2080 = vsel %vm210, %v2009, 0
      %v2083 = vsel %vm210, %v2010, 0
      %v2086 = vsel %vm566, %v2012, 0
      %2088 = vmatprep.subr.bf16.mxu0 0
      %2089 = vmatpush1.bf16.msra.mxu0 %v2086
      %2090 = vmatprep.subr.bf16.mxu0 0
      %2091 = vmatpush1.bf16.msra.mxu0 0
      %2092 = vmatprep.subr.bf16.mxu0 0
      %2093 = vmatpush1.bf16.msra.mxu0 0
      %2094 = vmatprep.subr.bf16.mxu0 0
      %2095 = vmatpush1.bf16.msra.mxu0 0
      %2096 = vmatprep.subr.bf16.mxu0 0
      %2097 = vmatpush1.bf16.msra.mxu0 0
      %2098 = vmatprep.subr.bf16.mxu0 0
      %2099 = vmatpush1.bf16.msra.mxu0 0
      %2100 = vmatprep.subr.bf16.mxu0 0
      %2101 = vmatpush1.bf16.msra.mxu0 0
      %2102 = vmatprep.subr.bf16.mxu0 0
      %2103 = vmatpush1.bf16.msra.mxu0 0
      %2104 = vmatprep.subr.bf16.mxu0 0
      %2105 = vmatpush1.bf16.msra.mxu0 0
      %2106 = vmatprep.subr.bf16.mxu0 0
      %2107 = vmatpush1.bf16.msra.mxu0 0
      %2108 = vmatprep.subr.bf16.mxu0 0
      %2109 = vmatpush1.bf16.msra.mxu0 0
      %2110 = vmatprep.subr.bf16.mxu0 0
      %2111 = vmatpush1.bf16.msra.mxu0 0
      %2112 = vmatprep.subr.bf16.mxu0 0
      %2113 = vmatpush1.bf16.msra.mxu0 0
      %2114 = vmatprep.subr.bf16.mxu0 0
      %2115 = vmatpush1.bf16.msra.mxu0 0
      %2116 = vmatprep.subr.bf16.mxu0 0
      %2117 = vmatpush1.bf16.msra.mxu0 0
      %2118 = vmatprep.subr.bf16.mxu0 0
      %2119 = vmatpush1.bf16.msra.mxu0 0
      %2120 = vmatprep.mubr.bf16.mxu0 0
      %2121 = vmatmul.mubr.bf16.gmra.mrb[0].mxu0 %v2014
      %v2122 = vpop.f32.mrb[0].mxu0
      %v2123 = vadd.f32 0.0, %v2122
      %v2124 = vpop.f32.mrb[0].mxu0
      %v2125 = vpop.f32.mrb[0].mxu0
      %v2126 = vadd.f32 0.0, %v2125
      %v2127 = vpop.f32.mrb[0].mxu0
      %2128 = vmatprep.mubr.bf16.mxu0 0
      %2129 = vmatmul.mubr.bf16.gmra.mrb[0].mxu0 %v2017
      %v2130 = vpop.f32.mrb[0].mxu0
      %v2131 = vadd.f32 0.0, %v2130
      %v2132 = vpop.f32.mrb[0].mxu0
      %v2133 = vpop.f32.mrb[0].mxu0
      %v2134 = vadd.f32 0.0, %v2133
      %v2135 = vpop.f32.mrb[0].mxu0
      %2136 = vmatprep.mubr.bf16.mxu0 0
      %2137 = vmatmul.mubr.bf16.gmra.mrb[0].mxu0 %v2020
      %v2138 = vpop.f32.mrb[0].mxu0
      %v2139 = vadd.f32 0.0, %v2138
      %v2140 = vpop.f32.mrb[0].mxu0
      %v2141 = vpop.f32.mrb[0].mxu0
      %v2142 = vadd.f32 0.0, %v2141
      %v2143 = vpop.f32.mrb[0].mxu0
      %2144 = vmatprep.mubr.bf16.mxu0 0
      %2145 = vmatmul.mubr.bf16.gmra.mrb[0].mxu0 %v2023
      %v2146 = vpop.f32.mrb[0].mxu0
      %v2147 = vadd.f32 0.0, %v2146
      %v2148 = vpop.f32.mrb[0].mxu0
      %v2149 = vpop.f32.mrb[0].mxu0
      %v2150 = vadd.f32 0.0, %v2149
      %v2151 = vpop.f32.mrb[0].mxu0
      %2152 = vmatprep.mubr.bf16.mxu0 0
      %2153 = vmatmul.mubr.bf16.gmra.mrb[0].mxu0 %v2026
      %v2154 = vpop.f32.mrb[0].mxu0
      %v2155 = vadd.f32 0.0, %v2154
      %v2156 = vpop.f32.mrb[0].mxu0
      %v2157 = vpop.f32.mrb[0].mxu0
      %v2158 = vadd.f32 0.0, %v2157
      %v2159 = vpop.f32.mrb[0].mxu0
      %2160 = vmatprep.mubr.bf16.mxu0 0
      %2161 = vmatmul.mubr.bf16.gmra.mrb[0].mxu0 %v2029
      %v2162 = vpop.f32.mrb[0].mxu0
      %v2163 = vadd.f32 0.0, %v2162
      %v2164 = vpop.f32.mrb[0].mxu0
      %v2165 = vpop.f32.mrb[0].mxu0
      %v2166 = vadd.f32 0.0, %v2165
      %v2167 = vpop.f32.mrb[0].mxu0
      %2168 = vmatprep.mubr.bf16.mxu0 0
      %2169 = vmatmul.mubr.bf16.gmra.mrb[0].mxu0 %v2032
      %v2170 = vpop.f32.mrb[0].mxu0
      %v2171 = vadd.f32 0.0, %v2170
      %v2172 = vpop.f32.mrb[0].mxu0
      %v2173 = vpop.f32.mrb[0].mxu0
      %v2174 = vadd.f32 0.0, %v2173
      %v2175 = vpop.f32.mrb[0].mxu0
      %2176 = vmatprep.mubr.bf16.mxu0 0
      %2177 = vmatmul.mubr.bf16.gmra.mrb[0].mxu0 %v2035
      %v2178 = vpop.f32.mrb[0].mxu0
      %v2179 = vadd.f32 0.0, %v2178
      %v2180 = vpop.f32.mrb[0].mxu0
      %v2181 = vpop.f32.mrb[0].mxu0
      %v2182 = vadd.f32 0.0, %v2181
      %v2183 = vpop.f32.mrb[0].mxu0
      %2184 = vmatprep.mubr.bf16.mxu0 0
      %2185 = vmatmul.mubr.bf16.gmra.mrb[0].mxu0 %v2038
      %v2186 = vpop.f32.mrb[0].mxu0
      %v2187 = vadd.f32 0.0, %v2186
      %v2188 = vpop.f32.mrb[0].mxu0
      %v2189 = vpop.f32.mrb[0].mxu0
      %v2190 = vadd.f32 0.0, %v2189
      %v2191 = vpop.f32.mrb[0].mxu0
      %2192 = vmatprep.mubr.bf16.mxu0 0
      %2193 = vmatmul.mubr.bf16.gmra.mrb[0].mxu0 %v2041
      %v2194 = vpop.f32.mrb[0].mxu0
      %v2195 = vadd.f32 0.0, %v2194
      %v2196 = vpop.f32.mrb[0].mxu0
      %v2197 = vpop.f32.mrb[0].mxu0
      %v2198 = vadd.f32 0.0, %v2197
      %v2199 = vpop.f32.mrb[0].mxu0
      %2200 = vmatprep.mubr.bf16.mxu0 0
      %2201 = vmatmul.mubr.bf16.gmra.mrb[0].mxu0 %v2044
      %v2202 = vpop.f32.mrb[0].mxu0
      %v2203 = vadd.f32 0.0, %v2202
      %v2204 = vpop.f32.mrb[0].mxu0
      %v2205 = vpop.f32.mrb[0].mxu0
      %v2206 = vadd.f32 0.0, %v2205
      %v2207 = vpop.f32.mrb[0].mxu0
      %2208 = vmatprep.mubr.bf16.mxu0 0
      %2209 = vmatmul.mubr.bf16.gmra.mrb[0].mxu0 %v2047
      %v2210 = vpop.f32.mrb[0].mxu0
      %v2211 = vadd.f32 0.0, %v2210
      %v2212 = vpop.f32.mrb[0].mxu0
      %v2213 = vpop.f32.mrb[0].mxu0
      %v2214 = vadd.f32 0.0, %v2213
      %v2215 = vpop.f32.mrb[0].mxu0
      %2216 = vmatprep.mubr.bf16.mxu0 0
      %2217 = vmatmul.mubr.bf16.gmra.mrb[0].mxu0 %v2050
      %v2218 = vpop.f32.mrb[0].mxu0
      %v2219 = vadd.f32 0.0, %v2218
      %v2220 = vpop.f32.mrb[0].mxu0
      %v2221 = vpop.f32.mrb[0].mxu0
      %v2222 = vadd.f32 0.0, %v2221
      %v2223 = vpop.f32.mrb[0].mxu0
      %2224 = vmatprep.mubr.bf16.mxu0 0
      %2225 = vmatmul.mubr.bf16.gmra.mrb[0].mxu0 %v2053
      %v2226 = vpop.f32.mrb[0].mxu0
      %v2227 = vadd.f32 0.0, %v2226
      %v2228 = vpop.f32.mrb[0].mxu0
      %v2229 = vpop.f32.mrb[0].mxu0
      %v2230 = vadd.f32 0.0, %v2229
      %v2231 = vpop.f32.mrb[0].mxu0
      %2232 = vmatprep.mubr.bf16.mxu0 0
      %2233 = vmatmul.mubr.bf16.gmra.mrb[0].mxu0 %v2056
      %v2234 = vpop.f32.mrb[0].mxu0
      %v2235 = vadd.f32 0.0, %v2234
      %v2236 = vpop.f32.mrb[0].mxu0
      %v2237 = vpop.f32.mrb[0].mxu0
      %v2238 = vadd.f32 0.0, %v2237
      %v2239 = vpop.f32.mrb[0].mxu0
      %2240 = vmatprep.mubr.bf16.mxu0 0
      %2241 = vmatmul.mubr.bf16.gmra.mrb[0].mxu0 %v2059
      %v2242 = vpop.f32.mrb[0].mxu0
      %v2243 = vadd.f32 0.0, %v2242
      %v2244 = vpop.f32.mrb[0].mxu0
      %v2245 = vpop.f32.mrb[0].mxu0
      %v2246 = vadd.f32 0.0, %v2245
      %v2247 = vpop.f32.mrb[0].mxu0
      %2248 = vmatprep.mubr.bf16.mxu0 0
      %2249 = vmatmul.mubr.bf16.gmra.mrb[0].mxu0 %v2062
      %v2250 = vpop.f32.mrb[0].mxu0
      %v2251 = vadd.f32 0.0, %v2250
      %v2252 = vpop.f32.mrb[0].mxu0
      %v2253 = vpop.f32.mrb[0].mxu0
      %v2254 = vadd.f32 0.0, %v2253
      %v2255 = vpop.f32.mrb[0].mxu0
      %2256 = vmatprep.mubr.bf16.mxu0 0
      %2257 = vmatmul.mubr.bf16.gmra.mrb[0].mxu0 %v2065
      %v2258 = vpop.f32.mrb[0].mxu0
      %v2259 = vadd.f32 0.0, %v2258
      %v2260 = vpop.f32.mrb[0].mxu0
      %v2261 = vpop.f32.mrb[0].mxu0
      %v2262 = vadd.f32 0.0, %v2261
      %v2263 = vpop.f32.mrb[0].mxu0
      %2264 = vmatprep.mubr.bf16.mxu0 0
      %2265 = vmatmul.mubr.bf16.gmra.mrb[0].mxu0 %v2068
      %v2266 = vpop.f32.mrb[0].mxu0
      %v2267 = vadd.f32 0.0, %v2266
      %v2268 = vpop.f32.mrb[0].mxu0
      %v2269 = vpop.f32.mrb[0].mxu0
      %v2270 = vadd.f32 0.0, %v2269
      %v2271 = vpop.f32.mrb[0].mxu0
      %2272 = vmatprep.mubr.bf16.mxu0 0
      %2273 = vmatmul.mubr.bf16.gmra.mrb[0].mxu0 %v2071
      %v2274 = vpop.f32.mrb[0].mxu0
      %v2275 = vadd.f32 0.0, %v2274
      %v2276 = vpop.f32.mrb[0].mxu0
      %v2277 = vpop.f32.mrb[0].mxu0
      %v2278 = vadd.f32 0.0, %v2277
      %v2279 = vpop.f32.mrb[0].mxu0
      %2280 = vmatprep.mubr.bf16.mxu0 0
      %2281 = vmatmul.mubr.bf16.gmra.mrb[0].mxu0 %v2074
      %v2282 = vpop.f32.mrb[0].mxu0
      %v2283 = vadd.f32 0.0, %v2282
      %v2284 = vpop.f32.mrb[0].mxu0
      %v2285 = vpop.f32.mrb[0].mxu0
      %v2286 = vadd.f32 0.0, %v2285
      %v2287 = vpop.f32.mrb[0].mxu0
      %2288 = vmatprep.mubr.bf16.mxu0 0
      %2289 = vmatmul.mubr.bf16.gmra.mrb[0].mxu0 %v2077
      %v2290 = vpop.f32.mrb[0].mxu0
      %v2291 = vadd.f32 0.0, %v2290
      %v2292 = vpop.f32.mrb[0].mxu0
      %v2293 = vpop.f32.mrb[0].mxu0
      %v2294 = vadd.f32 0.0, %v2293
      %v2295 = vpop.f32.mrb[0].mxu0
      %2296 = vmatprep.mubr.bf16.mxu0 0
      %2297 = vmatmul.mubr.bf16.gmra.mrb[0].mxu0 %v2080
      %v2298 = vpop.f32.mrb[0].mxu0
      %v2299 = vadd.f32 0.0, %v2298
      %v2300 = vpop.f32.mrb[0].mxu0
      %v2301 = vpop.f32.mrb[0].mxu0
      %v2302 = vadd.f32 0.0, %v2301
      %v2303 = vpop.f32.mrb[0].mxu0
      %2304 = vmatprep.mubr.bf16.mxu0 0
      %2305 = vmatmul.mubr.bf16.gmra.mrb[0].mxu0 %v2083
      %v2306 = vpop.f32.mrb[0].mxu0
      %v2307 = vadd.f32 0.0, %v2306
      %v2308 = vpop.f32.mrb[0].mxu0
      %v2309 = vpop.f32.mrb[0].mxu0
      %v2310 = vadd.f32 0.0, %v2309
      %v2311 = vpop.f32.mrb[0].mxu0
      %2312 = vdwg.mxu0
      %v2313 = vadd.f32 %v1891, %v2123
      %v2314 = vadd.f32 %v1892, %v2126
      %v2315 = vadd.f32 %v1893, %v2131
      %v2316 = vadd.f32 %v1894, %v2134
      %v2317 = vadd.f32 %v1895, %v2139
      %v2318 = vadd.f32 %v1896, %v2142
      %v2319 = vadd.f32 %v1897, %v2147
      %v2320 = vadd.f32 %v1898, %v2150
      %v2321 = vadd.f32 %v1899, %v2155
      %v2322 = vadd.f32 %v1900, %v2158
      %v2323 = vadd.f32 %v1901, %v2163
      %v2324 = vadd.f32 %v1902, %v2166
      %v2325 = vadd.f32 %v1903, %v2171
      %v2326 = vadd.f32 %v1904, %v2174
      %v2327 = vadd.f32 %v1905, %v2179
      %v2328 = vadd.f32 %v1906, %v2182
      %v2329 = vadd.f32 %v1907, %v2187
      %v2330 = vadd.f32 %v1908, %v2190
      %v2331 = vadd.f32 %v1909, %v2195
      %v2332 = vadd.f32 %v1910, %v2198
      %v2333 = vadd.f32 %v1911, %v2203
      %v2334 = vadd.f32 %v1912, %v2206
      %v2335 = vadd.f32 %v1913, %v2211
      %v2336 = vadd.f32 %v1914, %v2214
      %v2337 = vadd.f32 %v1915, %v2219
      %v2338 = vadd.f32 %v1916, %v2222
      %v2339 = vadd.f32 %v1917, %v2227
      %v2340 = vadd.f32 %v1918, %v2230
      %v2341 = vadd.f32 %v1919, %v2235
      %v2342 = vadd.f32 %v1920, %v2238
      %v2343 = vadd.f32 %v1921, %v2243
      %v2344 = vadd.f32 %v1922, %v2246
      %v2345 = vadd.f32 %v1923, %v2251
      %v2346 = vadd.f32 %v1924, %v2254
      %v2347 = vadd.f32 %v1925, %v2259
      %v2348 = vadd.f32 %v1926, %v2262
      %v2349 = vadd.f32 %v1927, %v2267
      %v2350 = vadd.f32 %v1928, %v2270
      %v2351 = vadd.f32 %v1929, %v2275
      %v2352 = vadd.f32 %v1930, %v2278
      %v2353 = vadd.f32 %v1931, %v2283
      %v2354 = vadd.f32 %v1932, %v2286
      %v2355 = vadd.f32 %v1933, %v2291
      %v2356 = vadd.f32 %v1934, %v2294
      %v2357 = vadd.f32 %v1935, %v2299
      %v2358 = vadd.f32 %v1936, %v2302
      %v2359 = vadd.f32 %v1937, %v2307
      %v2360 = vadd.f32 %v1938, %v2310
      %v2361 = vld [vmem:[#allocation2 + $0x21] sm:$0xff]
      %v2362 = vld [vmem:[#allocation2 + $0x29] sm:$0xff]
      %v2363 = vld [vmem:[#allocation2 + $0x31] sm:$0xff]
      %v2364 = vld [vmem:[#allocation2 + $0x39] sm:$0xff]
      %v2365 = vld [vmem:[#allocation2 + $0x41] sm:$0xff]
      %v2366 = vld [vmem:[#allocation2 + $0x49] sm:$0xff]
      %v2367 = vld [vmem:[#allocation2 + $0x51] sm:$0xff]
      %v2368 = vld [vmem:[#allocation2 + $0x59] sm:$0xff]
      %v2369 = vld [vmem:[#allocation2 + $0x61] sm:$0xff]
      %v2370 = vld [vmem:[#allocation2 + $0x69] sm:$0xff]
      %v2371 = vld [vmem:[#allocation2 + $0x71] sm:$0xff]
      %v2372 = vld [vmem:[#allocation2 + $0x79] sm:$0xff]
      %v2373 = vld [vmem:[#allocation2 + $0x81] sm:$0xff]
      %v2374 = vld [vmem:[#allocation2 + $0x89] sm:$0xff]
      %v2375 = vld [vmem:[#allocation2 + $0x91] sm:$0xff]
      %v2376 = vld [vmem:[#allocation2 + $0x99] sm:$0xff]
      %v2377 = vld [vmem:[#allocation2 + $0xa1] sm:$0xff]
      %v2378 = vld [vmem:[#allocation2 + $0xa9] sm:$0xff]
      %v2379 = vld [vmem:[#allocation2 + $0xb1] sm:$0xff]
      %v2380 = vld [vmem:[#allocation2 + $0xb9] sm:$0xff]
      %v2381 = vld [vmem:[#allocation2 + $0xc1] sm:$0xff]
      %v2382 = vld [vmem:[#allocation2 + $0xc9] sm:$0xff]
      %v2383 = vld [vmem:[#allocation2 + $0xd1] sm:$0xff]
      %v2384 = vld [vmem:[#allocation2 + $0xd9] sm:$0xff]
      %v2385 = vld [vmem:[#allocation2 + $0xe1] sm:$0xff]
      %v2386 = vld [vmem:[#allocation2 + $0xe9] sm:$0xff]
      %v2387 = vld [vmem:[#allocation2 + $0xf1] sm:$0xff]
      %v2388 = vld [vmem:[#allocation2 + $0xf9] sm:$0xff]
      %v2389 = vld [vmem:[#allocation2 + $0x101] sm:$0xff]
      %v2390 = vld [vmem:[#allocation2 + $0x109] sm:$0xff]
      %v2391 = vld [vmem:[#allocation2 + $0x111] sm:$0xff]
      %v2392 = vld [vmem:[#allocation2 + $0x119] sm:$0xff]
      %v2393 = vld [vmem:[#allocation2 + $0x121] sm:$0xff]
      %v2394 = vld [vmem:[#allocation2 + $0x129] sm:$0xff]
      %v2395 = vld [vmem:[#allocation2 + $0x131] sm:$0xff]
      %v2396 = vld [vmem:[#allocation2 + $0x139] sm:$0xff]
      %v2397 = vld [vmem:[#allocation2 + $0x141] sm:$0xff]
      %v2398 = vld [vmem:[#allocation2 + $0x149] sm:$0xff]
      %v2399 = vld [vmem:[#allocation2 + $0x151] sm:$0xff]
      %v2400 = vld [vmem:[#allocation2 + $0x159] sm:$0xff]
      %v2401 = vld [vmem:[#allocation2 + $0x161] sm:$0xff]
      %v2402 = vld [vmem:[#allocation2 + $0x169] sm:$0xff]
      %v2403 = vld [vmem:[#allocation2 + $0x171] sm:$0xff]
      %v2404 = vld [vmem:[#allocation2 + $0x179] sm:$0xff]
      %v2405 = vld [vmem:[#allocation2 + $0x181] sm:$0xff]
      %v2406 = vld [vmem:[#allocation2 + $0x189] sm:$0xff]
      %v2407 = vld [vmem:[#allocation2 + $0x191] sm:$0xff]
      %v2408 = vld [vmem:[#allocation2 + $0x199] sm:$0xff]
      %v2409 = vpack.c.bf16 %v2362, %v2361
      %v2410 = vpack.c.bf16 %v2364, %v2363
      %v2411 = vpack.c.bf16 %v2366, %v2365
      %v2412 = vpack.c.bf16 %v2368, %v2367
      %v2413 = vpack.c.bf16 %v2370, %v2369
      %v2414 = vpack.c.bf16 %v2372, %v2371
      %v2415 = vpack.c.bf16 %v2374, %v2373
      %v2416 = vpack.c.bf16 %v2376, %v2375
      %v2417 = vpack.c.bf16 %v2378, %v2377
      %v2418 = vpack.c.bf16 %v2380, %v2379
      %v2419 = vpack.c.bf16 %v2382, %v2381
      %v2420 = vpack.c.bf16 %v2384, %v2383
      %v2421 = vpack.c.bf16 %v2386, %v2385
      %v2422 = vpack.c.bf16 %v2388, %v2387
      %v2423 = vpack.c.bf16 %v2390, %v2389
      %v2424 = vpack.c.bf16 %v2392, %v2391
      %v2425 = vpack.c.bf16 %v2394, %v2393
      %v2426 = vpack.c.bf16 %v2396, %v2395
      %v2427 = vpack.c.bf16 %v2398, %v2397
      %v2428 = vpack.c.bf16 %v2400, %v2399
      %v2429 = vpack.c.bf16 %v2402, %v2401
      %v2430 = vpack.c.bf16 %v2404, %v2403
      %v2431 = vpack.c.bf16 %v2406, %v2405
      %v2432 = vpack.c.bf16 %v2408, %v2407
      %s2433 = scalar_lea.vmem %s1, 20
      %v2434 = vld [vmem:[%s2433] sm:$0xf]
      %v2436 = vsel %vm210, %v2409, 0
      %v2439 = vsel %vm210, %v2410, 0
      %v2442 = vsel %vm210, %v2411, 0
      %v2445 = vsel %vm210, %v2412, 0
      %v2448 = vsel %vm210, %v2413, 0
      %v2451 = vsel %vm210, %v2414, 0
      %v2454 = vsel %vm210, %v2415, 0
      %v2457 = vsel %vm210, %v2416, 0
      %v2460 = vsel %vm210, %v2417, 0
      %v2463 = vsel %vm210, %v2418, 0
      %v2466 = vsel %vm210, %v2419, 0
      %v2469 = vsel %vm210, %v2420, 0
      %v2472 = vsel %vm210, %v2421, 0
      %v2475 = vsel %vm210, %v2422, 0
      %v2478 = vsel %vm210, %v2423, 0
      %v2481 = vsel %vm210, %v2424, 0
      %v2484 = vsel %vm210, %v2425, 0
      %v2487 = vsel %vm210, %v2426, 0
      %v2490 = vsel %vm210, %v2427, 0
      %v2493 = vsel %vm210, %v2428, 0
      %v2496 = vsel %vm210, %v2429, 0
      %v2499 = vsel %vm210, %v2430, 0
      %v2502 = vsel %vm210, %v2431, 0
      %v2505 = vsel %vm210, %v2432, 0
      %v2508 = vsel %vm566, %v2434, 0
      %2510 = vmatprep.subr.bf16.mxu0 0
      %2511 = vmatpush1.bf16.msra.mxu0 %v2508
      %2512 = vmatprep.subr.bf16.mxu0 0
      %2513 = vmatpush1.bf16.msra.mxu0 0
      %2514 = vmatprep.subr.bf16.mxu0 0
      %2515 = vmatpush1.bf16.msra.mxu0 0
      %2516 = vmatprep.subr.bf16.mxu0 0
      %2517 = vmatpush1.bf16.msra.mxu0 0
      %2518 = vmatprep.subr.bf16.mxu0 0
      %2519 = vmatpush1.bf16.msra.mxu0 0
      %2520 = vmatprep.subr.bf16.mxu0 0
      %2521 = vmatpush1.bf16.msra.mxu0 0
      %2522 = vmatprep.subr.bf16.mxu0 0
      %2523 = vmatpush1.bf16.msra.mxu0 0
      %2524 = vmatprep.subr.bf16.mxu0 0
      %2525 = vmatpush1.bf16.msra.mxu0 0
      %2526 = vmatprep.subr.bf16.mxu0 0
      %2527 = vmatpush1.bf16.msra.mxu0 0
      %2528 = vmatprep.subr.bf16.mxu0 0
      %2529 = vmatpush1.bf16.msra.mxu0 0
      %2530 = vmatprep.subr.bf16.mxu0 0
      %2531 = vmatpush1.bf16.msra.mxu0 0
      %2532 = vmatprep.subr.bf16.mxu0 0
      %2533 = vmatpush1.bf16.msra.mxu0 0
      %2534 = vmatprep.subr.bf16.mxu0 0
      %2535 = vmatpush1.bf16.msra.mxu0 0
      %2536 = vmatprep.subr.bf16.mxu0 0
      %2537 = vmatpush1.bf16.msra.mxu0 0
      %2538 = vmatprep.subr.bf16.mxu0 0
      %2539 = vmatpush1.bf16.msra.mxu0 0
      %2540 = vmatprep.subr.bf16.mxu0 0
      %2541 = vmatpush1.bf16.msra.mxu0 0
      %2542 = vmatprep.mubr.bf16.mxu0 0
      %2543 = vmatmul.mubr.bf16.gmra.mrb[0].mxu0 %v2436
      %v2544 = vpop.f32.mrb[0].mxu0
      %v2545 = vadd.f32 0.0, %v2544
      %v2546 = vpop.f32.mrb[0].mxu0
      %v2547 = vpop.f32.mrb[0].mxu0
      %v2548 = vadd.f32 0.0, %v2547
      %v2549 = vpop.f32.mrb[0].mxu0
      %2550 = vmatprep.mubr.bf16.mxu0 0
      %2551 = vmatmul.mubr.bf16.gmra.mrb[0].mxu0 %v2439
      %v2552 = vpop.f32.mrb[0].mxu0
      %v2553 = vadd.f32 0.0, %v2552
      %v2554 = vpop.f32.mrb[0].mxu0
      %v2555 = vpop.f32.mrb[0].mxu0
      %v2556 = vadd.f32 0.0, %v2555
      %v2557 = vpop.f32.mrb[0].mxu0
      %2558 = vmatprep.mubr.bf16.mxu0 0
      %2559 = vmatmul.mubr.bf16.gmra.mrb[0].mxu0 %v2442
      %v2560 = vpop.f32.mrb[0].mxu0
      %v2561 = vadd.f32 0.0, %v2560
      %v2562 = vpop.f32.mrb[0].mxu0
      %v2563 = vpop.f32.mrb[0].mxu0
      %v2564 = vadd.f32 0.0, %v2563
      %v2565 = vpop.f32.mrb[0].mxu0
      %2566 = vmatprep.mubr.bf16.mxu0 0
      %2567 = vmatmul.mubr.bf16.gmra.mrb[0].mxu0 %v2445
      %v2568 = vpop.f32.mrb[0].mxu0
      %v2569 = vadd.f32 0.0, %v2568
      %v2570 = vpop.f32.mrb[0].mxu0
      %v2571 = vpop.f32.mrb[0].mxu0
      %v2572 = vadd.f32 0.0, %v2571
      %v2573 = vpop.f32.mrb[0].mxu0
      %2574 = vmatprep.mubr.bf16.mxu0 0
      %2575 = vmatmul.mubr.bf16.gmra.mrb[0].mxu0 %v2448
      %v2576 = vpop.f32.mrb[0].mxu0
      %v2577 = vadd.f32 0.0, %v2576
      %v2578 = vpop.f32.mrb[0].mxu0
      %v2579 = vpop.f32.mrb[0].mxu0
      %v2580 = vadd.f32 0.0, %v2579
      %v2581 = vpop.f32.mrb[0].mxu0
      %2582 = vmatprep.mubr.bf16.mxu0 0
      %2583 = vmatmul.mubr.bf16.gmra.mrb[0].mxu0 %v2451
      %v2584 = vpop.f32.mrb[0].mxu0
      %v2585 = vadd.f32 0.0, %v2584
      %v2586 = vpop.f32.mrb[0].mxu0
      %v2587 = vpop.f32.mrb[0].mxu0
      %v2588 = vadd.f32 0.0, %v2587
      %v2589 = vpop.f32.mrb[0].mxu0
      %2590 = vmatprep.mubr.bf16.mxu0 0
      %2591 = vmatmul.mubr.bf16.gmra.mrb[0].mxu0 %v2454
      %v2592 = vpop.f32.mrb[0].mxu0
      %v2593 = vadd.f32 0.0, %v2592
      %v2594 = vpop.f32.mrb[0].mxu0
      %v2595 = vpop.f32.mrb[0].mxu0
      %v2596 = vadd.f32 0.0, %v2595
      %v2597 = vpop.f32.mrb[0].mxu0
      %2598 = vmatprep.mubr.bf16.mxu0 0
      %2599 = vmatmul.mubr.bf16.gmra.mrb[0].mxu0 %v2457
      %v2600 = vpop.f32.mrb[0].mxu0
      %v2601 = vadd.f32 0.0, %v2600
      %v2602 = vpop.f32.mrb[0].mxu0
      %v2603 = vpop.f32.mrb[0].mxu0
      %v2604 = vadd.f32 0.0, %v2603
      %v2605 = vpop.f32.mrb[0].mxu0
      %2606 = vmatprep.mubr.bf16.mxu0 0
      %2607 = vmatmul.mubr.bf16.gmra.mrb[0].mxu0 %v2460
      %v2608 = vpop.f32.mrb[0].mxu0
      %v2609 = vadd.f32 0.0, %v2608
      %v2610 = vpop.f32.mrb[0].mxu0
      %v2611 = vpop.f32.mrb[0].mxu0
      %v2612 = vadd.f32 0.0, %v2611
      %v2613 = vpop.f32.mrb[0].mxu0
      %2614 = vmatprep.mubr.bf16.mxu0 0
      %2615 = vmatmul.mubr.bf16.gmra.mrb[0].mxu0 %v2463
      %v2616 = vpop.f32.mrb[0].mxu0
      %v2617 = vadd.f32 0.0, %v2616
      %v2618 = vpop.f32.mrb[0].mxu0
      %v2619 = vpop.f32.mrb[0].mxu0
      %v2620 = vadd.f32 0.0, %v2619
      %v2621 = vpop.f32.mrb[0].mxu0
      %2622 = vmatprep.mubr.bf16.mxu0 0
      %2623 = vmatmul.mubr.bf16.gmra.mrb[0].mxu0 %v2466
      %v2624 = vpop.f32.mrb[0].mxu0
      %v2625 = vadd.f32 0.0, %v2624
      %v2626 = vpop.f32.mrb[0].mxu0
      %v2627 = vpop.f32.mrb[0].mxu0
      %v2628 = vadd.f32 0.0, %v2627
      %v2629 = vpop.f32.mrb[0].mxu0
      %2630 = vmatprep.mubr.bf16.mxu0 0
      %2631 = vmatmul.mubr.bf16.gmra.mrb[0].mxu0 %v2469
      %v2632 = vpop.f32.mrb[0].mxu0
      %v2633 = vadd.f32 0.0, %v2632
      %v2634 = vpop.f32.mrb[0].mxu0
      %v2635 = vpop.f32.mrb[0].mxu0
      %v2636 = vadd.f32 0.0, %v2635
      %v2637 = vpop.f32.mrb[0].mxu0
      %2638 = vmatprep.mubr.bf16.mxu0 0
      %2639 = vmatmul.mubr.bf16.gmra.mrb[0].mxu0 %v2472
      %v2640 = vpop.f32.mrb[0].mxu0
      %v2641 = vadd.f32 0.0, %v2640
      %v2642 = vpop.f32.mrb[0].mxu0
      %v2643 = vpop.f32.mrb[0].mxu0
      %v2644 = vadd.f32 0.0, %v2643
      %v2645 = vpop.f32.mrb[0].mxu0
      %2646 = vmatprep.mubr.bf16.mxu0 0
      %2647 = vmatmul.mubr.bf16.gmra.mrb[0].mxu0 %v2475
      %v2648 = vpop.f32.mrb[0].mxu0
      %v2649 = vadd.f32 0.0, %v2648
      %v2650 = vpop.f32.mrb[0].mxu0
      %v2651 = vpop.f32.mrb[0].mxu0
      %v2652 = vadd.f32 0.0, %v2651
      %v2653 = vpop.f32.mrb[0].mxu0
      %2654 = vmatprep.mubr.bf16.mxu0 0
      %2655 = vmatmul.mubr.bf16.gmra.mrb[0].mxu0 %v2478
      %v2656 = vpop.f32.mrb[0].mxu0
      %v2657 = vadd.f32 0.0, %v2656
      %v2658 = vpop.f32.mrb[0].mxu0
      %v2659 = vpop.f32.mrb[0].mxu0
      %v2660 = vadd.f32 0.0, %v2659
      %v2661 = vpop.f32.mrb[0].mxu0
      %2662 = vmatprep.mubr.bf16.mxu0 0
      %2663 = vmatmul.mubr.bf16.gmra.mrb[0].mxu0 %v2481
      %v2664 = vpop.f32.mrb[0].mxu0
      %v2665 = vadd.f32 0.0, %v2664
      %v2666 = vpop.f32.mrb[0].mxu0
      %v2667 = vpop.f32.mrb[0].mxu0
      %v2668 = vadd.f32 0.0, %v2667
      %v2669 = vpop.f32.mrb[0].mxu0
      %2670 = vmatprep.mubr.bf16.mxu0 0
      %2671 = vmatmul.mubr.bf16.gmra.mrb[0].mxu0 %v2484
      %v2672 = vpop.f32.mrb[0].mxu0
      %v2673 = vadd.f32 0.0, %v2672
      %v2674 = vpop.f32.mrb[0].mxu0
      %v2675 = vpop.f32.mrb[0].mxu0
      %v2676 = vadd.f32 0.0, %v2675
      %v2677 = vpop.f32.mrb[0].mxu0
      %2678 = vmatprep.mubr.bf16.mxu0 0
      %2679 = vmatmul.mubr.bf16.gmra.mrb[0].mxu0 %v2487
      %v2680 = vpop.f32.mrb[0].mxu0
      %v2681 = vadd.f32 0.0, %v2680
      %v2682 = vpop.f32.mrb[0].mxu0
      %v2683 = vpop.f32.mrb[0].mxu0
      %v2684 = vadd.f32 0.0, %v2683
      %v2685 = vpop.f32.mrb[0].mxu0
      %2686 = vmatprep.mubr.bf16.mxu0 0
      %2687 = vmatmul.mubr.bf16.gmra.mrb[0].mxu0 %v2490
      %v2688 = vpop.f32.mrb[0].mxu0
      %v2689 = vadd.f32 0.0, %v2688
      %v2690 = vpop.f32.mrb[0].mxu0
      %v2691 = vpop.f32.mrb[0].mxu0
      %v2692 = vadd.f32 0.0, %v2691
      %v2693 = vpop.f32.mrb[0].mxu0
      %2694 = vmatprep.mubr.bf16.mxu0 0
      %2695 = vmatmul.mubr.bf16.gmra.mrb[0].mxu0 %v2493
      %v2696 = vpop.f32.mrb[0].mxu0
      %v2697 = vadd.f32 0.0, %v2696
      %v2698 = vpop.f32.mrb[0].mxu0
      %v2699 = vpop.f32.mrb[0].mxu0
      %v2700 = vadd.f32 0.0, %v2699
      %v2701 = vpop.f32.mrb[0].mxu0
      %2702 = vmatprep.mubr.bf16.mxu0 0
      %2703 = vmatmul.mubr.bf16.gmra.mrb[0].mxu0 %v2496
      %v2704 = vpop.f32.mrb[0].mxu0
      %v2705 = vadd.f32 0.0, %v2704
      %v2706 = vpop.f32.mrb[0].mxu0
      %v2707 = vpop.f32.mrb[0].mxu0
      %v2708 = vadd.f32 0.0, %v2707
      %v2709 = vpop.f32.mrb[0].mxu0
      %2710 = vmatprep.mubr.bf16.mxu0 0
      %2711 = vmatmul.mubr.bf16.gmra.mrb[0].mxu0 %v2499
      %v2712 = vpop.f32.mrb[0].mxu0
      %v2713 = vadd.f32 0.0, %v2712
      %v2714 = vpop.f32.mrb[0].mxu0
      %v2715 = vpop.f32.mrb[0].mxu0
      %v2716 = vadd.f32 0.0, %v2715
      %v2717 = vpop.f32.mrb[0].mxu0
      %2718 = vmatprep.mubr.bf16.mxu0 0
      %2719 = vmatmul.mubr.bf16.gmra.mrb[0].mxu0 %v2502
      %v2720 = vpop.f32.mrb[0].mxu0
      %v2721 = vadd.f32 0.0, %v2720
      %v2722 = vpop.f32.mrb[0].mxu0
      %v2723 = vpop.f32.mrb[0].mxu0
      %v2724 = vadd.f32 0.0, %v2723
      %v2725 = vpop.f32.mrb[0].mxu0
      %2726 = vmatprep.mubr.bf16.mxu0 0
      %2727 = vmatmul.mubr.bf16.gmra.mrb[0].mxu0 %v2505
      %v2728 = vpop.f32.mrb[0].mxu0
      %v2729 = vadd.f32 0.0, %v2728
      %v2730 = vpop.f32.mrb[0].mxu0
      %v2731 = vpop.f32.mrb[0].mxu0
      %v2732 = vadd.f32 0.0, %v2731
      %v2733 = vpop.f32.mrb[0].mxu0
      %2734 = vdwg.mxu0
      %v2735 = vadd.f32 %v2313, %v2545
      %v2736 = vadd.f32 %v2314, %v2548
      %v2737 = vadd.f32 %v2315, %v2553
      %v2738 = vadd.f32 %v2316, %v2556
      %v2739 = vadd.f32 %v2317, %v2561
      %v2740 = vadd.f32 %v2318, %v2564
      %v2741 = vadd.f32 %v2319, %v2569
      %v2742 = vadd.f32 %v2320, %v2572
      %v2743 = vadd.f32 %v2321, %v2577
      %v2744 = vadd.f32 %v2322, %v2580
      %v2745 = vadd.f32 %v2323, %v2585
      %v2746 = vadd.f32 %v2324, %v2588
      %v2747 = vadd.f32 %v2325, %v2593
      %v2748 = vadd.f32 %v2326, %v2596
      %v2749 = vadd.f32 %v2327, %v2601
      %v2750 = vadd.f32 %v2328, %v2604
      %v2751 = vadd.f32 %v2329, %v2609
      %v2752 = vadd.f32 %v2330, %v2612
      %v2753 = vadd.f32 %v2331, %v2617
      %v2754 = vadd.f32 %v2332, %v2620
      %v2755 = vadd.f32 %v2333, %v2625
      %v2756 = vadd.f32 %v2334, %v2628
      %v2757 = vadd.f32 %v2335, %v2633
      %v2758 = vadd.f32 %v2336, %v2636
      %v2759 = vadd.f32 %v2337, %v2641
      %v2760 = vadd.f32 %v2338, %v2644
      %v2761 = vadd.f32 %v2339, %v2649
      %v2762 = vadd.f32 %v2340, %v2652
      %v2763 = vadd.f32 %v2341, %v2657
      %v2764 = vadd.f32 %v2342, %v2660
      %v2765 = vadd.f32 %v2343, %v2665
      %v2766 = vadd.f32 %v2344, %v2668
      %v2767 = vadd.f32 %v2345, %v2673
      %v2768 = vadd.f32 %v2346, %v2676
      %v2769 = vadd.f32 %v2347, %v2681
      %v2770 = vadd.f32 %v2348, %v2684
      %v2771 = vadd.f32 %v2349, %v2689
      %v2772 = vadd.f32 %v2350, %v2692
      %v2773 = vadd.f32 %v2351, %v2697
      %v2774 = vadd.f32 %v2352, %v2700
      %v2775 = vadd.f32 %v2353, %v2705
      %v2776 = vadd.f32 %v2354, %v2708
      %v2777 = vadd.f32 %v2355, %v2713
      %v2778 = vadd.f32 %v2356, %v2716
      %v2779 = vadd.f32 %v2357, %v2721
      %v2780 = vadd.f32 %v2358, %v2724
      %v2781 = vadd.f32 %v2359, %v2729
      %v2782 = vadd.f32 %v2360, %v2732
      %v2783 = vld [vmem:[#allocation2 + $0x37] sm:$0xff]
      %v2784 = vld [vmem:[#allocation2 + $0x3f] sm:$0xff]
      %v2785 = vld [vmem:[#allocation2 + $0x47] sm:$0xff]
      %v2786 = vld [vmem:[#allocation2 + $0x4f] sm:$0xff]
      %v2787 = vld [vmem:[#allocation2 + $0x57] sm:$0xff]
      %v2788 = vld [vmem:[#allocation2 + $0x5f] sm:$0xff]
      %v2789 = vld [vmem:[#allocation2 + $0x67] sm:$0xff]
      %v2790 = vld [vmem:[#allocation2 + $0x6f] sm:$0xff]
      %v2791 = vld [vmem:[#allocation2 + $0x77] sm:$0xff]
      %v2792 = vld [vmem:[#allocation2 + $0x7f] sm:$0xff]
      %v2793 = vld [vmem:[#allocation2 + $0x87] sm:$0xff]
      %v2794 = vld [vmem:[#allocation2 + $0x8f] sm:$0xff]
      %v2795 = vld [vmem:[#allocation2 + $0x97] sm:$0xff]
      %v2796 = vld [vmem:[#allocation2 + $0x9f] sm:$0xff]
      %v2797 = vld [vmem:[#allocation2 + $0xa7] sm:$0xff]
      %v2798 = vld [vmem:[#allocation2 + $0xaf] sm:$0xff]
      %v2799 = vld [vmem:[#allocation2 + $0xb7] sm:$0xff]
      %v2800 = vld [vmem:[#allocation2 + $0xbf] sm:$0xff]
      %v2801 = vld [vmem:[#allocation2 + $0xc7] sm:$0xff]
      %v2802 = vld [vmem:[#allocation2 + $0xcf] sm:$0xff]
      %v2803 = vld [vmem:[#allocation2 + $0xd7] sm:$0xff]
      %v2804 = vld [vmem:[#allocation2 + $0xdf] sm:$0xff]
      %v2805 = vld [vmem:[#allocation2 + $0xe7] sm:$0xff]
      %v2806 = vld [vmem:[#allocation2 + $0xef] sm:$0xff]
      %v2807 = vld [vmem:[#allocation2 + $0xf7] sm:$0xff]
      %v2808 = vld [vmem:[#allocation2 + $0xff] sm:$0xff]
      %v2809 = vld [vmem:[#allocation2 + $0x107] sm:$0xff]
      %v2810 = vld [vmem:[#allocation2 + $0x10f] sm:$0xff]
      %v2811 = vld [vmem:[#allocation2 + $0x117] sm:$0xff]
      %v2812 = vld [vmem:[#allocation2 + $0x11f] sm:$0xff]
      %v2813 = vld [vmem:[#allocation2 + $0x127] sm:$0xff]
      %v2814 = vld [vmem:[#allocation2 + $0x12f] sm:$0xff]
      %v2815 = vld [vmem:[#allocation2 + $0x137] sm:$0xff]
      %v2816 = vld [vmem:[#allocation2 + $0x13f] sm:$0xff]
      %v2817 = vld [vmem:[#allocation2 + $0x147] sm:$0xff]
      %v2818 = vld [vmem:[#allocation2 + $0x14f] sm:$0xff]
      %v2819 = vld [vmem:[#allocation2 + $0x157] sm:$0xff]
      %v2820 = vld [vmem:[#allocation2 + $0x15f] sm:$0xff]
      %v2821 = vld [vmem:[#allocation2 + $0x167] sm:$0xff]
      %v2822 = vld [vmem:[#allocation2 + $0x16f] sm:$0xff]
      %v2823 = vld [vmem:[#allocation2 + $0x177] sm:$0xff]
      %v2824 = vld [vmem:[#allocation2 + $0x17f] sm:$0xff]
      %v2825 = vld [vmem:[#allocation2 + $0x187] sm:$0xff]
      %v2826 = vld [vmem:[#allocation2 + $0x18f] sm:$0xff]
      %v2827 = vld [vmem:[#allocation2 + $0x197] sm:$0xff]
      %v2828 = vld [vmem:[#allocation2 + $0x19f] sm:$0xff]
      %v2829 = vld [vmem:[#allocation2 + $0x1a7] sm:$0xff]
      %v2830 = vld [vmem:[#allocation2 + $0x1af] sm:$0xff]
      %v2831 = vpack.c.bf16 %v2784, %v2783
      %v2832 = vpack.c.bf16 %v2786, %v2785
      %v2833 = vpack.c.bf16 %v2788, %v2787
      %v2834 = vpack.c.bf16 %v2790, %v2789
      %v2835 = vpack.c.bf16 %v2792, %v2791
      %v2836 = vpack.c.bf16 %v2794, %v2793
      %v2837 = vpack.c.bf16 %v2796, %v2795
      %v2838 = vpack.c.bf16 %v2798, %v2797
      %v2839 = vpack.c.bf16 %v2800, %v2799
      %v2840 = vpack.c.bf16 %v2802, %v2801
      %v2841 = vpack.c.bf16 %v2804, %v2803
      %v2842 = vpack.c.bf16 %v2806, %v2805
      %v2843 = vpack.c.bf16 %v2808, %v2807
      %v2844 = vpack.c.bf16 %v2810, %v2809
      %v2845 = vpack.c.bf16 %v2812, %v2811
      %v2846 = vpack.c.bf16 %v2814, %v2813
      %v2847 = vpack.c.bf16 %v2816, %v2815
      %v2848 = vpack.c.bf16 %v2818, %v2817
      %v2849 = vpack.c.bf16 %v2820, %v2819
      %v2850 = vpack.c.bf16 %v2822, %v2821
      %v2851 = vpack.c.bf16 %v2824, %v2823
      %v2852 = vpack.c.bf16 %v2826, %v2825
      %v2853 = vpack.c.bf16 %v2828, %v2827
      %v2854 = vpack.c.bf16 %v2830, %v2829
      %s2855 = scalar_lea.vmem %s1, 24
      %v2856 = vld [vmem:[%s2855] sm:$0xf]
      %v2858 = vsel %vm210, %v2831, 0
      %v2861 = vsel %vm210, %v2832, 0
      %v2864 = vsel %vm210, %v2833, 0
      %v2867 = vsel %vm210, %v2834, 0
      %v2870 = vsel %vm210, %v2835, 0
      %v2873 = vsel %vm210, %v2836, 0
      %v2876 = vsel %vm210, %v2837, 0
      %v2879 = vsel %vm210, %v2838, 0
      %v2882 = vsel %vm210, %v2839, 0
      %v2885 = vsel %vm210, %v2840, 0
      %v2888 = vsel %vm210, %v2841, 0
      %v2891 = vsel %vm210, %v2842, 0
      %v2894 = vsel %vm210, %v2843, 0
      %v2897 = vsel %vm210, %v2844, 0
      %v2900 = vsel %vm210, %v2845, 0
      %v2903 = vsel %vm210, %v2846, 0
      %v2906 = vsel %vm210, %v2847, 0
      %v2909 = vsel %vm210, %v2848, 0
      %v2912 = vsel %vm210, %v2849, 0
      %v2915 = vsel %vm210, %v2850, 0
      %v2918 = vsel %vm210, %v2851, 0
      %v2921 = vsel %vm210, %v2852, 0
      %v2924 = vsel %vm210, %v2853, 0
      %v2927 = vsel %vm210, %v2854, 0
      %v2930 = vsel %vm566, %v2856, 0
      %2932 = vmatprep.subr.bf16.mxu0 0
      %2933 = vmatpush1.bf16.msra.mxu0 %v2930
      %2934 = vmatprep.subr.bf16.mxu0 0
      %2935 = vmatpush1.bf16.msra.mxu0 0
      %2936 = vmatprep.subr.bf16.mxu0 0
      %2937 = vmatpush1.bf16.msra.mxu0 0
      %2938 = vmatprep.subr.bf16.mxu0 0
      %2939 = vmatpush1.bf16.msra.mxu0 0
      %2940 = vmatprep.subr.bf16.mxu0 0
      %2941 = vmatpush1.bf16.msra.mxu0 0
      %2942 = vmatprep.subr.bf16.mxu0 0
      %2943 = vmatpush1.bf16.msra.mxu0 0
      %2944 = vmatprep.subr.bf16.mxu0 0
      %2945 = vmatpush1.bf16.msra.mxu0 0
      %2946 = vmatprep.subr.bf16.mxu0 0
      %2947 = vmatpush1.bf16.msra.mxu0 0
      %2948 = vmatprep.subr.bf16.mxu0 0
      %2949 = vmatpush1.bf16.msra.mxu0 0
      %2950 = vmatprep.subr.bf16.mxu0 0
      %2951 = vmatpush1.bf16.msra.mxu0 0
      %2952 = vmatprep.subr.bf16.mxu0 0
      %2953 = vmatpush1.bf16.msra.mxu0 0
      %2954 = vmatprep.subr.bf16.mxu0 0
      %2955 = vmatpush1.bf16.msra.mxu0 0
      %2956 = vmatprep.subr.bf16.mxu0 0
      %2957 = vmatpush1.bf16.msra.mxu0 0
      %2958 = vmatprep.subr.bf16.mxu0 0
      %2959 = vmatpush1.bf16.msra.mxu0 0
      %2960 = vmatprep.subr.bf16.mxu0 0
      %2961 = vmatpush1.bf16.msra.mxu0 0
      %2962 = vmatprep.subr.bf16.mxu0 0
      %2963 = vmatpush1.bf16.msra.mxu0 0
      %2964 = vmatprep.mubr.bf16.mxu0 0
      %2965 = vmatmul.mubr.bf16.gmra.mrb[0].mxu0 %v2858
      %v2966 = vpop.f32.mrb[0].mxu0
      %v2967 = vadd.f32 0.0, %v2966
      %v2968 = vpop.f32.mrb[0].mxu0
      %v2969 = vpop.f32.mrb[0].mxu0
      %v2970 = vadd.f32 0.0, %v2969
      %v2971 = vpop.f32.mrb[0].mxu0
      %2972 = vmatprep.mubr.bf16.mxu0 0
      %2973 = vmatmul.mubr.bf16.gmra.mrb[0].mxu0 %v2861
      %v2974 = vpop.f32.mrb[0].mxu0
      %v2975 = vadd.f32 0.0, %v2974
      %v2976 = vpop.f32.mrb[0].mxu0
      %v2977 = vpop.f32.mrb[0].mxu0
      %v2978 = vadd.f32 0.0, %v2977
      %v2979 = vpop.f32.mrb[0].mxu0
      %2980 = vmatprep.mubr.bf16.mxu0 0
      %2981 = vmatmul.mubr.bf16.gmra.mrb[0].mxu0 %v2864
      %v2982 = vpop.f32.mrb[0].mxu0
      %v2983 = vadd.f32 0.0, %v2982
      %v2984 = vpop.f32.mrb[0].mxu0
      %v2985 = vpop.f32.mrb[0].mxu0
      %v2986 = vadd.f32 0.0, %v2985
      %v2987 = vpop.f32.mrb[0].mxu0
      %2988 = vmatprep.mubr.bf16.mxu0 0
      %2989 = vmatmul.mubr.bf16.gmra.mrb[0].mxu0 %v2867
      %v2990 = vpop.f32.mrb[0].mxu0
      %v2991 = vadd.f32 0.0, %v2990
      %v2992 = vpop.f32.mrb[0].mxu0
      %v2993 = vpop.f32.mrb[0].mxu0
      %v2994 = vadd.f32 0.0, %v2993
      %v2995 = vpop.f32.mrb[0].mxu0
      %2996 = vmatprep.mubr.bf16.mxu0 0
      %2997 = vmatmul.mubr.bf16.gmra.mrb[0].mxu0 %v2870
      %v2998 = vpop.f32.mrb[0].mxu0
      %v2999 = vadd.f32 0.0, %v2998
      %v3000 = vpop.f32.mrb[0].mxu0
      %v3001 = vpop.f32.mrb[0].mxu0
      %v3002 = vadd.f32 0.0, %v3001
      %v3003 = vpop.f32.mrb[0].mxu0
      %3004 = vmatprep.mubr.bf16.mxu0 0
      %3005 = vmatmul.mubr.bf16.gmra.mrb[0].mxu0 %v2873
      %v3006 = vpop.f32.mrb[0].mxu0
      %v3007 = vadd.f32 0.0, %v3006
      %v3008 = vpop.f32.mrb[0].mxu0
      %v3009 = vpop.f32.mrb[0].mxu0
      %v3010 = vadd.f32 0.0, %v3009
      %v3011 = vpop.f32.mrb[0].mxu0
      %3012 = vmatprep.mubr.bf16.mxu0 0
      %3013 = vmatmul.mubr.bf16.gmra.mrb[0].mxu0 %v2876
      %v3014 = vpop.f32.mrb[0].mxu0
      %v3015 = vadd.f32 0.0, %v3014
      %v3016 = vpop.f32.mrb[0].mxu0
      %v3017 = vpop.f32.mrb[0].mxu0
      %v3018 = vadd.f32 0.0, %v3017
      %v3019 = vpop.f32.mrb[0].mxu0
      %3020 = vmatprep.mubr.bf16.mxu0 0
      %3021 = vmatmul.mubr.bf16.gmra.mrb[0].mxu0 %v2879
      %v3022 = vpop.f32.mrb[0].mxu0
      %v3023 = vadd.f32 0.0, %v3022
      %v3024 = vpop.f32.mrb[0].mxu0
      %v3025 = vpop.f32.mrb[0].mxu0
      %v3026 = vadd.f32 0.0, %v3025
      %v3027 = vpop.f32.mrb[0].mxu0
      %3028 = vmatprep.mubr.bf16.mxu0 0
      %3029 = vmatmul.mubr.bf16.gmra.mrb[0].mxu0 %v2882
      %v3030 = vpop.f32.mrb[0].mxu0
      %v3031 = vadd.f32 0.0, %v3030
      %v3032 = vpop.f32.mrb[0].mxu0
      %v3033 = vpop.f32.mrb[0].mxu0
      %v3034 = vadd.f32 0.0, %v3033
      %v3035 = vpop.f32.mrb[0].mxu0
      %3036 = vmatprep.mubr.bf16.mxu0 0
      %3037 = vmatmul.mubr.bf16.gmra.mrb[0].mxu0 %v2885
      %v3038 = vpop.f32.mrb[0].mxu0
      %v3039 = vadd.f32 0.0, %v3038
      %v3040 = vpop.f32.mrb[0].mxu0
      %v3041 = vpop.f32.mrb[0].mxu0
      %v3042 = vadd.f32 0.0, %v3041
      %v3043 = vpop.f32.mrb[0].mxu0
      %3044 = vmatprep.mubr.bf16.mxu0 0
      %3045 = vmatmul.mubr.bf16.gmra.mrb[0].mxu0 %v2888
      %v3046 = vpop.f32.mrb[0].mxu0
      %v3047 = vadd.f32 0.0, %v3046
      %v3048 = vpop.f32.mrb[0].mxu0
      %v3049 = vpop.f32.mrb[0].mxu0
      %v3050 = vadd.f32 0.0, %v3049
      %v3051 = vpop.f32.mrb[0].mxu0
      %3052 = vmatprep.mubr.bf16.mxu0 0
      %3053 = vmatmul.mubr.bf16.gmra.mrb[0].mxu0 %v2891
      %v3054 = vpop.f32.mrb[0].mxu0
      %v3055 = vadd.f32 0.0, %v3054
      %v3056 = vpop.f32.mrb[0].mxu0
      %v3057 = vpop.f32.mrb[0].mxu0
      %v3058 = vadd.f32 0.0, %v3057
      %v3059 = vpop.f32.mrb[0].mxu0
      %3060 = vmatprep.mubr.bf16.mxu0 0
      %3061 = vmatmul.mubr.bf16.gmra.mrb[0].mxu0 %v2894
      %v3062 = vpop.f32.mrb[0].mxu0
      %v3063 = vadd.f32 0.0, %v3062
      %v3064 = vpop.f32.mrb[0].mxu0
      %v3065 = vpop.f32.mrb[0].mxu0
      %v3066 = vadd.f32 0.0, %v3065
      %v3067 = vpop.f32.mrb[0].mxu0
      %3068 = vmatprep.mubr.bf16.mxu0 0
      %3069 = vmatmul.mubr.bf16.gmra.mrb[0].mxu0 %v2897
      %v3070 = vpop.f32.mrb[0].mxu0
      %v3071 = vadd.f32 0.0, %v3070
      %v3072 = vpop.f32.mrb[0].mxu0
      %v3073 = vpop.f32.mrb[0].mxu0
      %v3074 = vadd.f32 0.0, %v3073
      %v3075 = vpop.f32.mrb[0].mxu0
      %3076 = vmatprep.mubr.bf16.mxu0 0
      %3077 = vmatmul.mubr.bf16.gmra.mrb[0].mxu0 %v2900
      %v3078 = vpop.f32.mrb[0].mxu0
      %v3079 = vadd.f32 0.0, %v3078
      %v3080 = vpop.f32.mrb[0].mxu0
      %v3081 = vpop.f32.mrb[0].mxu0
      %v3082 = vadd.f32 0.0, %v3081
      %v3083 = vpop.f32.mrb[0].mxu0
      %3084 = vmatprep.mubr.bf16.mxu0 0
      %3085 = vmatmul.mubr.bf16.gmra.mrb[0].mxu0 %v2903
      %v3086 = vpop.f32.mrb[0].mxu0
      %v3087 = vadd.f32 0.0, %v3086
      %v3088 = vpop.f32.mrb[0].mxu0
      %v3089 = vpop.f32.mrb[0].mxu0
      %v3090 = vadd.f32 0.0, %v3089
      %v3091 = vpop.f32.mrb[0].mxu0
      %3092 = vmatprep.mubr.bf16.mxu0 0
      %3093 = vmatmul.mubr.bf16.gmra.mrb[0].mxu0 %v2906
      %v3094 = vpop.f32.mrb[0].mxu0
      %v3095 = vadd.f32 0.0, %v3094
      %v3096 = vpop.f32.mrb[0].mxu0
      %v3097 = vpop.f32.mrb[0].mxu0
      %v3098 = vadd.f32 0.0, %v3097
      %v3099 = vpop.f32.mrb[0].mxu0
      %3100 = vmatprep.mubr.bf16.mxu0 0
      %3101 = vmatmul.mubr.bf16.gmra.mrb[0].mxu0 %v2909
      %v3102 = vpop.f32.mrb[0].mxu0
      %v3103 = vadd.f32 0.0, %v3102
      %v3104 = vpop.f32.mrb[0].mxu0
      %v3105 = vpop.f32.mrb[0].mxu0
      %v3106 = vadd.f32 0.0, %v3105
      %v3107 = vpop.f32.mrb[0].mxu0
      %3108 = vmatprep.mubr.bf16.mxu0 0
      %3109 = vmatmul.mubr.bf16.gmra.mrb[0].mxu0 %v2912
      %v3110 = vpop.f32.mrb[0].mxu0
      %v3111 = vadd.f32 0.0, %v3110
      %v3112 = vpop.f32.mrb[0].mxu0
      %v3113 = vpop.f32.mrb[0].mxu0
      %v3114 = vadd.f32 0.0, %v3113
      %v3115 = vpop.f32.mrb[0].mxu0
      %3116 = vmatprep.mubr.bf16.mxu0 0
      %3117 = vmatmul.mubr.bf16.gmra.mrb[0].mxu0 %v2915
      %v3118 = vpop.f32.mrb[0].mxu0
      %v3119 = vadd.f32 0.0, %v3118
      %v3120 = vpop.f32.mrb[0].mxu0
      %v3121 = vpop.f32.mrb[0].mxu0
      %v3122 = vadd.f32 0.0, %v3121
      %v3123 = vpop.f32.mrb[0].mxu0
      %3124 = vmatprep.mubr.bf16.mxu0 0
      %3125 = vmatmul.mubr.bf16.gmra.mrb[0].mxu0 %v2918
      %v3126 = vpop.f32.mrb[0].mxu0
      %v3127 = vadd.f32 0.0, %v3126
      %v3128 = vpop.f32.mrb[0].mxu0
      %v3129 = vpop.f32.mrb[0].mxu0
      %v3130 = vadd.f32 0.0, %v3129
      %v3131 = vpop.f32.mrb[0].mxu0
      %3132 = vmatprep.mubr.bf16.mxu0 0
      %3133 = vmatmul.mubr.bf16.gmra.mrb[0].mxu0 %v2921
      %v3134 = vpop.f32.mrb[0].mxu0
      %v3135 = vadd.f32 0.0, %v3134
      %v3136 = vpop.f32.mrb[0].mxu0
      %v3137 = vpop.f32.mrb[0].mxu0
      %v3138 = vadd.f32 0.0, %v3137
      %v3139 = vpop.f32.mrb[0].mxu0
      %3140 = vmatprep.mubr.bf16.mxu0 0
      %3141 = vmatmul.mubr.bf16.gmra.mrb[0].mxu0 %v2924
      %v3142 = vpop.f32.mrb[0].mxu0
      %v3143 = vadd.f32 0.0, %v3142
      %v3144 = vpop.f32.mrb[0].mxu0
      %v3145 = vpop.f32.mrb[0].mxu0
      %v3146 = vadd.f32 0.0, %v3145
      %v3147 = vpop.f32.mrb[0].mxu0
      %3148 = vmatprep.mubr.bf16.mxu0 0
      %3149 = vmatmul.mubr.bf16.gmra.mrb[0].mxu0 %v2927
      %v3150 = vpop.f32.mrb[0].mxu0
      %v3151 = vadd.f32 0.0, %v3150
      %v3152 = vpop.f32.mrb[0].mxu0
      %v3153 = vpop.f32.mrb[0].mxu0
      %v3154 = vadd.f32 0.0, %v3153
      %v3155 = vpop.f32.mrb[0].mxu0
      %3156 = vdwg.mxu0
      %v3157 = vadd.f32 %v2735, %v2967
      %v3158 = vadd.f32 %v2736, %v2970
      %v3159 = vadd.f32 %v2737, %v2975
      %v3160 = vadd.f32 %v2738, %v2978
      %v3161 = vadd.f32 %v2739, %v2983
      %v3162 = vadd.f32 %v2740, %v2986
      %v3163 = vadd.f32 %v2741, %v2991
      %v3164 = vadd.f32 %v2742, %v2994
      %v3165 = vadd.f32 %v2743, %v2999
      %v3166 = vadd.f32 %v2744, %v3002
      %v3167 = vadd.f32 %v2745, %v3007
      %v3168 = vadd.f32 %v2746, %v3010
      %v3169 = vadd.f32 %v2747, %v3015
      %v3170 = vadd.f32 %v2748, %v3018
      %v3171 = vadd.f32 %v2749, %v3023
      %v3172 = vadd.f32 %v2750, %v3026
      %v3173 = vadd.f32 %v2751, %v3031
      %v3174 = vadd.f32 %v2752, %v3034
      %v3175 = vadd.f32 %v2753, %v3039
      %v3176 = vadd.f32 %v2754, %v3042
      %v3177 = vadd.f32 %v2755, %v3047
      %v3178 = vadd.f32 %v2756, %v3050
      %v3179 = vadd.f32 %v2757, %v3055
      %v3180 = vadd.f32 %v2758, %v3058
      %v3181 = vadd.f32 %v2759, %v3063
      %v3182 = vadd.f32 %v2760, %v3066
      %v3183 = vadd.f32 %v2761, %v3071
      %v3184 = vadd.f32 %v2762, %v3074
      %v3185 = vadd.f32 %v2763, %v3079
      %v3186 = vadd.f32 %v2764, %v3082
      %v3187 = vadd.f32 %v2765, %v3087
      %v3188 = vadd.f32 %v2766, %v3090
      %v3189 = vadd.f32 %v2767, %v3095
      %v3190 = vadd.f32 %v2768, %v3098
      %v3191 = vadd.f32 %v2769, %v3103
      %v3192 = vadd.f32 %v2770, %v3106
      %v3193 = vadd.f32 %v2771, %v3111
      %v3194 = vadd.f32 %v2772, %v3114
      %v3195 = vadd.f32 %v2773, %v3119
      %v3196 = vadd.f32 %v2774, %v3122
      %v3197 = vadd.f32 %v2775, %v3127
      %v3198 = vadd.f32 %v2776, %v3130
      %v3199 = vadd.f32 %v2777, %v3135
      %v3200 = vadd.f32 %v2778, %v3138
      %v3201 = vadd.f32 %v2779, %v3143
      %v3202 = vadd.f32 %v2780, %v3146
      %v3203 = vadd.f32 %v2781, %v3151
      %v3204 = vadd.f32 %v2782, %v3154
      %v3205 = vld [vmem:[#allocation2 + $0x38] sm:$0xff]
      %v3206 = vld [vmem:[#allocation2 + $0x40] sm:$0xff]
      %v3207 = vld [vmem:[#allocation2 + $0x48] sm:$0xff]
      %v3208 = vld [vmem:[#allocation2 + $0x50] sm:$0xff]
      %v3209 = vld [vmem:[#allocation2 + $0x58] sm:$0xff]
      %v3210 = vld [vmem:[#allocation2 + $0x60] sm:$0xff]
      %v3211 = vld [vmem:[#allocation2 + $0x68] sm:$0xff]
      %v3212 = vld [vmem:[#allocation2 + $0x70] sm:$0xff]
      %v3213 = vld [vmem:[#allocation2 + $0x78] sm:$0xff]
      %v3214 = vld [vmem:[#allocation2 + $0x80] sm:$0xff]
      %v3215 = vld [vmem:[#allocation2 + $0x88] sm:$0xff]
      %v3216 = vld [vmem:[#allocation2 + $0x90] sm:$0xff]
      %v3217 = vld [vmem:[#allocation2 + $0x98] sm:$0xff]
      %v3218 = vld [vmem:[#allocation2 + $0xa0] sm:$0xff]
      %v3219 = vld [vmem:[#allocation2 + $0xa8] sm:$0xff]
      %v3220 = vld [vmem:[#allocation2 + $0xb0] sm:$0xff]
      %v3221 = vld [vmem:[#allocation2 + $0xb8] sm:$0xff]
      %v3222 = vld [vmem:[#allocation2 + $0xc0] sm:$0xff]
      %v3223 = vld [vmem:[#allocation2 + $0xc8] sm:$0xff]
      %v3224 = vld [vmem:[#allocation2 + $0xd0] sm:$0xff]
      %v3225 = vld [vmem:[#allocation2 + $0xd8] sm:$0xff]
      %v3226 = vld [vmem:[#allocation2 + $0xe0] sm:$0xff]
      %v3227 = vld [vmem:[#allocation2 + $0xe8] sm:$0xff]
      %v3228 = vld [vmem:[#allocation2 + $0xf0] sm:$0xff]
      %v3229 = vld [vmem:[#allocation2 + $0xf8] sm:$0xff]
      %v3230 = vld [vmem:[#allocation2 + $0x100] sm:$0xff]
      %v3231 = vld [vmem:[#allocation2 + $0x108] sm:$0xff]
      %v3232 = vld [vmem:[#allocation2 + $0x110] sm:$0xff]
      %v3233 = vld [vmem:[#allocation2 + $0x118] sm:$0xff]
      %v3234 = vld [vmem:[#allocation2 + $0x120] sm:$0xff]
      %v3235 = vld [vmem:[#allocation2 + $0x128] sm:$0xff]
      %v3236 = vld [vmem:[#allocation2 + $0x130] sm:$0xff]
      %v3237 = vld [vmem:[#allocation2 + $0x138] sm:$0xff]
      %v3238 = vld [vmem:[#allocation2 + $0x140] sm:$0xff]
      %v3239 = vld [vmem:[#allocation2 + $0x148] sm:$0xff]
      %v3240 = vld [vmem:[#allocation2 + $0x150] sm:$0xff]
      %v3241 = vld [vmem:[#allocation2 + $0x158] sm:$0xff]
      %v3242 = vld [vmem:[#allocation2 + $0x160] sm:$0xff]
      %v3243 = vld [vmem:[#allocation2 + $0x168] sm:$0xff]
      %v3244 = vld [vmem:[#allocation2 + $0x170] sm:$0xff]
      %v3245 = vld [vmem:[#allocation2 + $0x178] sm:$0xff]
      %v3246 = vld [vmem:[#allocation2 + $0x180] sm:$0xff]
      %v3247 = vld [vmem:[#allocation2 + $0x188] sm:$0xff]
      %v3248 = vld [vmem:[#allocation2 + $0x190] sm:$0xff]
      %v3249 = vld [vmem:[#allocation2 + $0x198] sm:$0xff]
      %v3250 = vld [vmem:[#allocation2 + $0x1a0] sm:$0xff]
      %v3251 = vld [vmem:[#allocation2 + $0x1a8] sm:$0xff]
      %v3252 = vld [vmem:[#allocation2 + $0x1b0] sm:$0xff]
      %v3253 = vpack.c.bf16 %v3206, %v3205
      %v3254 = vpack.c.bf16 %v3208, %v3207
      %v3255 = vpack.c.bf16 %v3210, %v3209
      %v3256 = vpack.c.bf16 %v3212, %v3211
      %v3257 = vpack.c.bf16 %v3214, %v3213
      %v3258 = vpack.c.bf16 %v3216, %v3215
      %v3259 = vpack.c.bf16 %v3218, %v3217
      %v3260 = vpack.c.bf16 %v3220, %v3219
      %v3261 = vpack.c.bf16 %v3222, %v3221
      %v3262 = vpack.c.bf16 %v3224, %v3223
      %v3263 = vpack.c.bf16 %v3226, %v3225
      %v3264 = vpack.c.bf16 %v3228, %v3227
      %v3265 = vpack.c.bf16 %v3230, %v3229
      %v3266 = vpack.c.bf16 %v3232, %v3231
      %v3267 = vpack.c.bf16 %v3234, %v3233
      %v3268 = vpack.c.bf16 %v3236, %v3235
      %v3269 = vpack.c.bf16 %v3238, %v3237
      %v3270 = vpack.c.bf16 %v3240, %v3239
      %v3271 = vpack.c.bf16 %v3242, %v3241
      %v3272 = vpack.c.bf16 %v3244, %v3243
      %v3273 = vpack.c.bf16 %v3246, %v3245
      %v3274 = vpack.c.bf16 %v3248, %v3247
      %v3275 = vpack.c.bf16 %v3250, %v3249
      %v3276 = vpack.c.bf16 %v3252, %v3251
      %s3277 = scalar_lea.vmem %s1, 28
      %v3278 = vld [vmem:[%s3277] sm:$0xf]
      %v3280 = vsel %vm210, %v3253, 0
      %v3283 = vsel %vm210, %v3254, 0
      %v3286 = vsel %vm210, %v3255, 0
      %v3289 = vsel %vm210, %v3256, 0
      %v3292 = vsel %vm210, %v3257, 0
      %v3295 = vsel %vm210, %v3258, 0
      %v3298 = vsel %vm210, %v3259, 0
      %v3301 = vsel %vm210, %v3260, 0
      %v3304 = vsel %vm210, %v3261, 0
      %v3307 = vsel %vm210, %v3262, 0
      %v3310 = vsel %vm210, %v3263, 0
      %v3313 = vsel %vm210, %v3264, 0
      %v3316 = vsel %vm210, %v3265, 0
      %v3319 = vsel %vm210, %v3266, 0
      %v3322 = vsel %vm210, %v3267, 0
      %v3325 = vsel %vm210, %v3268, 0
      %v3328 = vsel %vm210, %v3269, 0
      %v3331 = vsel %vm210, %v3270, 0
      %v3334 = vsel %vm210, %v3271, 0
      %v3337 = vsel %vm210, %v3272, 0
      %v3340 = vsel %vm210, %v3273, 0
      %v3343 = vsel %vm210, %v3274, 0
      %v3346 = vsel %vm210, %v3275, 0
      %v3349 = vsel %vm210, %v3276, 0
      %v3352 = vsel %vm566, %v3278, 0
      %3354 = vmatprep.subr.bf16.mxu0 0
      %3355 = vmatpush1.bf16.msra.mxu0 %v3352
      %3356 = vmatprep.subr.bf16.mxu0 0
      %3357 = vmatpush1.bf16.msra.mxu0 0
      %3358 = vmatprep.subr.bf16.mxu0 0
      %3359 = vmatpush1.bf16.msra.mxu0 0
      %3360 = vmatprep.subr.bf16.mxu0 0
      %3361 = vmatpush1.bf16.msra.mxu0 0
      %3362 = vmatprep.subr.bf16.mxu0 0
      %3363 = vmatpush1.bf16.msra.mxu0 0
      %3364 = vmatprep.subr.bf16.mxu0 0
      %3365 = vmatpush1.bf16.msra.mxu0 0
      %3366 = vmatprep.subr.bf16.mxu0 0
      %3367 = vmatpush1.bf16.msra.mxu0 0
      %3368 = vmatprep.subr.bf16.mxu0 0
      %3369 = vmatpush1.bf16.msra.mxu0 0
      %3370 = vmatprep.subr.bf16.mxu0 0
      %3371 = vmatpush1.bf16.msra.mxu0 0
      %3372 = vmatprep.subr.bf16.mxu0 0
      %3373 = vmatpush1.bf16.msra.mxu0 0
      %3374 = vmatprep.subr.bf16.mxu0 0
      %3375 = vmatpush1.bf16.msra.mxu0 0
      %3376 = vmatprep.subr.bf16.mxu0 0
      %3377 = vmatpush1.bf16.msra.mxu0 0
      %3378 = vmatprep.subr.bf16.mxu0 0
      %3379 = vmatpush1.bf16.msra.mxu0 0
      %3380 = vmatprep.subr.bf16.mxu0 0
      %3381 = vmatpush1.bf16.msra.mxu0 0
      %3382 = vmatprep.subr.bf16.mxu0 0
      %3383 = vmatpush1.bf16.msra.mxu0 0
      %3384 = vmatprep.subr.bf16.mxu0 0
      %3385 = vmatpush1.bf16.msra.mxu0 0
      %3386 = vmatprep.mubr.bf16.mxu0 0
      %3387 = vmatmul.mubr.bf16.gmra.mrb[0].mxu0 %v3280
      %v3388 = vpop.f32.mrb[0].mxu0
      %v3389 = vadd.f32 0.0, %v3388
      %v3390 = vpop.f32.mrb[0].mxu0
      %v3391 = vpop.f32.mrb[0].mxu0
      %v3392 = vadd.f32 0.0, %v3391
      %v3393 = vpop.f32.mrb[0].mxu0
      %3394 = vmatprep.mubr.bf16.mxu0 0
      %3395 = vmatmul.mubr.bf16.gmra.mrb[0].mxu0 %v3283
      %v3396 = vpop.f32.mrb[0].mxu0
      %v3397 = vadd.f32 0.0, %v3396
      %v3398 = vpop.f32.mrb[0].mxu0
      %v3399 = vpop.f32.mrb[0].mxu0
      %v3400 = vadd.f32 0.0, %v3399
      %v3401 = vpop.f32.mrb[0].mxu0
      %3402 = vmatprep.mubr.bf16.mxu0 0
      %3403 = vmatmul.mubr.bf16.gmra.mrb[0].mxu0 %v3286
      %v3404 = vpop.f32.mrb[0].mxu0
      %v3405 = vadd.f32 0.0, %v3404
      %v3406 = vpop.f32.mrb[0].mxu0
      %v3407 = vpop.f32.mrb[0].mxu0
      %v3408 = vadd.f32 0.0, %v3407
      %v3409 = vpop.f32.mrb[0].mxu0
      %3410 = vmatprep.mubr.bf16.mxu0 0
      %3411 = vmatmul.mubr.bf16.gmra.mrb[0].mxu0 %v3289
      %v3412 = vpop.f32.mrb[0].mxu0
      %v3413 = vadd.f32 0.0, %v3412
      %v3414 = vpop.f32.mrb[0].mxu0
      %v3415 = vpop.f32.mrb[0].mxu0
      %v3416 = vadd.f32 0.0, %v3415
      %v3417 = vpop.f32.mrb[0].mxu0
      %3418 = vmatprep.mubr.bf16.mxu0 0
      %3419 = vmatmul.mubr.bf16.gmra.mrb[0].mxu0 %v3292
      %v3420 = vpop.f32.mrb[0].mxu0
      %v3421 = vadd.f32 0.0, %v3420
      %v3422 = vpop.f32.mrb[0].mxu0
      %v3423 = vpop.f32.mrb[0].mxu0
      %v3424 = vadd.f32 0.0, %v3423
      %v3425 = vpop.f32.mrb[0].mxu0
      %3426 = vmatprep.mubr.bf16.mxu0 0
      %3427 = vmatmul.mubr.bf16.gmra.mrb[0].mxu0 %v3295
      %v3428 = vpop.f32.mrb[0].mxu0
      %v3429 = vadd.f32 0.0, %v3428
      %v3430 = vpop.f32.mrb[0].mxu0
      %v3431 = vpop.f32.mrb[0].mxu0
      %v3432 = vadd.f32 0.0, %v3431
      %v3433 = vpop.f32.mrb[0].mxu0
      %3434 = vmatprep.mubr.bf16.mxu0 0
      %3435 = vmatmul.mubr.bf16.gmra.mrb[0].mxu0 %v3298
      %v3436 = vpop.f32.mrb[0].mxu0
      %v3437 = vadd.f32 0.0, %v3436
      %v3438 = vpop.f32.mrb[0].mxu0
      %v3439 = vpop.f32.mrb[0].mxu0
      %v3440 = vadd.f32 0.0, %v3439
      %v3441 = vpop.f32.mrb[0].mxu0
      %3442 = vmatprep.mubr.bf16.mxu0 0
      %3443 = vmatmul.mubr.bf16.gmra.mrb[0].mxu0 %v3301
      %v3444 = vpop.f32.mrb[0].mxu0
      %v3445 = vadd.f32 0.0, %v3444
      %v3446 = vpop.f32.mrb[0].mxu0
      %v3447 = vpop.f32.mrb[0].mxu0
      %v3448 = vadd.f32 0.0, %v3447
      %v3449 = vpop.f32.mrb[0].mxu0
      %3450 = vmatprep.mubr.bf16.mxu0 0
      %3451 = vmatmul.mubr.bf16.gmra.mrb[0].mxu0 %v3304
      %v3452 = vpop.f32.mrb[0].mxu0
      %v3453 = vadd.f32 0.0, %v3452
      %v3454 = vpop.f32.mrb[0].mxu0
      %v3455 = vpop.f32.mrb[0].mxu0
      %v3456 = vadd.f32 0.0, %v3455
      %v3457 = vpop.f32.mrb[0].mxu0
      %3458 = vmatprep.mubr.bf16.mxu0 0
      %3459 = vmatmul.mubr.bf16.gmra.mrb[0].mxu0 %v3307
      %v3460 = vpop.f32.mrb[0].mxu0
      %v3461 = vadd.f32 0.0, %v3460
      %v3462 = vpop.f32.mrb[0].mxu0
      %v3463 = vpop.f32.mrb[0].mxu0
      %v3464 = vadd.f32 0.0, %v3463
      %v3465 = vpop.f32.mrb[0].mxu0
      %3466 = vmatprep.mubr.bf16.mxu0 0
      %3467 = vmatmul.mubr.bf16.gmra.mrb[0].mxu0 %v3310
      %v3468 = vpop.f32.mrb[0].mxu0
      %v3469 = vadd.f32 0.0, %v3468
      %v3470 = vpop.f32.mrb[0].mxu0
      %v3471 = vpop.f32.mrb[0].mxu0
      %v3472 = vadd.f32 0.0, %v3471
      %v3473 = vpop.f32.mrb[0].mxu0
      %3474 = vmatprep.mubr.bf16.mxu0 0
      %3475 = vmatmul.mubr.bf16.gmra.mrb[0].mxu0 %v3313
      %v3476 = vpop.f32.mrb[0].mxu0
      %v3477 = vadd.f32 0.0, %v3476
      %v3478 = vpop.f32.mrb[0].mxu0
      %v3479 = vpop.f32.mrb[0].mxu0
      %v3480 = vadd.f32 0.0, %v3479
      %v3481 = vpop.f32.mrb[0].mxu0
      %3482 = vmatprep.mubr.bf16.mxu0 0
      %3483 = vmatmul.mubr.bf16.gmra.mrb[0].mxu0 %v3316
      %v3484 = vpop.f32.mrb[0].mxu0
      %v3485 = vadd.f32 0.0, %v3484
      %v3486 = vpop.f32.mrb[0].mxu0
      %v3487 = vpop.f32.mrb[0].mxu0
      %v3488 = vadd.f32 0.0, %v3487
      %v3489 = vpop.f32.mrb[0].mxu0
      %3490 = vmatprep.mubr.bf16.mxu0 0
      %3491 = vmatmul.mubr.bf16.gmra.mrb[0].mxu0 %v3319
      %v3492 = vpop.f32.mrb[0].mxu0
      %v3493 = vadd.f32 0.0, %v3492
      %v3494 = vpop.f32.mrb[0].mxu0
      %v3495 = vpop.f32.mrb[0].mxu0
      %v3496 = vadd.f32 0.0, %v3495
      %v3497 = vpop.f32.mrb[0].mxu0
      %3498 = vmatprep.mubr.bf16.mxu0 0
      %3499 = vmatmul.mubr.bf16.gmra.mrb[0].mxu0 %v3322
      %v3500 = vpop.f32.mrb[0].mxu0
      %v3501 = vadd.f32 0.0, %v3500
      %v3502 = vpop.f32.mrb[0].mxu0
      %v3503 = vpop.f32.mrb[0].mxu0
      %v3504 = vadd.f32 0.0, %v3503
      %v3505 = vpop.f32.mrb[0].mxu0
      %3506 = vmatprep.mubr.bf16.mxu0 0
      %3507 = vmatmul.mubr.bf16.gmra.mrb[0].mxu0 %v3325
      %v3508 = vpop.f32.mrb[0].mxu0
      %v3509 = vadd.f32 0.0, %v3508
      %v3510 = vpop.f32.mrb[0].mxu0
      %v3511 = vpop.f32.mrb[0].mxu0
      %v3512 = vadd.f32 0.0, %v3511
      %v3513 = vpop.f32.mrb[0].mxu0
      %3514 = vmatprep.mubr.bf16.mxu0 0
      %3515 = vmatmul.mubr.bf16.gmra.mrb[0].mxu0 %v3328
      %v3516 = vpop.f32.mrb[0].mxu0
      %v3517 = vadd.f32 0.0, %v3516
      %v3518 = vpop.f32.mrb[0].mxu0
      %v3519 = vpop.f32.mrb[0].mxu0
      %v3520 = vadd.f32 0.0, %v3519
      %v3521 = vpop.f32.mrb[0].mxu0
      %3522 = vmatprep.mubr.bf16.mxu0 0
      %3523 = vmatmul.mubr.bf16.gmra.mrb[0].mxu0 %v3331
      %v3524 = vpop.f32.mrb[0].mxu0
      %v3525 = vadd.f32 0.0, %v3524
      %v3526 = vpop.f32.mrb[0].mxu0
      %v3527 = vpop.f32.mrb[0].mxu0
      %v3528 = vadd.f32 0.0, %v3527
      %v3529 = vpop.f32.mrb[0].mxu0
      %3530 = vmatprep.mubr.bf16.mxu0 0
      %3531 = vmatmul.mubr.bf16.gmra.mrb[0].mxu0 %v3334
      %v3532 = vpop.f32.mrb[0].mxu0
      %v3533 = vadd.f32 0.0, %v3532
      %v3534 = vpop.f32.mrb[0].mxu0
      %v3535 = vpop.f32.mrb[0].mxu0
      %v3536 = vadd.f32 0.0, %v3535
      %v3537 = vpop.f32.mrb[0].mxu0
      %3538 = vmatprep.mubr.bf16.mxu0 0
      %3539 = vmatmul.mubr.bf16.gmra.mrb[0].mxu0 %v3337
      %v3540 = vpop.f32.mrb[0].mxu0
      %v3541 = vadd.f32 0.0, %v3540
      %v3542 = vpop.f32.mrb[0].mxu0
      %v3543 = vpop.f32.mrb[0].mxu0
      %v3544 = vadd.f32 0.0, %v3543
      %v3545 = vpop.f32.mrb[0].mxu0
      %3546 = vmatprep.mubr.bf16.mxu0 0
      %3547 = vmatmul.mubr.bf16.gmra.mrb[0].mxu0 %v3340
      %v3548 = vpop.f32.mrb[0].mxu0
      %v3549 = vadd.f32 0.0, %v3548
      %v3550 = vpop.f32.mrb[0].mxu0
      %v3551 = vpop.f32.mrb[0].mxu0
      %v3552 = vadd.f32 0.0, %v3551
      %v3553 = vpop.f32.mrb[0].mxu0
      %3554 = vmatprep.mubr.bf16.mxu0 0
      %3555 = vmatmul.mubr.bf16.gmra.mrb[0].mxu0 %v3343
      %v3556 = vpop.f32.mrb[0].mxu0
      %v3557 = vadd.f32 0.0, %v3556
      %v3558 = vpop.f32.mrb[0].mxu0
      %v3559 = vpop.f32.mrb[0].mxu0
      %v3560 = vadd.f32 0.0, %v3559
      %v3561 = vpop.f32.mrb[0].mxu0
      %3562 = vmatprep.mubr.bf16.mxu0 0
      %3563 = vmatmul.mubr.bf16.gmra.mrb[0].mxu0 %v3346
      %v3564 = vpop.f32.mrb[0].mxu0
      %v3565 = vadd.f32 0.0, %v3564
      %v3566 = vpop.f32.mrb[0].mxu0
      %v3567 = vpop.f32.mrb[0].mxu0
      %v3568 = vadd.f32 0.0, %v3567
      %v3569 = vpop.f32.mrb[0].mxu0
      %3570 = vmatprep.mubr.bf16.mxu0 0
      %3571 = vmatmul.mubr.bf16.gmra.mrb[0].mxu0 %v3349
      %v3572 = vpop.f32.mrb[0].mxu0
      %v3573 = vadd.f32 0.0, %v3572
      %v3574 = vpop.f32.mrb[0].mxu0
      %v3575 = vpop.f32.mrb[0].mxu0
      %v3576 = vadd.f32 0.0, %v3575
      %v3577 = vpop.f32.mrb[0].mxu0
      %3578 = vdwg.mxu0
      %v3579 = vadd.f32 %v3157, %v3389
      %v3580 = vadd.f32 %v3158, %v3392
      %v3581 = vadd.f32 %v3159, %v3397
      %v3582 = vadd.f32 %v3160, %v3400
      %v3583 = vadd.f32 %v3161, %v3405
      %v3584 = vadd.f32 %v3162, %v3408
      %v3585 = vadd.f32 %v3163, %v3413
      %v3586 = vadd.f32 %v3164, %v3416
      %v3587 = vadd.f32 %v3165, %v3421
      %v3588 = vadd.f32 %v3166, %v3424
      %v3589 = vadd.f32 %v3167, %v3429
      %v3590 = vadd.f32 %v3168, %v3432
      %v3591 = vadd.f32 %v3169, %v3437
      %v3592 = vadd.f32 %v3170, %v3440
      %v3593 = vadd.f32 %v3171, %v3445
      %v3594 = vadd.f32 %v3172, %v3448
      %v3595 = vadd.f32 %v3173, %v3453
      %v3596 = vadd.f32 %v3174, %v3456
      %v3597 = vadd.f32 %v3175, %v3461
      %v3598 = vadd.f32 %v3176, %v3464
      %v3599 = vadd.f32 %v3177, %v3469
      %v3600 = vadd.f32 %v3178, %v3472
      %v3601 = vadd.f32 %v3179, %v3477
      %v3602 = vadd.f32 %v3180, %v3480
      %v3603 = vadd.f32 %v3181, %v3485
      %v3604 = vadd.f32 %v3182, %v3488
      %v3605 = vadd.f32 %v3183, %v3493
      %v3606 = vadd.f32 %v3184, %v3496
      %v3607 = vadd.f32 %v3185, %v3501
      %v3608 = vadd.f32 %v3186, %v3504
      %v3609 = vadd.f32 %v3187, %v3509
      %v3610 = vadd.f32 %v3188, %v3512
      %v3611 = vadd.f32 %v3189, %v3517
      %v3612 = vadd.f32 %v3190, %v3520
      %v3613 = vadd.f32 %v3191, %v3525
      %v3614 = vadd.f32 %v3192, %v3528
      %v3615 = vadd.f32 %v3193, %v3533
      %v3616 = vadd.f32 %v3194, %v3536
      %v3617 = vadd.f32 %v3195, %v3541
      %v3618 = vadd.f32 %v3196, %v3544
      %v3619 = vadd.f32 %v3197, %v3549
      %v3620 = vadd.f32 %v3198, %v3552
      %v3621 = vadd.f32 %v3199, %v3557
      %v3622 = vadd.f32 %v3200, %v3560
      %v3623 = vadd.f32 %v3201, %v3565
      %v3624 = vadd.f32 %v3202, %v3568
      %v3625 = vadd.f32 %v3203, %v3573
      %v3626 = vadd.f32 %v3204, %v3576
      %v3627 = vld [vmem:[#allocation2 + $0x39] sm:$0xff]
      %v3628 = vld [vmem:[#allocation2 + $0x41] sm:$0xff]
      %v3629 = vld [vmem:[#allocation2 + $0x49] sm:$0xff]
      %v3630 = vld [vmem:[#allocation2 + $0x51] sm:$0xff]
      %v3631 = vld [vmem:[#allocation2 + $0x59] sm:$0xff]
      %v3632 = vld [vmem:[#allocation2 + $0x61] sm:$0xff]
      %v3633 = vld [vmem:[#allocation2 + $0x69] sm:$0xff]
      %v3634 = vld [vmem:[#allocation2 + $0x71] sm:$0xff]
      %v3635 = vld [vmem:[#allocation2 + $0x79] sm:$0xff]
      %v3636 = vld [vmem:[#allocation2 + $0x81] sm:$0xff]
      %v3637 = vld [vmem:[#allocation2 + $0x89] sm:$0xff]
      %v3638 = vld [vmem:[#allocation2 + $0x91] sm:$0xff]
      %v3639 = vld [vmem:[#allocation2 + $0x99] sm:$0xff]
      %v3640 = vld [vmem:[#allocation2 + $0xa1] sm:$0xff]
      %v3641 = vld [vmem:[#allocation2 + $0xa9] sm:$0xff]
      %v3642 = vld [vmem:[#allocation2 + $0xb1] sm:$0xff]
      %v3643 = vld [vmem:[#allocation2 + $0xb9] sm:$0xff]
      %v3644 = vld [vmem:[#allocation2 + $0xc1] sm:$0xff]
      %v3645 = vld [vmem:[#allocation2 + $0xc9] sm:$0xff]
      %v3646 = vld [vmem:[#allocation2 + $0xd1] sm:$0xff]
      %v3647 = vld [vmem:[#allocation2 + $0xd9] sm:$0xff]
      %v3648 = vld [vmem:[#allocation2 + $0xe1] sm:$0xff]
      %v3649 = vld [vmem:[#allocation2 + $0xe9] sm:$0xff]
      %v3650 = vld [vmem:[#allocation2 + $0xf1] sm:$0xff]
      %v3651 = vld [vmem:[#allocation2 + $0xf9] sm:$0xff]
      %v3652 = vld [vmem:[#allocation2 + $0x101] sm:$0xff]
      %v3653 = vld [vmem:[#allocation2 + $0x109] sm:$0xff]
      %v3654 = vld [vmem:[#allocation2 + $0x111] sm:$0xff]
      %v3655 = vld [vmem:[#allocation2 + $0x119] sm:$0xff]
      %v3656 = vld [vmem:[#allocation2 + $0x121] sm:$0xff]
      %v3657 = vld [vmem:[#allocation2 + $0x129] sm:$0xff]
      %v3658 = vld [vmem:[#allocation2 + $0x131] sm:$0xff]
      %v3659 = vld [vmem:[#allocation2 + $0x139] sm:$0xff]
      %v3660 = vld [vmem:[#allocation2 + $0x141] sm:$0xff]
      %v3661 = vld [vmem:[#allocation2 + $0x149] sm:$0xff]
      %v3662 = vld [vmem:[#allocation2 + $0x151] sm:$0xff]
      %v3663 = vld [vmem:[#allocation2 + $0x159] sm:$0xff]
      %v3664 = vld [vmem:[#allocation2 + $0x161] sm:$0xff]
      %v3665 = vld [vmem:[#allocation2 + $0x169] sm:$0xff]
      %v3666 = vld [vmem:[#allocation2 + $0x171] sm:$0xff]
      %v3667 = vld [vmem:[#allocation2 + $0x179] sm:$0xff]
      %v3668 = vld [vmem:[#allocation2 + $0x181] sm:$0xff]
      %v3669 = vld [vmem:[#allocation2 + $0x189] sm:$0xff]
      %v3670 = vld [vmem:[#allocation2 + $0x191] sm:$0xff]
      %v3671 = vld [vmem:[#allocation2 + $0x199] sm:$0xff]
      %v3672 = vld [vmem:[#allocation2 + $0x1a1] sm:$0xff]
      %v3673 = vld [vmem:[#allocation2 + $0x1a9] sm:$0xff]
      %v3674 = vld [vmem:[#allocation2 + $0x1b1] sm:$0xff]
      %v3675 = vpack.c.bf16 %v3628, %v3627
      %v3676 = vpack.c.bf16 %v3630, %v3629
      %v3677 = vpack.c.bf16 %v3632, %v3631
      %v3678 = vpack.c.bf16 %v3634, %v3633
      %v3679 = vpack.c.bf16 %v3636, %v3635
      %v3680 = vpack.c.bf16 %v3638, %v3637
      %v3681 = vpack.c.bf16 %v3640, %v3639
      %v3682 = vpack.c.bf16 %v3642, %v3641
      %v3683 = vpack.c.bf16 %v3644, %v3643
      %v3684 = vpack.c.bf16 %v3646, %v3645
      %v3685 = vpack.c.bf16 %v3648, %v3647
      %v3686 = vpack.c.bf16 %v3650, %v3649
      %v3687 = vpack.c.bf16 %v3652, %v3651
      %v3688 = vpack.c.bf16 %v3654, %v3653
      %v3689 = vpack.c.bf16 %v3656, %v3655
      %v3690 = vpack.c.bf16 %v3658, %v3657
      %v3691 = vpack.c.bf16 %v3660, %v3659
      %v3692 = vpack.c.bf16 %v3662, %v3661
      %v3693 = vpack.c.bf16 %v3664, %v3663
      %v3694 = vpack.c.bf16 %v3666, %v3665
      %v3695 = vpack.c.bf16 %v3668, %v3667
      %v3696 = vpack.c.bf16 %v3670, %v3669
      %v3697 = vpack.c.bf16 %v3672, %v3671
      %v3698 = vpack.c.bf16 %v3674, %v3673
      %s3699 = scalar_lea.vmem %s1, 32
      %v3700 = vld [vmem:[%s3699] sm:$0xf]
      %v3702 = vsel %vm210, %v3675, 0
      %v3705 = vsel %vm210, %v3676, 0
      %v3708 = vsel %vm210, %v3677, 0
      %v3711 = vsel %vm210, %v3678, 0
      %v3714 = vsel %vm210, %v3679, 0
      %v3717 = vsel %vm210, %v3680, 0
      %v3720 = vsel %vm210, %v3681, 0
      %v3723 = vsel %vm210, %v3682, 0
      %v3726 = vsel %vm210, %v3683, 0
      %v3729 = vsel %vm210, %v3684, 0
      %v3732 = vsel %vm210, %v3685, 0
      %v3735 = vsel %vm210, %v3686, 0
      %v3738 = vsel %vm210, %v3687, 0
      %v3741 = vsel %vm210, %v3688, 0
      %v3744 = vsel %vm210, %v3689, 0
      %v3747 = vsel %vm210, %v3690, 0
      %v3750 = vsel %vm210, %v3691, 0
      %v3753 = vsel %vm210, %v3692, 0
      %v3756 = vsel %vm210, %v3693, 0
      %v3759 = vsel %vm210, %v3694, 0
      %v3762 = vsel %vm210, %v3695, 0
      %v3765 = vsel %vm210, %v3696, 0
      %v3768 = vsel %vm210, %v3697, 0
      %v3771 = vsel %vm210, %v3698, 0
      %v3774 = vsel %vm566, %v3700, 0
      %3776 = vmatprep.subr.bf16.mxu0 0
      %3777 = vmatpush1.bf16.msra.mxu0 %v3774
      %3778 = vmatprep.subr.bf16.mxu0 0
      %3779 = vmatpush1.bf16.msra.mxu0 0
      %3780 = vmatprep.subr.bf16.mxu0 0
      %3781 = vmatpush1.bf16.msra.mxu0 0
      %3782 = vmatprep.subr.bf16.mxu0 0
      %3783 = vmatpush1.bf16.msra.mxu0 0
      %3784 = vmatprep.subr.bf16.mxu0 0
      %3785 = vmatpush1.bf16.msra.mxu0 0
      %3786 = vmatprep.subr.bf16.mxu0 0
      %3787 = vmatpush1.bf16.msra.mxu0 0
      %3788 = vmatprep.subr.bf16.mxu0 0
      %3789 = vmatpush1.bf16.msra.mxu0 0
      %3790 = vmatprep.subr.bf16.mxu0 0
      %3791 = vmatpush1.bf16.msra.mxu0 0
      %3792 = vmatprep.subr.bf16.mxu0 0
      %3793 = vmatpush1.bf16.msra.mxu0 0
      %3794 = vmatprep.subr.bf16.mxu0 0
      %3795 = vmatpush1.bf16.msra.mxu0 0
      %3796 = vmatprep.subr.bf16.mxu0 0
      %3797 = vmatpush1.bf16.msra.mxu0 0
      %3798 = vmatprep.subr.bf16.mxu0 0
      %3799 = vmatpush1.bf16.msra.mxu0 0
      %3800 = vmatprep.subr.bf16.mxu0 0
      %3801 = vmatpush1.bf16.msra.mxu0 0
      %3802 = vmatprep.subr.bf16.mxu0 0
      %3803 = vmatpush1.bf16.msra.mxu0 0
      %3804 = vmatprep.subr.bf16.mxu0 0
      %3805 = vmatpush1.bf16.msra.mxu0 0
      %3806 = vmatprep.subr.bf16.mxu0 0
      %3807 = vmatpush1.bf16.msra.mxu0 0
      %3808 = vmatprep.mubr.bf16.mxu0 0
      %3809 = vmatmul.mubr.bf16.gmra.mrb[0].mxu0 %v3702
      %v3810 = vpop.f32.mrb[0].mxu0
      %v3811 = vadd.f32 0.0, %v3810
      %v3812 = vpop.f32.mrb[0].mxu0
      %v3813 = vpop.f32.mrb[0].mxu0
      %v3814 = vadd.f32 0.0, %v3813
      %v3815 = vpop.f32.mrb[0].mxu0
      %3816 = vmatprep.mubr.bf16.mxu0 0
      %3817 = vmatmul.mubr.bf16.gmra.mrb[0].mxu0 %v3705
      %v3818 = vpop.f32.mrb[0].mxu0
      %v3819 = vadd.f32 0.0, %v3818
      %v3820 = vpop.f32.mrb[0].mxu0
      %v3821 = vpop.f32.mrb[0].mxu0
      %v3822 = vadd.f32 0.0, %v3821
      %v3823 = vpop.f32.mrb[0].mxu0
      %3824 = vmatprep.mubr.bf16.mxu0 0
      %3825 = vmatmul.mubr.bf16.gmra.mrb[0].mxu0 %v3708
      %v3826 = vpop.f32.mrb[0].mxu0
      %v3827 = vadd.f32 0.0, %v3826
      %v3828 = vpop.f32.mrb[0].mxu0
      %v3829 = vpop.f32.mrb[0].mxu0
      %v3830 = vadd.f32 0.0, %v3829
      %v3831 = vpop.f32.mrb[0].mxu0
      %3832 = vmatprep.mubr.bf16.mxu0 0
      %3833 = vmatmul.mubr.bf16.gmra.mrb[0].mxu0 %v3711
      %v3834 = vpop.f32.mrb[0].mxu0
      %v3835 = vadd.f32 0.0, %v3834
      %v3836 = vpop.f32.mrb[0].mxu0
      %v3837 = vpop.f32.mrb[0].mxu0
      %v3838 = vadd.f32 0.0, %v3837
      %v3839 = vpop.f32.mrb[0].mxu0
      %3840 = vmatprep.mubr.bf16.mxu0 0
      %3841 = vmatmul.mubr.bf16.gmra.mrb[0].mxu0 %v3714
      %v3842 = vpop.f32.mrb[0].mxu0
      %v3843 = vadd.f32 0.0, %v3842
      %v3844 = vpop.f32.mrb[0].mxu0
      %v3845 = vpop.f32.mrb[0].mxu0
      %v3846 = vadd.f32 0.0, %v3845
      %v3847 = vpop.f32.mrb[0].mxu0
      %3848 = vmatprep.mubr.bf16.mxu0 0
      %3849 = vmatmul.mubr.bf16.gmra.mrb[0].mxu0 %v3717
      %v3850 = vpop.f32.mrb[0].mxu0
      %v3851 = vadd.f32 0.0, %v3850
      %v3852 = vpop.f32.mrb[0].mxu0
      %v3853 = vpop.f32.mrb[0].mxu0
      %v3854 = vadd.f32 0.0, %v3853
      %v3855 = vpop.f32.mrb[0].mxu0
      %3856 = vmatprep.mubr.bf16.mxu0 0
      %3857 = vmatmul.mubr.bf16.gmra.mrb[0].mxu0 %v3720
      %v3858 = vpop.f32.mrb[0].mxu0
      %v3859 = vadd.f32 0.0, %v3858
      %v3860 = vpop.f32.mrb[0].mxu0
      %v3861 = vpop.f32.mrb[0].mxu0
      %v3862 = vadd.f32 0.0, %v3861
      %v3863 = vpop.f32.mrb[0].mxu0
      %3864 = vmatprep.mubr.bf16.mxu0 0
      %3865 = vmatmul.mubr.bf16.gmra.mrb[0].mxu0 %v3723
      %v3866 = vpop.f32.mrb[0].mxu0
      %v3867 = vadd.f32 0.0, %v3866
      %v3868 = vpop.f32.mrb[0].mxu0
      %v3869 = vpop.f32.mrb[0].mxu0
      %v3870 = vadd.f32 0.0, %v3869
      %v3871 = vpop.f32.mrb[0].mxu0
      %3872 = vmatprep.mubr.bf16.mxu0 0
      %3873 = vmatmul.mubr.bf16.gmra.mrb[0].mxu0 %v3726
      %v3874 = vpop.f32.mrb[0].mxu0
      %v3875 = vadd.f32 0.0, %v3874
      %v3876 = vpop.f32.mrb[0].mxu0
      %v3877 = vpop.f32.mrb[0].mxu0
      %v3878 = vadd.f32 0.0, %v3877
      %v3879 = vpop.f32.mrb[0].mxu0
      %3880 = vmatprep.mubr.bf16.mxu0 0
      %3881 = vmatmul.mubr.bf16.gmra.mrb[0].mxu0 %v3729
      %v3882 = vpop.f32.mrb[0].mxu0
      %v3883 = vadd.f32 0.0, %v3882
      %v3884 = vpop.f32.mrb[0].mxu0
      %v3885 = vpop.f32.mrb[0].mxu0
      %v3886 = vadd.f32 0.0, %v3885
      %v3887 = vpop.f32.mrb[0].mxu0
      %3888 = vmatprep.mubr.bf16.mxu0 0
      %3889 = vmatmul.mubr.bf16.gmra.mrb[0].mxu0 %v3732
      %v3890 = vpop.f32.mrb[0].mxu0
      %v3891 = vadd.f32 0.0, %v3890
      %v3892 = vpop.f32.mrb[0].mxu0
      %v3893 = vpop.f32.mrb[0].mxu0
      %v3894 = vadd.f32 0.0, %v3893
      %v3895 = vpop.f32.mrb[0].mxu0
      %3896 = vmatprep.mubr.bf16.mxu0 0
      %3897 = vmatmul.mubr.bf16.gmra.mrb[0].mxu0 %v3735
      %v3898 = vpop.f32.mrb[0].mxu0
      %v3899 = vadd.f32 0.0, %v3898
      %v3900 = vpop.f32.mrb[0].mxu0
      %v3901 = vpop.f32.mrb[0].mxu0
      %v3902 = vadd.f32 0.0, %v3901
      %v3903 = vpop.f32.mrb[0].mxu0
      %3904 = vmatprep.mubr.bf16.mxu0 0
      %3905 = vmatmul.mubr.bf16.gmra.mrb[0].mxu0 %v3738
      %v3906 = vpop.f32.mrb[0].mxu0
      %v3907 = vadd.f32 0.0, %v3906
      %v3908 = vpop.f32.mrb[0].mxu0
      %v3909 = vpop.f32.mrb[0].mxu0
      %v3910 = vadd.f32 0.0, %v3909
      %v3911 = vpop.f32.mrb[0].mxu0
      %3912 = vmatprep.mubr.bf16.mxu0 0
      %3913 = vmatmul.mubr.bf16.gmra.mrb[0].mxu0 %v3741
      %v3914 = vpop.f32.mrb[0].mxu0
      %v3915 = vadd.f32 0.0, %v3914
      %v3916 = vpop.f32.mrb[0].mxu0
      %v3917 = vpop.f32.mrb[0].mxu0
      %v3918 = vadd.f32 0.0, %v3917
      %v3919 = vpop.f32.mrb[0].mxu0
      %3920 = vmatprep.mubr.bf16.mxu0 0
      %3921 = vmatmul.mubr.bf16.gmra.mrb[0].mxu0 %v3744
      %v3922 = vpop.f32.mrb[0].mxu0
      %v3923 = vadd.f32 0.0, %v3922
      %v3924 = vpop.f32.mrb[0].mxu0
      %v3925 = vpop.f32.mrb[0].mxu0
      %v3926 = vadd.f32 0.0, %v3925
      %v3927 = vpop.f32.mrb[0].mxu0
      %3928 = vmatprep.mubr.bf16.mxu0 0
      %3929 = vmatmul.mubr.bf16.gmra.mrb[0].mxu0 %v3747
      %v3930 = vpop.f32.mrb[0].mxu0
      %v3931 = vadd.f32 0.0, %v3930
      %v3932 = vpop.f32.mrb[0].mxu0
      %v3933 = vpop.f32.mrb[0].mxu0
      %v3934 = vadd.f32 0.0, %v3933
      %v3935 = vpop.f32.mrb[0].mxu0
      %3936 = vmatprep.mubr.bf16.mxu0 0
      %3937 = vmatmul.mubr.bf16.gmra.mrb[0].mxu0 %v3750
      %v3938 = vpop.f32.mrb[0].mxu0
      %v3939 = vadd.f32 0.0, %v3938
      %v3940 = vpop.f32.mrb[0].mxu0
      %v3941 = vpop.f32.mrb[0].mxu0
      %v3942 = vadd.f32 0.0, %v3941
      %v3943 = vpop.f32.mrb[0].mxu0
      %3944 = vmatprep.mubr.bf16.mxu0 0
      %3945 = vmatmul.mubr.bf16.gmra.mrb[0].mxu0 %v3753
      %v3946 = vpop.f32.mrb[0].mxu0
      %v3947 = vadd.f32 0.0, %v3946
      %v3948 = vpop.f32.mrb[0].mxu0
      %v3949 = vpop.f32.mrb[0].mxu0
      %v3950 = vadd.f32 0.0, %v3949
      %v3951 = vpop.f32.mrb[0].mxu0
      %3952 = vmatprep.mubr.bf16.mxu0 0
      %3953 = vmatmul.mubr.bf16.gmra.mrb[0].mxu0 %v3756
      %v3954 = vpop.f32.mrb[0].mxu0
      %v3955 = vadd.f32 0.0, %v3954
      %v3956 = vpop.f32.mrb[0].mxu0
      %v3957 = vpop.f32.mrb[0].mxu0
      %v3958 = vadd.f32 0.0, %v3957
      %v3959 = vpop.f32.mrb[0].mxu0
      %3960 = vmatprep.mubr.bf16.mxu0 0
      %3961 = vmatmul.mubr.bf16.gmra.mrb[0].mxu0 %v3759
      %v3962 = vpop.f32.mrb[0].mxu0
      %v3963 = vadd.f32 0.0, %v3962
      %v3964 = vpop.f32.mrb[0].mxu0
      %v3965 = vpop.f32.mrb[0].mxu0
      %v3966 = vadd.f32 0.0, %v3965
      %v3967 = vpop.f32.mrb[0].mxu0
      %3968 = vmatprep.mubr.bf16.mxu0 0
      %3969 = vmatmul.mubr.bf16.gmra.mrb[0].mxu0 %v3762
      %v3970 = vpop.f32.mrb[0].mxu0
      %v3971 = vadd.f32 0.0, %v3970
      %v3972 = vpop.f32.mrb[0].mxu0
      %v3973 = vpop.f32.mrb[0].mxu0
      %v3974 = vadd.f32 0.0, %v3973
      %v3975 = vpop.f32.mrb[0].mxu0
      %3976 = vmatprep.mubr.bf16.mxu0 0
      %3977 = vmatmul.mubr.bf16.gmra.mrb[0].mxu0 %v3765
      %v3978 = vpop.f32.mrb[0].mxu0
      %v3979 = vadd.f32 0.0, %v3978
      %v3980 = vpop.f32.mrb[0].mxu0
      %v3981 = vpop.f32.mrb[0].mxu0
      %v3982 = vadd.f32 0.0, %v3981
      %v3983 = vpop.f32.mrb[0].mxu0
      %3984 = vmatprep.mubr.bf16.mxu0 0
      %3985 = vmatmul.mubr.bf16.gmra.mrb[0].mxu0 %v3768
      %v3986 = vpop.f32.mrb[0].mxu0
      %v3987 = vadd.f32 0.0, %v3986
      %v3988 = vpop.f32.mrb[0].mxu0
      %v3989 = vpop.f32.mrb[0].mxu0
      %v3990 = vadd.f32 0.0, %v3989
      %v3991 = vpop.f32.mrb[0].mxu0
      %3992 = vmatprep.mubr.bf16.mxu0 0
      %3993 = vmatmul.mubr.bf16.gmra.mrb[0].mxu0 %v3771
      %v3994 = vpop.f32.mrb[0].mxu0
      %v3995 = vadd.f32 0.0, %v3994
      %v3996 = vpop.f32.mrb[0].mxu0
      %v3997 = vpop.f32.mrb[0].mxu0
      %v3998 = vadd.f32 0.0, %v3997
      %v3999 = vpop.f32.mrb[0].mxu0
      %4000 = vdwg.mxu0
      %v4001 = vadd.f32 %v3579, %v3811
      %v4002 = vadd.f32 %v3580, %v3814
      %v4003 = vadd.f32 %v3581, %v3819
      %v4004 = vadd.f32 %v3582, %v3822
      %v4005 = vadd.f32 %v3583, %v3827
      %v4006 = vadd.f32 %v3584, %v3830
      %v4007 = vadd.f32 %v3585, %v3835
      %v4008 = vadd.f32 %v3586, %v3838
      %v4009 = vadd.f32 %v3587, %v3843
      %v4010 = vadd.f32 %v3588, %v3846
      %v4011 = vadd.f32 %v3589, %v3851
      %v4012 = vadd.f32 %v3590, %v3854
      %v4013 = vadd.f32 %v3591, %v3859
      %v4014 = vadd.f32 %v3592, %v3862
      %v4015 = vadd.f32 %v3593, %v3867
      %v4016 = vadd.f32 %v3594, %v3870
      %v4017 = vadd.f32 %v3595, %v3875
      %v4018 = vadd.f32 %v3596, %v3878
      %v4019 = vadd.f32 %v3597, %v3883
      %v4020 = vadd.f32 %v3598, %v3886
      %v4021 = vadd.f32 %v3599, %v3891
      %v4022 = vadd.f32 %v3600, %v3894
      %v4023 = vadd.f32 %v3601, %v3899
      %v4024 = vadd.f32 %v3602, %v3902
      %v4025 = vadd.f32 %v3603, %v3907
      %v4026 = vadd.f32 %v3604, %v3910
      %v4027 = vadd.f32 %v3605, %v3915
      %v4028 = vadd.f32 %v3606, %v3918
      %v4029 = vadd.f32 %v3607, %v3923
      %v4030 = vadd.f32 %v3608, %v3926
      %v4031 = vadd.f32 %v3609, %v3931
      %v4032 = vadd.f32 %v3610, %v3934
      %v4033 = vadd.f32 %v3611, %v3939
      %v4034 = vadd.f32 %v3612, %v3942
      %v4035 = vadd.f32 %v3613, %v3947
      %v4036 = vadd.f32 %v3614, %v3950
      %v4037 = vadd.f32 %v3615, %v3955
      %v4038 = vadd.f32 %v3616, %v3958
      %v4039 = vadd.f32 %v3617, %v3963
      %v4040 = vadd.f32 %v3618, %v3966
      %v4041 = vadd.f32 %v3619, %v3971
      %v4042 = vadd.f32 %v3620, %v3974
      %v4043 = vadd.f32 %v3621, %v3979
      %v4044 = vadd.f32 %v3622, %v3982
      %v4045 = vadd.f32 %v3623, %v3987
      %v4046 = vadd.f32 %v3624, %v3990
      %v4047 = vadd.f32 %v3625, %v3995
      %v4048 = vadd.f32 %v3626, %v3998
      %4050 = vset.pattern.permute.xlu0 0
      %4051 = vperm.xlu0 %4050, %v299
      %v4052 = vpop.permute.xlu0 %4051
      %4055 = vset.pattern.permute.xlu0 0
      %4056 = vperm.xlu0 %4055, %v300
      %v4057 = vpop.permute.xlu0 %4056
      %4060 = vset.pattern.permute.xlu0 0
      %4061 = vperm.xlu0 %4060, %v301
      %v4062 = vpop.permute.xlu0 %4061
      %4065 = vset.pattern.permute.xlu0 0
      %4066 = vperm.xlu0 %4065, %v302
      %v4067 = vpop.permute.xlu0 %4066
      %4070 = vset.pattern.permute.xlu0 0
      %4071 = vperm.xlu0 %4070, %v303
      %v4072 = vpop.permute.xlu0 %4071
      %4075 = vset.pattern.permute.xlu0 0
      %4076 = vperm.xlu0 %4075, %v304
      %v4077 = vpop.permute.xlu0 %4076
      %4080 = vset.pattern.permute.xlu0 0
      %4081 = vperm.xlu0 %4080, %v305
      %v4082 = vpop.permute.xlu0 %4081
      %4085 = vset.pattern.permute.xlu0 0
      %4086 = vperm.xlu0 %4085, %v306
      %v4087 = vpop.permute.xlu0 %4086
      %4090 = vset.pattern.permute.xlu0 0
      %4091 = vperm.xlu0 %4090, %v307
      %v4092 = vpop.permute.xlu0 %4091
      %4095 = vset.pattern.permute.xlu0 0
      %4096 = vperm.xlu0 %4095, %v308
      %v4097 = vpop.permute.xlu0 %4096
      %4100 = vset.pattern.permute.xlu0 0
      %4101 = vperm.xlu0 %4100, %v309
      %v4102 = vpop.permute.xlu0 %4101
      %4105 = vset.pattern.permute.xlu0 0
      %4106 = vperm.xlu0 %4105, %v310
      %v4107 = vpop.permute.xlu0 %4106
      %4110 = vset.pattern.permute.xlu0 0
      %4111 = vperm.xlu0 %4110, %v311
      %v4112 = vpop.permute.xlu0 %4111
      %4115 = vset.pattern.permute.xlu0 0
      %4116 = vperm.xlu0 %4115, %v312
      %v4117 = vpop.permute.xlu0 %4116
      %4120 = vset.pattern.permute.xlu0 0
      %4121 = vperm.xlu0 %4120, %v313
      %v4122 = vpop.permute.xlu0 %4121
      %4125 = vset.pattern.permute.xlu0 0
      %4126 = vperm.xlu0 %4125, %v314
      %v4127 = vpop.permute.xlu0 %4126
      %4130 = vset.pattern.permute.xlu0 0
      %4131 = vperm.xlu0 %4130, %v315
      %v4132 = vpop.permute.xlu0 %4131
      %4135 = vset.pattern.permute.xlu0 0
      %4136 = vperm.xlu0 %4135, %v316
      %v4137 = vpop.permute.xlu0 %4136
      %4140 = vset.pattern.permute.xlu0 0
      %4141 = vperm.xlu0 %4140, %v317
      %v4142 = vpop.permute.xlu0 %4141
      %4145 = vset.pattern.permute.xlu0 0
      %4146 = vperm.xlu0 %4145, %v318
      %v4147 = vpop.permute.xlu0 %4146
      %4150 = vset.pattern.permute.xlu0 0
      %4151 = vperm.xlu0 %4150, %v319
      %v4152 = vpop.permute.xlu0 %4151
      %4155 = vset.pattern.permute.xlu0 0
      %4156 = vperm.xlu0 %4155, %v320
      %v4157 = vpop.permute.xlu0 %4156
      %4160 = vset.pattern.permute.xlu0 0
      %4161 = vperm.xlu0 %4160, %v321
      %v4162 = vpop.permute.xlu0 %4161
      %4165 = vset.pattern.permute.xlu0 0
      %4166 = vperm.xlu0 %4165, %v322
      %v4167 = vpop.permute.xlu0 %4166
      %4170 = vset.pattern.permute.xlu0 0
      %4171 = vperm.xlu0 %4170, %v323
      %v4172 = vpop.permute.xlu0 %4171
      %4175 = vset.pattern.permute.xlu0 0
      %4176 = vperm.xlu0 %4175, %v324
      %v4177 = vpop.permute.xlu0 %4176
      %4180 = vset.pattern.permute.xlu0 0
      %4181 = vperm.xlu0 %4180, %v325
      %v4182 = vpop.permute.xlu0 %4181
      %4185 = vset.pattern.permute.xlu0 0
      %4186 = vperm.xlu0 %4185, %v326
      %v4187 = vpop.permute.xlu0 %4186
      %4190 = vset.pattern.permute.xlu0 0
      %4191 = vperm.xlu0 %4190, %v327
      %v4192 = vpop.permute.xlu0 %4191
      %4195 = vset.pattern.permute.xlu0 0
      %4196 = vperm.xlu0 %4195, %v328
      %v4197 = vpop.permute.xlu0 %4196
      %4200 = vset.pattern.permute.xlu0 0
      %4201 = vperm.xlu0 %4200, %v329
      %v4202 = vpop.permute.xlu0 %4201
      %4205 = vset.pattern.permute.xlu0 0
      %4206 = vperm.xlu0 %4205, %v330
      %v4207 = vpop.permute.xlu0 %4206
      %4210 = vset.pattern.permute.xlu0 0
      %4211 = vperm.xlu0 %4210, %v331
      %v4212 = vpop.permute.xlu0 %4211
      %4215 = vset.pattern.permute.xlu0 0
      %4216 = vperm.xlu0 %4215, %v332
      %v4217 = vpop.permute.xlu0 %4216
      %4220 = vset.pattern.permute.xlu0 0
      %4221 = vperm.xlu0 %4220, %v333
      %v4222 = vpop.permute.xlu0 %4221
      %4225 = vset.pattern.permute.xlu0 0
      %4226 = vperm.xlu0 %4225, %v334
      %v4227 = vpop.permute.xlu0 %4226
      %4230 = vset.pattern.permute.xlu0 0
      %4231 = vperm.xlu0 %4230, %v335
      %v4232 = vpop.permute.xlu0 %4231
      %4235 = vset.pattern.permute.xlu0 0
      %4236 = vperm.xlu0 %4235, %v336
      %v4237 = vpop.permute.xlu0 %4236
      %4240 = vset.pattern.permute.xlu0 0
      %4241 = vperm.xlu0 %4240, %v337
      %v4242 = vpop.permute.xlu0 %4241
      %4245 = vset.pattern.permute.xlu0 0
      %4246 = vperm.xlu0 %4245, %v338
      %v4247 = vpop.permute.xlu0 %4246
      %4250 = vset.pattern.permute.xlu0 0
      %4251 = vperm.xlu0 %4250, %v339
      %v4252 = vpop.permute.xlu0 %4251
      %4255 = vset.pattern.permute.xlu0 0
      %4256 = vperm.xlu0 %4255, %v340
      %v4257 = vpop.permute.xlu0 %4256
      %4260 = vset.pattern.permute.xlu0 0
      %4261 = vperm.xlu0 %4260, %v341
      %v4262 = vpop.permute.xlu0 %4261
      %4265 = vset.pattern.permute.xlu0 0
      %4266 = vperm.xlu0 %4265, %v342
      %v4267 = vpop.permute.xlu0 %4266
      %4270 = vset.pattern.permute.xlu0 0
      %4271 = vperm.xlu0 %4270, %v343
      %v4272 = vpop.permute.xlu0 %4271
      %4275 = vset.pattern.permute.xlu0 0
      %4276 = vperm.xlu0 %4275, %v344
      %v4277 = vpop.permute.xlu0 %4276
      %4280 = vset.pattern.permute.xlu0 0
      %4281 = vperm.xlu0 %4280, %v345
      %v4282 = vpop.permute.xlu0 %4281
      %4285 = vset.pattern.permute.xlu0 0
      %4286 = vperm.xlu0 %4285, %v346
      %v4287 = vpop.permute.xlu0 %4286
      %v4289 = vmul.f32 %v4001, %v4052
      %v4290 = vmul.f32 %v4002, %v4057
      %v4291 = vmul.f32 %v4003, %v4062
      %v4292 = vmul.f32 %v4004, %v4067
      %v4293 = vmul.f32 %v4005, %v4072
      %v4294 = vmul.f32 %v4006, %v4077
      %v4295 = vmul.f32 %v4007, %v4082
      %v4296 = vmul.f32 %v4008, %v4087
      %v4297 = vmul.f32 %v4009, %v4092
      %v4298 = vmul.f32 %v4010, %v4097
      %v4299 = vmul.f32 %v4011, %v4102
      %v4300 = vmul.f32 %v4012, %v4107
      %v4301 = vmul.f32 %v4013, %v4112
      %v4302 = vmul.f32 %v4014, %v4117
      %v4303 = vmul.f32 %v4015, %v4122
      %v4304 = vmul.f32 %v4016, %v4127
      %v4305 = vmul.f32 %v4017, %v4132
      %v4306 = vmul.f32 %v4018, %v4137
      %v4307 = vmul.f32 %v4019, %v4142
      %v4308 = vmul.f32 %v4020, %v4147
      %v4309 = vmul.f32 %v4021, %v4152
      %v4310 = vmul.f32 %v4022, %v4157
      %v4311 = vmul.f32 %v4023, %v4162
      %v4312 = vmul.f32 %v4024, %v4167
      %v4313 = vmul.f32 %v4025, %v4172
      %v4314 = vmul.f32 %v4026, %v4177
      %v4315 = vmul.f32 %v4027, %v4182
      %v4316 = vmul.f32 %v4028, %v4187
      %v4317 = vmul.f32 %v4029, %v4192
      %v4318 = vmul.f32 %v4030, %v4197
      %v4319 = vmul.f32 %v4031, %v4202
      %v4320 = vmul.f32 %v4032, %v4207
      %v4321 = vmul.f32 %v4033, %v4212
      %v4322 = vmul.f32 %v4034, %v4217
      %v4323 = vmul.f32 %v4035, %v4222
      %v4324 = vmul.f32 %v4036, %v4227
      %v4325 = vmul.f32 %v4037, %v4232
      %v4326 = vmul.f32 %v4038, %v4237
      %v4327 = vmul.f32 %v4039, %v4242
      %v4328 = vmul.f32 %v4040, %v4247
      %v4329 = vmul.f32 %v4041, %v4252
      %v4330 = vmul.f32 %v4042, %v4257
      %v4331 = vmul.f32 %v4043, %v4262
      %v4332 = vmul.f32 %v4044, %v4267
      %v4333 = vmul.f32 %v4045, %v4272
      %v4334 = vmul.f32 %v4046, %v4277
      %v4335 = vmul.f32 %v4047, %v4282
      %v4336 = vmul.f32 %v4048, %v4287
      %v4337 = vadd.f32 %v4289, %v4290
      %v4338 = vadd.f32 %v4337, %v4291
      %v4339 = vadd.f32 %v4338, %v4292
      %v4340 = vadd.f32 %v4339, %v4293
      %v4341 = vadd.f32 %v4340, %v4294
      %v4342 = vadd.f32 %v4341, %v4295
      %v4343 = vadd.f32 %v4342, %v4296
      %v4344 = vadd.f32 %v4343, %v4297
      %v4345 = vadd.f32 %v4344, %v4298
      %v4346 = vadd.f32 %v4345, %v4299
      %v4347 = vadd.f32 %v4346, %v4300
      %v4348 = vadd.f32 %v4347, %v4301
      %v4349 = vadd.f32 %v4348, %v4302
      %v4350 = vadd.f32 %v4349, %v4303
      %v4351 = vadd.f32 %v4350, %v4304
      %v4352 = vadd.f32 %v4351, %v4305
      %v4353 = vadd.f32 %v4352, %v4306
      %v4354 = vadd.f32 %v4353, %v4307
      %v4355 = vadd.f32 %v4354, %v4308
      %v4356 = vadd.f32 %v4355, %v4309
      %v4357 = vadd.f32 %v4356, %v4310
      %v4358 = vadd.f32 %v4357, %v4311
      %v4359 = vadd.f32 %v4358, %v4312
      %v4360 = vadd.f32 %v4359, %v4313
      %v4361 = vadd.f32 %v4360, %v4314
      %v4362 = vadd.f32 %v4361, %v4315
      %v4363 = vadd.f32 %v4362, %v4316
      %v4364 = vadd.f32 %v4363, %v4317
      %v4365 = vadd.f32 %v4364, %v4318
      %v4366 = vadd.f32 %v4365, %v4319
      %v4367 = vadd.f32 %v4366, %v4320
      %v4368 = vadd.f32 %v4367, %v4321
      %v4369 = vadd.f32 %v4368, %v4322
      %v4370 = vadd.f32 %v4369, %v4323
      %v4371 = vadd.f32 %v4370, %v4324
      %v4372 = vadd.f32 %v4371, %v4325
      %v4373 = vadd.f32 %v4372, %v4326
      %v4374 = vadd.f32 %v4373, %v4327
      %v4375 = vadd.f32 %v4374, %v4328
      %v4376 = vadd.f32 %v4375, %v4329
      %v4377 = vadd.f32 %v4376, %v4330
      %v4378 = vadd.f32 %v4377, %v4331
      %v4379 = vadd.f32 %v4378, %v4332
      %v4380 = vadd.f32 %v4379, %v4333
      %v4381 = vadd.f32 %v4380, %v4334
      %v4382 = vadd.f32 %v4381, %v4335
      %v4383 = vadd.f32 %v4382, %v4336
      %v4384 = vrot.slane %v4383, 4
      %v4385 = vadd.f32 %v4383, %v4384
      %v4386 = vrot.slane %v4385, 2
      %v4387 = vadd.f32 %v4385, %v4386
      %v4388 = vrot.slane %v4387, 1
      %v4389 = vadd.f32 %v4387, %v4388
      %v4390 = vmul.f32 %v4001, %v4289
      %v4391 = vmul.f32 %v4002, %v4290
      %v4392 = vmul.f32 %v4003, %v4291
      %v4393 = vmul.f32 %v4004, %v4292
      %v4394 = vmul.f32 %v4005, %v4293
      %v4395 = vmul.f32 %v4006, %v4294
      %v4396 = vmul.f32 %v4007, %v4295
      %v4397 = vmul.f32 %v4008, %v4296
      %v4398 = vmul.f32 %v4009, %v4297
      %v4399 = vmul.f32 %v4010, %v4298
      %v4400 = vmul.f32 %v4011, %v4299
      %v4401 = vmul.f32 %v4012, %v4300
      %v4402 = vmul.f32 %v4013, %v4301
      %v4403 = vmul.f32 %v4014, %v4302
      %v4404 = vmul.f32 %v4015, %v4303
      %v4405 = vmul.f32 %v4016, %v4304
      %v4406 = vmul.f32 %v4017, %v4305
      %v4407 = vmul.f32 %v4018, %v4306
      %v4408 = vmul.f32 %v4019, %v4307
      %v4409 = vmul.f32 %v4020, %v4308
      %v4410 = vmul.f32 %v4021, %v4309
      %v4411 = vmul.f32 %v4022, %v4310
      %v4412 = vmul.f32 %v4023, %v4311
      %v4413 = vmul.f32 %v4024, %v4312
      %v4414 = vmul.f32 %v4025, %v4313
      %v4415 = vmul.f32 %v4026, %v4314
      %v4416 = vmul.f32 %v4027, %v4315
      %v4417 = vmul.f32 %v4028, %v4316
      %v4418 = vmul.f32 %v4029, %v4317
      %v4419 = vmul.f32 %v4030, %v4318
      %v4420 = vmul.f32 %v4031, %v4319
      %v4421 = vmul.f32 %v4032, %v4320
      %v4422 = vmul.f32 %v4033, %v4321
      %v4423 = vmul.f32 %v4034, %v4322
      %v4424 = vmul.f32 %v4035, %v4323
      %v4425 = vmul.f32 %v4036, %v4324
      %v4426 = vmul.f32 %v4037, %v4325
      %v4427 = vmul.f32 %v4038, %v4326
      %v4428 = vmul.f32 %v4039, %v4327
      %v4429 = vmul.f32 %v4040, %v4328
      %v4430 = vmul.f32 %v4041, %v4329
      %v4431 = vmul.f32 %v4042, %v4330
      %v4432 = vmul.f32 %v4043, %v4331
      %v4433 = vmul.f32 %v4044, %v4332
      %v4434 = vmul.f32 %v4045, %v4333
      %v4435 = vmul.f32 %v4046, %v4334
      %v4436 = vmul.f32 %v4047, %v4335
      %v4437 = vmul.f32 %v4048, %v4336
      %v4438 = vadd.f32 %v4390, %v4391
      %v4439 = vadd.f32 %v4438, %v4392
      %v4440 = vadd.f32 %v4439, %v4393
      %v4441 = vadd.f32 %v4440, %v4394
      %v4442 = vadd.f32 %v4441, %v4395
      %v4443 = vadd.f32 %v4442, %v4396
      %v4444 = vadd.f32 %v4443, %v4397
      %v4445 = vadd.f32 %v4444, %v4398
      %v4446 = vadd.f32 %v4445, %v4399
      %v4447 = vadd.f32 %v4446, %v4400
      %v4448 = vadd.f32 %v4447, %v4401
      %v4449 = vadd.f32 %v4448, %v4402
      %v4450 = vadd.f32 %v4449, %v4403
      %v4451 = vadd.f32 %v4450, %v4404
      %v4452 = vadd.f32 %v4451, %v4405
      %v4453 = vadd.f32 %v4452, %v4406
      %v4454 = vadd.f32 %v4453, %v4407
      %v4455 = vadd.f32 %v4454, %v4408
      %v4456 = vadd.f32 %v4455, %v4409
      %v4457 = vadd.f32 %v4456, %v4410
      %v4458 = vadd.f32 %v4457, %v4411
      %v4459 = vadd.f32 %v4458, %v4412
      %v4460 = vadd.f32 %v4459, %v4413
      %v4461 = vadd.f32 %v4460, %v4414
      %v4462 = vadd.f32 %v4461, %v4415
      %v4463 = vadd.f32 %v4462, %v4416
      %v4464 = vadd.f32 %v4463, %v4417
      %v4465 = vadd.f32 %v4464, %v4418
      %v4466 = vadd.f32 %v4465, %v4419
      %v4467 = vadd.f32 %v4466, %v4420
      %v4468 = vadd.f32 %v4467, %v4421
      %v4469 = vadd.f32 %v4468, %v4422
      %v4470 = vadd.f32 %v4469, %v4423
      %v4471 = vadd.f32 %v4470, %v4424
      %v4472 = vadd.f32 %v4471, %v4425
      %v4473 = vadd.f32 %v4472, %v4426
      %v4474 = vadd.f32 %v4473, %v4427
      %v4475 = vadd.f32 %v4474, %v4428
      %v4476 = vadd.f32 %v4475, %v4429
      %v4477 = vadd.f32 %v4476, %v4430
      %v4478 = vadd.f32 %v4477, %v4431
      %v4479 = vadd.f32 %v4478, %v4432
      %v4480 = vadd.f32 %v4479, %v4433
      %v4481 = vadd.f32 %v4480, %v4434
      %v4482 = vadd.f32 %v4481, %v4435
      %v4483 = vadd.f32 %v4482, %v4436
      %v4484 = vadd.f32 %v4483, %v4437
      %v4485 = vrot.slane %v4484, 4
      %v4486 = vadd.f32 %v4484, %v4485
      %v4487 = vrot.slane %v4486, 2
      %v4488 = vadd.f32 %v4486, %v4487
      %v4489 = vrot.slane %v4488, 1
      %v4490 = vadd.f32 %v4488, %v4489
      %v4491 = vpack.c.bf16 %v4002, %v4001
      %v4492 = vpack.c.bf16 %v4004, %v4003
      %v4493 = vpack.c.bf16 %v4006, %v4005
      %v4494 = vpack.c.bf16 %v4008, %v4007
      %v4495 = vpack.c.bf16 %v4010, %v4009
      %v4496 = vpack.c.bf16 %v4012, %v4011
      %v4497 = vpack.c.bf16 %v4014, %v4013
      %v4498 = vpack.c.bf16 %v4016, %v4015
      %v4499 = vpack.c.bf16 %v4018, %v4017
      %v4500 = vpack.c.bf16 %v4020, %v4019
      %v4501 = vpack.c.bf16 %v4022, %v4021
      %v4502 = vpack.c.bf16 %v4024, %v4023
      %v4503 = vpack.c.bf16 %v4026, %v4025
      %v4504 = vpack.c.bf16 %v4028, %v4027
      %v4505 = vpack.c.bf16 %v4030, %v4029
      %v4506 = vpack.c.bf16 %v4032, %v4031
      %v4507 = vpack.c.bf16 %v4034, %v4033
      %v4508 = vpack.c.bf16 %v4036, %v4035
      %v4509 = vpack.c.bf16 %v4038, %v4037
      %v4510 = vpack.c.bf16 %v4040, %v4039
      %v4511 = vpack.c.bf16 %v4042, %v4041
      %v4512 = vpack.c.bf16 %v4044, %v4043
      %v4513 = vpack.c.bf16 %v4046, %v4045
      %v4514 = vpack.c.bf16 %v4048, %v4047
      %v4539 = vunpack.c.l.b16 %v4491
      %v4540 = vunpack.c.h.b16 %v4491
      %v4541 = vunpack.c.l.b16 %v4492
      %v4542 = vunpack.c.h.b16 %v4492
      %v4543 = vunpack.c.l.b16 %v4493
      %v4544 = vunpack.c.h.b16 %v4493
      %v4545 = vunpack.c.l.b16 %v4494
      %v4546 = vunpack.c.h.b16 %v4494
      %v4547 = vunpack.c.l.b16 %v4495
      %v4548 = vunpack.c.h.b16 %v4495
      %v4549 = vunpack.c.l.b16 %v4496
      %v4550 = vunpack.c.h.b16 %v4496
      %v4551 = vunpack.c.l.b16 %v4497
      %v4552 = vunpack.c.h.b16 %v4497
      %v4553 = vunpack.c.l.b16 %v4498
      %v4554 = vunpack.c.h.b16 %v4498
      %v4555 = vunpack.c.l.b16 %v4499
      %v4556 = vunpack.c.h.b16 %v4499
      %v4557 = vunpack.c.l.b16 %v4500
      %v4558 = vunpack.c.h.b16 %v4500
      %v4559 = vunpack.c.l.b16 %v4501
      %v4560 = vunpack.c.h.b16 %v4501
      %v4561 = vunpack.c.l.b16 %v4502
      %v4562 = vunpack.c.h.b16 %v4502
      %v4563 = vunpack.c.l.b16 %v4503
      %v4564 = vunpack.c.h.b16 %v4503
      %v4565 = vunpack.c.l.b16 %v4504
      %v4566 = vunpack.c.h.b16 %v4504
      %v4567 = vunpack.c.l.b16 %v4505
      %v4568 = vunpack.c.h.b16 %v4505
      %v4569 = vunpack.c.l.b16 %v4506
      %v4570 = vunpack.c.h.b16 %v4506
      %v4571 = vunpack.c.l.b16 %v4507
      %v4572 = vunpack.c.h.b16 %v4507
      %v4573 = vunpack.c.l.b16 %v4508
      %v4574 = vunpack.c.h.b16 %v4508
      %v4575 = vunpack.c.l.b16 %v4509
      %v4576 = vunpack.c.h.b16 %v4509
      %v4577 = vunpack.c.l.b16 %v4510
      %v4578 = vunpack.c.h.b16 %v4510
      %v4579 = vunpack.c.l.b16 %v4511
      %v4580 = vunpack.c.h.b16 %v4511
      %v4581 = vunpack.c.l.b16 %v4512
      %v4582 = vunpack.c.h.b16 %v4512
      %v4583 = vunpack.c.l.b16 %v4513
      %v4584 = vunpack.c.h.b16 %v4513
      %v4585 = vunpack.c.l.b16 %v4514
      %v4586 = vunpack.c.h.b16 %v4514
      %v4587 = vpack.c.b16 %v4539, %v4539
      %v4588 = vpack.c.b16 %v4540, %v4540
      %v4589 = vpack.c.b16 %v4541, %v4541
      %v4590 = vpack.c.b16 %v4542, %v4542
      %v4591 = vpack.c.b16 %v4543, %v4543
      %v4592 = vpack.c.b16 %v4544, %v4544
      %v4593 = vpack.c.b16 %v4545, %v4545
      %v4594 = vpack.c.b16 %v4546, %v4546
      %v4595 = vpack.c.b16 %v4547, %v4547
      %v4596 = vpack.c.b16 %v4548, %v4548
      %v4597 = vpack.c.b16 %v4549, %v4549
      %v4598 = vpack.c.b16 %v4550, %v4550
      %v4599 = vpack.c.b16 %v4551, %v4551
      %v4600 = vpack.c.b16 %v4552, %v4552
      %v4601 = vpack.c.b16 %v4553, %v4553
      %v4602 = vpack.c.b16 %v4554, %v4554
      %v4603 = vpack.c.b16 %v4555, %v4555
      %v4604 = vpack.c.b16 %v4556, %v4556
      %v4605 = vpack.c.b16 %v4557, %v4557
      %v4606 = vpack.c.b16 %v4558, %v4558
      %v4607 = vpack.c.b16 %v4559, %v4559
      %v4608 = vpack.c.b16 %v4560, %v4560
      %v4609 = vpack.c.b16 %v4561, %v4561
      %v4610 = vpack.c.b16 %v4562, %v4562
      %v4611 = vpack.c.b16 %v4563, %v4563
      %v4612 = vpack.c.b16 %v4564, %v4564
      %v4613 = vpack.c.b16 %v4565, %v4565
      %v4614 = vpack.c.b16 %v4566, %v4566
      %v4615 = vpack.c.b16 %v4567, %v4567
      %v4616 = vpack.c.b16 %v4568, %v4568
      %v4617 = vpack.c.b16 %v4569, %v4569
      %v4618 = vpack.c.b16 %v4570, %v4570
      %v4619 = vpack.c.b16 %v4571, %v4571
      %v4620 = vpack.c.b16 %v4572, %v4572
      %v4621 = vpack.c.b16 %v4573, %v4573
      %v4622 = vpack.c.b16 %v4574, %v4574
      %v4623 = vpack.c.b16 %v4575, %v4575
      %v4624 = vpack.c.b16 %v4576, %v4576
      %v4625 = vpack.c.b16 %v4577, %v4577
      %v4626 = vpack.c.b16 %v4578, %v4578
      %v4627 = vpack.c.b16 %v4579, %v4579
      %v4628 = vpack.c.b16 %v4580, %v4580
      %v4629 = vpack.c.b16 %v4581, %v4581
      %v4630 = vpack.c.b16 %v4582, %v4582
      %v4631 = vpack.c.b16 %v4583, %v4583
      %v4632 = vpack.c.b16 %v4584, %v4584
      %v4633 = vpack.c.b16 %v4585, %v4585
      %v4634 = vpack.c.b16 %v4586, %v4586
      %4683 = vst [vmem:[%s204] sm:$0xf] %v4587
      %4684 = vst [vmem:[%s204 + $0x4] sm:$0xf] %v4588
      %4685 = vst [vmem:[%s204 + $0x8] sm:$0xf] %v4589
      %4686 = vst [vmem:[%s204 + $0xc] sm:$0xf] %v4590
      %4687 = vst [vmem:[%s204 + $0x10] sm:$0xf] %v4591
      %4688 = vst [vmem:[%s204 + $0x14] sm:$0xf] %v4592
      %4689 = vst [vmem:[%s204 + $0x18] sm:$0xf] %v4593
      %4690 = vst [vmem:[%s204 + $0x1c] sm:$0xf] %v4594
      %4691 = vst [vmem:[%s204 + $0x20] sm:$0xf] %v4595
      %4692 = vst [vmem:[%s204 + $0x24] sm:$0xf] %v4596
      %4693 = vst [vmem:[%s204 + $0x28] sm:$0xf] %v4597
      %4694 = vst [vmem:[%s204 + $0x2c] sm:$0xf] %v4598
      %4695 = vst [vmem:[%s204 + $0x30] sm:$0xf] %v4599
      %4696 = vst [vmem:[%s204 + $0x34] sm:$0xf] %v4600
      %4697 = vst [vmem:[%s204 + $0x38] sm:$0xf] %v4601
      %4698 = vst [vmem:[%s204 + $0x3c] sm:$0xf] %v4602
      %4699 = vst [vmem:[%s204 + $0x40] sm:$0xf] %v4603
      %4700 = vst [vmem:[%s204 + $0x44] sm:$0xf] %v4604
      %4701 = vst [vmem:[%s204 + $0x48] sm:$0xf] %v4605
      %4702 = vst [vmem:[%s204 + $0x4c] sm:$0xf] %v4606
      %4703 = vst [vmem:[%s204 + $0x50] sm:$0xf] %v4607
      %4704 = vst [vmem:[%s204 + $0x54] sm:$0xf] %v4608
      %4705 = vst [vmem:[%s204 + $0x58] sm:$0xf] %v4609
      %4706 = vst [vmem:[%s204 + $0x5c] sm:$0xf] %v4610
      %4707 = vst [vmem:[%s204 + $0x60] sm:$0xf] %v4611
      %4708 = vst [vmem:[%s204 + $0x64] sm:$0xf] %v4612
      %4709 = vst [vmem:[%s204 + $0x68] sm:$0xf] %v4613
      %4710 = vst [vmem:[%s204 + $0x6c] sm:$0xf] %v4614
      %4711 = vst [vmem:[%s204 + $0x70] sm:$0xf] %v4615
      %4712 = vst [vmem:[%s204 + $0x74] sm:$0xf] %v4616
      %4713 = vst [vmem:[%s204 + $0x78] sm:$0xf] %v4617
      %4714 = vst [vmem:[%s204 + $0x7c] sm:$0xf] %v4618
      %4715 = vst [vmem:[%s204 + $0x80] sm:$0xf] %v4619
      %4716 = vst [vmem:[%s204 + $0x84] sm:$0xf] %v4620
      %4717 = vst [vmem:[%s204 + $0x88] sm:$0xf] %v4621
      %4718 = vst [vmem:[%s204 + $0x8c] sm:$0xf] %v4622
      %4719 = vst [vmem:[%s204 + $0x90] sm:$0xf] %v4623
      %4720 = vst [vmem:[%s204 + $0x94] sm:$0xf] %v4624
      %4721 = vst [vmem:[%s204 + $0x98] sm:$0xf] %v4625
      %4722 = vst [vmem:[%s204 + $0x9c] sm:$0xf] %v4626
      %4723 = vst [vmem:[%s204 + $0xa0] sm:$0xf] %v4627
      %4724 = vst [vmem:[%s204 + $0xa4] sm:$0xf] %v4628
      %4725 = vst [vmem:[%s204 + $0xa8] sm:$0xf] %v4629
      %4726 = vst [vmem:[%s204 + $0xac] sm:$0xf] %v4630
      %4727 = vst [vmem:[%s204 + $0xb0] sm:$0xf] %v4631
      %4728 = vst [vmem:[%s204 + $0xb4] sm:$0xf] %v4632
      %4729 = vst [vmem:[%s204 + $0xb8] sm:$0xf] %v4633
      %4730 = vst [vmem:[%s204 + $0xbc] sm:$0xf] %v4634
      %4731 = vst [vmem:[%s208] sm:$0x1] %v4389
      %4732 = vst [vmem:[%s208 + $0x1] sm:$0x1] %v4490
      %p4733 = scmp.lt.s32.totalorder %s16, 1
      %s4734 = scalar_select %p4733, %s16, 1
      %s4735 = smul.addr %s4734, 48
      %s4736 = smul.addr %s4735, 4
      %s4737 = scalar_lea.vmem %s3, %s4736
      %p4738 = scmp.lt.s32.totalorder %s16, 1
      %s4739 = scalar_select %p4738, %s16, 1
      %s4740 = smul.addr %s4739, 2
      %s4741 = scalar_lea.vmem %s4, %s4740
      // Predicated region
      $region33: #{_forward_impl.3} parent=31 // pred_check
        %p4742 = pneg %p102
      $region34: #{_forward_impl.3} parent=31 // pred_check_branch
        %4744 = sbr.rel (%p4742) target = $region36
      $region35: #{_forward_impl.3} parent=31 // pred_region
        _
      $region36: #{_forward_impl.3} parent=31 // pred_fallthru
        _
      // Predicated region
      $region37: #{_forward_impl.3} parent=31 // pred_check
        %p4745 = pneg %p128
      $region38: #{_forward_impl.3} parent=31 // pred_check_branch
        %4747 = sbr.rel (%p4745) target = $region40
      $region39: #{_forward_impl.3} parent=31 // pred_region
        _
      $region40: #{_forward_impl.3} parent=31 // pred_fallthru
        _
    $region32: #{_forward_impl.3} parent=5 // pred_fallthru
      _
    %p4748 = scmp.le.s32.totalorder 2, %s11
    // Predicated region
    $region41: #{_forward_impl.3} parent=5 // pred_check
      %p4749 = pneg %p4748
    $region42: #{_forward_impl.3} parent=5 // pred_check_branch
      %4751 = sbr.rel (%p4749) target = $region44
    $region43: #{_forward_impl.3} parent=5 // pred_region
      %s4752 = ssub.s32 %s11, 2
      // Predicated region
      $region45: #{_forward_impl.3} parent=43 // pred_check
        %p4753 = pneg %p108
      $region46: #{_forward_impl.3} parent=43 // pred_check_branch
        %4755 = sbr.rel (%p4753) target = $region48
      $region47: #{_forward_impl.3} parent=43 // pred_region
        %p4756 = scmp.lt.s32.totalorder %s17, 1
        %s4757 = scalar_select %p4756, %s17, 1
        %s4758 = smul.addr %s4757, 48
        %s4759 = smul.addr %s4758, 4
        %s4760 = scalar_lea.vmem %s3, %s4759
      $region48: #{_forward_impl.3} parent=43 // pred_fallthru
        _
      // Predicated region
      $region49: #{_forward_impl.3} parent=43 // pred_check
        %p4761 = pneg %p134
      $region50: #{_forward_impl.3} parent=43 // pred_check_branch
        %4763 = sbr.rel (%p4761) target = $region52
      $region51: #{_forward_impl.3} parent=43 // pred_region
        %p4764 = scmp.lt.s32.totalorder %s17, 1
        %s4765 = scalar_select %p4764, %s17, 1
        %s4766 = smul.addr %s4765, 2
        %s4767 = scalar_lea.vmem %s4, %s4766
      $region52: #{_forward_impl.3} parent=43 // pred_fallthru
        _
    $region44: #{_forward_impl.3} parent=5 // pred_fallthru
      _
  $region6: #{_forward_impl.3} parent=0 // loop_footer
    %s15 = sadd.s32 1, %s11
  $region7: #{_forward_impl.3} parent=0 // loop_footer_branch
    %10 = sbr.rel target = $region3
  $region8: #{_forward_impl.3} parent=0 // loop_exit
    _

</llo_original>
